<compile_context>
chip_gen: v6e
topology: v6e:2x2x1
jax: 0.10.0
libtpu: 0.0.40
codegen_flags: <defaults>
</compile_context>

<pallas_src>
import functools

import numpy as np
import jax
import jax.numpy as jnp
from jax import lax
from jax.experimental import pallas as pl
from jax.experimental.pallas import tpu as pltpu

ALPHA = 0.25
EPS = 1e-5


# ---------------------------------------------------------------------------
# Fused OctConv(3x3, stride 1) + folded-BN (+residual) + ReLU layer kernel.
#
# Layout: images are zero-padded (1 top, 2 bottom, 1 left, 1 right) and flattened
# to (rows * padded_width, C).  A 3x3 / pad-1 conv then becomes 9 matmuls on
# contiguous row-shifted slices of that flat tensor; outputs live in a
# "padded-width" layout (H, W+2) whose last two columns are garbage and are
# sliced off by cheap XLA glue outside the kernel.
# ---------------------------------------------------------------------------
def _oct_layer_kernel(*refs, wp_h, wp_l, ch_out, has_res):
    if has_res:
        (hf_ref, lo_ref, w_hf_ref, w_lo_ref, up_ref, sh_h_ref, sh_l_ref,
         res_h_ref, res_l_ref, hf_out_ref, lf_out_ref) = refs
    else:
        (hf_ref, lo_ref, w_hf_ref, w_lo_ref, up_ref, sh_h_ref, sh_l_ref,
         hf_out_ref, lf_out_ref) = refs
        res_h_ref = res_l_ref = None

    p_hf = hf_out_ref.shape[1]        # H  * (W  + 2)
    p_lf = lf_out_ref.shape[1]        # Hl * (Wl + 2)

    acc_h = jnp.zeros((p_hf, w_hf_ref.shape[2]), jnp.float32)
    acc_l = jnp.zeros((p_lf, w_lo_ref.shape[2]), jnp.float32)

    # 9-tap streaming 3x3 conv: contiguous shifted slices, bf16 MXU, f32 accumulate.
    for dh in range(3):
        for dw in range(3):
            t = dh * 3 + dw
            off_h = dh * wp_h + dw
            off_l = dh * wp_l + dw
            acc_h = acc_h + jnp.dot(hf_ref[0, off_h:off_h + p_hf, :], w_hf_ref[t],
                                    preferred_element_type=jnp.float32)
            acc_l = acc_l + jnp.dot(lo_ref[0, off_l:off_l + p_lf, :], w_lo_ref[t],
                                    preferred_element_type=jnp.float32)

    # Low-frequency output: L2L + H2L already summed by the packed block weight.
    zl = acc_l[:, ch_out:] + sh_l_ref[...]
    if has_res:
        zl = zl + res_l_ref[0]
    lf_out_ref[0] = jnp.maximum(zl, 0.0).astype(lf_out_ref.dtype)

    # High-frequency output: H2H + nearest-upsampled L2H (0/1 selection matmul).
    l2h = acc_l[:, :ch_out].astype(jnp.bfloat16)
    up = jnp.dot(up_ref[...], l2h, preferred_element_type=jnp.float32)
    zh = acc_h + up + sh_h_ref[...]
    if has_res:
        zh = zh + res_h_ref[0]
    hf_out_ref[0] = jnp.maximum(zh, 0.0).astype(hf_out_ref.dtype)


# ---------------------------------------------------------------------------
# XLA glue (layout plumbing only)
# ---------------------------------------------------------------------------
def avg_pool2(x):
    n, h, w, c = x.shape
    return x.astype(jnp.float32).reshape(n, h // 2, 2, w // 2, 2, c).mean(axis=(2, 4))


def upsample2(x):  # reference path only
    return jnp.repeat(jnp.repeat(x, 2, axis=1), 2, axis=2)


def _pad_flatten_in(x):
    """(B,H,W,C) -> (B,(H+3)*(W+2),C): zero-pad 1 top / 2 bottom / 1 left / 1 right
    and flatten rows.  The extra bottom rows keep every shifted conv slice in
    bounds (out-of-range reads only feed the discarded padded-width columns)."""
    b, h, w, c = x.shape
    xp = jnp.pad(x, ((0, 0), (1, 2), (1, 1), (0, 0)))
    return xp.reshape(b, (h + 3) * (w + 2), c)


def _padw_flatten(x):
    """(B,H,W,C) -> (B, H*(W+2), C): padded-width layout used for residuals."""
    b, h, w, c = x.shape
    xp = jnp.pad(x, ((0, 0), (0, 0), (0, 2), (0, 0)))
    return xp.reshape(b, h * (w + 2), c)


def _unflatten_valid(x, h, w):
    """(B, H*(W+2), C) padded-width layout -> (B,H,W,C) valid region."""
    b, _, c = x.shape
    return x.reshape(b, h, w + 2, c)[:, :, :w, :]


@functools.lru_cache(maxsize=None)
def _upsample_matrix(h, w):
    """0/1 matrix mapping half-res padded-width rows to full-res padded-width rows
    (nearest-neighbour 2x upsample) -- used as an in-kernel selection matmul."""
    hl, wl = h // 2, w // 2
    wp, wlp = w + 2, wl + 2
    rows = np.arange(h * wp)
    r, c = rows // wp, rows % wp
    cols = (r // 2) * wlp + np.minimum(c // 2, wlp - 1)
    u = np.zeros((h * wp, hl * wlp), np.float32)
    u[rows, cols] = 1.0
    return u


# ---------------------------------------------------------------------------
# Fused layer wrapper
# ---------------------------------------------------------------------------
def oct_layer_pallas(hf, lf, pack, res_h=None, res_l=None, out_dtype=jnp.float32):
    """One fused OctConv3x3 (normal, stride 1) -> folded BN (-> +res) -> ReLU."""
    B, H, W, _ = hf.shape
    Hl, Wl = H // 2, W // 2
    wp, wlp = W + 2, Wl + 2

    w_hf, w_lo = pack["w_hf"], pack["w_lo"]
    sh_h, sh_l = pack["shift_h"], pack["shift_l"]
    ch_in = w_hf.shape[1]
    clo_in = w_lo.shape[1]
    ch_out = w_hf.shape[2]
    cl_out = w_lo.shape[2] - ch_out

    p_hf_in = (H + 3) * wp
    p_lo_in = (Hl + 3) * wlp
    p_hf_out = H * wp
    p_lf_out = Hl * wlp

    bf16 = jnp.bfloat16
    hf_flat = _pad_flatten_in(hf.astype(bf16))
    lo = jnp.concatenate([lf.astype(bf16), avg_pool2(hf).astype(bf16)], axis=-1)
    lo_flat = _pad_flatten_in(lo)
    up_mat = jnp.asarray(_upsample_matrix(H, W), bf16)

    has_res = res_h is not None
    in_specs = [
        pl.BlockSpec((1, p_hf_in, ch_in), lambda b: (b, 0, 0)),
        pl.BlockSpec((1, p_lo_in, clo_in), lambda b: (b, 0, 0)),
        pl.BlockSpec((9, ch_in, ch_out), lambda b: (0, 0, 0)),
        pl.BlockSpec((9, clo_in, ch_out + cl_out), lambda b: (0, 0, 0)),
        pl.BlockSpec((p_hf_out, p_lf_out), lambda b: (0, 0)),
        pl.BlockSpec((1, ch_out), lambda b: (0, 0)),
        pl.BlockSpec((1, cl_out), lambda b: (0, 0)),
    ]
    args = [hf_flat, lo_flat, w_hf, w_lo, up_mat, sh_h, sh_l]
    if has_res:
        in_specs += [pl.BlockSpec((1, p_hf_out, ch_out), lambda b: (b, 0, 0)),
                     pl.BlockSpec((1, p_lf_out, cl_out), lambda b: (b, 0, 0))]
        args += [_padw_flatten(res_h.astype(jnp.float32)),
                 _padw_flatten(res_l.astype(jnp.float32))]

    hf_o, lf_o = pl.pallas_call(
        functools.partial(_oct_layer_kernel, wp_h=wp, wp_l=wlp,
                          ch_out=ch_out, has_res=has_res),
        out_shape=(jax.ShapeDtypeStruct((B, p_hf_out, ch_out), out_dtype),
                   jax.ShapeDtypeStruct((B, p_lf_out, cl_out), out_dtype)),
        grid=(B,),
        in_specs=in_specs,
        out_specs=(pl.BlockSpec((1, p_hf_out, ch_out), lambda b: (b, 0, 0)),
                   pl.BlockSpec((1, p_lf_out, cl_out), lambda b: (b, 0, 0))),
        compiler_params=pltpu.CompilerParams(dimension_semantics=("parallel",)),
    )(*args)

    return _unflatten_valid(hf_o, H, W), _unflatten_valid(lf_o, Hl, Wl)


# ---------------------------------------------------------------------------
# Parameters (raw PyTorch-style) and offline folding/packing for the kernel
# ---------------------------------------------------------------------------
def _conv_raw(key, cin, cout):
    kw, kb = jax.random.split(key)
    w = jax.random.normal(kw, (cout, cin, 3, 3), jnp.float32) / np.sqrt(9 * cin)
    b = 0.01 * jax.random.normal(kb, (cout,), jnp.float32)
    return w, b


def _oct_conv_raw(key, cin, cout):
    hf_in = int(cin * (1 - ALPHA))
    hf_out = int(cout * (1 - ALPHA))
    lf_in, lf_out = cin - hf_in, cout - hf_out
    ks = jax.random.split(key, 4)
    w_h2h, b_h2h = _conv_raw(ks[0], hf_in, hf_out)
    w_l2h, b_l2h = _conv_raw(ks[1], lf_in, hf_out)
    w_l2l, b_l2l = _conv_raw(ks[2], lf_in, lf_out)
    w_h2l, b_h2l = _conv_raw(ks[3], hf_in, lf_out)
    return dict(w_h2h=w_h2h, b_h2h=b_h2h, w_l2h=w_l2h, b_l2h=b_l2h,
                w_l2l=w_l2l, b_l2l=b_l2l, w_h2l=w_h2l, b_h2l=b_h2l)


def _bn_raw(key, c):
    k1, k2, k3, k4 = jax.random.split(key, 4)
    gamma = 1.0 + 0.1 * jax.random.normal(k1, (c,), jnp.float32)
    beta = 0.1 * jax.random.normal(k2, (c,), jnp.float32)
    mean = 0.1 * jax.random.normal(k3, (c,), jnp.float32)
    var = 1.0 + 0.1 * jax.random.uniform(k4, (c,), jnp.float32)
    return gamma, beta, mean, var


def _oct_bn_raw(key, c):
    hf = int(c * (1 - ALPHA))
    k1, k2 = jax.random.split(key)
    return _bn_raw(k1, hf), _bn_raw(k2, c - hf)


def make_basic_block_raw(key, inplanes, planes):
    ks = jax.random.split(key, 4)
    return dict(conv1=_oct_conv_raw(ks[0], inplanes, planes),
                bn1=_oct_bn_raw(ks[1], planes),
                conv2=_oct_conv_raw(ks[2], planes, planes),
                bn2=_oct_bn_raw(ks[3], planes))


def _pack_tap_weight(w, scale):
    # torch (Cout, Cin, 3, 3) -> (9, Cin, Cout), scaled per out-channel by BN scale.
    cout, cin = w.shape[0], w.shape[1]
    w9 = jnp.transpose(w, (2, 3, 1, 0)).reshape(9, cin, cout)
    return w9 * scale[None, None, :]


def _pack_layer(conv, bn):
    (g_h, be_h, m_h, v_h), (g_l, be_l, m_l, v_l) = bn
    sc_h = g_h / jnp.sqrt(v_h + EPS)
    sc_l = g_l / jnp.sqrt(v_l + EPS)
    w_h2h = _pack_tap_weight(conv["w_h2h"], sc_h)
    w_l2h = _pack_tap_weight(conv["w_l2h"], sc_h)
    w_l2l = _pack_tap_weight(conv["w_l2l"], sc_l)
    w_h2l = _pack_tap_weight(conv["w_h2l"], sc_l)
    ch_in, ch_out = w_h2h.shape[1], w_h2h.shape[2]
    # Combined half-res weight: input = [lf | avg_pool(hf)], output = [l2h | lf_out]
    top = jnp.concatenate([w_l2h, w_l2l], axis=2)
    bot = jnp.concatenate([jnp.zeros((9, ch_in, ch_out), jnp.float32), w_h2l], axis=2)
    w_lo = jnp.concatenate([top, bot], axis=1)
    shift_h = be_h - m_h * sc_h + (conv["b_h2h"] + conv["b_l2h"]) * sc_h
    shift_l = be_l - m_l * sc_l + (conv["b_l2l"] + conv["b_h2l"]) * sc_l
    return dict(w_hf=w_h2h.astype(jnp.bfloat16),
                w_lo=w_lo.astype(jnp.bfloat16),
                shift_h=shift_h.reshape(1, -1).astype(jnp.float32),
                shift_l=shift_l.reshape(1, -1).astype(jnp.float32))


def pack_basic_block(raw):
    return dict(layer1=_pack_layer(raw["conv1"], raw["bn1"]),
                layer2=_pack_layer(raw["conv2"], raw["bn2"]))


# ---------------------------------------------------------------------------
# Forward pass (Pallas)
# ---------------------------------------------------------------------------
def basic_block_forward_nhwc(packed, hf, lf):
    # conv1 -> bn1 -> relu1  (layer-1 intermediates bf16: re-cast next layer anyway)
    hf1, lf1 = oct_layer_pallas(hf, lf, packed["layer1"], out_dtype=jnp.bfloat16)
    # conv2 -> bn2 -> +identity -> relu2  (residual + ReLU fused in the epilogue)
    return oct_layer_pallas(hf1, lf1, packed["layer2"],
                            res_h=hf, res_l=lf, out_dtype=jnp.float32)


def basic_block_forward_nchw(packed, hf_nchw, lf_nchw):
    # NOTE: when stacking blocks keep activations NHWC and call the *_nhwc entry
    # point directly to avoid per-block transposes.
    hf = jnp.transpose(hf_nchw, (0, 2, 3, 1))
    lf = jnp.transpose(lf_nchw, (0, 2, 3, 1))
    oh, ol = basic_block_forward_nhwc(packed, hf, lf)
    return jnp.transpose(oh, (0, 3, 1, 2)), jnp.transpose(ol, (0, 3, 1, 2))


# ---------------------------------------------------------------------------
# Pure-JAX f32 reference of the PyTorch module (eval-mode BN) for validation
# ---------------------------------------------------------------------------
def _conv_ref(x, w, b):
    y = lax.conv_general_dilated(x, jnp.transpose(w, (2, 3, 1, 0)), (1, 1), "SAME",
                                 dimension_numbers=("NHWC", "HWIO", "NHWC"))
    return y + b


def _bn_ref(x, p):
    g, be, m, v = p
    return (x - m) / jnp.sqrt(v + EPS) * g + be


def _oct_conv_ref(hf, lf, c):
    hf_out = _conv_ref(hf, c["w_h2h"], c["b_h2h"]) + upsample2(
        _conv_ref(lf, c["w_l2h"], c["b_l2h"]))
    lf_out = _conv_ref(lf, c["w_l2l"], c["b_l2l"]) + _conv_ref(
        avg_pool2(hf), c["w_h2l"], c["b_h2l"])
    return hf_out, lf_out


def basic_block_ref_nhwc(raw, hf, lf):
    h1, l1 = _oct_conv_ref(hf, lf, raw["conv1"])
    h1 = jax.nn.relu(_bn_ref(h1, raw["bn1"][0]))
    l1 = jax.nn.relu(_bn_ref(l1, raw["bn1"][1]))
    h2, l2 = _oct_conv_ref(h1, l1, raw["conv2"])
    h2 = _bn_ref(h2, raw["bn2"][0]) + hf
    l2 = _bn_ref(l2, raw["bn2"][1]) + lf
    return jax.nn.relu(h2), jax.nn.relu(l2)


# ---------------------------------------------------------------------------
if __name__ == "__main__":
    key = jax.random.PRNGKey(0)
    k_par, k_hf, k_lf = jax.random.split(key, 3)

    # BasicBlock expansion=1, downsample=None -> inplanes == planes
    inplanes = planes = 32
    B, H, W = 2, 16, 16
    hf_ch = int(inplanes * (1 - ALPHA))   # 24
    lf_ch = inplanes - hf_ch              # 8

    raw = make_basic_block_raw(k_par, inplanes, planes)
    packed = pack_basic_block(raw)

    # PyTorch-style NCHW inputs: high-frequency full res, low-frequency half res.
    hf_in = jax.random.normal(k_hf, (B, hf_ch, H, W), jnp.float32)
    lf_in = jax.random.normal(k_lf, (B, lf_ch, H // 2, W // 2), jnp.float32)

    fwd = jax.jit(basic_block_forward_nchw)
    out_h, out_l = fwd(packed, hf_in, lf_in)
    jax.block_until_ready((out_h, out_l))

    assert out_h.shape == (B, hf_ch, H, W)
    assert out_l.shape == (B, lf_ch, H // 2, W // 2)

    # Validate against the pure-JAX f32 reference (bf16 MXU operands -> tolerance).
    ref_h, ref_l = jax.jit(basic_block_ref_nhwc)(
        raw, jnp.transpose(hf_in, (0, 2, 3, 1)), jnp.transpose(lf_in, (0, 2, 3, 1)))
    ref_h = jnp.transpose(ref_h, (0, 3, 1, 2))
    ref_l = jnp.transpose(ref_l, (0, 3, 1, 2))
    err_h = float(jnp.max(jnp.abs(out_h - ref_h)))
    err_l = float(jnp.max(jnp.abs(out_l - ref_l)))
    assert err_h < 0.25 and err_l < 0.25, (err_h, err_l)

    print("KERNEL_OK")
</pallas_src>

<mosaic_0001>
module attributes {stable_mosaic.version = 11 : i64} {
  func.func @_oct_layer_kernel(%arg0: i32, %arg1: memref<1x342x24xbf16, #tpu.memory_space<vmem>>, %arg2: memref<1x110x32xbf16, #tpu.memory_space<vmem>>, %arg3: memref<9x24x24xbf16, #tpu.memory_space<vmem>>, %arg4: memref<9x32x32xbf16, #tpu.memory_space<vmem>>, %arg5: memref<288x80xbf16, #tpu.memory_space<vmem>>, %arg6: memref<1x24xf32, #tpu.memory_space<vmem>>, %arg7: memref<1x8xf32, #tpu.memory_space<vmem>>, %arg8: memref<1x288x24xbf16, #tpu.memory_space<vmem>>, %arg9: memref<1x80x8xbf16, #tpu.memory_space<vmem>>) attributes {dimension_semantics = [#tpu.dimension_semantics<parallel>], iteration_bounds = array<i64: 2>, scalar_prefetch = 0 : i64, scratch_operands = 0 : i64, tpu.core_type = #tpu.core_type<tc>, window_params = [{transform_indices = @transform_0, window_bounds = array<i64: 1, 342, 24>}, {transform_indices = @transform_1, window_bounds = array<i64: 1, 110, 32>}, {pipeline_mode = #tpu.pipeline_mode<synchronous>, transform_indices = @transform_2, window_bounds = array<i64: 9, 24, 24>}, {pipeline_mode = #tpu.pipeline_mode<synchronous>, transform_indices = @transform_3, window_bounds = array<i64: 9, 32, 32>}, {pipeline_mode = #tpu.pipeline_mode<synchronous>, transform_indices = @transform_4, window_bounds = array<i64: 288, 80>}, {pipeline_mode = #tpu.pipeline_mode<synchronous>, transform_indices = @transform_5, window_bounds = array<i64: 1, 24>}, {pipeline_mode = #tpu.pipeline_mode<synchronous>, transform_indices = @transform_6, window_bounds = array<i64: 1, 8>}, {transform_indices = @transform_7, window_bounds = array<i64: 1, 288, 24>}, {transform_indices = @transform_8, window_bounds = array<i64: 1, 80, 8>}]} {
    %cst = arith.constant 0.000000e+00 : f32
    %0 = vector.broadcast %cst : f32 to vector<288x24xf32>
    %cst_0 = arith.constant 0.000000e+00 : f32
    %1 = vector.broadcast %cst_0 : f32 to vector<80x32xf32>
    %c0 = arith.constant 0 : index
    %c0_1 = arith.constant 0 : index
    %c0_2 = arith.constant 0 : index
    %2 = vector.load %arg1[%c0, %c0_1, %c0_2] : memref<1x342x24xbf16, #tpu.memory_space<vmem>>, vector<1x288x24xbf16>
    %3 = vector.shape_cast %2 : vector<1x288x24xbf16> to vector<288x24xbf16>
    %c0_3 = arith.constant 0 : index
    %c0_4 = arith.constant 0 : index
    %c0_5 = arith.constant 0 : index
    %4 = vector.load %arg3[%c0_3, %c0_4, %c0_5] : memref<9x24x24xbf16, #tpu.memory_space<vmem>>, vector<1x24x24xbf16>
    %5 = vector.shape_cast %4 : vector<1x24x24xbf16> to vector<24x24xbf16>
    %cst_6 = arith.constant dense<0.000000e+00> : vector<288x24xf32>
    %6 = tpu.matmul %3, %5, %cst_6 {dimension_numbers = #tpu.dot_dimension_numbers<[1], [0], [0], [1], [0, 0, 1, 1], [], []>} : vector<288x24xbf16>, vector<24x24xbf16>, vector<288x24xf32> -> vector<288x24xf32>
    %7 = arith.addf %0, %6 : vector<288x24xf32>
    %c0_7 = arith.constant 0 : index
    %c0_8 = arith.constant 0 : index
    %c0_9 = arith.constant 0 : index
    %8 = vector.load %arg2[%c0_7, %c0_8, %c0_9] : memref<1x110x32xbf16, #tpu.memory_space<vmem>>, vector<1x80x32xbf16>
    %9 = vector.shape_cast %8 : vector<1x80x32xbf16> to vector<80x32xbf16>
    %c0_10 = arith.constant 0 : index
    %c0_11 = arith.constant 0 : index
    %c0_12 = arith.constant 0 : index
    %10 = vector.load %arg4[%c0_10, %c0_11, %c0_12] : memref<9x32x32xbf16, #tpu.memory_space<vmem>>, vector<1x32x32xbf16>
    %11 = vector.shape_cast %10 : vector<1x32x32xbf16> to vector<32x32xbf16>
    %cst_13 = arith.constant dense<0.000000e+00> : vector<80x32xf32>
    %12 = tpu.matmul %9, %11, %cst_13 {dimension_numbers = #tpu.dot_dimension_numbers<[1], [0], [0], [1], [0, 0, 1, 1], [], []>} : vector<80x32xbf16>, vector<32x32xbf16>, vector<80x32xf32> -> vector<80x32xf32>
    %13 = arith.addf %1, %12 : vector<80x32xf32>
    %c0_14 = arith.constant 0 : index
    %c1 = arith.constant 1 : index
    %c0_15 = arith.constant 0 : index
    %14 = vector.load %arg1[%c0_14, %c1, %c0_15] : memref<1x342x24xbf16, #tpu.memory_space<vmem>>, vector<1x288x24xbf16>
    %15 = vector.shape_cast %14 : vector<1x288x24xbf16> to vector<288x24xbf16>
    %c1_16 = arith.constant 1 : index
    %c0_17 = arith.constant 0 : index
    %c0_18 = arith.constant 0 : index
    %16 = vector.load %arg3[%c1_16, %c0_17, %c0_18] : memref<9x24x24xbf16, #tpu.memory_space<vmem>>, vector<1x24x24xbf16>
    %17 = vector.shape_cast %16 : vector<1x24x24xbf16> to vector<24x24xbf16>
    %cst_19 = arith.constant dense<0.000000e+00> : vector<288x24xf32>
    %18 = tpu.matmul %15, %17, %cst_19 {dimension_numbers = #tpu.dot_dimension_numbers<[1], [0], [0], [1], [0, 0, 1, 1], [], []>} : vector<288x24xbf16>, vector<24x24xbf16>, vector<288x24xf32> -> vector<288x24xf32>
    %19 = arith.addf %7, %18 : vector<288x24xf32>
    %c0_20 = arith.constant 0 : index
    %c1_21 = arith.constant 1 : index
    %c0_22 = arith.constant 0 : index
    %20 = vector.load %arg2[%c0_20, %c1_21, %c0_22] : memref<1x110x32xbf16, #tpu.memory_space<vmem>>, vector<1x80x32xbf16>
    %21 = vector.shape_cast %20 : vector<1x80x32xbf16> to vector<80x32xbf16>
    %c1_23 = arith.constant 1 : index
    %c0_24 = arith.constant 0 : index
    %c0_25 = arith.constant 0 : index
    %22 = vector.load %arg4[%c1_23, %c0_24, %c0_25] : memref<9x32x32xbf16, #tpu.memory_space<vmem>>, vector<1x32x32xbf16>
    %23 = vector.shape_cast %22 : vector<1x32x32xbf16> to vector<32x32xbf16>
    %cst_26 = arith.constant dense<0.000000e+00> : vector<80x32xf32>
    %24 = tpu.matmul %21, %23, %cst_26 {dimension_numbers = #tpu.dot_dimension_numbers<[1], [0], [0], [1], [0, 0, 1, 1], [], []>} : vector<80x32xbf16>, vector<32x32xbf16>, vector<80x32xf32> -> vector<80x32xf32>
    %25 = arith.addf %13, %24 : vector<80x32xf32>
    %c0_27 = arith.constant 0 : index
    %c2 = arith.constant 2 : index
    %c0_28 = arith.constant 0 : index
    %26 = vector.load %arg1[%c0_27, %c2, %c0_28] : memref<1x342x24xbf16, #tpu.memory_space<vmem>>, vector<1x288x24xbf16>
    %27 = vector.shape_cast %26 : vector<1x288x24xbf16> to vector<288x24xbf16>
    %c2_29 = arith.constant 2 : index
    %c0_30 = arith.constant 0 : index
    %c0_31 = arith.constant 0 : index
    %28 = vector.load %arg3[%c2_29, %c0_30, %c0_31] : memref<9x24x24xbf16, #tpu.memory_space<vmem>>, vector<1x24x24xbf16>
    %29 = vector.shape_cast %28 : vector<1x24x24xbf16> to vector<24x24xbf16>
    %cst_32 = arith.constant dense<0.000000e+00> : vector<288x24xf32>
    %30 = tpu.matmul %27, %29, %cst_32 {dimension_numbers = #tpu.dot_dimension_numbers<[1], [0], [0], [1], [0, 0, 1, 1], [], []>} : vector<288x24xbf16>, vector<24x24xbf16>, vector<288x24xf32> -> vector<288x24xf32>
    %31 = arith.addf %19, %30 : vector<288x24xf32>
    %c0_33 = arith.constant 0 : index
    %c2_34 = arith.constant 2 : index
    %c0_35 = arith.constant 0 : index
    %32 = vector.load %arg2[%c0_33, %c2_34, %c0_35] : memref<1x110x32xbf16, #tpu.memory_space<vmem>>, vector<1x80x32xbf16>
    %33 = vector.shape_cast %32 : vector<1x80x32xbf16> to vector<80x32xbf16>
    %c2_36 = arith.constant 2 : index
    %c0_37 = arith.constant 0 : index
    %c0_38 = arith.constant 0 : index
    %34 = vector.load %arg4[%c2_36, %c0_37, %c0_38] : memref<9x32x32xbf16, #tpu.memory_space<vmem>>, vector<1x32x32xbf16>
    %35 = vector.shape_cast %34 : vector<1x32x32xbf16> to vector<32x32xbf16>
    %cst_39 = arith.constant dense<0.000000e+00> : vector<80x32xf32>
    %36 = tpu.matmul %33, %35, %cst_39 {dimension_numbers = #tpu.dot_dimension_numbers<[1], [0], [0], [1], [0, 0, 1, 1], [], []>} : vector<80x32xbf16>, vector<32x32xbf16>, vector<80x32xf32> -> vector<80x32xf32>
    %37 = arith.addf %25, %36 : vector<80x32xf32>
    %c0_40 = arith.constant 0 : index
    %c18 = arith.constant 18 : index
    %c0_41 = arith.constant 0 : index
    %38 = vector.load %arg1[%c0_40, %c18, %c0_41] : memref<1x342x24xbf16, #tpu.memory_space<vmem>>, vector<1x288x24xbf16>
    %39 = vector.shape_cast %38 : vector<1x288x24xbf16> to vector<288x24xbf16>
    %c3 = arith.constant 3 : index
    %c0_42 = arith.constant 0 : index
    %c0_43 = arith.constant 0 : index
    %40 = vector.load %arg3[%c3, %c0_42, %c0_43] : memref<9x24x24xbf16, #tpu.memory_space<vmem>>, vector<1x24x24xbf16>
    %41 = vector.shape_cast %40 : vector<1x24x24xbf16> to vector<24x24xbf16>
    %cst_44 = arith.constant dense<0.000000e+00> : vector<288x24xf32>
    %42 = tpu.matmul %39, %41, %cst_44 {dimension_numbers = #tpu.dot_dimension_numbers<[1], [0], [0], [1], [0, 0, 1, 1], [], []>} : vector<288x24xbf16>, vector<24x24xbf16>, vector<288x24xf32> -> vector<288x24xf32>
    %43 = arith.addf %31, %42 : vector<288x24xf32>
    %c0_45 = arith.constant 0 : index
    %c10 = arith.constant 10 : index
    %c0_46 = arith.constant 0 : index
    %44 = vector.load %arg2[%c0_45, %c10, %c0_46] : memref<1x110x32xbf16, #tpu.memory_space<vmem>>, vector<1x80x32xbf16>
    %45 = vector.shape_cast %44 : vector<1x80x32xbf16> to vector<80x32xbf16>
    %c3_47 = arith.constant 3 : index
    %c0_48 = arith.constant 0 : index
    %c0_49 = arith.constant 0 : index
    %46 = vector.load %arg4[%c3_47, %c0_48, %c0_49] : memref<9x32x32xbf16, #tpu.memory_space<vmem>>, vector<1x32x32xbf16>
    %47 = vector.shape_cast %46 : vector<1x32x32xbf16> to vector<32x32xbf16>
    %cst_50 = arith.constant dense<0.000000e+00> : vector<80x32xf32>
    %48 = tpu.matmul %45, %47, %cst_50 {dimension_numbers = #tpu.dot_dimension_numbers<[1], [0], [0], [1], [0, 0, 1, 1], [], []>} : vector<80x32xbf16>, vector<32x32xbf16>, vector<80x32xf32> -> vector<80x32xf32>
    %49 = arith.addf %37, %48 : vector<80x32xf32>
    %c0_51 = arith.constant 0 : index
    %c19 = arith.constant 19 : index
    %c0_52 = arith.constant 0 : index
    %50 = vector.load %arg1[%c0_51, %c19, %c0_52] : memref<1x342x24xbf16, #tpu.memory_space<vmem>>, vector<1x288x24xbf16>
    %51 = vector.shape_cast %50 : vector<1x288x24xbf16> to vector<288x24xbf16>
    %c4 = arith.constant 4 : index
    %c0_53 = arith.constant 0 : index
    %c0_54 = arith.constant 0 : index
    %52 = vector.load %arg3[%c4, %c0_53, %c0_54] : memref<9x24x24xbf16, #tpu.memory_space<vmem>>, vector<1x24x24xbf16>
    %53 = vector.shape_cast %52 : vector<1x24x24xbf16> to vector<24x24xbf16>
    %cst_55 = arith.constant dense<0.000000e+00> : vector<288x24xf32>
    %54 = tpu.matmul %51, %53, %cst_55 {dimension_numbers = #tpu.dot_dimension_numbers<[1], [0], [0], [1], [0, 0, 1, 1], [], []>} : vector<288x24xbf16>, vector<24x24xbf16>, vector<288x24xf32> -> vector<288x24xf32>
    %55 = arith.addf %43, %54 : vector<288x24xf32>
    %c0_56 = arith.constant 0 : index
    %c11 = arith.constant 11 : index
    %c0_57 = arith.constant 0 : index
    %56 = vector.load %arg2[%c0_56, %c11, %c0_57] : memref<1x110x32xbf16, #tpu.memory_space<vmem>>, vector<1x80x32xbf16>
    %57 = vector.shape_cast %56 : vector<1x80x32xbf16> to vector<80x32xbf16>
    %c4_58 = arith.constant 4 : index
    %c0_59 = arith.constant 0 : index
    %c0_60 = arith.constant 0 : index
    %58 = vector.load %arg4[%c4_58, %c0_59, %c0_60] : memref<9x32x32xbf16, #tpu.memory_space<vmem>>, vector<1x32x32xbf16>
    %59 = vector.shape_cast %58 : vector<1x32x32xbf16> to vector<32x32xbf16>
    %cst_61 = arith.constant dense<0.000000e+00> : vector<80x32xf32>
    %60 = tpu.matmul %57, %59, %cst_61 {dimension_numbers = #tpu.dot_dimension_numbers<[1], [0], [0], [1], [0, 0, 1, 1], [], []>} : vector<80x32xbf16>, vector<32x32xbf16>, vector<80x32xf32> -> vector<80x32xf32>
    %61 = arith.addf %49, %60 : vector<80x32xf32>
    %c0_62 = arith.constant 0 : index
    %c20 = arith.constant 20 : index
    %c0_63 = arith.constant 0 : index
    %62 = vector.load %arg1[%c0_62, %c20, %c0_63] : memref<1x342x24xbf16, #tpu.memory_space<vmem>>, vector<1x288x24xbf16>
    %63 = vector.shape_cast %62 : vector<1x288x24xbf16> to vector<288x24xbf16>
    %c5 = arith.constant 5 : index
    %c0_64 = arith.constant 0 : index
    %c0_65 = arith.constant 0 : index
    %64 = vector.load %arg3[%c5, %c0_64, %c0_65] : memref<9x24x24xbf16, #tpu.memory_space<vmem>>, vector<1x24x24xbf16>
    %65 = vector.shape_cast %64 : vector<1x24x24xbf16> to vector<24x24xbf16>
    %cst_66 = arith.constant dense<0.000000e+00> : vector<288x24xf32>
    %66 = tpu.matmul %63, %65, %cst_66 {dimension_numbers = #tpu.dot_dimension_numbers<[1], [0], [0], [1], [0, 0, 1, 1], [], []>} : vector<288x24xbf16>, vector<24x24xbf16>, vector<288x24xf32> -> vector<288x24xf32>
    %67 = arith.addf %55, %66 : vector<288x24xf32>
    %c0_67 = arith.constant 0 : index
    %c12 = arith.constant 12 : index
    %c0_68 = arith.constant 0 : index
    %68 = vector.load %arg2[%c0_67, %c12, %c0_68] : memref<1x110x32xbf16, #tpu.memory_space<vmem>>, vector<1x80x32xbf16>
    %69 = vector.shape_cast %68 : vector<1x80x32xbf16> to vector<80x32xbf16>
    %c5_69 = arith.constant 5 : index
    %c0_70 = arith.constant 0 : index
    %c0_71 = arith.constant 0 : index
    %70 = vector.load %arg4[%c5_69, %c0_70, %c0_71] : memref<9x32x32xbf16, #tpu.memory_space<vmem>>, vector<1x32x32xbf16>
    %71 = vector.shape_cast %70 : vector<1x32x32xbf16> to vector<32x32xbf16>
    %cst_72 = arith.constant dense<0.000000e+00> : vector<80x32xf32>
    %72 = tpu.matmul %69, %71, %cst_72 {dimension_numbers = #tpu.dot_dimension_numbers<[1], [0], [0], [1], [0, 0, 1, 1], [], []>} : vector<80x32xbf16>, vector<32x32xbf16>, vector<80x32xf32> -> vector<80x32xf32>
    %73 = arith.addf %61, %72 : vector<80x32xf32>
    %c0_73 = arith.constant 0 : index
    %c36 = arith.constant 36 : index
    %c0_74 = arith.constant 0 : index
    %74 = vector.load %arg1[%c0_73, %c36, %c0_74] : memref<1x342x24xbf16, #tpu.memory_space<vmem>>, vector<1x288x24xbf16>
    %75 = vector.shape_cast %74 : vector<1x288x24xbf16> to vector<288x24xbf16>
    %c6 = arith.constant 6 : index
    %c0_75 = arith.constant 0 : index
    %c0_76 = arith.constant 0 : index
    %76 = vector.load %arg3[%c6, %c0_75, %c0_76] : memref<9x24x24xbf16, #tpu.memory_space<vmem>>, vector<1x24x24xbf16>
    %77 = vector.shape_cast %76 : vector<1x24x24xbf16> to vector<24x24xbf16>
    %cst_77 = arith.constant dense<0.000000e+00> : vector<288x24xf32>
    %78 = tpu.matmul %75, %77, %cst_77 {dimension_numbers = #tpu.dot_dimension_numbers<[1], [0], [0], [1], [0, 0, 1, 1], [], []>} : vector<288x24xbf16>, vector<24x24xbf16>, vector<288x24xf32> -> vector<288x24xf32>
    %79 = arith.addf %67, %78 : vector<288x24xf32>
    %c0_78 = arith.constant 0 : index
    %c20_79 = arith.constant 20 : index
    %c0_80 = arith.constant 0 : index
    %80 = vector.load %arg2[%c0_78, %c20_79, %c0_80] : memref<1x110x32xbf16, #tpu.memory_space<vmem>>, vector<1x80x32xbf16>
    %81 = vector.shape_cast %80 : vector<1x80x32xbf16> to vector<80x32xbf16>
    %c6_81 = arith.constant 6 : index
    %c0_82 = arith.constant 0 : index
    %c0_83 = arith.constant 0 : index
    %82 = vector.load %arg4[%c6_81, %c0_82, %c0_83] : memref<9x32x32xbf16, #tpu.memory_space<vmem>>, vector<1x32x32xbf16>
    %83 = vector.shape_cast %82 : vector<1x32x32xbf16> to vector<32x32xbf16>
    %cst_84 = arith.constant dense<0.000000e+00> : vector<80x32xf32>
    %84 = tpu.matmul %81, %83, %cst_84 {dimension_numbers = #tpu.dot_dimension_numbers<[1], [0], [0], [1], [0, 0, 1, 1], [], []>} : vector<80x32xbf16>, vector<32x32xbf16>, vector<80x32xf32> -> vector<80x32xf32>
    %85 = arith.addf %73, %84 : vector<80x32xf32>
    %c0_85 = arith.constant 0 : index
    %c37 = arith.constant 37 : index
    %c0_86 = arith.constant 0 : index
    %86 = vector.load %arg1[%c0_85, %c37, %c0_86] : memref<1x342x24xbf16, #tpu.memory_space<vmem>>, vector<1x288x24xbf16>
    %87 = vector.shape_cast %86 : vector<1x288x24xbf16> to vector<288x24xbf16>
    %c7 = arith.constant 7 : index
    %c0_87 = arith.constant 0 : index
    %c0_88 = arith.constant 0 : index
    %88 = vector.load %arg3[%c7, %c0_87, %c0_88] : memref<9x24x24xbf16, #tpu.memory_space<vmem>>, vector<1x24x24xbf16>
    %89 = vector.shape_cast %88 : vector<1x24x24xbf16> to vector<24x24xbf16>
    %cst_89 = arith.constant dense<0.000000e+00> : vector<288x24xf32>
    %90 = tpu.matmul %87, %89, %cst_89 {dimension_numbers = #tpu.dot_dimension_numbers<[1], [0], [0], [1], [0, 0, 1, 1], [], []>} : vector<288x24xbf16>, vector<24x24xbf16>, vector<288x24xf32> -> vector<288x24xf32>
    %91 = arith.addf %79, %90 : vector<288x24xf32>
    %c0_90 = arith.constant 0 : index
    %c21 = arith.constant 21 : index
    %c0_91 = arith.constant 0 : index
    %92 = vector.load %arg2[%c0_90, %c21, %c0_91] : memref<1x110x32xbf16, #tpu.memory_space<vmem>>, vector<1x80x32xbf16>
    %93 = vector.shape_cast %92 : vector<1x80x32xbf16> to vector<80x32xbf16>
    %c7_92 = arith.constant 7 : index
    %c0_93 = arith.constant 0 : index
    %c0_94 = arith.constant 0 : index
    %94 = vector.load %arg4[%c7_92, %c0_93, %c0_94] : memref<9x32x32xbf16, #tpu.memory_space<vmem>>, vector<1x32x32xbf16>
    %95 = vector.shape_cast %94 : vector<1x32x32xbf16> to vector<32x32xbf16>
    %cst_95 = arith.constant dense<0.000000e+00> : vector<80x32xf32>
    %96 = tpu.matmul %93, %95, %cst_95 {dimension_numbers = #tpu.dot_dimension_numbers<[1], [0], [0], [1], [0, 0, 1, 1], [], []>} : vector<80x32xbf16>, vector<32x32xbf16>, vector<80x32xf32> -> vector<80x32xf32>
    %97 = arith.addf %85, %96 : vector<80x32xf32>
    %c0_96 = arith.constant 0 : index
    %c38 = arith.constant 38 : index
    %c0_97 = arith.constant 0 : index
    %98 = vector.load %arg1[%c0_96, %c38, %c0_97] : memref<1x342x24xbf16, #tpu.memory_space<vmem>>, vector<1x288x24xbf16>
    %99 = vector.shape_cast %98 : vector<1x288x24xbf16> to vector<288x24xbf16>
    %c8 = arith.constant 8 : index
    %c0_98 = arith.constant 0 : index
    %c0_99 = arith.constant 0 : index
    %100 = vector.load %arg3[%c8, %c0_98, %c0_99] : memref<9x24x24xbf16, #tpu.memory_space<vmem>>, vector<1x24x24xbf16>
    %101 = vector.shape_cast %100 : vector<1x24x24xbf16> to vector<24x24xbf16>
    %cst_100 = arith.constant dense<0.000000e+00> : vector<288x24xf32>
    %102 = tpu.matmul %99, %101, %cst_100 {dimension_numbers = #tpu.dot_dimension_numbers<[1], [0], [0], [1], [0, 0, 1, 1], [], []>} : vector<288x24xbf16>, vector<24x24xbf16>, vector<288x24xf32> -> vector<288x24xf32>
    %103 = arith.addf %91, %102 : vector<288x24xf32>
    %c0_101 = arith.constant 0 : index
    %c22 = arith.constant 22 : index
    %c0_102 = arith.constant 0 : index
    %104 = vector.load %arg2[%c0_101, %c22, %c0_102] : memref<1x110x32xbf16, #tpu.memory_space<vmem>>, vector<1x80x32xbf16>
    %105 = vector.shape_cast %104 : vector<1x80x32xbf16> to vector<80x32xbf16>
    %c8_103 = arith.constant 8 : index
    %c0_104 = arith.constant 0 : index
    %c0_105 = arith.constant 0 : index
    %106 = vector.load %arg4[%c8_103, %c0_104, %c0_105] : memref<9x32x32xbf16, #tpu.memory_space<vmem>>, vector<1x32x32xbf16>
    %107 = vector.shape_cast %106 : vector<1x32x32xbf16> to vector<32x32xbf16>
    %cst_106 = arith.constant dense<0.000000e+00> : vector<80x32xf32>
    %108 = tpu.matmul %105, %107, %cst_106 {dimension_numbers = #tpu.dot_dimension_numbers<[1], [0], [0], [1], [0, 0, 1, 1], [], []>} : vector<80x32xbf16>, vector<32x32xbf16>, vector<80x32xf32> -> vector<80x32xf32>
    %109 = arith.addf %97, %108 : vector<80x32xf32>
    %110 = vector.extract_strided_slice %109 {offsets = [0, 24], sizes = [80, 8], strides = [1, 1]} : vector<80x32xf32> to vector<80x8xf32>
    %c0_107 = arith.constant 0 : index
    %c0_108 = arith.constant 0 : index
    %111 = vector.load %arg7[%c0_107, %c0_108] : memref<1x8xf32, #tpu.memory_space<vmem>>, vector<1x8xf32>
    %112 = vector.broadcast %111 : vector<1x8xf32> to vector<80x8xf32>
    %113 = arith.addf %110, %112 : vector<80x8xf32>
    %cst_109 = arith.constant 0.000000e+00 : f32
    %114 = vector.broadcast %cst_109 : f32 to vector<80x8xf32>
    %115 = arith.maximumf %113, %114 : vector<80x8xf32>
    %116 = arith.truncf %115 : vector<80x8xf32> to vector<80x8xbf16>
    %c0_110 = arith.constant 0 : index
    %c0_111 = arith.constant 0 : index
    %c0_112 = arith.constant 0 : index
    %117 = vector.load %arg9[%c0_110, %c0_111, %c0_112] : memref<1x80x8xbf16, #tpu.memory_space<vmem>>, vector<1x80x8xbf16>
    %118 = vector.shape_cast %117 : vector<1x80x8xbf16> to vector<80x8xbf16>
    %119 = vector.shape_cast %116 : vector<80x8xbf16> to vector<1x80x8xbf16>
    tpu.vector_store %arg9[%c0_110, %c0_111, %c0_112], %119 {strides = array<i32>} : memref<1x80x8xbf16, #tpu.memory_space<vmem>>, vector<1x80x8xbf16>,
    %120 = vector.extract_strided_slice %109 {offsets = [0, 0], sizes = [80, 24], strides = [1, 1]} : vector<80x32xf32> to vector<80x24xf32>
    %121 = arith.truncf %120 : vector<80x24xf32> to vector<80x24xbf16>
    %c0_113 = arith.constant 0 : index
    %c0_114 = arith.constant 0 : index
    %122 = vector.load %arg5[%c0_113, %c0_114] : memref<288x80xbf16, #tpu.memory_space<vmem>>, vector<288x80xbf16>
    %cst_115 = arith.constant dense<0.000000e+00> : vector<288x24xf32>
    %123 = tpu.matmul %122, %121, %cst_115 {dimension_numbers = #tpu.dot_dimension_numbers<[1], [0], [0], [1], [0, 0, 1, 1], [], []>} : vector<288x80xbf16>, vector<80x24xbf16>, vector<288x24xf32> -> vector<288x24xf32>
    %124 = arith.addf %103, %123 : vector<288x24xf32>
    %c0_116 = arith.constant 0 : index
    %c0_117 = arith.constant 0 : index
    %125 = vector.load %arg6[%c0_116, %c0_117] : memref<1x24xf32, #tpu.memory_space<vmem>>, vector<1x24xf32>
    %126 = vector.broadcast %125 : vector<1x24xf32> to vector<288x24xf32>
    %127 = arith.addf %124, %126 : vector<288x24xf32>
    %cst_118 = arith.constant 0.000000e+00 : f32
    %128 = vector.broadcast %cst_118 : f32 to vector<288x24xf32>
    %129 = arith.maximumf %127, %128 : vector<288x24xf32>
    %130 = arith.truncf %129 : vector<288x24xf32> to vector<288x24xbf16>
    %c0_119 = arith.constant 0 : index
    %c0_120 = arith.constant 0 : index
    %c0_121 = arith.constant 0 : index
    %131 = vector.load %arg8[%c0_119, %c0_120, %c0_121] : memref<1x288x24xbf16, #tpu.memory_space<vmem>>, vector<1x288x24xbf16>
    %132 = vector.shape_cast %131 : vector<1x288x24xbf16> to vector<288x24xbf16>
    %133 = vector.shape_cast %130 : vector<288x24xbf16> to vector<1x288x24xbf16>
    tpu.vector_store %arg8[%c0_119, %c0_120, %c0_121], %133 {strides = array<i32>} : memref<1x288x24xbf16, #tpu.memory_space<vmem>>, vector<1x288x24xbf16>,
    return
  }
  func.func @transform_0(%arg0: i32) -> (i32, i32, i32) {
    %c0_i32 = arith.constant 0 : i32
    %c0_i32_0 = arith.constant 0 : i32
    %c0_i32_1 = arith.constant 0 : i32
    return %arg0, %c0_i32, %c0_i32_0 : i32, i32, i32
  }
  func.func @transform_1(%arg0: i32) -> (i32, i32, i32) {
    %c0_i32 = arith.constant 0 : i32
    %c0_i32_0 = arith.constant 0 : i32
    %c0_i32_1 = arith.constant 0 : i32
    return %arg0, %c0_i32, %c0_i32_0 : i32, i32, i32
  }
  func.func @transform_2(%arg0: i32) -> (i32, i32, i32) {
    %c0_i32 = arith.constant 0 : i32
    %c0_i32_0 = arith.constant 0 : i32
    %c0_i32_1 = arith.constant 0 : i32
    %c0_i32_2 = arith.constant 0 : i32
    return %c0_i32, %c0_i32_0, %c0_i32_1 : i32, i32, i32
  }
  func.func @transform_3(%arg0: i32) -> (i32, i32, i32) {
    %c0_i32 = arith.constant 0 : i32
    %c0_i32_0 = arith.constant 0 : i32
    %c0_i32_1 = arith.constant 0 : i32
    %c0_i32_2 = arith.constant 0 : i32
    return %c0_i32, %c0_i32_0, %c0_i32_1 : i32, i32, i32
  }
  func.func @transform_4(%arg0: i32) -> (i32, i32) {
    %c0_i32 = arith.constant 0 : i32
    %c0_i32_0 = arith.constant 0 : i32
    %c0_i32_1 = arith.constant 0 : i32
    return %c0_i32, %c0_i32_0 : i32, i32
  }
  func.func @transform_5(%arg0: i32) -> (i32, i32) {
    %c0_i32 = arith.constant 0 : i32
    %c0_i32_0 = arith.constant 0 : i32
    %c0_i32_1 = arith.constant 0 : i32
    return %c0_i32, %c0_i32_0 : i32, i32
  }
  func.func @transform_6(%arg0: i32) -> (i32, i32) {
    %c0_i32 = arith.constant 0 : i32
    %c0_i32_0 = arith.constant 0 : i32
    %c0_i32_1 = arith.constant 0 : i32
    return %c0_i32, %c0_i32_0 : i32, i32
  }
  func.func @transform_7(%arg0: i32) -> (i32, i32, i32) {
    %c0_i32 = arith.constant 0 : i32
    %c0_i32_0 = arith.constant 0 : i32
    %c0_i32_1 = arith.constant 0 : i32
    return %arg0, %c0_i32, %c0_i32_0 : i32, i32, i32
  }
  func.func @transform_8(%arg0: i32) -> (i32, i32, i32) {
    %c0_i32 = arith.constant 0 : i32
    %c0_i32_0 = arith.constant 0 : i32
    %c0_i32_1 = arith.constant 0 : i32
    return %arg0, %c0_i32, %c0_i32_0 : i32, i32, i32
  }
}

module attributes {stable_mosaic.version = 11 : i64} {
  func.func @_oct_layer_kernel(%arg0: i32, %arg1: memref<1x342x24xbf16, #tpu.memory_space<vmem>>, %arg2: memref<1x110x32xbf16, #tpu.memory_space<vmem>>, %arg3: memref<9x24x24xbf16, #tpu.memory_space<vmem>>, %arg4: memref<9x32x32xbf16, #tpu.memory_space<vmem>>, %arg5: memref<288x80xbf16, #tpu.memory_space<vmem>>, %arg6: memref<1x24xf32, #tpu.memory_space<vmem>>, %arg7: memref<1x8xf32, #tpu.memory_space<vmem>>, %arg8: memref<1x288x24xf32, #tpu.memory_space<vmem>>, %arg9: memref<1x80x8xf32, #tpu.memory_space<vmem>>, %arg10: memref<1x288x24xf32, #tpu.memory_space<vmem>>, %arg11: memref<1x80x8xf32, #tpu.memory_space<vmem>>) attributes {dimension_semantics = [#tpu.dimension_semantics<parallel>], iteration_bounds = array<i64: 2>, scalar_prefetch = 0 : i64, scratch_operands = 0 : i64, tpu.core_type = #tpu.core_type<tc>, window_params = [{transform_indices = @transform_0, window_bounds = array<i64: 1, 342, 24>}, {transform_indices = @transform_1, window_bounds = array<i64: 1, 110, 32>}, {pipeline_mode = #tpu.pipeline_mode<synchronous>, transform_indices = @transform_2, window_bounds = array<i64: 9, 24, 24>}, {pipeline_mode = #tpu.pipeline_mode<synchronous>, transform_indices = @transform_3, window_bounds = array<i64: 9, 32, 32>}, {pipeline_mode = #tpu.pipeline_mode<synchronous>, transform_indices = @transform_4, window_bounds = array<i64: 288, 80>}, {pipeline_mode = #tpu.pipeline_mode<synchronous>, transform_indices = @transform_5, window_bounds = array<i64: 1, 24>}, {pipeline_mode = #tpu.pipeline_mode<synchronous>, transform_indices = @transform_6, window_bounds = array<i64: 1, 8>}, {transform_indices = @transform_7, window_bounds = array<i64: 1, 288, 24>}, {transform_indices = @transform_8, window_bounds = array<i64: 1, 80, 8>}, {transform_indices = @transform_9, window_bounds = array<i64: 1, 288, 24>}, {transform_indices = @transform_10, window_bounds = array<i64: 1, 80, 8>}]} {
    %cst = arith.constant 0.000000e+00 : f32
    %0 = vector.broadcast %cst : f32 to vector<288x24xf32>
    %cst_0 = arith.constant 0.000000e+00 : f32
    %1 = vector.broadcast %cst_0 : f32 to vector<80x32xf32>
    %c0 = arith.constant 0 : index
    %c0_1 = arith.constant 0 : index
    %c0_2 = arith.constant 0 : index
    %2 = vector.load %arg1[%c0, %c0_1, %c0_2] : memref<1x342x24xbf16, #tpu.memory_space<vmem>>, vector<1x288x24xbf16>
    %3 = vector.shape_cast %2 : vector<1x288x24xbf16> to vector<288x24xbf16>
    %c0_3 = arith.constant 0 : index
    %c0_4 = arith.constant 0 : index
    %c0_5 = arith.constant 0 : index
    %4 = vector.load %arg3[%c0_3, %c0_4, %c0_5] : memref<9x24x24xbf16, #tpu.memory_space<vmem>>, vector<1x24x24xbf16>
    %5 = vector.shape_cast %4 : vector<1x24x24xbf16> to vector<24x24xbf16>
    %cst_6 = arith.constant dense<0.000000e+00> : vector<288x24xf32>
    %6 = tpu.matmul %3, %5, %cst_6 {dimension_numbers = #tpu.dot_dimension_numbers<[1], [0], [0], [1], [0, 0, 1, 1], [], []>} : vector<288x24xbf16>, vector<24x24xbf16>, vector<288x24xf32> -> vector<288x24xf32>
    %7 = arith.addf %0, %6 : vector<288x24xf32>
    %c0_7 = arith.constant 0 : index
    %c0_8 = arith.constant 0 : index
    %c0_9 = arith.constant 0 : index
    %8 = vector.load %arg2[%c0_7, %c0_8, %c0_9] : memref<1x110x32xbf16, #tpu.memory_space<vmem>>, vector<1x80x32xbf16>
    %9 = vector.shape_cast %8 : vector<1x80x32xbf16> to vector<80x32xbf16>
    %c0_10 = arith.constant 0 : index
    %c0_11 = arith.constant 0 : index
    %c0_12 = arith.constant 0 : index
    %10 = vector.load %arg4[%c0_10, %c0_11, %c0_12] : memref<9x32x32xbf16, #tpu.memory_space<vmem>>, vector<1x32x32xbf16>
    %11 = vector.shape_cast %10 : vector<1x32x32xbf16> to vector<32x32xbf16>
    %cst_13 = arith.constant dense<0.000000e+00> : vector<80x32xf32>
    %12 = tpu.matmul %9, %11, %cst_13 {dimension_numbers = #tpu.dot_dimension_numbers<[1], [0], [0], [1], [0, 0, 1, 1], [], []>} : vector<80x32xbf16>, vector<32x32xbf16>, vector<80x32xf32> -> vector<80x32xf32>
    %13 = arith.addf %1, %12 : vector<80x32xf32>
    %c0_14 = arith.constant 0 : index
    %c1 = arith.constant 1 : index
    %c0_15 = arith.constant 0 : index
    %14 = vector.load %arg1[%c0_14, %c1, %c0_15] : memref<1x342x24xbf16, #tpu.memory_space<vmem>>, vector<1x288x24xbf16>
    %15 = vector.shape_cast %14 : vector<1x288x24xbf16> to vector<288x24xbf16>
    %c1_16 = arith.constant 1 : index
    %c0_17 = arith.constant 0 : index
    %c0_18 = arith.constant 0 : index
    %16 = vector.load %arg3[%c1_16, %c0_17, %c0_18] : memref<9x24x24xbf16, #tpu.memory_space<vmem>>, vector<1x24x24xbf16>
    %17 = vector.shape_cast %16 : vector<1x24x24xbf16> to vector<24x24xbf16>
    %cst_19 = arith.constant dense<0.000000e+00> : vector<288x24xf32>
    %18 = tpu.matmul %15, %17, %cst_19 {dimension_numbers = #tpu.dot_dimension_numbers<[1], [0], [0], [1], [0, 0, 1, 1], [], []>} : vector<288x24xbf16>, vector<24x24xbf16>, vector<288x24xf32> -> vector<288x24xf32>
    %19 = arith.addf %7, %18 : vector<288x24xf32>
    %c0_20 = arith.constant 0 : index
    %c1_21 = arith.constant 1 : index
    %c0_22 = arith.constant 0 : index
    %20 = vector.load %arg2[%c0_20, %c1_21, %c0_22] : memref<1x110x32xbf16, #tpu.memory_space<vmem>>, vector<1x80x32xbf16>
    %21 = vector.shape_cast %20 : vector<1x80x32xbf16> to vector<80x32xbf16>
    %c1_23 = arith.constant 1 : index
    %c0_24 = arith.constant 0 : index
    %c0_25 = arith.constant 0 : index
    %22 = vector.load %arg4[%c1_23, %c0_24, %c0_25] : memref<9x32x32xbf16, #tpu.memory_space<vmem>>, vector<1x32x32xbf16>
    %23 = vector.shape_cast %22 : vector<1x32x32xbf16> to vector<32x32xbf16>
    %cst_26 = arith.constant dense<0.000000e+00> : vector<80x32xf32>
    %24 = tpu.matmul %21, %23, %cst_26 {dimension_numbers = #tpu.dot_dimension_numbers<[1], [0], [0], [1], [0, 0, 1, 1], [], []>} : vector<80x32xbf16>, vector<32x32xbf16>, vector<80x32xf32> -> vector<80x32xf32>
    %25 = arith.addf %13, %24 : vector<80x32xf32>
    %c0_27 = arith.constant 0 : index
    %c2 = arith.constant 2 : index
    %c0_28 = arith.constant 0 : index
    %26 = vector.load %arg1[%c0_27, %c2, %c0_28] : memref<1x342x24xbf16, #tpu.memory_space<vmem>>, vector<1x288x24xbf16>
    %27 = vector.shape_cast %26 : vector<1x288x24xbf16> to vector<288x24xbf16>
    %c2_29 = arith.constant 2 : index
    %c0_30 = arith.constant 0 : index
    %c0_31 = arith.constant 0 : index
    %28 = vector.load %arg3[%c2_29, %c0_30, %c0_31] : memref<9x24x24xbf16, #tpu.memory_space<vmem>>, vector<1x24x24xbf16>
    %29 = vector.shape_cast %28 : vector<1x24x24xbf16> to vector<24x24xbf16>
    %cst_32 = arith.constant dense<0.000000e+00> : vector<288x24xf32>
    %30 = tpu.matmul %27, %29, %cst_32 {dimension_numbers = #tpu.dot_dimension_numbers<[1], [0], [0], [1], [0, 0, 1, 1], [], []>} : vector<288x24xbf16>, vector<24x24xbf16>, vector<288x24xf32> -> vector<288x24xf32>
    %31 = arith.addf %19, %30 : vector<288x24xf32>
    %c0_33 = arith.constant 0 : index
    %c2_34 = arith.constant 2 : index
    %c0_35 = arith.constant 0 : index
    %32 = vector.load %arg2[%c0_33, %c2_34, %c0_35] : memref<1x110x32xbf16, #tpu.memory_space<vmem>>, vector<1x80x32xbf16>
    %33 = vector.shape_cast %32 : vector<1x80x32xbf16> to vector<80x32xbf16>
    %c2_36 = arith.constant 2 : index
    %c0_37 = arith.constant 0 : index
    %c0_38 = arith.constant 0 : index
    %34 = vector.load %arg4[%c2_36, %c0_37, %c0_38] : memref<9x32x32xbf16, #tpu.memory_space<vmem>>, vector<1x32x32xbf16>
    %35 = vector.shape_cast %34 : vector<1x32x32xbf16> to vector<32x32xbf16>
    %cst_39 = arith.constant dense<0.000000e+00> : vector<80x32xf32>
    %36 = tpu.matmul %33, %35, %cst_39 {dimension_numbers = #tpu.dot_dimension_numbers<[1], [0], [0], [1], [0, 0, 1, 1], [], []>} : vector<80x32xbf16>, vector<32x32xbf16>, vector<80x32xf32> -> vector<80x32xf32>
    %37 = arith.addf %25, %36 : vector<80x32xf32>
    %c0_40 = arith.constant 0 : index
    %c18 = arith.constant 18 : index
    %c0_41 = arith.constant 0 : index
    %38 = vector.load %arg1[%c0_40, %c18, %c0_41] : memref<1x342x24xbf16, #tpu.memory_space<vmem>>, vector<1x288x24xbf16>
    %39 = vector.shape_cast %38 : vector<1x288x24xbf16> to vector<288x24xbf16>
    %c3 = arith.constant 3 : index
    %c0_42 = arith.constant 0 : index
    %c0_43 = arith.constant 0 : index
    %40 = vector.load %arg3[%c3, %c0_42, %c0_43] : memref<9x24x24xbf16, #tpu.memory_space<vmem>>, vector<1x24x24xbf16>
    %41 = vector.shape_cast %40 : vector<1x24x24xbf16> to vector<24x24xbf16>
    %cst_44 = arith.constant dense<0.000000e+00> : vector<288x24xf32>
    %42 = tpu.matmul %39, %41, %cst_44 {dimension_numbers = #tpu.dot_dimension_numbers<[1], [0], [0], [1], [0, 0, 1, 1], [], []>} : vector<288x24xbf16>, vector<24x24xbf16>, vector<288x24xf32> -> vector<288x24xf32>
    %43 = arith.addf %31, %42 : vector<288x24xf32>
    %c0_45 = arith.constant 0 : index
    %c10 = arith.constant 10 : index
    %c0_46 = arith.constant 0 : index
    %44 = vector.load %arg2[%c0_45, %c10, %c0_46] : memref<1x110x32xbf16, #tpu.memory_space<vmem>>, vector<1x80x32xbf16>
    %45 = vector.shape_cast %44 : vector<1x80x32xbf16> to vector<80x32xbf16>
    %c3_47 = arith.constant 3 : index
    %c0_48 = arith.constant 0 : index
    %c0_49 = arith.constant 0 : index
    %46 = vector.load %arg4[%c3_47, %c0_48, %c0_49] : memref<9x32x32xbf16, #tpu.memory_space<vmem>>, vector<1x32x32xbf16>
    %47 = vector.shape_cast %46 : vector<1x32x32xbf16> to vector<32x32xbf16>
    %cst_50 = arith.constant dense<0.000000e+00> : vector<80x32xf32>
    %48 = tpu.matmul %45, %47, %cst_50 {dimension_numbers = #tpu.dot_dimension_numbers<[1], [0], [0], [1], [0, 0, 1, 1], [], []>} : vector<80x32xbf16>, vector<32x32xbf16>, vector<80x32xf32> -> vector<80x32xf32>
    %49 = arith.addf %37, %48 : vector<80x32xf32>
    %c0_51 = arith.constant 0 : index
    %c19 = arith.constant 19 : index
    %c0_52 = arith.constant 0 : index
    %50 = vector.load %arg1[%c0_51, %c19, %c0_52] : memref<1x342x24xbf16, #tpu.memory_space<vmem>>, vector<1x288x24xbf16>
    %51 = vector.shape_cast %50 : vector<1x288x24xbf16> to vector<288x24xbf16>
    %c4 = arith.constant 4 : index
    %c0_53 = arith.constant 0 : index
    %c0_54 = arith.constant 0 : index
    %52 = vector.load %arg3[%c4, %c0_53, %c0_54] : memref<9x24x24xbf16, #tpu.memory_space<vmem>>, vector<1x24x24xbf16>
    %53 = vector.shape_cast %52 : vector<1x24x24xbf16> to vector<24x24xbf16>
    %cst_55 = arith.constant dense<0.000000e+00> : vector<288x24xf32>
    %54 = tpu.matmul %51, %53, %cst_55 {dimension_numbers = #tpu.dot_dimension_numbers<[1], [0], [0], [1], [0, 0, 1, 1], [], []>} : vector<288x24xbf16>, vector<24x24xbf16>, vector<288x24xf32> -> vector<288x24xf32>
    %55 = arith.addf %43, %54 : vector<288x24xf32>
    %c0_56 = arith.constant 0 : index
    %c11 = arith.constant 11 : index
    %c0_57 = arith.constant 0 : index
    %56 = vector.load %arg2[%c0_56, %c11, %c0_57] : memref<1x110x32xbf16, #tpu.memory_space<vmem>>, vector<1x80x32xbf16>
    %57 = vector.shape_cast %56 : vector<1x80x32xbf16> to vector<80x32xbf16>
    %c4_58 = arith.constant 4 : index
    %c0_59 = arith.constant 0 : index
    %c0_60 = arith.constant 0 : index
    %58 = vector.load %arg4[%c4_58, %c0_59, %c0_60] : memref<9x32x32xbf16, #tpu.memory_space<vmem>>, vector<1x32x32xbf16>
    %59 = vector.shape_cast %58 : vector<1x32x32xbf16> to vector<32x32xbf16>
    %cst_61 = arith.constant dense<0.000000e+00> : vector<80x32xf32>
    %60 = tpu.matmul %57, %59, %cst_61 {dimension_numbers = #tpu.dot_dimension_numbers<[1], [0], [0], [1], [0, 0, 1, 1], [], []>} : vector<80x32xbf16>, vector<32x32xbf16>, vector<80x32xf32> -> vector<80x32xf32>
    %61 = arith.addf %49, %60 : vector<80x32xf32>
    %c0_62 = arith.constant 0 : index
    %c20 = arith.constant 20 : index
    %c0_63 = arith.constant 0 : index
    %62 = vector.load %arg1[%c0_62, %c20, %c0_63] : memref<1x342x24xbf16, #tpu.memory_space<vmem>>, vector<1x288x24xbf16>
    %63 = vector.shape_cast %62 : vector<1x288x24xbf16> to vector<288x24xbf16>
    %c5 = arith.constant 5 : index
    %c0_64 = arith.constant 0 : index
    %c0_65 = arith.constant 0 : index
    %64 = vector.load %arg3[%c5, %c0_64, %c0_65] : memref<9x24x24xbf16, #tpu.memory_space<vmem>>, vector<1x24x24xbf16>
    %65 = vector.shape_cast %64 : vector<1x24x24xbf16> to vector<24x24xbf16>
    %cst_66 = arith.constant dense<0.000000e+00> : vector<288x24xf32>
    %66 = tpu.matmul %63, %65, %cst_66 {dimension_numbers = #tpu.dot_dimension_numbers<[1], [0], [0], [1], [0, 0, 1, 1], [], []>} : vector<288x24xbf16>, vector<24x24xbf16>, vector<288x24xf32> -> vector<288x24xf32>
    %67 = arith.addf %55, %66 : vector<288x24xf32>
    %c0_67 = arith.constant 0 : index
    %c12 = arith.constant 12 : index
    %c0_68 = arith.constant 0 : index
    %68 = vector.load %arg2[%c0_67, %c12, %c0_68] : memref<1x110x32xbf16, #tpu.memory_space<vmem>>, vector<1x80x32xbf16>
    %69 = vector.shape_cast %68 : vector<1x80x32xbf16> to vector<80x32xbf16>
    %c5_69 = arith.constant 5 : index
    %c0_70 = arith.constant 0 : index
    %c0_71 = arith.constant 0 : index
    %70 = vector.load %arg4[%c5_69, %c0_70, %c0_71] : memref<9x32x32xbf16, #tpu.memory_space<vmem>>, vector<1x32x32xbf16>
    %71 = vector.shape_cast %70 : vector<1x32x32xbf16> to vector<32x32xbf16>
    %cst_72 = arith.constant dense<0.000000e+00> : vector<80x32xf32>
    %72 = tpu.matmul %69, %71, %cst_72 {dimension_numbers = #tpu.dot_dimension_numbers<[1], [0], [0], [1], [0, 0, 1, 1], [], []>} : vector<80x32xbf16>, vector<32x32xbf16>, vector<80x32xf32> -> vector<80x32xf32>
    %73 = arith.addf %61, %72 : vector<80x32xf32>
    %c0_73 = arith.constant 0 : index
    %c36 = arith.constant 36 : index
    %c0_74 = arith.constant 0 : index
    %74 = vector.load %arg1[%c0_73, %c36, %c0_74] : memref<1x342x24xbf16, #tpu.memory_space<vmem>>, vector<1x288x24xbf16>
    %75 = vector.shape_cast %74 : vector<1x288x24xbf16> to vector<288x24xbf16>
    %c6 = arith.constant 6 : index
    %c0_75 = arith.constant 0 : index
    %c0_76 = arith.constant 0 : index
    %76 = vector.load %arg3[%c6, %c0_75, %c0_76] : memref<9x24x24xbf16, #tpu.memory_space<vmem>>, vector<1x24x24xbf16>
    %77 = vector.shape_cast %76 : vector<1x24x24xbf16> to vector<24x24xbf16>
    %cst_77 = arith.constant dense<0.000000e+00> : vector<288x24xf32>
    %78 = tpu.matmul %75, %77, %cst_77 {dimension_numbers = #tpu.dot_dimension_numbers<[1], [0], [0], [1], [0, 0, 1, 1], [], []>} : vector<288x24xbf16>, vector<24x24xbf16>, vector<288x24xf32> -> vector<288x24xf32>
    %79 = arith.addf %67, %78 : vector<288x24xf32>
    %c0_78 = arith.constant 0 : index
    %c20_79 = arith.constant 20 : index
    %c0_80 = arith.constant 0 : index
    %80 = vector.load %arg2[%c0_78, %c20_79, %c0_80] : memref<1x110x32xbf16, #tpu.memory_space<vmem>>, vector<1x80x32xbf16>
    %81 = vector.shape_cast %80 : vector<1x80x32xbf16> to vector<80x32xbf16>
    %c6_81 = arith.constant 6 : index
    %c0_82 = arith.constant 0 : index
    %c0_83 = arith.constant 0 : index
    %82 = vector.load %arg4[%c6_81, %c0_82, %c0_83] : memref<9x32x32xbf16, #tpu.memory_space<vmem>>, vector<1x32x32xbf16>
    %83 = vector.shape_cast %82 : vector<1x32x32xbf16> to vector<32x32xbf16>
    %cst_84 = arith.constant dense<0.000000e+00> : vector<80x32xf32>
    %84 = tpu.matmul %81, %83, %cst_84 {dimension_numbers = #tpu.dot_dimension_numbers<[1], [0], [0], [1], [0, 0, 1, 1], [], []>} : vector<80x32xbf16>, vector<32x32xbf16>, vector<80x32xf32> -> vector<80x32xf32>
    %85 = arith.addf %73, %84 : vector<80x32xf32>
    %c0_85 = arith.constant 0 : index
    %c37 = arith.constant 37 : index
    %c0_86 = arith.constant 0 : index
    %86 = vector.load %arg1[%c0_85, %c37, %c0_86] : memref<1x342x24xbf16, #tpu.memory_space<vmem>>, vector<1x288x24xbf16>
    %87 = vector.shape_cast %86 : vector<1x288x24xbf16> to vector<288x24xbf16>
    %c7 = arith.constant 7 : index
    %c0_87 = arith.constant 0 : index
    %c0_88 = arith.constant 0 : index
    %88 = vector.load %arg3[%c7, %c0_87, %c0_88] : memref<9x24x24xbf16, #tpu.memory_space<vmem>>, vector<1x24x24xbf16>
    %89 = vector.shape_cast %88 : vector<1x24x24xbf16> to vector<24x24xbf16>
    %cst_89 = arith.constant dense<0.000000e+00> : vector<288x24xf32>
    %90 = tpu.matmul %87, %89, %cst_89 {dimension_numbers = #tpu.dot_dimension_numbers<[1], [0], [0], [1], [0, 0, 1, 1], [], []>} : vector<288x24xbf16>, vector<24x24xbf16>, vector<288x24xf32> -> vector<288x24xf32>
    %91 = arith.addf %79, %90 : vector<288x24xf32>
    %c0_90 = arith.constant 0 : index
    %c21 = arith.constant 21 : index
    %c0_91 = arith.constant 0 : index
    %92 = vector.load %arg2[%c0_90, %c21, %c0_91] : memref<1x110x32xbf16, #tpu.memory_space<vmem>>, vector<1x80x32xbf16>
    %93 = vector.shape_cast %92 : vector<1x80x32xbf16> to vector<80x32xbf16>
    %c7_92 = arith.constant 7 : index
    %c0_93 = arith.constant 0 : index
    %c0_94 = arith.constant 0 : index
    %94 = vector.load %arg4[%c7_92, %c0_93, %c0_94] : memref<9x32x32xbf16, #tpu.memory_space<vmem>>, vector<1x32x32xbf16>
    %95 = vector.shape_cast %94 : vector<1x32x32xbf16> to vector<32x32xbf16>
    %cst_95 = arith.constant dense<0.000000e+00> : vector<80x32xf32>
    %96 = tpu.matmul %93, %95, %cst_95 {dimension_numbers = #tpu.dot_dimension_numbers<[1], [0], [0], [1], [0, 0, 1, 1], [], []>} : vector<80x32xbf16>, vector<32x32xbf16>, vector<80x32xf32> -> vector<80x32xf32>
    %97 = arith.addf %85, %96 : vector<80x32xf32>
    %c0_96 = arith.constant 0 : index
    %c38 = arith.constant 38 : index
    %c0_97 = arith.constant 0 : index
    %98 = vector.load %arg1[%c0_96, %c38, %c0_97] : memref<1x342x24xbf16, #tpu.memory_space<vmem>>, vector<1x288x24xbf16>
    %99 = vector.shape_cast %98 : vector<1x288x24xbf16> to vector<288x24xbf16>
    %c8 = arith.constant 8 : index
    %c0_98 = arith.constant 0 : index
    %c0_99 = arith.constant 0 : index
    %100 = vector.load %arg3[%c8, %c0_98, %c0_99] : memref<9x24x24xbf16, #tpu.memory_space<vmem>>, vector<1x24x24xbf16>
    %101 = vector.shape_cast %100 : vector<1x24x24xbf16> to vector<24x24xbf16>
    %cst_100 = arith.constant dense<0.000000e+00> : vector<288x24xf32>
    %102 = tpu.matmul %99, %101, %cst_100 {dimension_numbers = #tpu.dot_dimension_numbers<[1], [0], [0], [1], [0, 0, 1, 1], [], []>} : vector<288x24xbf16>, vector<24x24xbf16>, vector<288x24xf32> -> vector<288x24xf32>
    %103 = arith.addf %91, %102 : vector<288x24xf32>
    %c0_101 = arith.constant 0 : index
    %c22 = arith.constant 22 : index
    %c0_102 = arith.constant 0 : index
    %104 = vector.load %arg2[%c0_101, %c22, %c0_102] : memref<1x110x32xbf16, #tpu.memory_space<vmem>>, vector<1x80x32xbf16>
    %105 = vector.shape_cast %104 : vector<1x80x32xbf16> to vector<80x32xbf16>
    %c8_103 = arith.constant 8 : index
    %c0_104 = arith.constant 0 : index
    %c0_105 = arith.constant 0 : index
    %106 = vector.load %arg4[%c8_103, %c0_104, %c0_105] : memref<9x32x32xbf16, #tpu.memory_space<vmem>>, vector<1x32x32xbf16>
    %107 = vector.shape_cast %106 : vector<1x32x32xbf16> to vector<32x32xbf16>
    %cst_106 = arith.constant dense<0.000000e+00> : vector<80x32xf32>
    %108 = tpu.matmul %105, %107, %cst_106 {dimension_numbers = #tpu.dot_dimension_numbers<[1], [0], [0], [1], [0, 0, 1, 1], [], []>} : vector<80x32xbf16>, vector<32x32xbf16>, vector<80x32xf32> -> vector<80x32xf32>
    %109 = arith.addf %97, %108 : vector<80x32xf32>
    %110 = vector.extract_strided_slice %109 {offsets = [0, 24], sizes = [80, 8], strides = [1, 1]} : vector<80x32xf32> to vector<80x8xf32>
    %c0_107 = arith.constant 0 : index
    %c0_108 = arith.constant 0 : index
    %111 = vector.load %arg7[%c0_107, %c0_108] : memref<1x8xf32, #tpu.memory_space<vmem>>, vector<1x8xf32>
    %112 = vector.broadcast %111 : vector<1x8xf32> to vector<80x8xf32>
    %113 = arith.addf %110, %112 : vector<80x8xf32>
    %c0_109 = arith.constant 0 : index
    %c0_110 = arith.constant 0 : index
    %c0_111 = arith.constant 0 : index
    %114 = vector.load %arg9[%c0_109, %c0_110, %c0_111] : memref<1x80x8xf32, #tpu.memory_space<vmem>>, vector<1x80x8xf32>
    %115 = vector.shape_cast %114 : vector<1x80x8xf32> to vector<80x8xf32>
    %116 = arith.addf %113, %115 : vector<80x8xf32>
    %cst_112 = arith.constant 0.000000e+00 : f32
    %117 = vector.broadcast %cst_112 : f32 to vector<80x8xf32>
    %118 = arith.maximumf %116, %117 : vector<80x8xf32>
    %c0_113 = arith.constant 0 : index
    %c0_114 = arith.constant 0 : index
    %c0_115 = arith.constant 0 : index
    %119 = vector.load %arg11[%c0_113, %c0_114, %c0_115] : memref<1x80x8xf32, #tpu.memory_space<vmem>>, vector<1x80x8xf32>
    %120 = vector.shape_cast %119 : vector<1x80x8xf32> to vector<80x8xf32>
    %121 = vector.shape_cast %118 : vector<80x8xf32> to vector<1x80x8xf32>
    tpu.vector_store %arg11[%c0_113, %c0_114, %c0_115], %121 {strides = array<i32>} : memref<1x80x8xf32, #tpu.memory_space<vmem>>, vector<1x80x8xf32>,
    %122 = vector.extract_strided_slice %109 {offsets = [0, 0], sizes = [80, 24], strides = [1, 1]} : vector<80x32xf32> to vector<80x24xf32>
    %123 = arith.truncf %122 : vector<80x24xf32> to vector<80x24xbf16>
    %c0_116 = arith.constant 0 : index
    %c0_117 = arith.constant 0 : index
    %124 = vector.load %arg5[%c0_116, %c0_117] : memref<288x80xbf16, #tpu.memory_space<vmem>>, vector<288x80xbf16>
    %cst_118 = arith.constant dense<0.000000e+00> : vector<288x24xf32>
    %125 = tpu.matmul %124, %123, %cst_118 {dimension_numbers = #tpu.dot_dimension_numbers<[1], [0], [0], [1], [0, 0, 1, 1], [], []>} : vector<288x80xbf16>, vector<80x24xbf16>, vector<288x24xf32> -> vector<288x24xf32>
    %126 = arith.addf %103, %125 : vector<288x24xf32>
    %c0_119 = arith.constant 0 : index
    %c0_120 = arith.constant 0 : index
    %127 = vector.load %arg6[%c0_119, %c0_120] : memref<1x24xf32, #tpu.memory_space<vmem>>, vector<1x24xf32>
    %128 = vector.broadcast %127 : vector<1x24xf32> to vector<288x24xf32>
    %129 = arith.addf %126, %128 : vector<288x24xf32>
    %c0_121 = arith.constant 0 : index
    %c0_122 = arith.constant 0 : index
    %c0_123 = arith.constant 0 : index
    %130 = vector.load %arg8[%c0_121, %c0_122, %c0_123] : memref<1x288x24xf32, #tpu.memory_space<vmem>>, vector<1x288x24xf32>
    %131 = vector.shape_cast %130 : vector<1x288x24xf32> to vector<288x24xf32>
    %132 = arith.addf %129, %131 : vector<288x24xf32>
    %cst_124 = arith.constant 0.000000e+00 : f32
    %133 = vector.broadcast %cst_124 : f32 to vector<288x24xf32>
    %134 = arith.maximumf %132, %133 : vector<288x24xf32>
    %c0_125 = arith.constant 0 : index
    %c0_126 = arith.constant 0 : index
    %c0_127 = arith.constant 0 : index
    %135 = vector.load %arg10[%c0_125, %c0_126, %c0_127] : memref<1x288x24xf32, #tpu.memory_space<vmem>>, vector<1x288x24xf32>
    %136 = vector.shape_cast %135 : vector<1x288x24xf32> to vector<288x24xf32>
    %137 = vector.shape_cast %134 : vector<288x24xf32> to vector<1x288x24xf32>
    tpu.vector_store %arg10[%c0_125, %c0_126, %c0_127], %137 {strides = array<i32>} : memref<1x288x24xf32, #tpu.memory_space<vmem>>, vector<1x288x24xf32>,
    return
  }
  func.func @transform_0(%arg0: i32) -> (i32, i32, i32) {
    %c0_i32 = arith.constant 0 : i32
    %c0_i32_0 = arith.constant 0 : i32
    %c0_i32_1 = arith.constant 0 : i32
    return %arg0, %c0_i32, %c0_i32_0 : i32, i32, i32
  }
  func.func @transform_1(%arg0: i32) -> (i32, i32, i32) {
    %c0_i32 = arith.constant 0 : i32
    %c0_i32_0 = arith.constant 0 : i32
    %c0_i32_1 = arith.constant 0 : i32
    return %arg0, %c0_i32, %c0_i32_0 : i32, i32, i32
  }
  func.func @transform_2(%arg0: i32) -> (i32, i32, i32) {
    %c0_i32 = arith.constant 0 : i32
    %c0_i32_0 = arith.constant 0 : i32
    %c0_i32_1 = arith.constant 0 : i32
    %c0_i32_2 = arith.constant 0 : i32
    return %c0_i32, %c0_i32_0, %c0_i32_1 : i32, i32, i32
  }
  func.func @transform_3(%arg0: i32) -> (i32, i32, i32) {
    %c0_i32 = arith.constant 0 : i32
    %c0_i32_0 = arith.constant 0 : i32
    %c0_i32_1 = arith.constant 0 : i32
    %c0_i32_2 = arith.constant 0 : i32
    return %c0_i32, %c0_i32_0, %c0_i32_1 : i32, i32, i32
  }
  func.func @transform_4(%arg0: i32) -> (i32, i32) {
    %c0_i32 = arith.constant 0 : i32
    %c0_i32_0 = arith.constant 0 : i32
    %c0_i32_1 = arith.constant 0 : i32
    return %c0_i32, %c0_i32_0 : i32, i32
  }
  func.func @transform_5(%arg0: i32) -> (i32, i32) {
    %c0_i32 = arith.constant 0 : i32
    %c0_i32_0 = arith.constant 0 : i32
    %c0_i32_1 = arith.constant 0 : i32
    return %c0_i32, %c0_i32_0 : i32, i32
  }
  func.func @transform_6(%arg0: i32) -> (i32, i32) {
    %c0_i32 = arith.constant 0 : i32
    %c0_i32_0 = arith.constant 0 : i32
    %c0_i32_1 = arith.constant 0 : i32
    return %c0_i32, %c0_i32_0 : i32, i32
  }
  func.func @transform_7(%arg0: i32) -> (i32, i32, i32) {
    %c0_i32 = arith.constant 0 : i32
    %c0_i32_0 = arith.constant 0 : i32
    %c0_i32_1 = arith.constant 0 : i32
    return %arg0, %c0_i32, %c0_i32_0 : i32, i32, i32
  }
  func.func @transform_8(%arg0: i32) -> (i32, i32, i32) {
    %c0_i32 = arith.constant 0 : i32
    %c0_i32_0 = arith.constant 0 : i32
    %c0_i32_1 = arith.constant 0 : i32
    return %arg0, %c0_i32, %c0_i32_0 : i32, i32, i32
  }
  func.func @transform_9(%arg0: i32) -> (i32, i32, i32) {
    %c0_i32 = arith.constant 0 : i32
    %c0_i32_0 = arith.constant 0 : i32
    %c0_i32_1 = arith.constant 0 : i32
    return %arg0, %c0_i32, %c0_i32_0 : i32, i32, i32
  }
  func.func @transform_10(%arg0: i32) -> (i32, i32, i32) {
    %c0_i32 = arith.constant 0 : i32
    %c0_i32_0 = arith.constant 0 : i32
    %c0_i32_1 = arith.constant 0 : i32
    return %arg0, %c0_i32, %c0_i32_0 : i32, i32, i32
  }
}

</mosaic_0001>

<llo_original>
// kernel: basic_block_forward_nchw.2
$region0: #{basic_block_forward_nchw.2}
  #allocation0 [shape = 'u32[]', space=smem, size = 0x4, offset = 0x4, fixed_abs, tag = 'smem constant byte address 0x4 - core index']
  #allocation1 [shape = 'u32[144,128]{1,0:T(1,128)}', space=vmem, size = 0x12000, scoped, tag = 'internal scratch']
  %s0 = inlined_call_operand.vmem [shape: bf16[2,342,24], index: 0, kind: input, shape index: {}]
  %s1 = inlined_call_operand.vmem [shape: bf16[2,110,32], index: 1, kind: input, shape index: {}]
  %s2 = inlined_call_operand.vmem [shape: bf16[9,24,24], index: 2, kind: input, shape index: {}]
  %s3 = inlined_call_operand.vmem [shape: bf16[9,32,32], index: 3, kind: input, shape index: {}]
  %s4 = inlined_call_operand.vmem [shape: bf16[288,80], index: 4, kind: input, shape index: {}]
  %s5 = inlined_call_operand.vmem [shape: f32[1,24], index: 5, kind: input, shape index: {}]
  %s6 = inlined_call_operand.vmem [shape: f32[1,8], index: 6, kind: input, shape index: {}]
  %s7 = inlined_call_operand.vmem [shape: bf16[2,288,24], index: 7, kind: output, shape index: {0}]
  %s8 = inlined_call_operand.vmem [shape: bf16[2,80,8], index: 8, kind: output, shape index: {1}]
  %9 = xla_tuple %s7, %s8
  %s10 = sld [smem:[#allocation0]]
  $region69: #{basic_block_forward_nchw.2} parent=0
    _
  %s12 = ssub.s32 1, %s10
  %s13 = scalar_select 0, %s12, %s10
  loop: start=0, step=1, limit=4
  $region2: #{basic_block_forward_nchw.2} parent=0 // loop_pre_header
    _
  $region3: #{basic_block_forward_nchw.2} parent=0 // loop_header
    %s15 = sphi 0, %s19
    %p16 = scmp.ge.s32.totalorder %s15, 4
    %s25 = sphi 0, %s27
    %s28 = sphi 0, %s25
    %s29 = sphi 0, %s28
    %s45 = sphi 0, %s29
    %s51 = sphi 0, %s53
    %s54 = sphi 0, %s51
    %s55 = sphi 0, %s54
    %s71 = sphi 0, %s55
    %s75 = sphi 0, %s75
    %s77 = sphi 0, %s75
    %s78 = sphi 0, %s77
    %s92 = sphi 0, %s78
    %s96 = sphi 0, %s96
    %s98 = sphi 0, %s96
    %s99 = sphi 0, %s98
    %s113 = sphi 0, %s99
    %s117 = sphi 0, %s117
    %s119 = sphi 0, %s117
    %s120 = sphi 0, %s119
    %s134 = sphi 0, %s120
    %s138 = sphi 0, %s138
    %s140 = sphi 0, %s138
    %s141 = sphi 0, %s140
    %s155 = sphi 0, %s141
    %s159 = sphi 0, %s159
    %s161 = sphi 0, %s159
    %s162 = sphi 0, %s161
    %s176 = sphi 0, %s162
    %s182 = sphi 0, %s184
    %s185 = sphi 0, %s182
    %s186 = sphi 0, %s185
    %s202 = sphi 0, %s186
    %s208 = sphi 0, %s210
    %s211 = sphi 0, %s208
    %s212 = sphi 0, %s211
    %s228 = sphi 0, %s212
  $region4: #{basic_block_forward_nchw.2} parent=0 // loop_header_branch
    %18 = sbr.rel (%p16) target = $region8
  $region5: #{basic_block_forward_nchw.2} parent=0 // loop_body
    %s20 = ssub.s32 %s15, 1
    %s21 = ssub.s32 %s15, 2
    %s22 = sadd.s32 %s15, 1
    %s23 = ssub.s32 %s15, %s22
    %p24 = scmp.eq.s32.totalorder %s23, 0
    %s26 = sadd.s32 %s25, 1
    %s27 = scalar_select %p24, %s25, %s26
    %p30 = pneg %p24
    %p31 = scmp.eq.s32.totalorder %s15, 1
    %p32 = por %p30, %p31
    %p33 = scmp.ne.s32.totalorder %s25, %s28
    %p34 = scmp.eq.s32.totalorder %s15, 0
    %p35 = por %p33, %p34
    %p36 = scmp.ne.s32.totalorder %s25, %s28
    %p37 = scmp.eq.s32.totalorder %s20, 1
    %p38 = por %p36, %p37
    %p39 = scmp.ne.s32.totalorder %s28, %s29
    %p40 = scmp.eq.s32.totalorder %s20, 0
    %p41 = por %p39, %p40
    %p42 = scmp.ne.s32.totalorder %s28, %s29
    %p43 = scmp.eq.s32.totalorder %s21, 1
    %p44 = por %p42, %p43
    %p46 = scmp.ne.s32.totalorder %s29, %s45
    %p47 = scmp.eq.s32.totalorder %s21, 0
    %p48 = por %p46, %p47
    %s49 = ssub.s32 %s15, %s22
    %p50 = scmp.eq.s32.totalorder %s49, 0
    %s52 = sadd.s32 %s51, 1
    %s53 = scalar_select %p50, %s51, %s52
    %p56 = pneg %p50
    %p57 = scmp.eq.s32.totalorder %s15, 1
    %p58 = por %p56, %p57
    %p59 = scmp.ne.s32.totalorder %s51, %s54
    %p60 = scmp.eq.s32.totalorder %s15, 0
    %p61 = por %p59, %p60
    %p62 = scmp.ne.s32.totalorder %s51, %s54
    %p63 = scmp.eq.s32.totalorder %s20, 1
    %p64 = por %p62, %p63
    %p65 = scmp.ne.s32.totalorder %s54, %s55
    %p66 = scmp.eq.s32.totalorder %s20, 0
    %p67 = por %p65, %p66
    %p68 = scmp.ne.s32.totalorder %s54, %s55
    %p69 = scmp.eq.s32.totalorder %s21, 1
    %p70 = por %p68, %p69
    %p72 = scmp.ne.s32.totalorder %s55, %s71
    %p73 = scmp.eq.s32.totalorder %s21, 0
    %p74 = por %p72, %p73
    %s76 = sadd.s32 %s75, 1
    %p79 = scmp.eq.s32.totalorder %s15, 1
    %p80 = scmp.ne.s32.totalorder %s75, %s77
    %p81 = scmp.eq.s32.totalorder %s15, 0
    %p82 = por %p80, %p81
    %p83 = scmp.ne.s32.totalorder %s75, %s77
    %p84 = scmp.eq.s32.totalorder %s20, 1
    %p85 = por %p83, %p84
    %p86 = scmp.ne.s32.totalorder %s77, %s78
    %p87 = scmp.eq.s32.totalorder %s20, 0
    %p88 = por %p86, %p87
    %p89 = scmp.ne.s32.totalorder %s77, %s78
    %p90 = scmp.eq.s32.totalorder %s21, 1
    %p91 = por %p89, %p90
    %p93 = scmp.ne.s32.totalorder %s78, %s92
    %p94 = scmp.eq.s32.totalorder %s21, 0
    %p95 = por %p93, %p94
    %s97 = sadd.s32 %s96, 1
    %p100 = scmp.eq.s32.totalorder %s15, 1
    %p101 = scmp.ne.s32.totalorder %s96, %s98
    %p102 = scmp.eq.s32.totalorder %s15, 0
    %p103 = por %p101, %p102
    %p104 = scmp.ne.s32.totalorder %s96, %s98
    %p105 = scmp.eq.s32.totalorder %s20, 1
    %p106 = por %p104, %p105
    %p107 = scmp.ne.s32.totalorder %s98, %s99
    %p108 = scmp.eq.s32.totalorder %s20, 0
    %p109 = por %p107, %p108
    %p110 = scmp.ne.s32.totalorder %s98, %s99
    %p111 = scmp.eq.s32.totalorder %s21, 1
    %p112 = por %p110, %p111
    %p114 = scmp.ne.s32.totalorder %s99, %s113
    %p115 = scmp.eq.s32.totalorder %s21, 0
    %p116 = por %p114, %p115
    %s118 = sadd.s32 %s117, 1
    %p121 = scmp.eq.s32.totalorder %s15, 1
    %p122 = scmp.ne.s32.totalorder %s117, %s119
    %p123 = scmp.eq.s32.totalorder %s15, 0
    %p124 = por %p122, %p123
    %p125 = scmp.ne.s32.totalorder %s117, %s119
    %p126 = scmp.eq.s32.totalorder %s20, 1
    %p127 = por %p125, %p126
    %p128 = scmp.ne.s32.totalorder %s119, %s120
    %p129 = scmp.eq.s32.totalorder %s20, 0
    %p130 = por %p128, %p129
    %p131 = scmp.ne.s32.totalorder %s119, %s120
    %p132 = scmp.eq.s32.totalorder %s21, 1
    %p133 = por %p131, %p132
    %p135 = scmp.ne.s32.totalorder %s120, %s134
    %p136 = scmp.eq.s32.totalorder %s21, 0
    %p137 = por %p135, %p136
    %s139 = sadd.s32 %s138, 1
    %p142 = scmp.eq.s32.totalorder %s15, 1
    %p143 = scmp.ne.s32.totalorder %s138, %s140
    %p144 = scmp.eq.s32.totalorder %s15, 0
    %p145 = por %p143, %p144
    %p146 = scmp.ne.s32.totalorder %s138, %s140
    %p147 = scmp.eq.s32.totalorder %s20, 1
    %p148 = por %p146, %p147
    %p149 = scmp.ne.s32.totalorder %s140, %s141
    %p150 = scmp.eq.s32.totalorder %s20, 0
    %p151 = por %p149, %p150
    %p152 = scmp.ne.s32.totalorder %s140, %s141
    %p153 = scmp.eq.s32.totalorder %s21, 1
    %p154 = por %p152, %p153
    %p156 = scmp.ne.s32.totalorder %s141, %s155
    %p157 = scmp.eq.s32.totalorder %s21, 0
    %p158 = por %p156, %p157
    %s160 = sadd.s32 %s159, 1
    %p163 = scmp.eq.s32.totalorder %s15, 1
    %p164 = scmp.ne.s32.totalorder %s159, %s161
    %p165 = scmp.eq.s32.totalorder %s15, 0
    %p166 = por %p164, %p165
    %p167 = scmp.ne.s32.totalorder %s159, %s161
    %p168 = scmp.eq.s32.totalorder %s20, 1
    %p169 = por %p167, %p168
    %p170 = scmp.ne.s32.totalorder %s161, %s162
    %p171 = scmp.eq.s32.totalorder %s20, 0
    %p172 = por %p170, %p171
    %p173 = scmp.ne.s32.totalorder %s161, %s162
    %p174 = scmp.eq.s32.totalorder %s21, 1
    %p175 = por %p173, %p174
    %p177 = scmp.ne.s32.totalorder %s162, %s176
    %p178 = scmp.eq.s32.totalorder %s21, 0
    %p179 = por %p177, %p178
    %s180 = ssub.s32 %s15, %s22
    %p181 = scmp.eq.s32.totalorder %s180, 0
    %s183 = sadd.s32 %s182, 1
    %s184 = scalar_select %p181, %s182, %s183
    %p187 = pneg %p181
    %p188 = scmp.eq.s32.totalorder %s15, 1
    %p189 = por %p187, %p188
    %p190 = scmp.ne.s32.totalorder %s182, %s185
    %p191 = scmp.eq.s32.totalorder %s15, 0
    %p192 = por %p190, %p191
    %p193 = scmp.ne.s32.totalorder %s182, %s185
    %p194 = scmp.eq.s32.totalorder %s20, 1
    %p195 = por %p193, %p194
    %p196 = scmp.ne.s32.totalorder %s185, %s186
    %p197 = scmp.eq.s32.totalorder %s20, 0
    %p198 = por %p196, %p197
    %p199 = scmp.ne.s32.totalorder %s185, %s186
    %p200 = scmp.eq.s32.totalorder %s21, 1
    %p201 = por %p199, %p200
    %p203 = scmp.ne.s32.totalorder %s186, %s202
    %p204 = scmp.eq.s32.totalorder %s21, 0
    %p205 = por %p203, %p204
    %s206 = ssub.s32 %s15, %s22
    %p207 = scmp.eq.s32.totalorder %s206, 0
    %s209 = sadd.s32 %s208, 1
    %s210 = scalar_select %p207, %s208, %s209
    %p213 = pneg %p207
    %p214 = scmp.eq.s32.totalorder %s15, 1
    %p215 = por %p213, %p214
    %p216 = scmp.ne.s32.totalorder %s208, %s211
    %p217 = scmp.eq.s32.totalorder %s15, 0
    %p218 = por %p216, %p217
    %p219 = scmp.ne.s32.totalorder %s208, %s211
    %p220 = scmp.eq.s32.totalorder %s20, 1
    %p221 = por %p219, %p220
    %p222 = scmp.ne.s32.totalorder %s211, %s212
    %p223 = scmp.eq.s32.totalorder %s20, 0
    %p224 = por %p222, %p223
    %p225 = scmp.ne.s32.totalorder %s211, %s212
    %p226 = scmp.eq.s32.totalorder %s21, 1
    %p227 = por %p225, %p226
    %p229 = scmp.ne.s32.totalorder %s212, %s228
    %p230 = scmp.eq.s32.totalorder %s21, 0
    %p231 = por %p229, %p230
    %p232 = scmp.le.s32.totalorder 1, %s15
    %p233 = scmp.lt.s32.totalorder %s15, 3
    %p234 = pnand %p232, %p233
    %p235 = pneg %p234
    // Predicated region
    $region9: #{basic_block_forward_nchw.2} parent=5 // pred_check
      _
    $region10: #{basic_block_forward_nchw.2} parent=5 // pred_check_branch
      %237 = sbr.rel (%p234) target = $region12
    $region11: #{basic_block_forward_nchw.2} parent=5 // pred_region
      %s238 = ssub.s32 %s15, 1
      // Predicated region
      $region13: #{basic_block_forward_nchw.2} parent=11 // pred_check
        %p239 = pneg %p88
      $region14: #{basic_block_forward_nchw.2} parent=11 // pred_check_branch
        %241 = sbr.rel (%p239) target = $region16
      $region15: #{basic_block_forward_nchw.2} parent=11 // pred_region
        _
      $region16: #{basic_block_forward_nchw.2} parent=11 // pred_fallthru
        _
      // Predicated region
      $region17: #{basic_block_forward_nchw.2} parent=11 // pred_check
        %p242 = pneg %p109
      $region18: #{basic_block_forward_nchw.2} parent=11 // pred_check_branch
        %244 = sbr.rel (%p242) target = $region20
      $region19: #{basic_block_forward_nchw.2} parent=11 // pred_region
        _
      $region20: #{basic_block_forward_nchw.2} parent=11 // pred_fallthru
        _
      // Predicated region
      $region21: #{basic_block_forward_nchw.2} parent=11 // pred_check
        %p245 = pneg %p130
      $region22: #{basic_block_forward_nchw.2} parent=11 // pred_check_branch
        %247 = sbr.rel (%p245) target = $region24
      $region23: #{basic_block_forward_nchw.2} parent=11 // pred_region
        _
      $region24: #{basic_block_forward_nchw.2} parent=11 // pred_fallthru
        _
      // Predicated region
      $region25: #{basic_block_forward_nchw.2} parent=11 // pred_check
        %p248 = pneg %p151
      $region26: #{basic_block_forward_nchw.2} parent=11 // pred_check_branch
        %250 = sbr.rel (%p248) target = $region28
      $region27: #{basic_block_forward_nchw.2} parent=11 // pred_region
        _
      $region28: #{basic_block_forward_nchw.2} parent=11 // pred_fallthru
        _
      // Predicated region
      $region29: #{basic_block_forward_nchw.2} parent=11 // pred_check
        %p251 = pneg %p172
      $region30: #{basic_block_forward_nchw.2} parent=11 // pred_check_branch
        %253 = sbr.rel (%p251) target = $region32
      $region31: #{basic_block_forward_nchw.2} parent=11 // pred_region
        _
      $region32: #{basic_block_forward_nchw.2} parent=11 // pred_fallthru
        _
    $region12: #{basic_block_forward_nchw.2} parent=5 // pred_fallthru
      _
    %p254 = scmp.lt.s32.totalorder %s15, 2
    // Predicated region
    $region33: #{basic_block_forward_nchw.2} parent=5 // pred_check
      %p255 = pneg %p254
    $region34: #{basic_block_forward_nchw.2} parent=5 // pred_check_branch
      %257 = sbr.rel (%p255) target = $region36
    $region35: #{basic_block_forward_nchw.2} parent=5 // pred_region
      // Predicated region
      $region37: #{basic_block_forward_nchw.2} parent=35 // pred_check
        %p258 = pneg %p35
      $region38: #{basic_block_forward_nchw.2} parent=35 // pred_check_branch
        %260 = sbr.rel (%p258) target = $region40
      $region39: #{basic_block_forward_nchw.2} parent=35 // pred_region
        %p261 = scmp.lt.s32.totalorder %s15, 1
        %s262 = scalar_select %p261, %s15, 1
        %s263 = smul.addr %s262, 43
        %s264 = smul.addr %s263, 4
        %s265 = scalar_lea.vmem %s0, %s264
      $region40: #{basic_block_forward_nchw.2} parent=35 // pred_fallthru
        _
      // Predicated region
      $region41: #{basic_block_forward_nchw.2} parent=35 // pred_check
        %p266 = pneg %p61
      $region42: #{basic_block_forward_nchw.2} parent=35 // pred_check_branch
        %268 = sbr.rel (%p266) target = $region44
      $region43: #{basic_block_forward_nchw.2} parent=35 // pred_region
        %p269 = scmp.lt.s32.totalorder %s15, 1
        %s270 = scalar_select %p269, %s15, 1
        %s271 = smul.addr %s270, 14
        %s272 = smul.addr %s271, 4
        %s273 = scalar_lea.vmem %s1, %s272
      $region44: #{basic_block_forward_nchw.2} parent=35 // pred_fallthru
        _
    $region36: #{basic_block_forward_nchw.2} parent=5 // pred_fallthru
      _
    %p274 = scmp.le.s32.totalorder 1, %s15
    %p275 = scmp.lt.s32.totalorder %s15, 3
    %p276 = pnand %p274, %p275
    %p277 = pneg %p276
    // Predicated region
    $region45: #{basic_block_forward_nchw.2} parent=5 // pred_check
      _
    $region46: #{basic_block_forward_nchw.2} parent=5 // pred_check_branch
      %279 = sbr.rel (%p276) target = $region48
    $region47: #{basic_block_forward_nchw.2} parent=5 // pred_region
      %s280 = ssub.s32 %s15, 1
      %p281 = scmp.lt.s32.totalorder %s20, 1
      %s282 = scalar_select %p281, %s20, 1
      %s283 = smul.addr %s282, 43
      %s284 = smul.addr %s283, 4
      %s285 = scalar_lea.vmem %s0, %s284
      %p286 = pneg %p41
      %p287 = pneg %p38
      %p288 = scmp.lt.s32.totalorder %s20, 1
      %s289 = scalar_select %p288, %s20, 1
      %s290 = smul.addr %s289, 14
      %s291 = smul.addr %s290, 4
      %s292 = scalar_lea.vmem %s1, %s291
      %p293 = pneg %p67
      %p294 = pneg %p64
      %p295 = pneg %p88
      %p296 = pneg %p85
      %p297 = pneg %p109
      %p298 = pneg %p106
      %p299 = pneg %p130
      %p300 = pneg %p127
      %p301 = pneg %p151
      %p302 = pneg %p148
      %p303 = pneg %p172
      %p304 = pneg %p169
      %p305 = pneg %p198
      %p306 = pneg %p195
      %p307 = scmp.lt.s32.totalorder %s20, 1
      %s308 = scalar_select %p307, %s20, 1
      %s309 = smul.addr %s308, 36
      %s310 = smul.addr %s309, 4
      %s311 = scalar_lea.vmem %s7, %s310
      %p312 = pneg %p224
      %p313 = pneg %p221
      %p314 = scmp.lt.s32.totalorder %s20, 1
      %s315 = scalar_select %p314, %s20, 1
      %s316 = smul.addr %s315, 10
      %s317 = smul.addr %s316, 4
      %s318 = scalar_lea.vmem %s8, %s317
      %p319 = scmp.lt.s32.totalorder %s20, 1
      %s320 = scalar_select %p319, %s20, 1
      %s321 = smul.addr %s320, 43
      %s322 = smul.addr %s321, 4
      %s323 = scalar_lea.vmem %s0, %s322
      %p324 = scmp.lt.s32.totalorder %s20, 1
      %s325 = scalar_select %p324, %s20, 1
      %s326 = smul.addr %s325, 14
      %s327 = smul.addr %s326, 4
      %s328 = scalar_lea.vmem %s1, %s327
      %p329 = scmp.lt.s32.totalorder %s20, 1
      %s330 = scalar_select %p329, %s20, 1
      %s331 = smul.addr %s330, 36
      %s332 = smul.addr %s331, 4
      %s333 = scalar_lea.vmem %s7, %s332
      %p334 = scmp.lt.s32.totalorder %s20, 1
      %s335 = scalar_select %p334, %s20, 1
      %s336 = smul.addr %s335, 10
      %s337 = smul.addr %s336, 4
      %s338 = scalar_lea.vmem %s8, %s337
      %v340 = vld [vmem:[%s323] sm:$0xf]
      %v341 = vld [vmem:[%s323 + $0x4] sm:$0xf]
      %v342 = vld [vmem:[%s323 + $0x8] sm:$0xf]
      %v343 = vld [vmem:[%s323 + $0xc] sm:$0xf]
      %v344 = vld [vmem:[%s323 + $0x10] sm:$0xf]
      %v345 = vld [vmem:[%s323 + $0x14] sm:$0xf]
      %v346 = vld [vmem:[%s323 + $0x18] sm:$0xf]
      %v347 = vld [vmem:[%s323 + $0x1c] sm:$0xf]
      %v348 = vld [vmem:[%s323 + $0x20] sm:$0xf]
      %v349 = vld [vmem:[%s323 + $0x24] sm:$0xf]
      %v350 = vld [vmem:[%s323 + $0x28] sm:$0xf]
      %v351 = vld [vmem:[%s323 + $0x2c] sm:$0xf]
      %v352 = vld [vmem:[%s323 + $0x30] sm:$0xf]
      %v353 = vld [vmem:[%s323 + $0x34] sm:$0xf]
      %v354 = vld [vmem:[%s323 + $0x38] sm:$0xf]
      %v355 = vld [vmem:[%s323 + $0x3c] sm:$0xf]
      %v356 = vld [vmem:[%s323 + $0x40] sm:$0xf]
      %v357 = vld [vmem:[%s323 + $0x44] sm:$0xf]
      %v358 = vld [vmem:[%s323 + $0x48] sm:$0xf]
      %v359 = vld [vmem:[%s323 + $0x4c] sm:$0xf]
      %v360 = vld [vmem:[%s323 + $0x50] sm:$0xf]
      %v361 = vld [vmem:[%s323 + $0x54] sm:$0xf]
      %v362 = vld [vmem:[%s323 + $0x58] sm:$0xf]
      %v363 = vld [vmem:[%s323 + $0x5c] sm:$0xf]
      %v364 = vld [vmem:[%s323 + $0x60] sm:$0xf]
      %v365 = vld [vmem:[%s323 + $0x64] sm:$0xf]
      %v366 = vld [vmem:[%s323 + $0x68] sm:$0xf]
      %v367 = vld [vmem:[%s323 + $0x6c] sm:$0xf]
      %v368 = vld [vmem:[%s323 + $0x70] sm:$0xf]
      %v369 = vld [vmem:[%s323 + $0x74] sm:$0xf]
      %v370 = vld [vmem:[%s323 + $0x78] sm:$0xf]
      %v371 = vld [vmem:[%s323 + $0x7c] sm:$0xf]
      %v372 = vld [vmem:[%s323 + $0x80] sm:$0xf]
      %v373 = vld [vmem:[%s323 + $0x84] sm:$0xf]
      %v374 = vld [vmem:[%s323 + $0x88] sm:$0xf]
      %v375 = vld [vmem:[%s323 + $0x8c] sm:$0xf]
      %v376 = vld [vmem:[%s2] sm:$0xf]
      %v377 = vld [vmem:[%s2 + $0x4] sm:$0xf]
      %v378 = vld [vmem:[%s2 + $0x8] sm:$0xf]
      %v379 = vld [vmem:[%s328] sm:$0xf]
      %v380 = vld [vmem:[%s328 + $0x4] sm:$0xf]
      %v381 = vld [vmem:[%s328 + $0x8] sm:$0xf]
      %v382 = vld [vmem:[%s328 + $0xc] sm:$0xf]
      %v383 = vld [vmem:[%s328 + $0x10] sm:$0xf]
      %v384 = vld [vmem:[%s328 + $0x14] sm:$0xf]
      %v385 = vld [vmem:[%s328 + $0x18] sm:$0xf]
      %v386 = vld [vmem:[%s328 + $0x1c] sm:$0xf]
      %v387 = vld [vmem:[%s328 + $0x20] sm:$0xf]
      %v388 = vld [vmem:[%s328 + $0x24] sm:$0xf]
      %v389 = vld [vmem:[%s3] sm:$0xf]
      %v390 = vld [vmem:[%s3 + $0x4] sm:$0xf]
      %v391 = vld [vmem:[%s3 + $0x8] sm:$0xf]
      %v392 = vld [vmem:[%s3 + $0xc] sm:$0xf]
      %v393 = vld [vmem:[%s323 + $0x90] sm:$0x1]
      %s394 = scalar_lea.vmem %s2, 12
      %v395 = vld [vmem:[%s394] sm:$0xf]
      %v396 = vld [vmem:[%s394 + $0x4] sm:$0xf]
      %v397 = vld [vmem:[%s394 + $0x8] sm:$0xf]
      %v435 = vunpack.c.l.b16 %v340
      %v436 = vunpack.c.l.b16 %v341
      %v437 = vunpack.c.l.b16 %v342
      %v438 = vunpack.c.l.b16 %v343
      %v439 = vunpack.c.l.b16 %v344
      %v440 = vunpack.c.l.b16 %v345
      %v441 = vunpack.c.l.b16 %v346
      %v442 = vunpack.c.l.b16 %v347
      %v443 = vunpack.c.l.b16 %v348
      %v444 = vunpack.c.l.b16 %v349
      %v445 = vunpack.c.l.b16 %v350
      %v446 = vunpack.c.l.b16 %v351
      %v447 = vunpack.c.l.b16 %v352
      %v448 = vunpack.c.l.b16 %v353
      %v449 = vunpack.c.l.b16 %v354
      %v450 = vunpack.c.l.b16 %v355
      %v451 = vunpack.c.l.b16 %v356
      %v452 = vunpack.c.l.b16 %v357
      %v453 = vunpack.c.l.b16 %v358
      %v454 = vunpack.c.l.b16 %v359
      %v455 = vunpack.c.l.b16 %v360
      %v456 = vunpack.c.l.b16 %v361
      %v457 = vunpack.c.l.b16 %v362
      %v458 = vunpack.c.l.b16 %v363
      %v459 = vunpack.c.l.b16 %v364
      %v460 = vunpack.c.l.b16 %v365
      %v461 = vunpack.c.l.b16 %v366
      %v462 = vunpack.c.l.b16 %v367
      %v463 = vunpack.c.l.b16 %v368
      %v464 = vunpack.c.l.b16 %v369
      %v465 = vunpack.c.l.b16 %v370
      %v466 = vunpack.c.l.b16 %v371
      %v467 = vunpack.c.l.b16 %v372
      %v468 = vunpack.c.l.b16 %v373
      %v469 = vunpack.c.l.b16 %v374
      %v470 = vunpack.c.l.b16 %v375
      %v471 = vunpack.c.l.b16 %v393
      %v472 = vpack.c.b16 %v436, %v435
      %v473 = vpack.c.b16 %v438, %v437
      %v474 = vpack.c.b16 %v440, %v439
      %v475 = vpack.c.b16 %v442, %v441
      %v476 = vpack.c.b16 %v444, %v443
      %v477 = vpack.c.b16 %v446, %v445
      %v478 = vpack.c.b16 %v448, %v447
      %v479 = vpack.c.b16 %v450, %v449
      %v480 = vpack.c.b16 %v452, %v451
      %v481 = vpack.c.b16 %v454, %v453
      %v482 = vpack.c.b16 %v456, %v455
      %v483 = vpack.c.b16 %v458, %v457
      %v484 = vpack.c.b16 %v460, %v459
      %v485 = vpack.c.b16 %v462, %v461
      %v486 = vpack.c.b16 %v464, %v463
      %v487 = vpack.c.b16 %v466, %v465
      %v488 = vpack.c.b16 %v468, %v467
      %v489 = vpack.c.b16 %v470, %v469
      %v490 = vpack.c.b16 %v471, %v471
      %vm491 = vsmask.f32 7424
      %v493 = vshrl.u32 %v472, 16
      %v495 = vshll.u32 %v472, 16
      %v497 = vrot.slane %v495, 1
      %v498 = vor.u32 %v493, %v497
      %v500 = vshll.u32 %v473, 16
      %v502 = vrot.slane %v500, 1
      %v503 = vsel %vm491, %v498, %v502
      %v504 = vshrl.u32 %v473, 16
      %v506 = vor.u32 %v504, %v502
      %v508 = vshll.u32 %v474, 16
      %v510 = vrot.slane %v508, 1
      %v511 = vsel %vm491, %v506, %v510
      %v512 = vshrl.u32 %v474, 16
      %v514 = vor.u32 %v512, %v510
      %v516 = vshll.u32 %v475, 16
      %v518 = vrot.slane %v516, 1
      %v519 = vsel %vm491, %v514, %v518
      %v520 = vshrl.u32 %v475, 16
      %v522 = vor.u32 %v520, %v518
      %v524 = vshll.u32 %v476, 16
      %v526 = vrot.slane %v524, 1
      %v527 = vsel %vm491, %v522, %v526
      %v528 = vshrl.u32 %v476, 16
      %v530 = vor.u32 %v528, %v526
      %v532 = vshll.u32 %v477, 16
      %v534 = vrot.slane %v532, 1
      %v535 = vsel %vm491, %v530, %v534
      %v536 = vshrl.u32 %v477, 16
      %v538 = vor.u32 %v536, %v534
      %v540 = vshll.u32 %v478, 16
      %v542 = vrot.slane %v540, 1
      %v543 = vsel %vm491, %v538, %v542
      %v544 = vshrl.u32 %v478, 16
      %v546 = vor.u32 %v544, %v542
      %v548 = vshll.u32 %v479, 16
      %v550 = vrot.slane %v548, 1
      %v551 = vsel %vm491, %v546, %v550
      %v552 = vshrl.u32 %v479, 16
      %v554 = vor.u32 %v552, %v550
      %v556 = vshll.u32 %v480, 16
      %v558 = vrot.slane %v556, 1
      %v559 = vsel %vm491, %v554, %v558
      %v560 = vshrl.u32 %v480, 16
      %v562 = vor.u32 %v560, %v558
      %v564 = vshll.u32 %v481, 16
      %v566 = vrot.slane %v564, 1
      %v567 = vsel %vm491, %v562, %v566
      %v568 = vshrl.u32 %v481, 16
      %v570 = vor.u32 %v568, %v566
      %v572 = vshll.u32 %v482, 16
      %v574 = vrot.slane %v572, 1
      %v575 = vsel %vm491, %v570, %v574
      %v576 = vshrl.u32 %v482, 16
      %v578 = vor.u32 %v576, %v574
      %v580 = vshll.u32 %v483, 16
      %v582 = vrot.slane %v580, 1
      %v583 = vsel %vm491, %v578, %v582
      %v584 = vshrl.u32 %v483, 16
      %v586 = vor.u32 %v584, %v582
      %v588 = vshll.u32 %v484, 16
      %v590 = vrot.slane %v588, 1
      %v591 = vsel %vm491, %v586, %v590
      %v592 = vshrl.u32 %v484, 16
      %v594 = vor.u32 %v592, %v590
      %v596 = vshll.u32 %v485, 16
      %v598 = vrot.slane %v596, 1
      %v599 = vsel %vm491, %v594, %v598
      %v600 = vshrl.u32 %v485, 16
      %v602 = vor.u32 %v600, %v598
      %v604 = vshll.u32 %v486, 16
      %v606 = vrot.slane %v604, 1
      %v607 = vsel %vm491, %v602, %v606
      %v608 = vshrl.u32 %v486, 16
      %v610 = vor.u32 %v608, %v606
      %v612 = vshll.u32 %v487, 16
      %v614 = vrot.slane %v612, 1
      %v615 = vsel %vm491, %v610, %v614
      %v616 = vshrl.u32 %v487, 16
      %v618 = vor.u32 %v616, %v614
      %v620 = vshll.u32 %v488, 16
      %v622 = vrot.slane %v620, 1
      %v623 = vsel %vm491, %v618, %v622
      %v624 = vshrl.u32 %v488, 16
      %v626 = vor.u32 %v624, %v622
      %v628 = vshll.u32 %v489, 16
      %v630 = vrot.slane %v628, 1
      %v631 = vsel %vm491, %v626, %v630
      %v632 = vshrl.u32 %v489, 16
      %v634 = vor.u32 %v632, %v630
      %v636 = vshll.u32 %v490, 16
      %v638 = vrot.slane %v636, 1
      %v639 = vsel %vm491, %v634, %v638
      %v643 = vunpack.c.l.b16 %v395
      %v644 = vunpack.c.l.b16 %v396
      %v645 = vunpack.c.l.b16 %v397
      %v646 = vpack.c.b16 %v644, %v643
      %v647 = vpack.c.b16 %v645, %v645
      %vm649 = vcmask 195584
      %v651 = vsel %vm649, %v503, 0
      %v654 = vsel %vm649, %v511, 0
      %v657 = vsel %vm649, %v519, 0
      %v660 = vsel %vm649, %v527, 0
      %v663 = vsel %vm649, %v535, 0
      %v666 = vsel %vm649, %v543, 0
      %v669 = vsel %vm649, %v551, 0
      %v672 = vsel %vm649, %v559, 0
      %v675 = vsel %vm649, %v567, 0
      %v678 = vsel %vm649, %v575, 0
      %v681 = vsel %vm649, %v583, 0
      %v684 = vsel %vm649, %v591, 0
      %v687 = vsel %vm649, %v599, 0
      %v690 = vsel %vm649, %v607, 0
      %v693 = vsel %vm649, %v615, 0
      %v696 = vsel %vm649, %v623, 0
      %v699 = vsel %vm649, %v631, 0
      %v702 = vsel %vm649, %v639, 0
      %vm704 = vcmask 1043456
      %v706 = vsel %vm704, %v647, 0
      %708 = vmatprep.subr.bf16.mxu0 0
      %709 = vmatpush1.bf16.msra.mxu0 0
      %710 = vmatprep.subr.bf16.mxu0 0
      %711 = vmatpush1.bf16.msra.mxu0 0
      %712 = vmatprep.subr.bf16.mxu0 0
      %713 = vmatpush1.bf16.msra.mxu0 0
      %714 = vmatprep.subr.bf16.mxu0 0
      %715 = vmatpush1.bf16.msra.mxu0 0
      %716 = vmatprep.subr.bf16.mxu0 0
      %717 = vmatpush1.bf16.msra.mxu0 0
      %718 = vmatprep.subr.bf16.mxu0 0
      %719 = vmatpush1.bf16.msra.mxu0 0
      %720 = vmatprep.subr.bf16.mxu0 0
      %721 = vmatpush1.bf16.msra.mxu0 %v706
      %722 = vmatprep.subr.bf16.mxu0 0
      %723 = vmatpush1.bf16.msra.mxu0 %v646
      %724 = vmatprep.subr.bf16.mxu0 0
      %725 = vmatpush2.bf16.msra.mxu0 0
      %726 = vmatprep.subr.bf16.mxu0 0
      %727 = vmatpush2.bf16.msra.mxu0 0
      %728 = vmatprep.subr.bf16.mxu0 0
      %729 = vmatpush2.bf16.msra.mxu0 0
      %730 = vmatprep.subr.bf16.mxu0 0
      %731 = vmatpush2.bf16.msra.mxu0 0
      %732 = vmatprep.subr.bf16.mxu0 0
      %733 = vmatpush2.bf16.msra.mxu0 0
      %734 = vmatprep.subr.bf16.mxu0 0
      %735 = vmatpush2.bf16.msra.mxu0 0
      %736 = vmatprep.subr.bf16.mxu0 0
      %737 = vmatpush2.bf16.msra.mxu0 0
      %738 = vmatprep.subr.bf16.mxu0 0
      %739 = vmatpush2.bf16.msra.mxu0 0
      %740 = vmatprep.mubr.bf16.mxu0 0
      %741 = vmatmul.mubr.bf16.gmra.mxu0 %v651
      %v742 = vpop.f32.mrf.mxu0
      %v743 = vadd.f32 0.0, %v742
      %v744 = vpop.f32.mrf.mxu0
      %v745 = vpop.f32.mrf.mxu0
      %v746 = vadd.f32 0.0, %v745
      %v747 = vpop.f32.mrf.mxu0
      %748 = vmatprep.mubr.bf16.mxu0 0
      %749 = vmatmul.mubr.bf16.gmra.mxu0 %v654
      %v750 = vpop.f32.mrf.mxu0
      %v751 = vadd.f32 0.0, %v750
      %v752 = vpop.f32.mrf.mxu0
      %v753 = vpop.f32.mrf.mxu0
      %v754 = vadd.f32 0.0, %v753
      %v755 = vpop.f32.mrf.mxu0
      %756 = vmatprep.mubr.bf16.mxu0 0
      %757 = vmatmul.mubr.bf16.gmra.mxu0 %v657
      %v758 = vpop.f32.mrf.mxu0
      %v759 = vadd.f32 0.0, %v758
      %v760 = vpop.f32.mrf.mxu0
      %v761 = vpop.f32.mrf.mxu0
      %v762 = vadd.f32 0.0, %v761
      %v763 = vpop.f32.mrf.mxu0
      %764 = vmatprep.mubr.bf16.mxu0 0
      %765 = vmatmul.mubr.bf16.gmra.mxu0 %v660
      %v766 = vpop.f32.mrf.mxu0
      %v767 = vadd.f32 0.0, %v766
      %v768 = vpop.f32.mrf.mxu0
      %v769 = vpop.f32.mrf.mxu0
      %v770 = vadd.f32 0.0, %v769
      %v771 = vpop.f32.mrf.mxu0
      %772 = vmatprep.mubr.bf16.mxu0 0
      %773 = vmatmul.mubr.bf16.gmra.mxu0 %v663
      %v774 = vpop.f32.mrf.mxu0
      %v775 = vadd.f32 0.0, %v774
      %v776 = vpop.f32.mrf.mxu0
      %v777 = vpop.f32.mrf.mxu0
      %v778 = vadd.f32 0.0, %v777
      %v779 = vpop.f32.mrf.mxu0
      %780 = vmatprep.mubr.bf16.mxu0 0
      %781 = vmatmul.mubr.bf16.gmra.mxu0 %v666
      %v782 = vpop.f32.mrf.mxu0
      %v783 = vadd.f32 0.0, %v782
      %v784 = vpop.f32.mrf.mxu0
      %v785 = vpop.f32.mrf.mxu0
      %v786 = vadd.f32 0.0, %v785
      %v787 = vpop.f32.mrf.mxu0
      %788 = vmatprep.mubr.bf16.mxu0 0
      %789 = vmatmul.mubr.bf16.gmra.mxu0 %v669
      %v790 = vpop.f32.mrf.mxu0
      %v791 = vadd.f32 0.0, %v790
      %v792 = vpop.f32.mrf.mxu0
      %v793 = vpop.f32.mrf.mxu0
      %v794 = vadd.f32 0.0, %v793
      %v795 = vpop.f32.mrf.mxu0
      %796 = vmatprep.mubr.bf16.mxu0 0
      %797 = vmatmul.mubr.bf16.gmra.mxu0 %v672
      %v798 = vpop.f32.mrf.mxu0
      %v799 = vadd.f32 0.0, %v798
      %v800 = vpop.f32.mrf.mxu0
      %v801 = vpop.f32.mrf.mxu0
      %v802 = vadd.f32 0.0, %v801
      %v803 = vpop.f32.mrf.mxu0
      %804 = vmatprep.mubr.bf16.mxu0 0
      %805 = vmatmul.mubr.bf16.gmra.mxu0 %v675
      %v806 = vpop.f32.mrf.mxu0
      %v807 = vadd.f32 0.0, %v806
      %v808 = vpop.f32.mrf.mxu0
      %v809 = vpop.f32.mrf.mxu0
      %v810 = vadd.f32 0.0, %v809
      %v811 = vpop.f32.mrf.mxu0
      %812 = vmatprep.mubr.bf16.mxu0 0
      %813 = vmatmul.mubr.bf16.gmra.mxu0 %v678
      %v814 = vpop.f32.mrf.mxu0
      %v815 = vadd.f32 0.0, %v814
      %v816 = vpop.f32.mrf.mxu0
      %v817 = vpop.f32.mrf.mxu0
      %v818 = vadd.f32 0.0, %v817
      %v819 = vpop.f32.mrf.mxu0
      %820 = vmatprep.mubr.bf16.mxu0 0
      %821 = vmatmul.mubr.bf16.gmra.mxu0 %v681
      %v822 = vpop.f32.mrf.mxu0
      %v823 = vadd.f32 0.0, %v822
      %v824 = vpop.f32.mrf.mxu0
      %v825 = vpop.f32.mrf.mxu0
      %v826 = vadd.f32 0.0, %v825
      %v827 = vpop.f32.mrf.mxu0
      %828 = vmatprep.mubr.bf16.mxu0 0
      %829 = vmatmul.mubr.bf16.gmra.mxu0 %v684
      %v830 = vpop.f32.mrf.mxu0
      %v831 = vadd.f32 0.0, %v830
      %v832 = vpop.f32.mrf.mxu0
      %v833 = vpop.f32.mrf.mxu0
      %v834 = vadd.f32 0.0, %v833
      %v835 = vpop.f32.mrf.mxu0
      %836 = vmatprep.mubr.bf16.mxu0 0
      %837 = vmatmul.mubr.bf16.gmra.mxu0 %v687
      %v838 = vpop.f32.mrf.mxu0
      %v839 = vadd.f32 0.0, %v838
      %v840 = vpop.f32.mrf.mxu0
      %v841 = vpop.f32.mrf.mxu0
      %v842 = vadd.f32 0.0, %v841
      %v843 = vpop.f32.mrf.mxu0
      %844 = vmatprep.mubr.bf16.mxu0 0
      %845 = vmatmul.mubr.bf16.gmra.mxu0 %v690
      %v846 = vpop.f32.mrf.mxu0
      %v847 = vadd.f32 0.0, %v846
      %v848 = vpop.f32.mrf.mxu0
      %v849 = vpop.f32.mrf.mxu0
      %v850 = vadd.f32 0.0, %v849
      %v851 = vpop.f32.mrf.mxu0
      %852 = vmatprep.mubr.bf16.mxu0 0
      %853 = vmatmul.mubr.bf16.gmra.mxu0 %v693
      %v854 = vpop.f32.mrf.mxu0
      %v855 = vadd.f32 0.0, %v854
      %v856 = vpop.f32.mrf.mxu0
      %v857 = vpop.f32.mrf.mxu0
      %v858 = vadd.f32 0.0, %v857
      %v859 = vpop.f32.mrf.mxu0
      %860 = vmatprep.mubr.bf16.mxu0 0
      %861 = vmatmul.mubr.bf16.gmra.mxu0 %v696
      %v862 = vpop.f32.mrf.mxu0
      %v863 = vadd.f32 0.0, %v862
      %v864 = vpop.f32.mrf.mxu0
      %v865 = vpop.f32.mrf.mxu0
      %v866 = vadd.f32 0.0, %v865
      %v867 = vpop.f32.mrf.mxu0
      %868 = vmatprep.mubr.bf16.mxu0 0
      %869 = vmatmul.mubr.bf16.gmra.mxu0 %v699
      %v870 = vpop.f32.mrf.mxu0
      %v871 = vadd.f32 0.0, %v870
      %v872 = vpop.f32.mrf.mxu0
      %v873 = vpop.f32.mrf.mxu0
      %v874 = vadd.f32 0.0, %v873
      %v875 = vpop.f32.mrf.mxu0
      %876 = vmatprep.mubr.bf16.mxu0 0
      %877 = vmatmul.mubr.bf16.gmra.mxu0 %v702
      %v878 = vpop.f32.mrf.mxu0
      %v879 = vadd.f32 0.0, %v878
      %v880 = vpop.f32.mrf.mxu0
      %v881 = vpop.f32.mrf.mxu0
      %v882 = vadd.f32 0.0, %v881
      %v883 = vpop.f32.mrf.mxu0
      %884 = vdwg.mxu0
      %v888 = vunpack.c.l.b16 %v376
      %v889 = vunpack.c.l.b16 %v377
      %v890 = vunpack.c.l.b16 %v378
      %v891 = vpack.c.b16 %v889, %v888
      %v892 = vpack.c.b16 %v890, %v890
      %v894 = vsel %vm649, %v472, 0
      %v896 = vsel %vm649, %v473, 0
      %v898 = vsel %vm649, %v474, 0
      %v900 = vsel %vm649, %v475, 0
      %v902 = vsel %vm649, %v476, 0
      %v904 = vsel %vm649, %v477, 0
      %v906 = vsel %vm649, %v478, 0
      %v908 = vsel %vm649, %v479, 0
      %v910 = vsel %vm649, %v480, 0
      %v912 = vsel %vm649, %v481, 0
      %v914 = vsel %vm649, %v482, 0
      %v916 = vsel %vm649, %v483, 0
      %v918 = vsel %vm649, %v484, 0
      %v920 = vsel %vm649, %v485, 0
      %v922 = vsel %vm649, %v486, 0
      %v924 = vsel %vm649, %v487, 0
      %v926 = vsel %vm649, %v488, 0
      %v928 = vsel %vm649, %v489, 0
      %v931 = vsel %vm704, %v892, 0
      %933 = vmatprep.subr.bf16.mxu0 0
      %934 = vmatpush1.bf16.msra.mxu0 0
      %935 = vmatprep.subr.bf16.mxu0 0
      %936 = vmatpush1.bf16.msra.mxu0 0
      %937 = vmatprep.subr.bf16.mxu0 0
      %938 = vmatpush1.bf16.msra.mxu0 0
      %939 = vmatprep.subr.bf16.mxu0 0
      %940 = vmatpush1.bf16.msra.mxu0 0
      %941 = vmatprep.subr.bf16.mxu0 0
      %942 = vmatpush1.bf16.msra.mxu0 0
      %943 = vmatprep.subr.bf16.mxu0 0
      %944 = vmatpush1.bf16.msra.mxu0 0
      %945 = vmatprep.subr.bf16.mxu0 0
      %946 = vmatpush1.bf16.msra.mxu0 %v931
      %947 = vmatprep.subr.bf16.mxu0 0
      %948 = vmatpush1.bf16.msra.mxu0 %v891
      %949 = vmatprep.subr.bf16.mxu0 0
      %950 = vmatpush2.bf16.msra.mxu0 0
      %951 = vmatprep.subr.bf16.mxu0 0
      %952 = vmatpush2.bf16.msra.mxu0 0
      %953 = vmatprep.subr.bf16.mxu0 0
      %954 = vmatpush2.bf16.msra.mxu0 0
      %955 = vmatprep.subr.bf16.mxu0 0
      %956 = vmatpush2.bf16.msra.mxu0 0
      %957 = vmatprep.subr.bf16.mxu0 0
      %958 = vmatpush2.bf16.msra.mxu0 0
      %959 = vmatprep.subr.bf16.mxu0 0
      %960 = vmatpush2.bf16.msra.mxu0 0
      %961 = vmatprep.subr.bf16.mxu0 0
      %962 = vmatpush2.bf16.msra.mxu0 0
      %963 = vmatprep.subr.bf16.mxu0 0
      %964 = vmatpush2.bf16.msra.mxu0 0
      %965 = vmatprep.mubr.bf16.mxu0 0
      %966 = vmatmul.mubr.bf16.gmra.mxu0 %v894
      %v967 = vpop.f32.mrf.mxu0
      %v968 = vadd.f32 %v743, %v967
      %v969 = vpop.f32.mrf.mxu0
      %v970 = vpop.f32.mrf.mxu0
      %v971 = vadd.f32 %v746, %v970
      %v972 = vpop.f32.mrf.mxu0
      %973 = vmatprep.mubr.bf16.mxu0 0
      %974 = vmatmul.mubr.bf16.gmra.mxu0 %v896
      %v975 = vpop.f32.mrf.mxu0
      %v976 = vadd.f32 %v751, %v975
      %v977 = vpop.f32.mrf.mxu0
      %v978 = vpop.f32.mrf.mxu0
      %v979 = vadd.f32 %v754, %v978
      %v980 = vpop.f32.mrf.mxu0
      %981 = vmatprep.mubr.bf16.mxu0 0
      %982 = vmatmul.mubr.bf16.gmra.mxu0 %v898
      %v983 = vpop.f32.mrf.mxu0
      %v984 = vadd.f32 %v759, %v983
      %v985 = vpop.f32.mrf.mxu0
      %v986 = vpop.f32.mrf.mxu0
      %v987 = vadd.f32 %v762, %v986
      %v988 = vpop.f32.mrf.mxu0
      %989 = vmatprep.mubr.bf16.mxu0 0
      %990 = vmatmul.mubr.bf16.gmra.mxu0 %v900
      %v991 = vpop.f32.mrf.mxu0
      %v992 = vadd.f32 %v767, %v991
      %v993 = vpop.f32.mrf.mxu0
      %v994 = vpop.f32.mrf.mxu0
      %v995 = vadd.f32 %v770, %v994
      %v996 = vpop.f32.mrf.mxu0
      %997 = vmatprep.mubr.bf16.mxu0 0
      %998 = vmatmul.mubr.bf16.gmra.mxu0 %v902
      %v999 = vpop.f32.mrf.mxu0
      %v1000 = vadd.f32 %v775, %v999
      %v1001 = vpop.f32.mrf.mxu0
      %v1002 = vpop.f32.mrf.mxu0
      %v1003 = vadd.f32 %v778, %v1002
      %v1004 = vpop.f32.mrf.mxu0
      %1005 = vmatprep.mubr.bf16.mxu0 0
      %1006 = vmatmul.mubr.bf16.gmra.mxu0 %v904
      %v1007 = vpop.f32.mrf.mxu0
      %v1008 = vadd.f32 %v783, %v1007
      %v1009 = vpop.f32.mrf.mxu0
      %v1010 = vpop.f32.mrf.mxu0
      %v1011 = vadd.f32 %v786, %v1010
      %v1012 = vpop.f32.mrf.mxu0
      %1013 = vmatprep.mubr.bf16.mxu0 0
      %1014 = vmatmul.mubr.bf16.gmra.mxu0 %v906
      %v1015 = vpop.f32.mrf.mxu0
      %v1016 = vadd.f32 %v791, %v1015
      %v1017 = vpop.f32.mrf.mxu0
      %v1018 = vpop.f32.mrf.mxu0
      %v1019 = vadd.f32 %v794, %v1018
      %v1020 = vpop.f32.mrf.mxu0
      %1021 = vmatprep.mubr.bf16.mxu0 0
      %1022 = vmatmul.mubr.bf16.gmra.mxu0 %v908
      %v1023 = vpop.f32.mrf.mxu0
      %v1024 = vadd.f32 %v799, %v1023
      %v1025 = vpop.f32.mrf.mxu0
      %v1026 = vpop.f32.mrf.mxu0
      %v1027 = vadd.f32 %v802, %v1026
      %v1028 = vpop.f32.mrf.mxu0
      %1029 = vmatprep.mubr.bf16.mxu0 0
      %1030 = vmatmul.mubr.bf16.gmra.mxu0 %v910
      %v1031 = vpop.f32.mrf.mxu0
      %v1032 = vadd.f32 %v807, %v1031
      %v1033 = vpop.f32.mrf.mxu0
      %v1034 = vpop.f32.mrf.mxu0
      %v1035 = vadd.f32 %v810, %v1034
      %v1036 = vpop.f32.mrf.mxu0
      %1037 = vmatprep.mubr.bf16.mxu0 0
      %1038 = vmatmul.mubr.bf16.gmra.mxu0 %v912
      %v1039 = vpop.f32.mrf.mxu0
      %v1040 = vadd.f32 %v815, %v1039
      %v1041 = vpop.f32.mrf.mxu0
      %v1042 = vpop.f32.mrf.mxu0
      %v1043 = vadd.f32 %v818, %v1042
      %v1044 = vpop.f32.mrf.mxu0
      %1045 = vmatprep.mubr.bf16.mxu0 0
      %1046 = vmatmul.mubr.bf16.gmra.mxu0 %v914
      %v1047 = vpop.f32.mrf.mxu0
      %v1048 = vadd.f32 %v823, %v1047
      %v1049 = vpop.f32.mrf.mxu0
      %v1050 = vpop.f32.mrf.mxu0
      %v1051 = vadd.f32 %v826, %v1050
      %v1052 = vpop.f32.mrf.mxu0
      %1053 = vmatprep.mubr.bf16.mxu0 0
      %1054 = vmatmul.mubr.bf16.gmra.mxu0 %v916
      %v1055 = vpop.f32.mrf.mxu0
      %v1056 = vadd.f32 %v831, %v1055
      %v1057 = vpop.f32.mrf.mxu0
      %v1058 = vpop.f32.mrf.mxu0
      %v1059 = vadd.f32 %v834, %v1058
      %v1060 = vpop.f32.mrf.mxu0
      %1061 = vmatprep.mubr.bf16.mxu0 0
      %1062 = vmatmul.mubr.bf16.gmra.mxu0 %v918
      %v1063 = vpop.f32.mrf.mxu0
      %v1064 = vadd.f32 %v839, %v1063
      %v1065 = vpop.f32.mrf.mxu0
      %v1066 = vpop.f32.mrf.mxu0
      %v1067 = vadd.f32 %v842, %v1066
      %v1068 = vpop.f32.mrf.mxu0
      %1069 = vmatprep.mubr.bf16.mxu0 0
      %1070 = vmatmul.mubr.bf16.gmra.mxu0 %v920
      %v1071 = vpop.f32.mrf.mxu0
      %v1072 = vadd.f32 %v847, %v1071
      %v1073 = vpop.f32.mrf.mxu0
      %v1074 = vpop.f32.mrf.mxu0
      %v1075 = vadd.f32 %v850, %v1074
      %v1076 = vpop.f32.mrf.mxu0
      %1077 = vmatprep.mubr.bf16.mxu0 0
      %1078 = vmatmul.mubr.bf16.gmra.mxu0 %v922
      %v1079 = vpop.f32.mrf.mxu0
      %v1080 = vadd.f32 %v855, %v1079
      %v1081 = vpop.f32.mrf.mxu0
      %v1082 = vpop.f32.mrf.mxu0
      %v1083 = vadd.f32 %v858, %v1082
      %v1084 = vpop.f32.mrf.mxu0
      %1085 = vmatprep.mubr.bf16.mxu0 0
      %1086 = vmatmul.mubr.bf16.gmra.mxu0 %v924
      %v1087 = vpop.f32.mrf.mxu0
      %v1088 = vadd.f32 %v863, %v1087
      %v1089 = vpop.f32.mrf.mxu0
      %v1090 = vpop.f32.mrf.mxu0
      %v1091 = vadd.f32 %v866, %v1090
      %v1092 = vpop.f32.mrf.mxu0
      %1093 = vmatprep.mubr.bf16.mxu0 0
      %1094 = vmatmul.mubr.bf16.gmra.mxu0 %v926
      %v1095 = vpop.f32.mrf.mxu0
      %v1096 = vadd.f32 %v871, %v1095
      %v1097 = vpop.f32.mrf.mxu0
      %v1098 = vpop.f32.mrf.mxu0
      %v1099 = vadd.f32 %v874, %v1098
      %v1100 = vpop.f32.mrf.mxu0
      %1101 = vmatprep.mubr.bf16.mxu0 0
      %1102 = vmatmul.mubr.bf16.gmra.mxu0 %v928
      %v1103 = vpop.f32.mrf.mxu0
      %v1104 = vadd.f32 %v879, %v1103
      %v1105 = vpop.f32.mrf.mxu0
      %v1106 = vpop.f32.mrf.mxu0
      %v1107 = vadd.f32 %v882, %v1106
      %v1108 = vpop.f32.mrf.mxu0
      %1109 = vdwg.mxu0
      %v1110 = vld [vmem:[%s328] sm:$0xf]
      %v1111 = vld [vmem:[%s328 + $0x4] sm:$0xf]
      %v1112 = vld [vmem:[%s328 + $0x8] sm:$0xf]
      %v1113 = vld [vmem:[%s328 + $0xc] sm:$0xf]
      %v1114 = vld [vmem:[%s328 + $0x10] sm:$0xf]
      %v1115 = vld [vmem:[%s328 + $0x14] sm:$0xf]
      %v1116 = vld [vmem:[%s328 + $0x18] sm:$0xf]
      %v1117 = vld [vmem:[%s328 + $0x1c] sm:$0xf]
      %v1118 = vld [vmem:[%s328 + $0x20] sm:$0xf]
      %v1119 = vld [vmem:[%s328 + $0x24] sm:$0xf]
      %v1120 = vld [vmem:[%s328 + $0x28] sm:$0x1]
      %s1121 = scalar_lea.vmem %s3, 16
      %v1122 = vld [vmem:[%s1121] sm:$0xf]
      %v1123 = vld [vmem:[%s1121 + $0x4] sm:$0xf]
      %v1124 = vld [vmem:[%s1121 + $0x8] sm:$0xf]
      %v1125 = vld [vmem:[%s1121 + $0xc] sm:$0xf]
      %v1137 = vunpack.c.l.b16 %v1110
      %v1138 = vunpack.c.l.b16 %v1111
      %v1139 = vunpack.c.l.b16 %v1112
      %v1140 = vunpack.c.l.b16 %v1113
      %v1141 = vunpack.c.l.b16 %v1114
      %v1142 = vunpack.c.l.b16 %v1115
      %v1143 = vunpack.c.l.b16 %v1116
      %v1144 = vunpack.c.l.b16 %v1117
      %v1145 = vunpack.c.l.b16 %v1118
      %v1146 = vunpack.c.l.b16 %v1119
      %v1147 = vunpack.c.l.b16 %v1120
      %v1148 = vpack.c.b16 %v1138, %v1137
      %v1149 = vpack.c.b16 %v1140, %v1139
      %v1150 = vpack.c.b16 %v1142, %v1141
      %v1151 = vpack.c.b16 %v1144, %v1143
      %v1152 = vpack.c.b16 %v1146, %v1145
      %v1153 = vpack.c.b16 %v1147, %v1147
      %v1155 = vshrl.u32 %v1148, 16
      %v1157 = vshll.u32 %v1148, 16
      %v1159 = vrot.slane %v1157, 1
      %v1160 = vor.u32 %v1155, %v1159
      %v1162 = vshll.u32 %v1149, 16
      %v1164 = vrot.slane %v1162, 1
      %v1165 = vsel %vm491, %v1160, %v1164
      %v1166 = vshrl.u32 %v1149, 16
      %v1168 = vor.u32 %v1166, %v1164
      %v1170 = vshll.u32 %v1150, 16
      %v1172 = vrot.slane %v1170, 1
      %v1173 = vsel %vm491, %v1168, %v1172
      %v1174 = vshrl.u32 %v1150, 16
      %v1176 = vor.u32 %v1174, %v1172
      %v1178 = vshll.u32 %v1151, 16
      %v1180 = vrot.slane %v1178, 1
      %v1181 = vsel %vm491, %v1176, %v1180
      %v1182 = vshrl.u32 %v1151, 16
      %v1184 = vor.u32 %v1182, %v1180
      %v1186 = vshll.u32 %v1152, 16
      %v1188 = vrot.slane %v1186, 1
      %v1189 = vsel %vm491, %v1184, %v1188
      %v1190 = vshrl.u32 %v1152, 16
      %v1192 = vor.u32 %v1190, %v1188
      %v1194 = vshll.u32 %v1153, 16
      %v1196 = vrot.slane %v1194, 1
      %v1197 = vsel %vm491, %v1192, %v1196
      %v1202 = vunpack.c.l.b16 %v1122
      %v1203 = vunpack.c.l.b16 %v1123
      %v1204 = vunpack.c.l.b16 %v1124
      %v1205 = vunpack.c.l.b16 %v1125
      %v1206 = vpack.c.b16 %v1203, %v1202
      %v1207 = vpack.c.b16 %v1205, %v1204
      %vm1210 = vcmask 261120
      %v1212 = vsel %vm1210, %v1165, 0
      %v1215 = vsel %vm1210, %v1173, 0
      %v1218 = vsel %vm1210, %v1181, 0
      %v1221 = vsel %vm1210, %v1189, 0
      %v1224 = vsel %vm1210, %v1197, 0
      %1226 = vmatprep.subr.bf16.mxu0 0
      %1227 = vmatpush1.bf16.msra.mxu0 0
      %1228 = vmatprep.subr.bf16.mxu0 0
      %1229 = vmatpush1.bf16.msra.mxu0 0
      %1230 = vmatprep.subr.bf16.mxu0 0
      %1231 = vmatpush1.bf16.msra.mxu0 0
      %1232 = vmatprep.subr.bf16.mxu0 0
      %1233 = vmatpush1.bf16.msra.mxu0 0
      %1234 = vmatprep.subr.bf16.mxu0 0
      %1235 = vmatpush1.bf16.msra.mxu0 0
      %1236 = vmatprep.subr.bf16.mxu0 0
      %1237 = vmatpush1.bf16.msra.mxu0 0
      %1238 = vmatprep.subr.bf16.mxu0 0
      %1239 = vmatpush1.bf16.msra.mxu0 %v1207
      %1240 = vmatprep.subr.bf16.mxu0 0
      %1241 = vmatpush1.bf16.msra.mxu0 %v1206
      %1242 = vmatprep.subr.bf16.mxu0 0
      %1243 = vmatpush2.bf16.msra.mxu0 0
      %1244 = vmatprep.subr.bf16.mxu0 0
      %1245 = vmatpush2.bf16.msra.mxu0 0
      %1246 = vmatprep.subr.bf16.mxu0 0
      %1247 = vmatpush2.bf16.msra.mxu0 0
      %1248 = vmatprep.subr.bf16.mxu0 0
      %1249 = vmatpush2.bf16.msra.mxu0 0
      %1250 = vmatprep.subr.bf16.mxu0 0
      %1251 = vmatpush2.bf16.msra.mxu0 0
      %1252 = vmatprep.subr.bf16.mxu0 0
      %1253 = vmatpush2.bf16.msra.mxu0 0
      %1254 = vmatprep.subr.bf16.mxu0 0
      %1255 = vmatpush2.bf16.msra.mxu0 0
      %1256 = vmatprep.subr.bf16.mxu0 0
      %1257 = vmatpush2.bf16.msra.mxu0 0
      %1258 = vmatprep.mubr.bf16.mxu0 0
      %1259 = vmatmul.mubr.bf16.gmra.mxu0 %v1212
      %v1260 = vpop.f32.mrf.mxu0
      %v1261 = vadd.f32 0.0, %v1260
      %v1262 = vpop.f32.mrf.mxu0
      %v1263 = vpop.f32.mrf.mxu0
      %v1264 = vadd.f32 0.0, %v1263
      %v1265 = vpop.f32.mrf.mxu0
      %1266 = vmatprep.mubr.bf16.mxu0 0
      %1267 = vmatmul.mubr.bf16.gmra.mxu0 %v1215
      %v1268 = vpop.f32.mrf.mxu0
      %v1269 = vadd.f32 0.0, %v1268
      %v1270 = vpop.f32.mrf.mxu0
      %v1271 = vpop.f32.mrf.mxu0
      %v1272 = vadd.f32 0.0, %v1271
      %v1273 = vpop.f32.mrf.mxu0
      %1274 = vmatprep.mubr.bf16.mxu0 0
      %1275 = vmatmul.mubr.bf16.gmra.mxu0 %v1218
      %v1276 = vpop.f32.mrf.mxu0
      %v1277 = vadd.f32 0.0, %v1276
      %v1278 = vpop.f32.mrf.mxu0
      %v1279 = vpop.f32.mrf.mxu0
      %v1280 = vadd.f32 0.0, %v1279
      %v1281 = vpop.f32.mrf.mxu0
      %1282 = vmatprep.mubr.bf16.mxu0 0
      %1283 = vmatmul.mubr.bf16.gmra.mxu0 %v1221
      %v1284 = vpop.f32.mrf.mxu0
      %v1285 = vadd.f32 0.0, %v1284
      %v1286 = vpop.f32.mrf.mxu0
      %v1287 = vpop.f32.mrf.mxu0
      %v1288 = vadd.f32 0.0, %v1287
      %v1289 = vpop.f32.mrf.mxu0
      %1290 = vmatprep.mubr.bf16.mxu0 0
      %1291 = vmatmul.mubr.bf16.gmra.mxu0 %v1224
      %v1292 = vpop.f32.mrf.mxu0
      %v1293 = vadd.f32 0.0, %v1292
      %v1294 = vpop.f32.mrf.mxu0
      %v1295 = vpop.f32.mrf.mxu0
      %v1296 = vadd.f32 0.0, %v1295
      %v1297 = vpop.f32.mrf.mxu0
      %1298 = vdwg.mxu0
      %v1309 = vunpack.c.l.b16 %v379
      %v1310 = vunpack.c.l.b16 %v380
      %v1311 = vunpack.c.l.b16 %v381
      %v1312 = vunpack.c.l.b16 %v382
      %v1313 = vunpack.c.l.b16 %v383
      %v1314 = vunpack.c.l.b16 %v384
      %v1315 = vunpack.c.l.b16 %v385
      %v1316 = vunpack.c.l.b16 %v386
      %v1317 = vunpack.c.l.b16 %v387
      %v1318 = vunpack.c.l.b16 %v388
      %v1319 = vpack.c.b16 %v1310, %v1309
      %v1320 = vpack.c.b16 %v1312, %v1311
      %v1321 = vpack.c.b16 %v1314, %v1313
      %v1322 = vpack.c.b16 %v1316, %v1315
      %v1323 = vpack.c.b16 %v1318, %v1317
      %v1328 = vunpack.c.l.b16 %v389
      %v1329 = vunpack.c.l.b16 %v390
      %v1330 = vunpack.c.l.b16 %v391
      %v1331 = vunpack.c.l.b16 %v392
      %v1332 = vpack.c.b16 %v1329, %v1328
      %v1333 = vpack.c.b16 %v1331, %v1330
      %v1337 = vsel %vm1210, %v1319, 0
      %v1340 = vsel %vm1210, %v1320, 0
      %v1343 = vsel %vm1210, %v1321, 0
      %v1346 = vsel %vm1210, %v1322, 0
      %v1349 = vsel %vm1210, %v1323, 0
      %1351 = vmatprep.subr.bf16.mxu0 0
      %1352 = vmatpush1.bf16.msra.mxu0 0
      %1353 = vmatprep.subr.bf16.mxu0 0
      %1354 = vmatpush1.bf16.msra.mxu0 0
      %1355 = vmatprep.subr.bf16.mxu0 0
      %1356 = vmatpush1.bf16.msra.mxu0 0
      %1357 = vmatprep.subr.bf16.mxu0 0
      %1358 = vmatpush1.bf16.msra.mxu0 0
      %1359 = vmatprep.subr.bf16.mxu0 0
      %1360 = vmatpush1.bf16.msra.mxu0 0
      %1361 = vmatprep.subr.bf16.mxu0 0
      %1362 = vmatpush1.bf16.msra.mxu0 0
      %1363 = vmatprep.subr.bf16.mxu0 0
      %1364 = vmatpush1.bf16.msra.mxu0 %v1333
      %1365 = vmatprep.subr.bf16.mxu0 0
      %1366 = vmatpush1.bf16.msra.mxu0 %v1332
      %1367 = vmatprep.subr.bf16.mxu0 0
      %1368 = vmatpush2.bf16.msra.mxu0 0
      %1369 = vmatprep.subr.bf16.mxu0 0
      %1370 = vmatpush2.bf16.msra.mxu0 0
      %1371 = vmatprep.subr.bf16.mxu0 0
      %1372 = vmatpush2.bf16.msra.mxu0 0
      %1373 = vmatprep.subr.bf16.mxu0 0
      %1374 = vmatpush2.bf16.msra.mxu0 0
      %1375 = vmatprep.subr.bf16.mxu0 0
      %1376 = vmatpush2.bf16.msra.mxu0 0
      %1377 = vmatprep.subr.bf16.mxu0 0
      %1378 = vmatpush2.bf16.msra.mxu0 0
      %1379 = vmatprep.subr.bf16.mxu0 0
      %1380 = vmatpush2.bf16.msra.mxu0 0
      %1381 = vmatprep.subr.bf16.mxu0 0
      %1382 = vmatpush2.bf16.msra.mxu0 0
      %1383 = vmatprep.mubr.bf16.mxu0 0
      %1384 = vmatmul.mubr.bf16.gmra.mxu0 %v1337
      %v1385 = vpop.f32.mrf.mxu0
      %v1386 = vadd.f32 %v1261, %v1385
      %v1387 = vpop.f32.mrf.mxu0
      %v1388 = vpop.f32.mrf.mxu0
      %v1389 = vadd.f32 %v1264, %v1388
      %v1390 = vpop.f32.mrf.mxu0
      %1391 = vmatprep.mubr.bf16.mxu0 0
      %1392 = vmatmul.mubr.bf16.gmra.mxu0 %v1340
      %v1393 = vpop.f32.mrf.mxu0
      %v1394 = vadd.f32 %v1269, %v1393
      %v1395 = vpop.f32.mrf.mxu0
      %v1396 = vpop.f32.mrf.mxu0
      %v1397 = vadd.f32 %v1272, %v1396
      %v1398 = vpop.f32.mrf.mxu0
      %1399 = vmatprep.mubr.bf16.mxu0 0
      %1400 = vmatmul.mubr.bf16.gmra.mxu0 %v1343
      %v1401 = vpop.f32.mrf.mxu0
      %v1402 = vadd.f32 %v1277, %v1401
      %v1403 = vpop.f32.mrf.mxu0
      %v1404 = vpop.f32.mrf.mxu0
      %v1405 = vadd.f32 %v1280, %v1404
      %v1406 = vpop.f32.mrf.mxu0
      %1407 = vmatprep.mubr.bf16.mxu0 0
      %1408 = vmatmul.mubr.bf16.gmra.mxu0 %v1346
      %v1409 = vpop.f32.mrf.mxu0
      %v1410 = vadd.f32 %v1285, %v1409
      %v1411 = vpop.f32.mrf.mxu0
      %v1412 = vpop.f32.mrf.mxu0
      %v1413 = vadd.f32 %v1288, %v1412
      %v1414 = vpop.f32.mrf.mxu0
      %1415 = vmatprep.mubr.bf16.mxu0 0
      %1416 = vmatmul.mubr.bf16.gmra.mxu0 %v1349
      %v1417 = vpop.f32.mrf.mxu0
      %v1418 = vadd.f32 %v1293, %v1417
      %v1419 = vpop.f32.mrf.mxu0
      %v1420 = vpop.f32.mrf.mxu0
      %v1421 = vadd.f32 %v1296, %v1420
      %v1422 = vpop.f32.mrf.mxu0
      %1423 = vdwg.mxu0
      %v1424 = vld [vmem:[%s323] sm:$0xe]
      %s1425 = scalar_lea.vmem %s2, 24
      %v1426 = vld [vmem:[%s1425] sm:$0xf]
      %v1427 = vld [vmem:[%s1425 + $0x4] sm:$0xf]
      %v1428 = vld [vmem:[%s1425 + $0x8] sm:$0xf]
      %v1430 = vunpack.c.l.b16 %v1424
      %v1431 = vpack.c.b16 %v436, %v1430
      %vm1432 = vcmask 1046528
      %v1433 = vrot.slane %v1431, 1
      %v1434 = vrot.slane %v473, 1
      %v1435 = vsel %vm1432, %v1433, %v1434
      %v1436 = vrot.slane %v474, 1
      %v1437 = vsel %vm1432, %v1434, %v1436
      %v1438 = vrot.slane %v475, 1
      %v1439 = vsel %vm1432, %v1436, %v1438
      %v1440 = vrot.slane %v476, 1
      %v1441 = vsel %vm1432, %v1438, %v1440
      %v1442 = vrot.slane %v477, 1
      %v1443 = vsel %vm1432, %v1440, %v1442
      %v1444 = vrot.slane %v478, 1
      %v1445 = vsel %vm1432, %v1442, %v1444
      %v1446 = vrot.slane %v479, 1
      %v1447 = vsel %vm1432, %v1444, %v1446
      %v1448 = vrot.slane %v480, 1
      %v1449 = vsel %vm1432, %v1446, %v1448
      %v1450 = vrot.slane %v481, 1
      %v1451 = vsel %vm1432, %v1448, %v1450
      %v1452 = vrot.slane %v482, 1
      %v1453 = vsel %vm1432, %v1450, %v1452
      %v1454 = vrot.slane %v483, 1
      %v1455 = vsel %vm1432, %v1452, %v1454
      %v1456 = vrot.slane %v484, 1
      %v1457 = vsel %vm1432, %v1454, %v1456
      %v1458 = vrot.slane %v485, 1
      %v1459 = vsel %vm1432, %v1456, %v1458
      %v1460 = vrot.slane %v486, 1
      %v1461 = vsel %vm1432, %v1458, %v1460
      %v1462 = vrot.slane %v487, 1
      %v1463 = vsel %vm1432, %v1460, %v1462
      %v1464 = vrot.slane %v488, 1
      %v1465 = vsel %vm1432, %v1462, %v1464
      %v1466 = vrot.slane %v489, 1
      %v1467 = vsel %vm1432, %v1464, %v1466
      %v1468 = vrot.slane %v490, 1
      %v1469 = vsel %vm1432, %v1466, %v1468
      %v1473 = vunpack.c.l.b16 %v1426
      %v1474 = vunpack.c.l.b16 %v1427
      %v1475 = vunpack.c.l.b16 %v1428
      %v1476 = vpack.c.b16 %v1474, %v1473
      %v1477 = vpack.c.b16 %v1475, %v1475
      %v1480 = vsel %vm649, %v1435, 0
      %v1483 = vsel %vm649, %v1437, 0
      %v1486 = vsel %vm649, %v1439, 0
      %v1489 = vsel %vm649, %v1441, 0
      %v1492 = vsel %vm649, %v1443, 0
      %v1495 = vsel %vm649, %v1445, 0
      %v1498 = vsel %vm649, %v1447, 0
      %v1501 = vsel %vm649, %v1449, 0
      %v1504 = vsel %vm649, %v1451, 0
      %v1507 = vsel %vm649, %v1453, 0
      %v1510 = vsel %vm649, %v1455, 0
      %v1513 = vsel %vm649, %v1457, 0
      %v1516 = vsel %vm649, %v1459, 0
      %v1519 = vsel %vm649, %v1461, 0
      %v1522 = vsel %vm649, %v1463, 0
      %v1525 = vsel %vm649, %v1465, 0
      %v1528 = vsel %vm649, %v1467, 0
      %v1531 = vsel %vm649, %v1469, 0
      %v1534 = vsel %vm704, %v1477, 0
      %1536 = vmatprep.subr.bf16.mxu0 0
      %1537 = vmatpush1.bf16.msra.mxu0 0
      %1538 = vmatprep.subr.bf16.mxu0 0
      %1539 = vmatpush1.bf16.msra.mxu0 0
      %1540 = vmatprep.subr.bf16.mxu0 0
      %1541 = vmatpush1.bf16.msra.mxu0 0
      %1542 = vmatprep.subr.bf16.mxu0 0
      %1543 = vmatpush1.bf16.msra.mxu0 0
      %1544 = vmatprep.subr.bf16.mxu0 0
      %1545 = vmatpush1.bf16.msra.mxu0 0
      %1546 = vmatprep.subr.bf16.mxu0 0
      %1547 = vmatpush1.bf16.msra.mxu0 0
      %1548 = vmatprep.subr.bf16.mxu0 0
      %1549 = vmatpush1.bf16.msra.mxu0 %v1534
      %1550 = vmatprep.subr.bf16.mxu0 0
      %1551 = vmatpush1.bf16.msra.mxu0 %v1476
      %1552 = vmatprep.subr.bf16.mxu0 0
      %1553 = vmatpush2.bf16.msra.mxu0 0
      %1554 = vmatprep.subr.bf16.mxu0 0
      %1555 = vmatpush2.bf16.msra.mxu0 0
      %1556 = vmatprep.subr.bf16.mxu0 0
      %1557 = vmatpush2.bf16.msra.mxu0 0
      %1558 = vmatprep.subr.bf16.mxu0 0
      %1559 = vmatpush2.bf16.msra.mxu0 0
      %1560 = vmatprep.subr.bf16.mxu0 0
      %1561 = vmatpush2.bf16.msra.mxu0 0
      %1562 = vmatprep.subr.bf16.mxu0 0
      %1563 = vmatpush2.bf16.msra.mxu0 0
      %1564 = vmatprep.subr.bf16.mxu0 0
      %1565 = vmatpush2.bf16.msra.mxu0 0
      %1566 = vmatprep.subr.bf16.mxu0 0
      %1567 = vmatpush2.bf16.msra.mxu0 0
      %1568 = vmatprep.mubr.bf16.mxu0 0
      %1569 = vmatmul.mubr.bf16.gmra.mxu0 %v1480
      %v1570 = vpop.f32.mrf.mxu0
      %v1571 = vadd.f32 0.0, %v1570
      %v1572 = vpop.f32.mrf.mxu0
      %v1573 = vpop.f32.mrf.mxu0
      %v1574 = vadd.f32 0.0, %v1573
      %v1575 = vpop.f32.mrf.mxu0
      %1576 = vmatprep.mubr.bf16.mxu0 0
      %1577 = vmatmul.mubr.bf16.gmra.mxu0 %v1483
      %v1578 = vpop.f32.mrf.mxu0
      %v1579 = vadd.f32 0.0, %v1578
      %v1580 = vpop.f32.mrf.mxu0
      %v1581 = vpop.f32.mrf.mxu0
      %v1582 = vadd.f32 0.0, %v1581
      %v1583 = vpop.f32.mrf.mxu0
      %1584 = vmatprep.mubr.bf16.mxu0 0
      %1585 = vmatmul.mubr.bf16.gmra.mxu0 %v1486
      %v1586 = vpop.f32.mrf.mxu0
      %v1587 = vadd.f32 0.0, %v1586
      %v1588 = vpop.f32.mrf.mxu0
      %v1589 = vpop.f32.mrf.mxu0
      %v1590 = vadd.f32 0.0, %v1589
      %v1591 = vpop.f32.mrf.mxu0
      %1592 = vmatprep.mubr.bf16.mxu0 0
      %1593 = vmatmul.mubr.bf16.gmra.mxu0 %v1489
      %v1594 = vpop.f32.mrf.mxu0
      %v1595 = vadd.f32 0.0, %v1594
      %v1596 = vpop.f32.mrf.mxu0
      %v1597 = vpop.f32.mrf.mxu0
      %v1598 = vadd.f32 0.0, %v1597
      %v1599 = vpop.f32.mrf.mxu0
      %1600 = vmatprep.mubr.bf16.mxu0 0
      %1601 = vmatmul.mubr.bf16.gmra.mxu0 %v1492
      %v1602 = vpop.f32.mrf.mxu0
      %v1603 = vadd.f32 0.0, %v1602
      %v1604 = vpop.f32.mrf.mxu0
      %v1605 = vpop.f32.mrf.mxu0
      %v1606 = vadd.f32 0.0, %v1605
      %v1607 = vpop.f32.mrf.mxu0
      %1608 = vmatprep.mubr.bf16.mxu0 0
      %1609 = vmatmul.mubr.bf16.gmra.mxu0 %v1495
      %v1610 = vpop.f32.mrf.mxu0
      %v1611 = vadd.f32 0.0, %v1610
      %v1612 = vpop.f32.mrf.mxu0
      %v1613 = vpop.f32.mrf.mxu0
      %v1614 = vadd.f32 0.0, %v1613
      %v1615 = vpop.f32.mrf.mxu0
      %1616 = vmatprep.mubr.bf16.mxu0 0
      %1617 = vmatmul.mubr.bf16.gmra.mxu0 %v1498
      %v1618 = vpop.f32.mrf.mxu0
      %v1619 = vadd.f32 0.0, %v1618
      %v1620 = vpop.f32.mrf.mxu0
      %v1621 = vpop.f32.mrf.mxu0
      %v1622 = vadd.f32 0.0, %v1621
      %v1623 = vpop.f32.mrf.mxu0
      %1624 = vmatprep.mubr.bf16.mxu0 0
      %1625 = vmatmul.mubr.bf16.gmra.mxu0 %v1501
      %v1626 = vpop.f32.mrf.mxu0
      %v1627 = vadd.f32 0.0, %v1626
      %v1628 = vpop.f32.mrf.mxu0
      %v1629 = vpop.f32.mrf.mxu0
      %v1630 = vadd.f32 0.0, %v1629
      %v1631 = vpop.f32.mrf.mxu0
      %1632 = vmatprep.mubr.bf16.mxu0 0
      %1633 = vmatmul.mubr.bf16.gmra.mxu0 %v1504
      %v1634 = vpop.f32.mrf.mxu0
      %v1635 = vadd.f32 0.0, %v1634
      %v1636 = vpop.f32.mrf.mxu0
      %v1637 = vpop.f32.mrf.mxu0
      %v1638 = vadd.f32 0.0, %v1637
      %v1639 = vpop.f32.mrf.mxu0
      %1640 = vmatprep.mubr.bf16.mxu0 0
      %1641 = vmatmul.mubr.bf16.gmra.mxu0 %v1507
      %v1642 = vpop.f32.mrf.mxu0
      %v1643 = vadd.f32 0.0, %v1642
      %v1644 = vpop.f32.mrf.mxu0
      %v1645 = vpop.f32.mrf.mxu0
      %v1646 = vadd.f32 0.0, %v1645
      %v1647 = vpop.f32.mrf.mxu0
      %1648 = vmatprep.mubr.bf16.mxu0 0
      %1649 = vmatmul.mubr.bf16.gmra.mxu0 %v1510
      %v1650 = vpop.f32.mrf.mxu0
      %v1651 = vadd.f32 0.0, %v1650
      %v1652 = vpop.f32.mrf.mxu0
      %v1653 = vpop.f32.mrf.mxu0
      %v1654 = vadd.f32 0.0, %v1653
      %v1655 = vpop.f32.mrf.mxu0
      %1656 = vmatprep.mubr.bf16.mxu0 0
      %1657 = vmatmul.mubr.bf16.gmra.mxu0 %v1513
      %v1658 = vpop.f32.mrf.mxu0
      %v1659 = vadd.f32 0.0, %v1658
      %v1660 = vpop.f32.mrf.mxu0
      %v1661 = vpop.f32.mrf.mxu0
      %v1662 = vadd.f32 0.0, %v1661
      %v1663 = vpop.f32.mrf.mxu0
      %1664 = vmatprep.mubr.bf16.mxu0 0
      %1665 = vmatmul.mubr.bf16.gmra.mxu0 %v1516
      %v1666 = vpop.f32.mrf.mxu0
      %v1667 = vadd.f32 0.0, %v1666
      %v1668 = vpop.f32.mrf.mxu0
      %v1669 = vpop.f32.mrf.mxu0
      %v1670 = vadd.f32 0.0, %v1669
      %v1671 = vpop.f32.mrf.mxu0
      %1672 = vmatprep.mubr.bf16.mxu0 0
      %1673 = vmatmul.mubr.bf16.gmra.mxu0 %v1519
      %v1674 = vpop.f32.mrf.mxu0
      %v1675 = vadd.f32 0.0, %v1674
      %v1676 = vpop.f32.mrf.mxu0
      %v1677 = vpop.f32.mrf.mxu0
      %v1678 = vadd.f32 0.0, %v1677
      %v1679 = vpop.f32.mrf.mxu0
      %1680 = vmatprep.mubr.bf16.mxu0 0
      %1681 = vmatmul.mubr.bf16.gmra.mxu0 %v1522
      %v1682 = vpop.f32.mrf.mxu0
      %v1683 = vadd.f32 0.0, %v1682
      %v1684 = vpop.f32.mrf.mxu0
      %v1685 = vpop.f32.mrf.mxu0
      %v1686 = vadd.f32 0.0, %v1685
      %v1687 = vpop.f32.mrf.mxu0
      %1688 = vmatprep.mubr.bf16.mxu0 0
      %1689 = vmatmul.mubr.bf16.gmra.mxu0 %v1525
      %v1690 = vpop.f32.mrf.mxu0
      %v1691 = vadd.f32 0.0, %v1690
      %v1692 = vpop.f32.mrf.mxu0
      %v1693 = vpop.f32.mrf.mxu0
      %v1694 = vadd.f32 0.0, %v1693
      %v1695 = vpop.f32.mrf.mxu0
      %1696 = vmatprep.mubr.bf16.mxu0 0
      %1697 = vmatmul.mubr.bf16.gmra.mxu0 %v1528
      %v1698 = vpop.f32.mrf.mxu0
      %v1699 = vadd.f32 0.0, %v1698
      %v1700 = vpop.f32.mrf.mxu0
      %v1701 = vpop.f32.mrf.mxu0
      %v1702 = vadd.f32 0.0, %v1701
      %v1703 = vpop.f32.mrf.mxu0
      %1704 = vmatprep.mubr.bf16.mxu0 0
      %1705 = vmatmul.mubr.bf16.gmra.mxu0 %v1531
      %v1706 = vpop.f32.mrf.mxu0
      %v1707 = vadd.f32 0.0, %v1706
      %v1708 = vpop.f32.mrf.mxu0
      %v1709 = vpop.f32.mrf.mxu0
      %v1710 = vadd.f32 0.0, %v1709
      %v1711 = vpop.f32.mrf.mxu0
      %1712 = vdwg.mxu0
      %v1713 = vadd.f32 %v968, %v1571
      %v1714 = vadd.f32 %v971, %v1574
      %v1715 = vadd.f32 %v976, %v1579
      %v1716 = vadd.f32 %v979, %v1582
      %v1717 = vadd.f32 %v984, %v1587
      %v1718 = vadd.f32 %v987, %v1590
      %v1719 = vadd.f32 %v992, %v1595
      %v1720 = vadd.f32 %v995, %v1598
      %v1721 = vadd.f32 %v1000, %v1603
      %v1722 = vadd.f32 %v1003, %v1606
      %v1723 = vadd.f32 %v1008, %v1611
      %v1724 = vadd.f32 %v1011, %v1614
      %v1725 = vadd.f32 %v1016, %v1619
      %v1726 = vadd.f32 %v1019, %v1622
      %v1727 = vadd.f32 %v1024, %v1627
      %v1728 = vadd.f32 %v1027, %v1630
      %v1729 = vadd.f32 %v1032, %v1635
      %v1730 = vadd.f32 %v1035, %v1638
      %v1731 = vadd.f32 %v1040, %v1643
      %v1732 = vadd.f32 %v1043, %v1646
      %v1733 = vadd.f32 %v1048, %v1651
      %v1734 = vadd.f32 %v1051, %v1654
      %v1735 = vadd.f32 %v1056, %v1659
      %v1736 = vadd.f32 %v1059, %v1662
      %v1737 = vadd.f32 %v1064, %v1667
      %v1738 = vadd.f32 %v1067, %v1670
      %v1739 = vadd.f32 %v1072, %v1675
      %v1740 = vadd.f32 %v1075, %v1678
      %v1741 = vadd.f32 %v1080, %v1683
      %v1742 = vadd.f32 %v1083, %v1686
      %v1743 = vadd.f32 %v1088, %v1691
      %v1744 = vadd.f32 %v1091, %v1694
      %v1745 = vadd.f32 %v1096, %v1699
      %v1746 = vadd.f32 %v1099, %v1702
      %v1747 = vadd.f32 %v1104, %v1707
      %v1748 = vadd.f32 %v1107, %v1710
      %v1749 = vld [vmem:[%s328] sm:$0xe]
      %s1750 = scalar_lea.vmem %s3, 32
      %v1751 = vld [vmem:[%s1750] sm:$0xf]
      %v1752 = vld [vmem:[%s1750 + $0x4] sm:$0xf]
      %v1753 = vld [vmem:[%s1750 + $0x8] sm:$0xf]
      %v1754 = vld [vmem:[%s1750 + $0xc] sm:$0xf]
      %v1756 = vunpack.c.l.b16 %v1749
      %v1757 = vpack.c.b16 %v1138, %v1756
      %v1758 = vrot.slane %v1757, 1
      %v1759 = vrot.slane %v1149, 1
      %v1760 = vsel %vm1432, %v1758, %v1759
      %v1761 = vrot.slane %v1150, 1
      %v1762 = vsel %vm1432, %v1759, %v1761
      %v1763 = vrot.slane %v1151, 1
      %v1764 = vsel %vm1432, %v1761, %v1763
      %v1765 = vrot.slane %v1152, 1
      %v1766 = vsel %vm1432, %v1763, %v1765
      %v1767 = vrot.slane %v1153, 1
      %v1768 = vsel %vm1432, %v1765, %v1767
      %v1773 = vunpack.c.l.b16 %v1751
      %v1774 = vunpack.c.l.b16 %v1752
      %v1775 = vunpack.c.l.b16 %v1753
      %v1776 = vunpack.c.l.b16 %v1754
      %v1777 = vpack.c.b16 %v1774, %v1773
      %v1778 = vpack.c.b16 %v1776, %v1775
      %v1782 = vsel %vm1210, %v1760, 0
      %v1785 = vsel %vm1210, %v1762, 0
      %v1788 = vsel %vm1210, %v1764, 0
      %v1791 = vsel %vm1210, %v1766, 0
      %v1794 = vsel %vm1210, %v1768, 0
      %1796 = vmatprep.subr.bf16.mxu0 0
      %1797 = vmatpush1.bf16.msra.mxu0 0
      %1798 = vmatprep.subr.bf16.mxu0 0
      %1799 = vmatpush1.bf16.msra.mxu0 0
      %1800 = vmatprep.subr.bf16.mxu0 0
      %1801 = vmatpush1.bf16.msra.mxu0 0
      %1802 = vmatprep.subr.bf16.mxu0 0
      %1803 = vmatpush1.bf16.msra.mxu0 0
      %1804 = vmatprep.subr.bf16.mxu0 0
      %1805 = vmatpush1.bf16.msra.mxu0 0
      %1806 = vmatprep.subr.bf16.mxu0 0
      %1807 = vmatpush1.bf16.msra.mxu0 0
      %1808 = vmatprep.subr.bf16.mxu0 0
      %1809 = vmatpush1.bf16.msra.mxu0 %v1778
      %1810 = vmatprep.subr.bf16.mxu0 0
      %1811 = vmatpush1.bf16.msra.mxu0 %v1777
      %1812 = vmatprep.subr.bf16.mxu0 0
      %1813 = vmatpush2.bf16.msra.mxu0 0
      %1814 = vmatprep.subr.bf16.mxu0 0
      %1815 = vmatpush2.bf16.msra.mxu0 0
      %1816 = vmatprep.subr.bf16.mxu0 0
      %1817 = vmatpush2.bf16.msra.mxu0 0
      %1818 = vmatprep.subr.bf16.mxu0 0
      %1819 = vmatpush2.bf16.msra.mxu0 0
      %1820 = vmatprep.subr.bf16.mxu0 0
      %1821 = vmatpush2.bf16.msra.mxu0 0
      %1822 = vmatprep.subr.bf16.mxu0 0
      %1823 = vmatpush2.bf16.msra.mxu0 0
      %1824 = vmatprep.subr.bf16.mxu0 0
      %1825 = vmatpush2.bf16.msra.mxu0 0
      %1826 = vmatprep.subr.bf16.mxu0 0
      %1827 = vmatpush2.bf16.msra.mxu0 0
      %1828 = vmatprep.mubr.bf16.mxu0 0
      %1829 = vmatmul.mubr.bf16.gmra.mxu0 %v1782
      %v1830 = vpop.f32.mrf.mxu0
      %v1831 = vadd.f32 0.0, %v1830
      %v1832 = vpop.f32.mrf.mxu0
      %v1833 = vpop.f32.mrf.mxu0
      %v1834 = vadd.f32 0.0, %v1833
      %v1835 = vpop.f32.mrf.mxu0
      %1836 = vmatprep.mubr.bf16.mxu0 0
      %1837 = vmatmul.mubr.bf16.gmra.mxu0 %v1785
      %v1838 = vpop.f32.mrf.mxu0
      %v1839 = vadd.f32 0.0, %v1838
      %v1840 = vpop.f32.mrf.mxu0
      %v1841 = vpop.f32.mrf.mxu0
      %v1842 = vadd.f32 0.0, %v1841
      %v1843 = vpop.f32.mrf.mxu0
      %1844 = vmatprep.mubr.bf16.mxu0 0
      %1845 = vmatmul.mubr.bf16.gmra.mxu0 %v1788
      %v1846 = vpop.f32.mrf.mxu0
      %v1847 = vadd.f32 0.0, %v1846
      %v1848 = vpop.f32.mrf.mxu0
      %v1849 = vpop.f32.mrf.mxu0
      %v1850 = vadd.f32 0.0, %v1849
      %v1851 = vpop.f32.mrf.mxu0
      %1852 = vmatprep.mubr.bf16.mxu0 0
      %1853 = vmatmul.mubr.bf16.gmra.mxu0 %v1791
      %v1854 = vpop.f32.mrf.mxu0
      %v1855 = vadd.f32 0.0, %v1854
      %v1856 = vpop.f32.mrf.mxu0
      %v1857 = vpop.f32.mrf.mxu0
      %v1858 = vadd.f32 0.0, %v1857
      %v1859 = vpop.f32.mrf.mxu0
      %1860 = vmatprep.mubr.bf16.mxu0 0
      %1861 = vmatmul.mubr.bf16.gmra.mxu0 %v1794
      %v1862 = vpop.f32.mrf.mxu0
      %v1863 = vadd.f32 0.0, %v1862
      %v1864 = vpop.f32.mrf.mxu0
      %v1865 = vpop.f32.mrf.mxu0
      %v1866 = vadd.f32 0.0, %v1865
      %v1867 = vpop.f32.mrf.mxu0
      %1868 = vdwg.mxu0
      %v1869 = vadd.f32 %v1386, %v1831
      %v1870 = vadd.f32 %v1389, %v1834
      %v1871 = vadd.f32 %v1394, %v1839
      %v1872 = vadd.f32 %v1397, %v1842
      %v1873 = vadd.f32 %v1402, %v1847
      %v1874 = vadd.f32 %v1405, %v1850
      %v1875 = vadd.f32 %v1410, %v1855
      %v1876 = vadd.f32 %v1413, %v1858
      %v1877 = vadd.f32 %v1418, %v1863
      %v1878 = vadd.f32 %v1421, %v1866
      %v1879 = vld [vmem:[%s323 + $0x8] sm:$0xe]
      %v1880 = vld [vmem:[%s323 + $0xc] sm:$0xf]
      %v1881 = vld [vmem:[%s323 + $0x10] sm:$0xf]
      %v1882 = vld [vmem:[%s323 + $0x14] sm:$0xf]
      %v1883 = vld [vmem:[%s323 + $0x18] sm:$0xf]
      %v1884 = vld [vmem:[%s323 + $0x1c] sm:$0xf]
      %v1885 = vld [vmem:[%s323 + $0x20] sm:$0xf]
      %v1886 = vld [vmem:[%s323 + $0x24] sm:$0xf]
      %v1887 = vld [vmem:[%s323 + $0x28] sm:$0xf]
      %v1888 = vld [vmem:[%s323 + $0x2c] sm:$0xf]
      %v1889 = vld [vmem:[%s323 + $0x30] sm:$0xf]
      %v1890 = vld [vmem:[%s323 + $0x34] sm:$0xf]
      %v1891 = vld [vmem:[%s323 + $0x38] sm:$0xf]
      %v1892 = vld [vmem:[%s323 + $0x3c] sm:$0xf]
      %v1893 = vld [vmem:[%s323 + $0x40] sm:$0xf]
      %v1894 = vld [vmem:[%s323 + $0x44] sm:$0xf]
      %v1895 = vld [vmem:[%s323 + $0x48] sm:$0xf]
      %v1896 = vld [vmem:[%s323 + $0x4c] sm:$0xf]
      %v1897 = vld [vmem:[%s323 + $0x50] sm:$0xf]
      %v1898 = vld [vmem:[%s323 + $0x54] sm:$0xf]
      %v1899 = vld [vmem:[%s323 + $0x58] sm:$0xf]
      %v1900 = vld [vmem:[%s323 + $0x5c] sm:$0xf]
      %v1901 = vld [vmem:[%s323 + $0x60] sm:$0xf]
      %v1902 = vld [vmem:[%s323 + $0x64] sm:$0xf]
      %v1903 = vld [vmem:[%s323 + $0x68] sm:$0xf]
      %v1904 = vld [vmem:[%s323 + $0x6c] sm:$0xf]
      %v1905 = vld [vmem:[%s323 + $0x70] sm:$0xf]
      %v1906 = vld [vmem:[%s323 + $0x74] sm:$0xf]
      %v1907 = vld [vmem:[%s323 + $0x78] sm:$0xf]
      %v1908 = vld [vmem:[%s323 + $0x7c] sm:$0xf]
      %v1909 = vld [vmem:[%s323 + $0x80] sm:$0xf]
      %v1910 = vld [vmem:[%s323 + $0x84] sm:$0xf]
      %v1911 = vld [vmem:[%s323 + $0x88] sm:$0xf]
      %v1912 = vld [vmem:[%s323 + $0x8c] sm:$0xf]
      %v1913 = vld [vmem:[%s323 + $0x90] sm:$0xf]
      %v1914 = vld [vmem:[%s323 + $0x94] sm:$0xf]
      %v1915 = vld [vmem:[%s323 + $0x98] sm:$0x1]
      %s1916 = scalar_lea.vmem %s2, 36
      %v1917 = vld [vmem:[%s1916] sm:$0xf]
      %v1918 = vld [vmem:[%s1916 + $0x4] sm:$0xf]
      %v1919 = vld [vmem:[%s1916 + $0x8] sm:$0xf]
      %v1957 = vunpack.c.l.b16 %v1879
      %v1958 = vunpack.c.l.b16 %v1880
      %v1959 = vunpack.c.l.b16 %v1881
      %v1960 = vunpack.c.l.b16 %v1882
      %v1961 = vunpack.c.l.b16 %v1883
      %v1962 = vunpack.c.l.b16 %v1884
      %v1963 = vunpack.c.l.b16 %v1885
      %v1964 = vunpack.c.l.b16 %v1886
      %v1965 = vunpack.c.l.b16 %v1887
      %v1966 = vunpack.c.l.b16 %v1888
      %v1967 = vunpack.c.l.b16 %v1889
      %v1968 = vunpack.c.l.b16 %v1890
      %v1969 = vunpack.c.l.b16 %v1891
      %v1970 = vunpack.c.l.b16 %v1892
      %v1971 = vunpack.c.l.b16 %v1893
      %v1972 = vunpack.c.l.b16 %v1894
      %v1973 = vunpack.c.l.b16 %v1895
      %v1974 = vunpack.c.l.b16 %v1896
      %v1975 = vunpack.c.l.b16 %v1897
      %v1976 = vunpack.c.l.b16 %v1898
      %v1977 = vunpack.c.l.b16 %v1899
      %v1978 = vunpack.c.l.b16 %v1900
      %v1979 = vunpack.c.l.b16 %v1901
      %v1980 = vunpack.c.l.b16 %v1902
      %v1981 = vunpack.c.l.b16 %v1903
      %v1982 = vunpack.c.l.b16 %v1904
      %v1983 = vunpack.c.l.b16 %v1905
      %v1984 = vunpack.c.l.b16 %v1906
      %v1985 = vunpack.c.l.b16 %v1907
      %v1986 = vunpack.c.l.b16 %v1908
      %v1987 = vunpack.c.l.b16 %v1909
      %v1988 = vunpack.c.l.b16 %v1910
      %v1989 = vunpack.c.l.b16 %v1911
      %v1990 = vunpack.c.l.b16 %v1912
      %v1991 = vunpack.c.l.b16 %v1913
      %v1992 = vunpack.c.l.b16 %v1914
      %v1993 = vunpack.c.l.b16 %v1915
      %v1994 = vpack.c.b16 %v1958, %v1957
      %v1995 = vpack.c.b16 %v1960, %v1959
      %v1996 = vpack.c.b16 %v1962, %v1961
      %v1997 = vpack.c.b16 %v1964, %v1963
      %v1998 = vpack.c.b16 %v1966, %v1965
      %v1999 = vpack.c.b16 %v1968, %v1967
      %v2000 = vpack.c.b16 %v1970, %v1969
      %v2001 = vpack.c.b16 %v1972, %v1971
      %v2002 = vpack.c.b16 %v1974, %v1973
      %v2003 = vpack.c.b16 %v1976, %v1975
      %v2004 = vpack.c.b16 %v1978, %v1977
      %v2005 = vpack.c.b16 %v1980, %v1979
      %v2006 = vpack.c.b16 %v1982, %v1981
      %v2007 = vpack.c.b16 %v1984, %v1983
      %v2008 = vpack.c.b16 %v1986, %v1985
      %v2009 = vpack.c.b16 %v1988, %v1987
      %v2010 = vpack.c.b16 %v1990, %v1989
      %v2011 = vpack.c.b16 %v1992, %v1991
      %v2012 = vpack.c.b16 %v1993, %v1993
      %v2013 = vrot.slane %v1994, 1
      %v2014 = vrot.slane %v1995, 1
      %v2015 = vsel %vm1432, %v2013, %v2014
      %v2016 = vrot.slane %v1996, 1
      %v2017 = vsel %vm1432, %v2014, %v2016
      %v2018 = vrot.slane %v1997, 1
      %v2019 = vsel %vm1432, %v2016, %v2018
      %v2020 = vrot.slane %v1998, 1
      %v2021 = vsel %vm1432, %v2018, %v2020
      %v2022 = vrot.slane %v1999, 1
      %v2023 = vsel %vm1432, %v2020, %v2022
      %v2024 = vrot.slane %v2000, 1
      %v2025 = vsel %vm1432, %v2022, %v2024
      %v2026 = vrot.slane %v2001, 1
      %v2027 = vsel %vm1432, %v2024, %v2026
      %v2028 = vrot.slane %v2002, 1
      %v2029 = vsel %vm1432, %v2026, %v2028
      %v2030 = vrot.slane %v2003, 1
      %v2031 = vsel %vm1432, %v2028, %v2030
      %v2032 = vrot.slane %v2004, 1
      %v2033 = vsel %vm1432, %v2030, %v2032
      %v2034 = vrot.slane %v2005, 1
      %v2035 = vsel %vm1432, %v2032, %v2034
      %v2036 = vrot.slane %v2006, 1
      %v2037 = vsel %vm1432, %v2034, %v2036
      %v2038 = vrot.slane %v2007, 1
      %v2039 = vsel %vm1432, %v2036, %v2038
      %v2040 = vrot.slane %v2008, 1
      %v2041 = vsel %vm1432, %v2038, %v2040
      %v2042 = vrot.slane %v2009, 1
      %v2043 = vsel %vm1432, %v2040, %v2042
      %v2044 = vrot.slane %v2010, 1
      %v2045 = vsel %vm1432, %v2042, %v2044
      %v2046 = vrot.slane %v2011, 1
      %v2047 = vsel %vm1432, %v2044, %v2046
      %v2048 = vrot.slane %v2012, 1
      %v2049 = vsel %vm1432, %v2046, %v2048
      %v2053 = vunpack.c.l.b16 %v1917
      %v2054 = vunpack.c.l.b16 %v1918
      %v2055 = vunpack.c.l.b16 %v1919
      %v2056 = vpack.c.b16 %v2054, %v2053
      %v2057 = vpack.c.b16 %v2055, %v2055
      %v2060 = vsel %vm649, %v2015, 0
      %v2063 = vsel %vm649, %v2017, 0
      %v2066 = vsel %vm649, %v2019, 0
      %v2069 = vsel %vm649, %v2021, 0
      %v2072 = vsel %vm649, %v2023, 0
      %v2075 = vsel %vm649, %v2025, 0
      %v2078 = vsel %vm649, %v2027, 0
      %v2081 = vsel %vm649, %v2029, 0
      %v2084 = vsel %vm649, %v2031, 0
      %v2087 = vsel %vm649, %v2033, 0
      %v2090 = vsel %vm649, %v2035, 0
      %v2093 = vsel %vm649, %v2037, 0
      %v2096 = vsel %vm649, %v2039, 0
      %v2099 = vsel %vm649, %v2041, 0
      %v2102 = vsel %vm649, %v2043, 0
      %v2105 = vsel %vm649, %v2045, 0
      %v2108 = vsel %vm649, %v2047, 0
      %v2111 = vsel %vm649, %v2049, 0
      %v2114 = vsel %vm704, %v2057, 0
      %2116 = vmatprep.subr.bf16.mxu0 0
      %2117 = vmatpush1.bf16.msra.mxu0 0
      %2118 = vmatprep.subr.bf16.mxu0 0
      %2119 = vmatpush1.bf16.msra.mxu0 0
      %2120 = vmatprep.subr.bf16.mxu0 0
      %2121 = vmatpush1.bf16.msra.mxu0 0
      %2122 = vmatprep.subr.bf16.mxu0 0
      %2123 = vmatpush1.bf16.msra.mxu0 0
      %2124 = vmatprep.subr.bf16.mxu0 0
      %2125 = vmatpush1.bf16.msra.mxu0 0
      %2126 = vmatprep.subr.bf16.mxu0 0
      %2127 = vmatpush1.bf16.msra.mxu0 0
      %2128 = vmatprep.subr.bf16.mxu0 0
      %2129 = vmatpush1.bf16.msra.mxu0 %v2114
      %2130 = vmatprep.subr.bf16.mxu0 0
      %2131 = vmatpush1.bf16.msra.mxu0 %v2056
      %2132 = vmatprep.subr.bf16.mxu0 0
      %2133 = vmatpush2.bf16.msra.mxu0 0
      %2134 = vmatprep.subr.bf16.mxu0 0
      %2135 = vmatpush2.bf16.msra.mxu0 0
      %2136 = vmatprep.subr.bf16.mxu0 0
      %2137 = vmatpush2.bf16.msra.mxu0 0
      %2138 = vmatprep.subr.bf16.mxu0 0
      %2139 = vmatpush2.bf16.msra.mxu0 0
      %2140 = vmatprep.subr.bf16.mxu0 0
      %2141 = vmatpush2.bf16.msra.mxu0 0
      %2142 = vmatprep.subr.bf16.mxu0 0
      %2143 = vmatpush2.bf16.msra.mxu0 0
      %2144 = vmatprep.subr.bf16.mxu0 0
      %2145 = vmatpush2.bf16.msra.mxu0 0
      %2146 = vmatprep.subr.bf16.mxu0 0
      %2147 = vmatpush2.bf16.msra.mxu0 0
      %2148 = vmatprep.mubr.bf16.mxu0 0
      %2149 = vmatmul.mubr.bf16.gmra.mxu0 %v2060
      %v2150 = vpop.f32.mrf.mxu0
      %v2151 = vadd.f32 0.0, %v2150
      %v2152 = vpop.f32.mrf.mxu0
      %v2153 = vpop.f32.mrf.mxu0
      %v2154 = vadd.f32 0.0, %v2153
      %v2155 = vpop.f32.mrf.mxu0
      %2156 = vmatprep.mubr.bf16.mxu0 0
      %2157 = vmatmul.mubr.bf16.gmra.mxu0 %v2063
      %v2158 = vpop.f32.mrf.mxu0
      %v2159 = vadd.f32 0.0, %v2158
      %v2160 = vpop.f32.mrf.mxu0
      %v2161 = vpop.f32.mrf.mxu0
      %v2162 = vadd.f32 0.0, %v2161
      %v2163 = vpop.f32.mrf.mxu0
      %2164 = vmatprep.mubr.bf16.mxu0 0
      %2165 = vmatmul.mubr.bf16.gmra.mxu0 %v2066
      %v2166 = vpop.f32.mrf.mxu0
      %v2167 = vadd.f32 0.0, %v2166
      %v2168 = vpop.f32.mrf.mxu0
      %v2169 = vpop.f32.mrf.mxu0
      %v2170 = vadd.f32 0.0, %v2169
      %v2171 = vpop.f32.mrf.mxu0
      %2172 = vmatprep.mubr.bf16.mxu0 0
      %2173 = vmatmul.mubr.bf16.gmra.mxu0 %v2069
      %v2174 = vpop.f32.mrf.mxu0
      %v2175 = vadd.f32 0.0, %v2174
      %v2176 = vpop.f32.mrf.mxu0
      %v2177 = vpop.f32.mrf.mxu0
      %v2178 = vadd.f32 0.0, %v2177
      %v2179 = vpop.f32.mrf.mxu0
      %2180 = vmatprep.mubr.bf16.mxu0 0
      %2181 = vmatmul.mubr.bf16.gmra.mxu0 %v2072
      %v2182 = vpop.f32.mrf.mxu0
      %v2183 = vadd.f32 0.0, %v2182
      %v2184 = vpop.f32.mrf.mxu0
      %v2185 = vpop.f32.mrf.mxu0
      %v2186 = vadd.f32 0.0, %v2185
      %v2187 = vpop.f32.mrf.mxu0
      %2188 = vmatprep.mubr.bf16.mxu0 0
      %2189 = vmatmul.mubr.bf16.gmra.mxu0 %v2075
      %v2190 = vpop.f32.mrf.mxu0
      %v2191 = vadd.f32 0.0, %v2190
      %v2192 = vpop.f32.mrf.mxu0
      %v2193 = vpop.f32.mrf.mxu0
      %v2194 = vadd.f32 0.0, %v2193
      %v2195 = vpop.f32.mrf.mxu0
      %2196 = vmatprep.mubr.bf16.mxu0 0
      %2197 = vmatmul.mubr.bf16.gmra.mxu0 %v2078
      %v2198 = vpop.f32.mrf.mxu0
      %v2199 = vadd.f32 0.0, %v2198
      %v2200 = vpop.f32.mrf.mxu0
      %v2201 = vpop.f32.mrf.mxu0
      %v2202 = vadd.f32 0.0, %v2201
      %v2203 = vpop.f32.mrf.mxu0
      %2204 = vmatprep.mubr.bf16.mxu0 0
      %2205 = vmatmul.mubr.bf16.gmra.mxu0 %v2081
      %v2206 = vpop.f32.mrf.mxu0
      %v2207 = vadd.f32 0.0, %v2206
      %v2208 = vpop.f32.mrf.mxu0
      %v2209 = vpop.f32.mrf.mxu0
      %v2210 = vadd.f32 0.0, %v2209
      %v2211 = vpop.f32.mrf.mxu0
      %2212 = vmatprep.mubr.bf16.mxu0 0
      %2213 = vmatmul.mubr.bf16.gmra.mxu0 %v2084
      %v2214 = vpop.f32.mrf.mxu0
      %v2215 = vadd.f32 0.0, %v2214
      %v2216 = vpop.f32.mrf.mxu0
      %v2217 = vpop.f32.mrf.mxu0
      %v2218 = vadd.f32 0.0, %v2217
      %v2219 = vpop.f32.mrf.mxu0
      %2220 = vmatprep.mubr.bf16.mxu0 0
      %2221 = vmatmul.mubr.bf16.gmra.mxu0 %v2087
      %v2222 = vpop.f32.mrf.mxu0
      %v2223 = vadd.f32 0.0, %v2222
      %v2224 = vpop.f32.mrf.mxu0
      %v2225 = vpop.f32.mrf.mxu0
      %v2226 = vadd.f32 0.0, %v2225
      %v2227 = vpop.f32.mrf.mxu0
      %2228 = vmatprep.mubr.bf16.mxu0 0
      %2229 = vmatmul.mubr.bf16.gmra.mxu0 %v2090
      %v2230 = vpop.f32.mrf.mxu0
      %v2231 = vadd.f32 0.0, %v2230
      %v2232 = vpop.f32.mrf.mxu0
      %v2233 = vpop.f32.mrf.mxu0
      %v2234 = vadd.f32 0.0, %v2233
      %v2235 = vpop.f32.mrf.mxu0
      %2236 = vmatprep.mubr.bf16.mxu0 0
      %2237 = vmatmul.mubr.bf16.gmra.mxu0 %v2093
      %v2238 = vpop.f32.mrf.mxu0
      %v2239 = vadd.f32 0.0, %v2238
      %v2240 = vpop.f32.mrf.mxu0
      %v2241 = vpop.f32.mrf.mxu0
      %v2242 = vadd.f32 0.0, %v2241
      %v2243 = vpop.f32.mrf.mxu0
      %2244 = vmatprep.mubr.bf16.mxu0 0
      %2245 = vmatmul.mubr.bf16.gmra.mxu0 %v2096
      %v2246 = vpop.f32.mrf.mxu0
      %v2247 = vadd.f32 0.0, %v2246
      %v2248 = vpop.f32.mrf.mxu0
      %v2249 = vpop.f32.mrf.mxu0
      %v2250 = vadd.f32 0.0, %v2249
      %v2251 = vpop.f32.mrf.mxu0
      %2252 = vmatprep.mubr.bf16.mxu0 0
      %2253 = vmatmul.mubr.bf16.gmra.mxu0 %v2099
      %v2254 = vpop.f32.mrf.mxu0
      %v2255 = vadd.f32 0.0, %v2254
      %v2256 = vpop.f32.mrf.mxu0
      %v2257 = vpop.f32.mrf.mxu0
      %v2258 = vadd.f32 0.0, %v2257
      %v2259 = vpop.f32.mrf.mxu0
      %2260 = vmatprep.mubr.bf16.mxu0 0
      %2261 = vmatmul.mubr.bf16.gmra.mxu0 %v2102
      %v2262 = vpop.f32.mrf.mxu0
      %v2263 = vadd.f32 0.0, %v2262
      %v2264 = vpop.f32.mrf.mxu0
      %v2265 = vpop.f32.mrf.mxu0
      %v2266 = vadd.f32 0.0, %v2265
      %v2267 = vpop.f32.mrf.mxu0
      %2268 = vmatprep.mubr.bf16.mxu0 0
      %2269 = vmatmul.mubr.bf16.gmra.mxu0 %v2105
      %v2270 = vpop.f32.mrf.mxu0
      %v2271 = vadd.f32 0.0, %v2270
      %v2272 = vpop.f32.mrf.mxu0
      %v2273 = vpop.f32.mrf.mxu0
      %v2274 = vadd.f32 0.0, %v2273
      %v2275 = vpop.f32.mrf.mxu0
      %2276 = vmatprep.mubr.bf16.mxu0 0
      %2277 = vmatmul.mubr.bf16.gmra.mxu0 %v2108
      %v2278 = vpop.f32.mrf.mxu0
      %v2279 = vadd.f32 0.0, %v2278
      %v2280 = vpop.f32.mrf.mxu0
      %v2281 = vpop.f32.mrf.mxu0
      %v2282 = vadd.f32 0.0, %v2281
      %v2283 = vpop.f32.mrf.mxu0
      %2284 = vmatprep.mubr.bf16.mxu0 0
      %2285 = vmatmul.mubr.bf16.gmra.mxu0 %v2111
      %v2286 = vpop.f32.mrf.mxu0
      %v2287 = vadd.f32 0.0, %v2286
      %v2288 = vpop.f32.mrf.mxu0
      %v2289 = vpop.f32.mrf.mxu0
      %v2290 = vadd.f32 0.0, %v2289
      %v2291 = vpop.f32.mrf.mxu0
      %2292 = vdwg.mxu0
      %v2293 = vadd.f32 %v1713, %v2151
      %v2294 = vadd.f32 %v1714, %v2154
      %v2295 = vadd.f32 %v1715, %v2159
      %v2296 = vadd.f32 %v1716, %v2162
      %v2297 = vadd.f32 %v1717, %v2167
      %v2298 = vadd.f32 %v1718, %v2170
      %v2299 = vadd.f32 %v1719, %v2175
      %v2300 = vadd.f32 %v1720, %v2178
      %v2301 = vadd.f32 %v1721, %v2183
      %v2302 = vadd.f32 %v1722, %v2186
      %v2303 = vadd.f32 %v1723, %v2191
      %v2304 = vadd.f32 %v1724, %v2194
      %v2305 = vadd.f32 %v1725, %v2199
      %v2306 = vadd.f32 %v1726, %v2202
      %v2307 = vadd.f32 %v1727, %v2207
      %v2308 = vadd.f32 %v1728, %v2210
      %v2309 = vadd.f32 %v1729, %v2215
      %v2310 = vadd.f32 %v1730, %v2218
      %v2311 = vadd.f32 %v1731, %v2223
      %v2312 = vadd.f32 %v1732, %v2226
      %v2313 = vadd.f32 %v1733, %v2231
      %v2314 = vadd.f32 %v1734, %v2234
      %v2315 = vadd.f32 %v1735, %v2239
      %v2316 = vadd.f32 %v1736, %v2242
      %v2317 = vadd.f32 %v1737, %v2247
      %v2318 = vadd.f32 %v1738, %v2250
      %v2319 = vadd.f32 %v1739, %v2255
      %v2320 = vadd.f32 %v1740, %v2258
      %v2321 = vadd.f32 %v1741, %v2263
      %v2322 = vadd.f32 %v1742, %v2266
      %v2323 = vadd.f32 %v1743, %v2271
      %v2324 = vadd.f32 %v1744, %v2274
      %v2325 = vadd.f32 %v1745, %v2279
      %v2326 = vadd.f32 %v1746, %v2282
      %v2327 = vadd.f32 %v1747, %v2287
      %v2328 = vadd.f32 %v1748, %v2290
      %v2329 = vld [vmem:[%s328 + $0x4] sm:$0xe]
      %v2330 = vld [vmem:[%s328 + $0x8] sm:$0xf]
      %v2331 = vld [vmem:[%s328 + $0xc] sm:$0xf]
      %v2332 = vld [vmem:[%s328 + $0x10] sm:$0xf]
      %v2333 = vld [vmem:[%s328 + $0x14] sm:$0xf]
      %v2334 = vld [vmem:[%s328 + $0x18] sm:$0xf]
      %v2335 = vld [vmem:[%s328 + $0x1c] sm:$0xf]
      %v2336 = vld [vmem:[%s328 + $0x20] sm:$0xf]
      %v2337 = vld [vmem:[%s328 + $0x24] sm:$0xf]
      %v2338 = vld [vmem:[%s328 + $0x28] sm:$0xf]
      %v2339 = vld [vmem:[%s328 + $0x2c] sm:$0x1]
      %s2340 = scalar_lea.vmem %s3, 48
      %v2341 = vld [vmem:[%s2340] sm:$0xf]
      %v2342 = vld [vmem:[%s2340 + $0x4] sm:$0xf]
      %v2343 = vld [vmem:[%s2340 + $0x8] sm:$0xf]
      %v2344 = vld [vmem:[%s2340 + $0xc] sm:$0xf]
      %v2356 = vunpack.c.l.b16 %v2329
      %v2357 = vunpack.c.l.b16 %v2330
      %v2358 = vunpack.c.l.b16 %v2331
      %v2359 = vunpack.c.l.b16 %v2332
      %v2360 = vunpack.c.l.b16 %v2333
      %v2361 = vunpack.c.l.b16 %v2334
      %v2362 = vunpack.c.l.b16 %v2335
      %v2363 = vunpack.c.l.b16 %v2336
      %v2364 = vunpack.c.l.b16 %v2337
      %v2365 = vunpack.c.l.b16 %v2338
      %v2366 = vunpack.c.l.b16 %v2339
      %v2367 = vpack.c.b16 %v2357, %v2356
      %v2368 = vpack.c.b16 %v2359, %v2358
      %v2369 = vpack.c.b16 %v2361, %v2360
      %v2370 = vpack.c.b16 %v2363, %v2362
      %v2371 = vpack.c.b16 %v2365, %v2364
      %v2372 = vpack.c.b16 %v2366, %v2366
      %v2373 = vrot.slane %v2367, 1
      %v2374 = vrot.slane %v2368, 1
      %v2375 = vsel %vm1432, %v2373, %v2374
      %v2376 = vrot.slane %v2369, 1
      %v2377 = vsel %vm1432, %v2374, %v2376
      %v2378 = vrot.slane %v2370, 1
      %v2379 = vsel %vm1432, %v2376, %v2378
      %v2380 = vrot.slane %v2371, 1
      %v2381 = vsel %vm1432, %v2378, %v2380
      %v2382 = vrot.slane %v2372, 1
      %v2383 = vsel %vm1432, %v2380, %v2382
      %v2388 = vunpack.c.l.b16 %v2341
      %v2389 = vunpack.c.l.b16 %v2342
      %v2390 = vunpack.c.l.b16 %v2343
      %v2391 = vunpack.c.l.b16 %v2344
      %v2392 = vpack.c.b16 %v2389, %v2388
      %v2393 = vpack.c.b16 %v2391, %v2390
      %v2397 = vsel %vm1210, %v2375, 0
      %v2400 = vsel %vm1210, %v2377, 0
      %v2403 = vsel %vm1210, %v2379, 0
      %v2406 = vsel %vm1210, %v2381, 0
      %v2409 = vsel %vm1210, %v2383, 0
      %2411 = vmatprep.subr.bf16.mxu0 0
      %2412 = vmatpush1.bf16.msra.mxu0 0
      %2413 = vmatprep.subr.bf16.mxu0 0
      %2414 = vmatpush1.bf16.msra.mxu0 0
      %2415 = vmatprep.subr.bf16.mxu0 0
      %2416 = vmatpush1.bf16.msra.mxu0 0
      %2417 = vmatprep.subr.bf16.mxu0 0
      %2418 = vmatpush1.bf16.msra.mxu0 0
      %2419 = vmatprep.subr.bf16.mxu0 0
      %2420 = vmatpush1.bf16.msra.mxu0 0
      %2421 = vmatprep.subr.bf16.mxu0 0
      %2422 = vmatpush1.bf16.msra.mxu0 0
      %2423 = vmatprep.subr.bf16.mxu0 0
      %2424 = vmatpush1.bf16.msra.mxu0 %v2393
      %2425 = vmatprep.subr.bf16.mxu0 0
      %2426 = vmatpush1.bf16.msra.mxu0 %v2392
      %2427 = vmatprep.subr.bf16.mxu0 0
      %2428 = vmatpush2.bf16.msra.mxu0 0
      %2429 = vmatprep.subr.bf16.mxu0 0
      %2430 = vmatpush2.bf16.msra.mxu0 0
      %2431 = vmatprep.subr.bf16.mxu0 0
      %2432 = vmatpush2.bf16.msra.mxu0 0
      %2433 = vmatprep.subr.bf16.mxu0 0
      %2434 = vmatpush2.bf16.msra.mxu0 0
      %2435 = vmatprep.subr.bf16.mxu0 0
      %2436 = vmatpush2.bf16.msra.mxu0 0
      %2437 = vmatprep.subr.bf16.mxu0 0
      %2438 = vmatpush2.bf16.msra.mxu0 0
      %2439 = vmatprep.subr.bf16.mxu0 0
      %2440 = vmatpush2.bf16.msra.mxu0 0
      %2441 = vmatprep.subr.bf16.mxu0 0
      %2442 = vmatpush2.bf16.msra.mxu0 0
      %2443 = vmatprep.mubr.bf16.mxu0 0
      %2444 = vmatmul.mubr.bf16.gmra.mxu0 %v2397
      %v2445 = vpop.f32.mrf.mxu0
      %v2446 = vadd.f32 0.0, %v2445
      %v2447 = vpop.f32.mrf.mxu0
      %v2448 = vpop.f32.mrf.mxu0
      %v2449 = vadd.f32 0.0, %v2448
      %v2450 = vpop.f32.mrf.mxu0
      %2451 = vmatprep.mubr.bf16.mxu0 0
      %2452 = vmatmul.mubr.bf16.gmra.mxu0 %v2400
      %v2453 = vpop.f32.mrf.mxu0
      %v2454 = vadd.f32 0.0, %v2453
      %v2455 = vpop.f32.mrf.mxu0
      %v2456 = vpop.f32.mrf.mxu0
      %v2457 = vadd.f32 0.0, %v2456
      %v2458 = vpop.f32.mrf.mxu0
      %2459 = vmatprep.mubr.bf16.mxu0 0
      %2460 = vmatmul.mubr.bf16.gmra.mxu0 %v2403
      %v2461 = vpop.f32.mrf.mxu0
      %v2462 = vadd.f32 0.0, %v2461
      %v2463 = vpop.f32.mrf.mxu0
      %v2464 = vpop.f32.mrf.mxu0
      %v2465 = vadd.f32 0.0, %v2464
      %v2466 = vpop.f32.mrf.mxu0
      %2467 = vmatprep.mubr.bf16.mxu0 0
      %2468 = vmatmul.mubr.bf16.gmra.mxu0 %v2406
      %v2469 = vpop.f32.mrf.mxu0
      %v2470 = vadd.f32 0.0, %v2469
      %v2471 = vpop.f32.mrf.mxu0
      %v2472 = vpop.f32.mrf.mxu0
      %v2473 = vadd.f32 0.0, %v2472
      %v2474 = vpop.f32.mrf.mxu0
      %2475 = vmatprep.mubr.bf16.mxu0 0
      %2476 = vmatmul.mubr.bf16.gmra.mxu0 %v2409
      %v2477 = vpop.f32.mrf.mxu0
      %v2478 = vadd.f32 0.0, %v2477
      %v2479 = vpop.f32.mrf.mxu0
      %v2480 = vpop.f32.mrf.mxu0
      %v2481 = vadd.f32 0.0, %v2480
      %v2482 = vpop.f32.mrf.mxu0
      %2483 = vdwg.mxu0
      %v2484 = vadd.f32 %v1869, %v2446
      %v2485 = vadd.f32 %v1870, %v2449
      %v2486 = vadd.f32 %v1871, %v2454
      %v2487 = vadd.f32 %v1872, %v2457
      %v2488 = vadd.f32 %v1873, %v2462
      %v2489 = vadd.f32 %v1874, %v2465
      %v2490 = vadd.f32 %v1875, %v2470
      %v2491 = vadd.f32 %v1876, %v2473
      %v2492 = vadd.f32 %v1877, %v2478
      %v2493 = vadd.f32 %v1878, %v2481
      %v2494 = vld [vmem:[%s323 + $0x98] sm:$0x3]
      %s2495 = scalar_lea.vmem %s2, 48
      %v2496 = vld [vmem:[%s2495] sm:$0xf]
      %v2497 = vld [vmem:[%s2495 + $0x4] sm:$0xf]
      %v2498 = vld [vmem:[%s2495 + $0x8] sm:$0xf]
      %v2500 = vunpack.c.l.b16 %v2494
      %v2501 = vpack.c.b16 %v2500, %v2500
      %vm2502 = vsmask.f32 6400
      %v2504 = vshrl.u32 %v1994, 16
      %v2506 = vrot.slane %v2504, 1
      %v2507 = vshll.u32 %v1994, 16
      %v2509 = vrot.slane %v2507, 2
      %v2510 = vor.u32 %v2506, %v2509
      %v2512 = vshrl.u32 %v1995, 16
      %v2514 = vrot.slane %v2512, 1
      %v2515 = vshll.u32 %v1995, 16
      %v2517 = vrot.slane %v2515, 2
      %v2518 = vor.u32 %v2514, %v2517
      %v2519 = vsel %vm2502, %v2510, %v2518
      %v2521 = vshrl.u32 %v1996, 16
      %v2523 = vrot.slane %v2521, 1
      %v2524 = vshll.u32 %v1996, 16
      %v2526 = vrot.slane %v2524, 2
      %v2527 = vor.u32 %v2523, %v2526
      %v2528 = vsel %vm2502, %v2518, %v2527
      %v2530 = vshrl.u32 %v1997, 16
      %v2532 = vrot.slane %v2530, 1
      %v2533 = vshll.u32 %v1997, 16
      %v2535 = vrot.slane %v2533, 2
      %v2536 = vor.u32 %v2532, %v2535
      %v2537 = vsel %vm2502, %v2527, %v2536
      %v2539 = vshrl.u32 %v1998, 16
      %v2541 = vrot.slane %v2539, 1
      %v2542 = vshll.u32 %v1998, 16
      %v2544 = vrot.slane %v2542, 2
      %v2545 = vor.u32 %v2541, %v2544
      %v2546 = vsel %vm2502, %v2536, %v2545
      %v2548 = vshrl.u32 %v1999, 16
      %v2550 = vrot.slane %v2548, 1
      %v2551 = vshll.u32 %v1999, 16
      %v2553 = vrot.slane %v2551, 2
      %v2554 = vor.u32 %v2550, %v2553
      %v2555 = vsel %vm2502, %v2545, %v2554
      %v2557 = vshrl.u32 %v2000, 16
      %v2559 = vrot.slane %v2557, 1
      %v2560 = vshll.u32 %v2000, 16
      %v2562 = vrot.slane %v2560, 2
      %v2563 = vor.u32 %v2559, %v2562
      %v2564 = vsel %vm2502, %v2554, %v2563
      %v2566 = vshrl.u32 %v2001, 16
      %v2568 = vrot.slane %v2566, 1
      %v2569 = vshll.u32 %v2001, 16
      %v2571 = vrot.slane %v2569, 2
      %v2572 = vor.u32 %v2568, %v2571
      %v2573 = vsel %vm2502, %v2563, %v2572
      %v2575 = vshrl.u32 %v2002, 16
      %v2577 = vrot.slane %v2575, 1
      %v2578 = vshll.u32 %v2002, 16
      %v2580 = vrot.slane %v2578, 2
      %v2581 = vor.u32 %v2577, %v2580
      %v2582 = vsel %vm2502, %v2572, %v2581
      %v2584 = vshrl.u32 %v2003, 16
      %v2586 = vrot.slane %v2584, 1
      %v2587 = vshll.u32 %v2003, 16
      %v2589 = vrot.slane %v2587, 2
      %v2590 = vor.u32 %v2586, %v2589
      %v2591 = vsel %vm2502, %v2581, %v2590
      %v2593 = vshrl.u32 %v2004, 16
      %v2595 = vrot.slane %v2593, 1
      %v2596 = vshll.u32 %v2004, 16
      %v2598 = vrot.slane %v2596, 2
      %v2599 = vor.u32 %v2595, %v2598
      %v2600 = vsel %vm2502, %v2590, %v2599
      %v2602 = vshrl.u32 %v2005, 16
      %v2604 = vrot.slane %v2602, 1
      %v2605 = vshll.u32 %v2005, 16
      %v2607 = vrot.slane %v2605, 2
      %v2608 = vor.u32 %v2604, %v2607
      %v2609 = vsel %vm2502, %v2599, %v2608
      %v2611 = vshrl.u32 %v2006, 16
      %v2613 = vrot.slane %v2611, 1
      %v2614 = vshll.u32 %v2006, 16
      %v2616 = vrot.slane %v2614, 2
      %v2617 = vor.u32 %v2613, %v2616
      %v2618 = vsel %vm2502, %v2608, %v2617
      %v2620 = vshrl.u32 %v2007, 16
      %v2622 = vrot.slane %v2620, 1
      %v2623 = vshll.u32 %v2007, 16
      %v2625 = vrot.slane %v2623, 2
      %v2626 = vor.u32 %v2622, %v2625
      %v2627 = vsel %vm2502, %v2617, %v2626
      %v2629 = vshrl.u32 %v2008, 16
      %v2631 = vrot.slane %v2629, 1
      %v2632 = vshll.u32 %v2008, 16
      %v2634 = vrot.slane %v2632, 2
      %v2635 = vor.u32 %v2631, %v2634
      %v2636 = vsel %vm2502, %v2626, %v2635
      %v2638 = vshrl.u32 %v2009, 16
      %v2640 = vrot.slane %v2638, 1
      %v2641 = vshll.u32 %v2009, 16
      %v2643 = vrot.slane %v2641, 2
      %v2644 = vor.u32 %v2640, %v2643
      %v2645 = vsel %vm2502, %v2635, %v2644
      %v2647 = vshrl.u32 %v2010, 16
      %v2649 = vrot.slane %v2647, 1
      %v2650 = vshll.u32 %v2010, 16
      %v2652 = vrot.slane %v2650, 2
      %v2653 = vor.u32 %v2649, %v2652
      %v2654 = vsel %vm2502, %v2644, %v2653
      %v2656 = vshrl.u32 %v2011, 16
      %v2658 = vrot.slane %v2656, 1
      %v2659 = vshll.u32 %v2011, 16
      %v2661 = vrot.slane %v2659, 2
      %v2662 = vor.u32 %v2658, %v2661
      %v2663 = vsel %vm2502, %v2653, %v2662
      %v2665 = vshrl.u32 %v2501, 16
      %v2667 = vrot.slane %v2665, 1
      %v2668 = vshll.u32 %v2501, 16
      %v2670 = vrot.slane %v2668, 2
      %v2671 = vor.u32 %v2667, %v2670
      %v2672 = vsel %vm2502, %v2662, %v2671
      %v2676 = vunpack.c.l.b16 %v2496
      %v2677 = vunpack.c.l.b16 %v2497
      %v2678 = vunpack.c.l.b16 %v2498
      %v2679 = vpack.c.b16 %v2677, %v2676
      %v2680 = vpack.c.b16 %v2678, %v2678
      %v2683 = vsel %vm649, %v2519, 0
      %v2686 = vsel %vm649, %v2528, 0
      %v2689 = vsel %vm649, %v2537, 0
      %v2692 = vsel %vm649, %v2546, 0
      %v2695 = vsel %vm649, %v2555, 0
      %v2698 = vsel %vm649, %v2564, 0
      %v2701 = vsel %vm649, %v2573, 0
      %v2704 = vsel %vm649, %v2582, 0
      %v2707 = vsel %vm649, %v2591, 0
      %v2710 = vsel %vm649, %v2600, 0
      %v2713 = vsel %vm649, %v2609, 0
      %v2716 = vsel %vm649, %v2618, 0
      %v2719 = vsel %vm649, %v2627, 0
      %v2722 = vsel %vm649, %v2636, 0
      %v2725 = vsel %vm649, %v2645, 0
      %v2728 = vsel %vm649, %v2654, 0
      %v2731 = vsel %vm649, %v2663, 0
      %v2734 = vsel %vm649, %v2672, 0
      %v2737 = vsel %vm704, %v2680, 0
      %2739 = vmatprep.subr.bf16.mxu0 0
      %2740 = vmatpush1.bf16.msra.mxu0 0
      %2741 = vmatprep.subr.bf16.mxu0 0
      %2742 = vmatpush1.bf16.msra.mxu0 0
      %2743 = vmatprep.subr.bf16.mxu0 0
      %2744 = vmatpush1.bf16.msra.mxu0 0
      %2745 = vmatprep.subr.bf16.mxu0 0
      %2746 = vmatpush1.bf16.msra.mxu0 0
      %2747 = vmatprep.subr.bf16.mxu0 0
      %2748 = vmatpush1.bf16.msra.mxu0 0
      %2749 = vmatprep.subr.bf16.mxu0 0
      %2750 = vmatpush1.bf16.msra.mxu0 0
      %2751 = vmatprep.subr.bf16.mxu0 0
      %2752 = vmatpush1.bf16.msra.mxu0 %v2737
      %2753 = vmatprep.subr.bf16.mxu0 0
      %2754 = vmatpush1.bf16.msra.mxu0 %v2679
      %2755 = vmatprep.subr.bf16.mxu0 0
      %2756 = vmatpush2.bf16.msra.mxu0 0
      %2757 = vmatprep.subr.bf16.mxu0 0
      %2758 = vmatpush2.bf16.msra.mxu0 0
      %2759 = vmatprep.subr.bf16.mxu0 0
      %2760 = vmatpush2.bf16.msra.mxu0 0
      %2761 = vmatprep.subr.bf16.mxu0 0
      %2762 = vmatpush2.bf16.msra.mxu0 0
      %2763 = vmatprep.subr.bf16.mxu0 0
      %2764 = vmatpush2.bf16.msra.mxu0 0
      %2765 = vmatprep.subr.bf16.mxu0 0
      %2766 = vmatpush2.bf16.msra.mxu0 0
      %2767 = vmatprep.subr.bf16.mxu0 0
      %2768 = vmatpush2.bf16.msra.mxu0 0
      %2769 = vmatprep.subr.bf16.mxu0 0
      %2770 = vmatpush2.bf16.msra.mxu0 0
      %2771 = vmatprep.mubr.bf16.mxu0 0
      %2772 = vmatmul.mubr.bf16.gmra.mxu0 %v2683
      %v2773 = vpop.f32.mrf.mxu0
      %v2774 = vadd.f32 0.0, %v2773
      %v2775 = vpop.f32.mrf.mxu0
      %v2776 = vpop.f32.mrf.mxu0
      %v2777 = vadd.f32 0.0, %v2776
      %v2778 = vpop.f32.mrf.mxu0
      %2779 = vmatprep.mubr.bf16.mxu0 0
      %2780 = vmatmul.mubr.bf16.gmra.mxu0 %v2686
      %v2781 = vpop.f32.mrf.mxu0
      %v2782 = vadd.f32 0.0, %v2781
      %v2783 = vpop.f32.mrf.mxu0
      %v2784 = vpop.f32.mrf.mxu0
      %v2785 = vadd.f32 0.0, %v2784
      %v2786 = vpop.f32.mrf.mxu0
      %2787 = vmatprep.mubr.bf16.mxu0 0
      %2788 = vmatmul.mubr.bf16.gmra.mxu0 %v2689
      %v2789 = vpop.f32.mrf.mxu0
      %v2790 = vadd.f32 0.0, %v2789
      %v2791 = vpop.f32.mrf.mxu0
      %v2792 = vpop.f32.mrf.mxu0
      %v2793 = vadd.f32 0.0, %v2792
      %v2794 = vpop.f32.mrf.mxu0
      %2795 = vmatprep.mubr.bf16.mxu0 0
      %2796 = vmatmul.mubr.bf16.gmra.mxu0 %v2692
      %v2797 = vpop.f32.mrf.mxu0
      %v2798 = vadd.f32 0.0, %v2797
      %v2799 = vpop.f32.mrf.mxu0
      %v2800 = vpop.f32.mrf.mxu0
      %v2801 = vadd.f32 0.0, %v2800
      %v2802 = vpop.f32.mrf.mxu0
      %2803 = vmatprep.mubr.bf16.mxu0 0
      %2804 = vmatmul.mubr.bf16.gmra.mxu0 %v2695
      %v2805 = vpop.f32.mrf.mxu0
      %v2806 = vadd.f32 0.0, %v2805
      %v2807 = vpop.f32.mrf.mxu0
      %v2808 = vpop.f32.mrf.mxu0
      %v2809 = vadd.f32 0.0, %v2808
      %v2810 = vpop.f32.mrf.mxu0
      %2811 = vmatprep.mubr.bf16.mxu0 0
      %2812 = vmatmul.mubr.bf16.gmra.mxu0 %v2698
      %v2813 = vpop.f32.mrf.mxu0
      %v2814 = vadd.f32 0.0, %v2813
      %v2815 = vpop.f32.mrf.mxu0
      %v2816 = vpop.f32.mrf.mxu0
      %v2817 = vadd.f32 0.0, %v2816
      %v2818 = vpop.f32.mrf.mxu0
      %2819 = vmatprep.mubr.bf16.mxu0 0
      %2820 = vmatmul.mubr.bf16.gmra.mxu0 %v2701
      %v2821 = vpop.f32.mrf.mxu0
      %v2822 = vadd.f32 0.0, %v2821
      %v2823 = vpop.f32.mrf.mxu0
      %v2824 = vpop.f32.mrf.mxu0
      %v2825 = vadd.f32 0.0, %v2824
      %v2826 = vpop.f32.mrf.mxu0
      %2827 = vmatprep.mubr.bf16.mxu0 0
      %2828 = vmatmul.mubr.bf16.gmra.mxu0 %v2704
      %v2829 = vpop.f32.mrf.mxu0
      %v2830 = vadd.f32 0.0, %v2829
      %v2831 = vpop.f32.mrf.mxu0
      %v2832 = vpop.f32.mrf.mxu0
      %v2833 = vadd.f32 0.0, %v2832
      %v2834 = vpop.f32.mrf.mxu0
      %2835 = vmatprep.mubr.bf16.mxu0 0
      %2836 = vmatmul.mubr.bf16.gmra.mxu0 %v2707
      %v2837 = vpop.f32.mrf.mxu0
      %v2838 = vadd.f32 0.0, %v2837
      %v2839 = vpop.f32.mrf.mxu0
      %v2840 = vpop.f32.mrf.mxu0
      %v2841 = vadd.f32 0.0, %v2840
      %v2842 = vpop.f32.mrf.mxu0
      %2843 = vmatprep.mubr.bf16.mxu0 0
      %2844 = vmatmul.mubr.bf16.gmra.mxu0 %v2710
      %v2845 = vpop.f32.mrf.mxu0
      %v2846 = vadd.f32 0.0, %v2845
      %v2847 = vpop.f32.mrf.mxu0
      %v2848 = vpop.f32.mrf.mxu0
      %v2849 = vadd.f32 0.0, %v2848
      %v2850 = vpop.f32.mrf.mxu0
      %2851 = vmatprep.mubr.bf16.mxu0 0
      %2852 = vmatmul.mubr.bf16.gmra.mxu0 %v2713
      %v2853 = vpop.f32.mrf.mxu0
      %v2854 = vadd.f32 0.0, %v2853
      %v2855 = vpop.f32.mrf.mxu0
      %v2856 = vpop.f32.mrf.mxu0
      %v2857 = vadd.f32 0.0, %v2856
      %v2858 = vpop.f32.mrf.mxu0
      %2859 = vmatprep.mubr.bf16.mxu0 0
      %2860 = vmatmul.mubr.bf16.gmra.mxu0 %v2716
      %v2861 = vpop.f32.mrf.mxu0
      %v2862 = vadd.f32 0.0, %v2861
      %v2863 = vpop.f32.mrf.mxu0
      %v2864 = vpop.f32.mrf.mxu0
      %v2865 = vadd.f32 0.0, %v2864
      %v2866 = vpop.f32.mrf.mxu0
      %2867 = vmatprep.mubr.bf16.mxu0 0
      %2868 = vmatmul.mubr.bf16.gmra.mxu0 %v2719
      %v2869 = vpop.f32.mrf.mxu0
      %v2870 = vadd.f32 0.0, %v2869
      %v2871 = vpop.f32.mrf.mxu0
      %v2872 = vpop.f32.mrf.mxu0
      %v2873 = vadd.f32 0.0, %v2872
      %v2874 = vpop.f32.mrf.mxu0
      %2875 = vmatprep.mubr.bf16.mxu0 0
      %2876 = vmatmul.mubr.bf16.gmra.mxu0 %v2722
      %v2877 = vpop.f32.mrf.mxu0
      %v2878 = vadd.f32 0.0, %v2877
      %v2879 = vpop.f32.mrf.mxu0
      %v2880 = vpop.f32.mrf.mxu0
      %v2881 = vadd.f32 0.0, %v2880
      %v2882 = vpop.f32.mrf.mxu0
      %2883 = vmatprep.mubr.bf16.mxu0 0
      %2884 = vmatmul.mubr.bf16.gmra.mxu0 %v2725
      %v2885 = vpop.f32.mrf.mxu0
      %v2886 = vadd.f32 0.0, %v2885
      %v2887 = vpop.f32.mrf.mxu0
      %v2888 = vpop.f32.mrf.mxu0
      %v2889 = vadd.f32 0.0, %v2888
      %v2890 = vpop.f32.mrf.mxu0
      %2891 = vmatprep.mubr.bf16.mxu0 0
      %2892 = vmatmul.mubr.bf16.gmra.mxu0 %v2728
      %v2893 = vpop.f32.mrf.mxu0
      %v2894 = vadd.f32 0.0, %v2893
      %v2895 = vpop.f32.mrf.mxu0
      %v2896 = vpop.f32.mrf.mxu0
      %v2897 = vadd.f32 0.0, %v2896
      %v2898 = vpop.f32.mrf.mxu0
      %2899 = vmatprep.mubr.bf16.mxu0 0
      %2900 = vmatmul.mubr.bf16.gmra.mxu0 %v2731
      %v2901 = vpop.f32.mrf.mxu0
      %v2902 = vadd.f32 0.0, %v2901
      %v2903 = vpop.f32.mrf.mxu0
      %v2904 = vpop.f32.mrf.mxu0
      %v2905 = vadd.f32 0.0, %v2904
      %v2906 = vpop.f32.mrf.mxu0
      %2907 = vmatprep.mubr.bf16.mxu0 0
      %2908 = vmatmul.mubr.bf16.gmra.mxu0 %v2734
      %v2909 = vpop.f32.mrf.mxu0
      %v2910 = vadd.f32 0.0, %v2909
      %v2911 = vpop.f32.mrf.mxu0
      %v2912 = vpop.f32.mrf.mxu0
      %v2913 = vadd.f32 0.0, %v2912
      %v2914 = vpop.f32.mrf.mxu0
      %2915 = vdwg.mxu0
      %v2916 = vadd.f32 %v2293, %v2774
      %v2917 = vadd.f32 %v2294, %v2777
      %v2918 = vadd.f32 %v2295, %v2782
      %v2919 = vadd.f32 %v2296, %v2785
      %v2920 = vadd.f32 %v2297, %v2790
      %v2921 = vadd.f32 %v2298, %v2793
      %v2922 = vadd.f32 %v2299, %v2798
      %v2923 = vadd.f32 %v2300, %v2801
      %v2924 = vadd.f32 %v2301, %v2806
      %v2925 = vadd.f32 %v2302, %v2809
      %v2926 = vadd.f32 %v2303, %v2814
      %v2927 = vadd.f32 %v2304, %v2817
      %v2928 = vadd.f32 %v2305, %v2822
      %v2929 = vadd.f32 %v2306, %v2825
      %v2930 = vadd.f32 %v2307, %v2830
      %v2931 = vadd.f32 %v2308, %v2833
      %v2932 = vadd.f32 %v2309, %v2838
      %v2933 = vadd.f32 %v2310, %v2841
      %v2934 = vadd.f32 %v2311, %v2846
      %v2935 = vadd.f32 %v2312, %v2849
      %v2936 = vadd.f32 %v2313, %v2854
      %v2937 = vadd.f32 %v2314, %v2857
      %v2938 = vadd.f32 %v2315, %v2862
      %v2939 = vadd.f32 %v2316, %v2865
      %v2940 = vadd.f32 %v2317, %v2870
      %v2941 = vadd.f32 %v2318, %v2873
      %v2942 = vadd.f32 %v2319, %v2878
      %v2943 = vadd.f32 %v2320, %v2881
      %v2944 = vadd.f32 %v2321, %v2886
      %v2945 = vadd.f32 %v2322, %v2889
      %v2946 = vadd.f32 %v2323, %v2894
      %v2947 = vadd.f32 %v2324, %v2897
      %v2948 = vadd.f32 %v2325, %v2902
      %v2949 = vadd.f32 %v2326, %v2905
      %v2950 = vadd.f32 %v2327, %v2910
      %v2951 = vadd.f32 %v2328, %v2913
      %v2952 = vld [vmem:[%s328 + $0x2c] sm:$0x3]
      %s2953 = scalar_lea.vmem %s3, 64
      %v2954 = vld [vmem:[%s2953] sm:$0xf]
      %v2955 = vld [vmem:[%s2953 + $0x4] sm:$0xf]
      %v2956 = vld [vmem:[%s2953 + $0x8] sm:$0xf]
      %v2957 = vld [vmem:[%s2953 + $0xc] sm:$0xf]
      %v2959 = vunpack.c.l.b16 %v2952
      %v2960 = vpack.c.b16 %v2959, %v2959
      %v2962 = vshrl.u32 %v2367, 16
      %v2964 = vrot.slane %v2962, 1
      %v2965 = vshll.u32 %v2367, 16
      %v2967 = vrot.slane %v2965, 2
      %v2968 = vor.u32 %v2964, %v2967
      %v2970 = vshrl.u32 %v2368, 16
      %v2972 = vrot.slane %v2970, 1
      %v2973 = vshll.u32 %v2368, 16
      %v2975 = vrot.slane %v2973, 2
      %v2976 = vor.u32 %v2972, %v2975
      %v2977 = vsel %vm2502, %v2968, %v2976
      %v2979 = vshrl.u32 %v2369, 16
      %v2981 = vrot.slane %v2979, 1
      %v2982 = vshll.u32 %v2369, 16
      %v2984 = vrot.slane %v2982, 2
      %v2985 = vor.u32 %v2981, %v2984
      %v2986 = vsel %vm2502, %v2976, %v2985
      %v2988 = vshrl.u32 %v2370, 16
      %v2990 = vrot.slane %v2988, 1
      %v2991 = vshll.u32 %v2370, 16
      %v2993 = vrot.slane %v2991, 2
      %v2994 = vor.u32 %v2990, %v2993
      %v2995 = vsel %vm2502, %v2985, %v2994
      %v2997 = vshrl.u32 %v2371, 16
      %v2999 = vrot.slane %v2997, 1
      %v3000 = vshll.u32 %v2371, 16
      %v3002 = vrot.slane %v3000, 2
      %v3003 = vor.u32 %v2999, %v3002
      %v3004 = vsel %vm2502, %v2994, %v3003
      %v3006 = vshrl.u32 %v2960, 16
      %v3008 = vrot.slane %v3006, 1
      %v3009 = vshll.u32 %v2960, 16
      %v3011 = vrot.slane %v3009, 2
      %v3012 = vor.u32 %v3008, %v3011
      %v3013 = vsel %vm2502, %v3003, %v3012
      %v3018 = vunpack.c.l.b16 %v2954
      %v3019 = vunpack.c.l.b16 %v2955
      %v3020 = vunpack.c.l.b16 %v2956
      %v3021 = vunpack.c.l.b16 %v2957
      %v3022 = vpack.c.b16 %v3019, %v3018
      %v3023 = vpack.c.b16 %v3021, %v3020
      %v3027 = vsel %vm1210, %v2977, 0
      %v3030 = vsel %vm1210, %v2986, 0
      %v3033 = vsel %vm1210, %v2995, 0
      %v3036 = vsel %vm1210, %v3004, 0
      %v3039 = vsel %vm1210, %v3013, 0
      %3041 = vmatprep.subr.bf16.mxu0 0
      %3042 = vmatpush1.bf16.msra.mxu0 0
      %3043 = vmatprep.subr.bf16.mxu0 0
      %3044 = vmatpush1.bf16.msra.mxu0 0
      %3045 = vmatprep.subr.bf16.mxu0 0
      %3046 = vmatpush1.bf16.msra.mxu0 0
      %3047 = vmatprep.subr.bf16.mxu0 0
      %3048 = vmatpush1.bf16.msra.mxu0 0
      %3049 = vmatprep.subr.bf16.mxu0 0
      %3050 = vmatpush1.bf16.msra.mxu0 0
      %3051 = vmatprep.subr.bf16.mxu0 0
      %3052 = vmatpush1.bf16.msra.mxu0 0
      %3053 = vmatprep.subr.bf16.mxu0 0
      %3054 = vmatpush1.bf16.msra.mxu0 %v3023
      %3055 = vmatprep.subr.bf16.mxu0 0
      %3056 = vmatpush1.bf16.msra.mxu0 %v3022
      %3057 = vmatprep.subr.bf16.mxu0 0
      %3058 = vmatpush2.bf16.msra.mxu0 0
      %3059 = vmatprep.subr.bf16.mxu0 0
      %3060 = vmatpush2.bf16.msra.mxu0 0
      %3061 = vmatprep.subr.bf16.mxu0 0
      %3062 = vmatpush2.bf16.msra.mxu0 0
      %3063 = vmatprep.subr.bf16.mxu0 0
      %3064 = vmatpush2.bf16.msra.mxu0 0
      %3065 = vmatprep.subr.bf16.mxu0 0
      %3066 = vmatpush2.bf16.msra.mxu0 0
      %3067 = vmatprep.subr.bf16.mxu0 0
      %3068 = vmatpush2.bf16.msra.mxu0 0
      %3069 = vmatprep.subr.bf16.mxu0 0
      %3070 = vmatpush2.bf16.msra.mxu0 0
      %3071 = vmatprep.subr.bf16.mxu0 0
      %3072 = vmatpush2.bf16.msra.mxu0 0
      %3073 = vmatprep.mubr.bf16.mxu0 0
      %3074 = vmatmul.mubr.bf16.gmra.mxu0 %v3027
      %v3075 = vpop.f32.mrf.mxu0
      %v3076 = vadd.f32 0.0, %v3075
      %v3077 = vpop.f32.mrf.mxu0
      %v3078 = vpop.f32.mrf.mxu0
      %v3079 = vadd.f32 0.0, %v3078
      %v3080 = vpop.f32.mrf.mxu0
      %3081 = vmatprep.mubr.bf16.mxu0 0
      %3082 = vmatmul.mubr.bf16.gmra.mxu0 %v3030
      %v3083 = vpop.f32.mrf.mxu0
      %v3084 = vadd.f32 0.0, %v3083
      %v3085 = vpop.f32.mrf.mxu0
      %v3086 = vpop.f32.mrf.mxu0
      %v3087 = vadd.f32 0.0, %v3086
      %v3088 = vpop.f32.mrf.mxu0
      %3089 = vmatprep.mubr.bf16.mxu0 0
      %3090 = vmatmul.mubr.bf16.gmra.mxu0 %v3033
      %v3091 = vpop.f32.mrf.mxu0
      %v3092 = vadd.f32 0.0, %v3091
      %v3093 = vpop.f32.mrf.mxu0
      %v3094 = vpop.f32.mrf.mxu0
      %v3095 = vadd.f32 0.0, %v3094
      %v3096 = vpop.f32.mrf.mxu0
      %3097 = vmatprep.mubr.bf16.mxu0 0
      %3098 = vmatmul.mubr.bf16.gmra.mxu0 %v3036
      %v3099 = vpop.f32.mrf.mxu0
      %v3100 = vadd.f32 0.0, %v3099
      %v3101 = vpop.f32.mrf.mxu0
      %v3102 = vpop.f32.mrf.mxu0
      %v3103 = vadd.f32 0.0, %v3102
      %v3104 = vpop.f32.mrf.mxu0
      %3105 = vmatprep.mubr.bf16.mxu0 0
      %3106 = vmatmul.mubr.bf16.gmra.mxu0 %v3039
      %v3107 = vpop.f32.mrf.mxu0
      %v3108 = vadd.f32 0.0, %v3107
      %v3109 = vpop.f32.mrf.mxu0
      %v3110 = vpop.f32.mrf.mxu0
      %v3111 = vadd.f32 0.0, %v3110
      %v3112 = vpop.f32.mrf.mxu0
      %3113 = vdwg.mxu0
      %v3114 = vadd.f32 %v2484, %v3076
      %v3115 = vadd.f32 %v2485, %v3079
      %v3116 = vadd.f32 %v2486, %v3084
      %v3117 = vadd.f32 %v2487, %v3087
      %v3118 = vadd.f32 %v2488, %v3092
      %v3119 = vadd.f32 %v2489, %v3095
      %v3120 = vadd.f32 %v2490, %v3100
      %v3121 = vadd.f32 %v2491, %v3103
      %v3122 = vadd.f32 %v2492, %v3108
      %v3123 = vadd.f32 %v2493, %v3111
      %v3124 = vld [vmem:[%s323 + $0x8] sm:$0xc]
      %s3125 = scalar_lea.vmem %s2, 60
      %v3126 = vld [vmem:[%s3125] sm:$0xf]
      %v3127 = vld [vmem:[%s3125 + $0x4] sm:$0xf]
      %v3128 = vld [vmem:[%s3125 + $0x8] sm:$0xf]
      %v3130 = vunpack.c.l.b16 %v3124
      %v3131 = vpack.c.b16 %v1958, %v3130
      %vm3132 = vcmask 1045504
      %v3133 = vrot.slane %v3131, 2
      %v3134 = vrot.slane %v1995, 2
      %v3135 = vsel %vm3132, %v3133, %v3134
      %v3136 = vrot.slane %v1996, 2
      %v3137 = vsel %vm3132, %v3134, %v3136
      %v3138 = vrot.slane %v1997, 2
      %v3139 = vsel %vm3132, %v3136, %v3138
      %v3140 = vrot.slane %v1998, 2
      %v3141 = vsel %vm3132, %v3138, %v3140
      %v3142 = vrot.slane %v1999, 2
      %v3143 = vsel %vm3132, %v3140, %v3142
      %v3144 = vrot.slane %v2000, 2
      %v3145 = vsel %vm3132, %v3142, %v3144
      %v3146 = vrot.slane %v2001, 2
      %v3147 = vsel %vm3132, %v3144, %v3146
      %v3148 = vrot.slane %v2002, 2
      %v3149 = vsel %vm3132, %v3146, %v3148
      %v3150 = vrot.slane %v2003, 2
      %v3151 = vsel %vm3132, %v3148, %v3150
      %v3152 = vrot.slane %v2004, 2
      %v3153 = vsel %vm3132, %v3150, %v3152
      %v3154 = vrot.slane %v2005, 2
      %v3155 = vsel %vm3132, %v3152, %v3154
      %v3156 = vrot.slane %v2006, 2
      %v3157 = vsel %vm3132, %v3154, %v3156
      %v3158 = vrot.slane %v2007, 2
      %v3159 = vsel %vm3132, %v3156, %v3158
      %v3160 = vrot.slane %v2008, 2
      %v3161 = vsel %vm3132, %v3158, %v3160
      %v3162 = vrot.slane %v2009, 2
      %v3163 = vsel %vm3132, %v3160, %v3162
      %v3164 = vrot.slane %v2010, 2
      %v3165 = vsel %vm3132, %v3162, %v3164
      %v3166 = vrot.slane %v2011, 2
      %v3167 = vsel %vm3132, %v3164, %v3166
      %v3168 = vrot.slane %v2501, 2
      %v3169 = vsel %vm3132, %v3166, %v3168
      %v3173 = vunpack.c.l.b16 %v3126
      %v3174 = vunpack.c.l.b16 %v3127
      %v3175 = vunpack.c.l.b16 %v3128
      %v3176 = vpack.c.b16 %v3174, %v3173
      %v3177 = vpack.c.b16 %v3175, %v3175
      %v3180 = vsel %vm649, %v3135, 0
      %v3183 = vsel %vm649, %v3137, 0
      %v3186 = vsel %vm649, %v3139, 0
      %v3189 = vsel %vm649, %v3141, 0
      %v3192 = vsel %vm649, %v3143, 0
      %v3195 = vsel %vm649, %v3145, 0
      %v3198 = vsel %vm649, %v3147, 0
      %v3201 = vsel %vm649, %v3149, 0
      %v3204 = vsel %vm649, %v3151, 0
      %v3207 = vsel %vm649, %v3153, 0
      %v3210 = vsel %vm649, %v3155, 0
      %v3213 = vsel %vm649, %v3157, 0
      %v3216 = vsel %vm649, %v3159, 0
      %v3219 = vsel %vm649, %v3161, 0
      %v3222 = vsel %vm649, %v3163, 0
      %v3225 = vsel %vm649, %v3165, 0
      %v3228 = vsel %vm649, %v3167, 0
      %v3231 = vsel %vm649, %v3169, 0
      %v3234 = vsel %vm704, %v3177, 0
      %3236 = vmatprep.subr.bf16.mxu0 0
      %3237 = vmatpush1.bf16.msra.mxu0 0
      %3238 = vmatprep.subr.bf16.mxu0 0
      %3239 = vmatpush1.bf16.msra.mxu0 0
      %3240 = vmatprep.subr.bf16.mxu0 0
      %3241 = vmatpush1.bf16.msra.mxu0 0
      %3242 = vmatprep.subr.bf16.mxu0 0
      %3243 = vmatpush1.bf16.msra.mxu0 0
      %3244 = vmatprep.subr.bf16.mxu0 0
      %3245 = vmatpush1.bf16.msra.mxu0 0
      %3246 = vmatprep.subr.bf16.mxu0 0
      %3247 = vmatpush1.bf16.msra.mxu0 0
      %3248 = vmatprep.subr.bf16.mxu0 0
      %3249 = vmatpush1.bf16.msra.mxu0 %v3234
      %3250 = vmatprep.subr.bf16.mxu0 0
      %3251 = vmatpush1.bf16.msra.mxu0 %v3176
      %3252 = vmatprep.subr.bf16.mxu0 0
      %3253 = vmatpush2.bf16.msra.mxu0 0
      %3254 = vmatprep.subr.bf16.mxu0 0
      %3255 = vmatpush2.bf16.msra.mxu0 0
      %3256 = vmatprep.subr.bf16.mxu0 0
      %3257 = vmatpush2.bf16.msra.mxu0 0
      %3258 = vmatprep.subr.bf16.mxu0 0
      %3259 = vmatpush2.bf16.msra.mxu0 0
      %3260 = vmatprep.subr.bf16.mxu0 0
      %3261 = vmatpush2.bf16.msra.mxu0 0
      %3262 = vmatprep.subr.bf16.mxu0 0
      %3263 = vmatpush2.bf16.msra.mxu0 0
      %3264 = vmatprep.subr.bf16.mxu0 0
      %3265 = vmatpush2.bf16.msra.mxu0 0
      %3266 = vmatprep.subr.bf16.mxu0 0
      %3267 = vmatpush2.bf16.msra.mxu0 0
      %3268 = vmatprep.mubr.bf16.mxu0 0
      %3269 = vmatmul.mubr.bf16.gmra.mxu0 %v3180
      %v3270 = vpop.f32.mrf.mxu0
      %v3271 = vadd.f32 0.0, %v3270
      %v3272 = vpop.f32.mrf.mxu0
      %v3273 = vpop.f32.mrf.mxu0
      %v3274 = vadd.f32 0.0, %v3273
      %v3275 = vpop.f32.mrf.mxu0
      %3276 = vmatprep.mubr.bf16.mxu0 0
      %3277 = vmatmul.mubr.bf16.gmra.mxu0 %v3183
      %v3278 = vpop.f32.mrf.mxu0
      %v3279 = vadd.f32 0.0, %v3278
      %v3280 = vpop.f32.mrf.mxu0
      %v3281 = vpop.f32.mrf.mxu0
      %v3282 = vadd.f32 0.0, %v3281
      %v3283 = vpop.f32.mrf.mxu0
      %3284 = vmatprep.mubr.bf16.mxu0 0
      %3285 = vmatmul.mubr.bf16.gmra.mxu0 %v3186
      %v3286 = vpop.f32.mrf.mxu0
      %v3287 = vadd.f32 0.0, %v3286
      %v3288 = vpop.f32.mrf.mxu0
      %v3289 = vpop.f32.mrf.mxu0
      %v3290 = vadd.f32 0.0, %v3289
      %v3291 = vpop.f32.mrf.mxu0
      %3292 = vmatprep.mubr.bf16.mxu0 0
      %3293 = vmatmul.mubr.bf16.gmra.mxu0 %v3189
      %v3294 = vpop.f32.mrf.mxu0
      %v3295 = vadd.f32 0.0, %v3294
      %v3296 = vpop.f32.mrf.mxu0
      %v3297 = vpop.f32.mrf.mxu0
      %v3298 = vadd.f32 0.0, %v3297
      %v3299 = vpop.f32.mrf.mxu0
      %3300 = vmatprep.mubr.bf16.mxu0 0
      %3301 = vmatmul.mubr.bf16.gmra.mxu0 %v3192
      %v3302 = vpop.f32.mrf.mxu0
      %v3303 = vadd.f32 0.0, %v3302
      %v3304 = vpop.f32.mrf.mxu0
      %v3305 = vpop.f32.mrf.mxu0
      %v3306 = vadd.f32 0.0, %v3305
      %v3307 = vpop.f32.mrf.mxu0
      %3308 = vmatprep.mubr.bf16.mxu0 0
      %3309 = vmatmul.mubr.bf16.gmra.mxu0 %v3195
      %v3310 = vpop.f32.mrf.mxu0
      %v3311 = vadd.f32 0.0, %v3310
      %v3312 = vpop.f32.mrf.mxu0
      %v3313 = vpop.f32.mrf.mxu0
      %v3314 = vadd.f32 0.0, %v3313
      %v3315 = vpop.f32.mrf.mxu0
      %3316 = vmatprep.mubr.bf16.mxu0 0
      %3317 = vmatmul.mubr.bf16.gmra.mxu0 %v3198
      %v3318 = vpop.f32.mrf.mxu0
      %v3319 = vadd.f32 0.0, %v3318
      %v3320 = vpop.f32.mrf.mxu0
      %v3321 = vpop.f32.mrf.mxu0
      %v3322 = vadd.f32 0.0, %v3321
      %v3323 = vpop.f32.mrf.mxu0
      %3324 = vmatprep.mubr.bf16.mxu0 0
      %3325 = vmatmul.mubr.bf16.gmra.mxu0 %v3201
      %v3326 = vpop.f32.mrf.mxu0
      %v3327 = vadd.f32 0.0, %v3326
      %v3328 = vpop.f32.mrf.mxu0
      %v3329 = vpop.f32.mrf.mxu0
      %v3330 = vadd.f32 0.0, %v3329
      %v3331 = vpop.f32.mrf.mxu0
      %3332 = vmatprep.mubr.bf16.mxu0 0
      %3333 = vmatmul.mubr.bf16.gmra.mxu0 %v3204
      %v3334 = vpop.f32.mrf.mxu0
      %v3335 = vadd.f32 0.0, %v3334
      %v3336 = vpop.f32.mrf.mxu0
      %v3337 = vpop.f32.mrf.mxu0
      %v3338 = vadd.f32 0.0, %v3337
      %v3339 = vpop.f32.mrf.mxu0
      %3340 = vmatprep.mubr.bf16.mxu0 0
      %3341 = vmatmul.mubr.bf16.gmra.mxu0 %v3207
      %v3342 = vpop.f32.mrf.mxu0
      %v3343 = vadd.f32 0.0, %v3342
      %v3344 = vpop.f32.mrf.mxu0
      %v3345 = vpop.f32.mrf.mxu0
      %v3346 = vadd.f32 0.0, %v3345
      %v3347 = vpop.f32.mrf.mxu0
      %3348 = vmatprep.mubr.bf16.mxu0 0
      %3349 = vmatmul.mubr.bf16.gmra.mxu0 %v3210
      %v3350 = vpop.f32.mrf.mxu0
      %v3351 = vadd.f32 0.0, %v3350
      %v3352 = vpop.f32.mrf.mxu0
      %v3353 = vpop.f32.mrf.mxu0
      %v3354 = vadd.f32 0.0, %v3353
      %v3355 = vpop.f32.mrf.mxu0
      %3356 = vmatprep.mubr.bf16.mxu0 0
      %3357 = vmatmul.mubr.bf16.gmra.mxu0 %v3213
      %v3358 = vpop.f32.mrf.mxu0
      %v3359 = vadd.f32 0.0, %v3358
      %v3360 = vpop.f32.mrf.mxu0
      %v3361 = vpop.f32.mrf.mxu0
      %v3362 = vadd.f32 0.0, %v3361
      %v3363 = vpop.f32.mrf.mxu0
      %3364 = vmatprep.mubr.bf16.mxu0 0
      %3365 = vmatmul.mubr.bf16.gmra.mxu0 %v3216
      %v3366 = vpop.f32.mrf.mxu0
      %v3367 = vadd.f32 0.0, %v3366
      %v3368 = vpop.f32.mrf.mxu0
      %v3369 = vpop.f32.mrf.mxu0
      %v3370 = vadd.f32 0.0, %v3369
      %v3371 = vpop.f32.mrf.mxu0
      %3372 = vmatprep.mubr.bf16.mxu0 0
      %3373 = vmatmul.mubr.bf16.gmra.mxu0 %v3219
      %v3374 = vpop.f32.mrf.mxu0
      %v3375 = vadd.f32 0.0, %v3374
      %v3376 = vpop.f32.mrf.mxu0
      %v3377 = vpop.f32.mrf.mxu0
      %v3378 = vadd.f32 0.0, %v3377
      %v3379 = vpop.f32.mrf.mxu0
      %3380 = vmatprep.mubr.bf16.mxu0 0
      %3381 = vmatmul.mubr.bf16.gmra.mxu0 %v3222
      %v3382 = vpop.f32.mrf.mxu0
      %v3383 = vadd.f32 0.0, %v3382
      %v3384 = vpop.f32.mrf.mxu0
      %v3385 = vpop.f32.mrf.mxu0
      %v3386 = vadd.f32 0.0, %v3385
      %v3387 = vpop.f32.mrf.mxu0
      %3388 = vmatprep.mubr.bf16.mxu0 0
      %3389 = vmatmul.mubr.bf16.gmra.mxu0 %v3225
      %v3390 = vpop.f32.mrf.mxu0
      %v3391 = vadd.f32 0.0, %v3390
      %v3392 = vpop.f32.mrf.mxu0
      %v3393 = vpop.f32.mrf.mxu0
      %v3394 = vadd.f32 0.0, %v3393
      %v3395 = vpop.f32.mrf.mxu0
      %3396 = vmatprep.mubr.bf16.mxu0 0
      %3397 = vmatmul.mubr.bf16.gmra.mxu0 %v3228
      %v3398 = vpop.f32.mrf.mxu0
      %v3399 = vadd.f32 0.0, %v3398
      %v3400 = vpop.f32.mrf.mxu0
      %v3401 = vpop.f32.mrf.mxu0
      %v3402 = vadd.f32 0.0, %v3401
      %v3403 = vpop.f32.mrf.mxu0
      %3404 = vmatprep.mubr.bf16.mxu0 0
      %3405 = vmatmul.mubr.bf16.gmra.mxu0 %v3231
      %v3406 = vpop.f32.mrf.mxu0
      %v3407 = vadd.f32 0.0, %v3406
      %v3408 = vpop.f32.mrf.mxu0
      %v3409 = vpop.f32.mrf.mxu0
      %v3410 = vadd.f32 0.0, %v3409
      %v3411 = vpop.f32.mrf.mxu0
      %3412 = vdwg.mxu0
      %v3413 = vadd.f32 %v2916, %v3271
      %v3414 = vadd.f32 %v2917, %v3274
      %v3415 = vadd.f32 %v2918, %v3279
      %v3416 = vadd.f32 %v2919, %v3282
      %v3417 = vadd.f32 %v2920, %v3287
      %v3418 = vadd.f32 %v2921, %v3290
      %v3419 = vadd.f32 %v2922, %v3295
      %v3420 = vadd.f32 %v2923, %v3298
      %v3421 = vadd.f32 %v2924, %v3303
      %v3422 = vadd.f32 %v2925, %v3306
      %v3423 = vadd.f32 %v2926, %v3311
      %v3424 = vadd.f32 %v2927, %v3314
      %v3425 = vadd.f32 %v2928, %v3319
      %v3426 = vadd.f32 %v2929, %v3322
      %v3427 = vadd.f32 %v2930, %v3327
      %v3428 = vadd.f32 %v2931, %v3330
      %v3429 = vadd.f32 %v2932, %v3335
      %v3430 = vadd.f32 %v2933, %v3338
      %v3431 = vadd.f32 %v2934, %v3343
      %v3432 = vadd.f32 %v2935, %v3346
      %v3433 = vadd.f32 %v2936, %v3351
      %v3434 = vadd.f32 %v2937, %v3354
      %v3435 = vadd.f32 %v2938, %v3359
      %v3436 = vadd.f32 %v2939, %v3362
      %v3437 = vadd.f32 %v2940, %v3367
      %v3438 = vadd.f32 %v2941, %v3370
      %v3439 = vadd.f32 %v2942, %v3375
      %v3440 = vadd.f32 %v2943, %v3378
      %v3441 = vadd.f32 %v2944, %v3383
      %v3442 = vadd.f32 %v2945, %v3386
      %v3443 = vadd.f32 %v2946, %v3391
      %v3444 = vadd.f32 %v2947, %v3394
      %v3445 = vadd.f32 %v2948, %v3399
      %v3446 = vadd.f32 %v2949, %v3402
      %v3447 = vadd.f32 %v2950, %v3407
      %v3448 = vadd.f32 %v2951, %v3410
      %v3449 = vld [vmem:[%s328 + $0x4] sm:$0xc]
      %s3450 = scalar_lea.vmem %s3, 80
      %v3451 = vld [vmem:[%s3450] sm:$0xf]
      %v3452 = vld [vmem:[%s3450 + $0x4] sm:$0xf]
      %v3453 = vld [vmem:[%s3450 + $0x8] sm:$0xf]
      %v3454 = vld [vmem:[%s3450 + $0xc] sm:$0xf]
      %v3456 = vunpack.c.l.b16 %v3449
      %v3457 = vpack.c.b16 %v2357, %v3456
      %v3458 = vrot.slane %v3457, 2
      %v3459 = vrot.slane %v2368, 2
      %v3460 = vsel %vm3132, %v3458, %v3459
      %v3461 = vrot.slane %v2369, 2
      %v3462 = vsel %vm3132, %v3459, %v3461
      %v3463 = vrot.slane %v2370, 2
      %v3464 = vsel %vm3132, %v3461, %v3463
      %v3465 = vrot.slane %v2371, 2
      %v3466 = vsel %vm3132, %v3463, %v3465
      %v3467 = vrot.slane %v2960, 2
      %v3468 = vsel %vm3132, %v3465, %v3467
      %v3473 = vunpack.c.l.b16 %v3451
      %v3474 = vunpack.c.l.b16 %v3452
      %v3475 = vunpack.c.l.b16 %v3453
      %v3476 = vunpack.c.l.b16 %v3454
      %v3477 = vpack.c.b16 %v3474, %v3473
      %v3478 = vpack.c.b16 %v3476, %v3475
      %v3482 = vsel %vm1210, %v3460, 0
      %v3485 = vsel %vm1210, %v3462, 0
      %v3488 = vsel %vm1210, %v3464, 0
      %v3491 = vsel %vm1210, %v3466, 0
      %v3494 = vsel %vm1210, %v3468, 0
      %3496 = vmatprep.subr.bf16.mxu0 0
      %3497 = vmatpush1.bf16.msra.mxu0 0
      %3498 = vmatprep.subr.bf16.mxu0 0
      %3499 = vmatpush1.bf16.msra.mxu0 0
      %3500 = vmatprep.subr.bf16.mxu0 0
      %3501 = vmatpush1.bf16.msra.mxu0 0
      %3502 = vmatprep.subr.bf16.mxu0 0
      %3503 = vmatpush1.bf16.msra.mxu0 0
      %3504 = vmatprep.subr.bf16.mxu0 0
      %3505 = vmatpush1.bf16.msra.mxu0 0
      %3506 = vmatprep.subr.bf16.mxu0 0
      %3507 = vmatpush1.bf16.msra.mxu0 0
      %3508 = vmatprep.subr.bf16.mxu0 0
      %3509 = vmatpush1.bf16.msra.mxu0 %v3478
      %3510 = vmatprep.subr.bf16.mxu0 0
      %3511 = vmatpush1.bf16.msra.mxu0 %v3477
      %3512 = vmatprep.subr.bf16.mxu0 0
      %3513 = vmatpush2.bf16.msra.mxu0 0
      %3514 = vmatprep.subr.bf16.mxu0 0
      %3515 = vmatpush2.bf16.msra.mxu0 0
      %3516 = vmatprep.subr.bf16.mxu0 0
      %3517 = vmatpush2.bf16.msra.mxu0 0
      %3518 = vmatprep.subr.bf16.mxu0 0
      %3519 = vmatpush2.bf16.msra.mxu0 0
      %3520 = vmatprep.subr.bf16.mxu0 0
      %3521 = vmatpush2.bf16.msra.mxu0 0
      %3522 = vmatprep.subr.bf16.mxu0 0
      %3523 = vmatpush2.bf16.msra.mxu0 0
      %3524 = vmatprep.subr.bf16.mxu0 0
      %3525 = vmatpush2.bf16.msra.mxu0 0
      %3526 = vmatprep.subr.bf16.mxu0 0
      %3527 = vmatpush2.bf16.msra.mxu0 0
      %3528 = vmatprep.mubr.bf16.mxu0 0
      %3529 = vmatmul.mubr.bf16.gmra.mxu0 %v3482
      %v3530 = vpop.f32.mrf.mxu0
      %v3531 = vadd.f32 0.0, %v3530
      %v3532 = vpop.f32.mrf.mxu0
      %v3533 = vpop.f32.mrf.mxu0
      %v3534 = vadd.f32 0.0, %v3533
      %v3535 = vpop.f32.mrf.mxu0
      %3536 = vmatprep.mubr.bf16.mxu0 0
      %3537 = vmatmul.mubr.bf16.gmra.mxu0 %v3485
      %v3538 = vpop.f32.mrf.mxu0
      %v3539 = vadd.f32 0.0, %v3538
      %v3540 = vpop.f32.mrf.mxu0
      %v3541 = vpop.f32.mrf.mxu0
      %v3542 = vadd.f32 0.0, %v3541
      %v3543 = vpop.f32.mrf.mxu0
      %3544 = vmatprep.mubr.bf16.mxu0 0
      %3545 = vmatmul.mubr.bf16.gmra.mxu0 %v3488
      %v3546 = vpop.f32.mrf.mxu0
      %v3547 = vadd.f32 0.0, %v3546
      %v3548 = vpop.f32.mrf.mxu0
      %v3549 = vpop.f32.mrf.mxu0
      %v3550 = vadd.f32 0.0, %v3549
      %v3551 = vpop.f32.mrf.mxu0
      %3552 = vmatprep.mubr.bf16.mxu0 0
      %3553 = vmatmul.mubr.bf16.gmra.mxu0 %v3491
      %v3554 = vpop.f32.mrf.mxu0
      %v3555 = vadd.f32 0.0, %v3554
      %v3556 = vpop.f32.mrf.mxu0
      %v3557 = vpop.f32.mrf.mxu0
      %v3558 = vadd.f32 0.0, %v3557
      %v3559 = vpop.f32.mrf.mxu0
      %3560 = vmatprep.mubr.bf16.mxu0 0
      %3561 = vmatmul.mubr.bf16.gmra.mxu0 %v3494
      %v3562 = vpop.f32.mrf.mxu0
      %v3563 = vadd.f32 0.0, %v3562
      %v3564 = vpop.f32.mrf.mxu0
      %v3565 = vpop.f32.mrf.mxu0
      %v3566 = vadd.f32 0.0, %v3565
      %v3567 = vpop.f32.mrf.mxu0
      %3568 = vdwg.mxu0
      %v3569 = vadd.f32 %v3114, %v3531
      %v3570 = vadd.f32 %v3115, %v3534
      %v3571 = vadd.f32 %v3116, %v3539
      %v3572 = vadd.f32 %v3117, %v3542
      %v3573 = vadd.f32 %v3118, %v3547
      %v3574 = vadd.f32 %v3119, %v3550
      %v3575 = vadd.f32 %v3120, %v3555
      %v3576 = vadd.f32 %v3121, %v3558
      %v3577 = vadd.f32 %v3122, %v3563
      %v3578 = vadd.f32 %v3123, %v3566
      %v3579 = vld [vmem:[%s323 + $0x10] sm:$0xc]
      %v3580 = vld [vmem:[%s323 + $0x14] sm:$0xf]
      %v3581 = vld [vmem:[%s323 + $0x18] sm:$0xf]
      %v3582 = vld [vmem:[%s323 + $0x1c] sm:$0xf]
      %v3583 = vld [vmem:[%s323 + $0x20] sm:$0xf]
      %v3584 = vld [vmem:[%s323 + $0x24] sm:$0xf]
      %v3585 = vld [vmem:[%s323 + $0x28] sm:$0xf]
      %v3586 = vld [vmem:[%s323 + $0x2c] sm:$0xf]
      %v3587 = vld [vmem:[%s323 + $0x30] sm:$0xf]
      %v3588 = vld [vmem:[%s323 + $0x34] sm:$0xf]
      %v3589 = vld [vmem:[%s323 + $0x38] sm:$0xf]
      %v3590 = vld [vmem:[%s323 + $0x3c] sm:$0xf]
      %v3591 = vld [vmem:[%s323 + $0x40] sm:$0xf]
      %v3592 = vld [vmem:[%s323 + $0x44] sm:$0xf]
      %v3593 = vld [vmem:[%s323 + $0x48] sm:$0xf]
      %v3594 = vld [vmem:[%s323 + $0x4c] sm:$0xf]
      %v3595 = vld [vmem:[%s323 + $0x50] sm:$0xf]
      %v3596 = vld [vmem:[%s323 + $0x54] sm:$0xf]
      %v3597 = vld [vmem:[%s323 + $0x58] sm:$0xf]
      %v3598 = vld [vmem:[%s323 + $0x5c] sm:$0xf]
      %v3599 = vld [vmem:[%s323 + $0x60] sm:$0xf]
      %v3600 = vld [vmem:[%s323 + $0x64] sm:$0xf]
      %v3601 = vld [vmem:[%s323 + $0x68] sm:$0xf]
      %v3602 = vld [vmem:[%s323 + $0x6c] sm:$0xf]
      %v3603 = vld [vmem:[%s323 + $0x70] sm:$0xf]
      %v3604 = vld [vmem:[%s323 + $0x74] sm:$0xf]
      %v3605 = vld [vmem:[%s323 + $0x78] sm:$0xf]
      %v3606 = vld [vmem:[%s323 + $0x7c] sm:$0xf]
      %v3607 = vld [vmem:[%s323 + $0x80] sm:$0xf]
      %v3608 = vld [vmem:[%s323 + $0x84] sm:$0xf]
      %v3609 = vld [vmem:[%s323 + $0x88] sm:$0xf]
      %v3610 = vld [vmem:[%s323 + $0x8c] sm:$0xf]
      %v3611 = vld [vmem:[%s323 + $0x90] sm:$0xf]
      %v3612 = vld [vmem:[%s323 + $0x94] sm:$0xf]
      %v3613 = vld [vmem:[%s323 + $0x98] sm:$0xf]
      %v3614 = vld [vmem:[%s323 + $0x9c] sm:$0xf]
      %v3615 = vld [vmem:[%s323 + $0xa0] sm:$0x3]
      %s3616 = scalar_lea.vmem %s2, 72
      %v3617 = vld [vmem:[%s3616] sm:$0xf]
      %v3618 = vld [vmem:[%s3616 + $0x4] sm:$0xf]
      %v3619 = vld [vmem:[%s3616 + $0x8] sm:$0xf]
      %v3657 = vunpack.c.l.b16 %v3579
      %v3658 = vunpack.c.l.b16 %v3580
      %v3659 = vunpack.c.l.b16 %v3581
      %v3660 = vunpack.c.l.b16 %v3582
      %v3661 = vunpack.c.l.b16 %v3583
      %v3662 = vunpack.c.l.b16 %v3584
      %v3663 = vunpack.c.l.b16 %v3585
      %v3664 = vunpack.c.l.b16 %v3586
      %v3665 = vunpack.c.l.b16 %v3587
      %v3666 = vunpack.c.l.b16 %v3588
      %v3667 = vunpack.c.l.b16 %v3589
      %v3668 = vunpack.c.l.b16 %v3590
      %v3669 = vunpack.c.l.b16 %v3591
      %v3670 = vunpack.c.l.b16 %v3592
      %v3671 = vunpack.c.l.b16 %v3593
      %v3672 = vunpack.c.l.b16 %v3594
      %v3673 = vunpack.c.l.b16 %v3595
      %v3674 = vunpack.c.l.b16 %v3596
      %v3675 = vunpack.c.l.b16 %v3597
      %v3676 = vunpack.c.l.b16 %v3598
      %v3677 = vunpack.c.l.b16 %v3599
      %v3678 = vunpack.c.l.b16 %v3600
      %v3679 = vunpack.c.l.b16 %v3601
      %v3680 = vunpack.c.l.b16 %v3602
      %v3681 = vunpack.c.l.b16 %v3603
      %v3682 = vunpack.c.l.b16 %v3604
      %v3683 = vunpack.c.l.b16 %v3605
      %v3684 = vunpack.c.l.b16 %v3606
      %v3685 = vunpack.c.l.b16 %v3607
      %v3686 = vunpack.c.l.b16 %v3608
      %v3687 = vunpack.c.l.b16 %v3609
      %v3688 = vunpack.c.l.b16 %v3610
      %v3689 = vunpack.c.l.b16 %v3611
      %v3690 = vunpack.c.l.b16 %v3612
      %v3691 = vunpack.c.l.b16 %v3613
      %v3692 = vunpack.c.l.b16 %v3614
      %v3693 = vunpack.c.l.b16 %v3615
      %v3694 = vpack.c.b16 %v3658, %v3657
      %v3695 = vpack.c.b16 %v3660, %v3659
      %v3696 = vpack.c.b16 %v3662, %v3661
      %v3697 = vpack.c.b16 %v3664, %v3663
      %v3698 = vpack.c.b16 %v3666, %v3665
      %v3699 = vpack.c.b16 %v3668, %v3667
      %v3700 = vpack.c.b16 %v3670, %v3669
      %v3701 = vpack.c.b16 %v3672, %v3671
      %v3702 = vpack.c.b16 %v3674, %v3673
      %v3703 = vpack.c.b16 %v3676, %v3675
      %v3704 = vpack.c.b16 %v3678, %v3677
      %v3705 = vpack.c.b16 %v3680, %v3679
      %v3706 = vpack.c.b16 %v3682, %v3681
      %v3707 = vpack.c.b16 %v3684, %v3683
      %v3708 = vpack.c.b16 %v3686, %v3685
      %v3709 = vpack.c.b16 %v3688, %v3687
      %v3710 = vpack.c.b16 %v3690, %v3689
      %v3711 = vpack.c.b16 %v3692, %v3691
      %v3712 = vpack.c.b16 %v3693, %v3693
      %v3713 = vrot.slane %v3694, 2
      %v3714 = vrot.slane %v3695, 2
      %v3715 = vsel %vm3132, %v3713, %v3714
      %v3716 = vrot.slane %v3696, 2
      %v3717 = vsel %vm3132, %v3714, %v3716
      %v3718 = vrot.slane %v3697, 2
      %v3719 = vsel %vm3132, %v3716, %v3718
      %v3720 = vrot.slane %v3698, 2
      %v3721 = vsel %vm3132, %v3718, %v3720
      %v3722 = vrot.slane %v3699, 2
      %v3723 = vsel %vm3132, %v3720, %v3722
      %v3724 = vrot.slane %v3700, 2
      %v3725 = vsel %vm3132, %v3722, %v3724
      %v3726 = vrot.slane %v3701, 2
      %v3727 = vsel %vm3132, %v3724, %v3726
      %v3728 = vrot.slane %v3702, 2
      %v3729 = vsel %vm3132, %v3726, %v3728
      %v3730 = vrot.slane %v3703, 2
      %v3731 = vsel %vm3132, %v3728, %v3730
      %v3732 = vrot.slane %v3704, 2
      %v3733 = vsel %vm3132, %v3730, %v3732
      %v3734 = vrot.slane %v3705, 2
      %v3735 = vsel %vm3132, %v3732, %v3734
      %v3736 = vrot.slane %v3706, 2
      %v3737 = vsel %vm3132, %v3734, %v3736
      %v3738 = vrot.slane %v3707, 2
      %v3739 = vsel %vm3132, %v3736, %v3738
      %v3740 = vrot.slane %v3708, 2
      %v3741 = vsel %vm3132, %v3738, %v3740
      %v3742 = vrot.slane %v3709, 2
      %v3743 = vsel %vm3132, %v3740, %v3742
      %v3744 = vrot.slane %v3710, 2
      %v3745 = vsel %vm3132, %v3742, %v3744
      %v3746 = vrot.slane %v3711, 2
      %v3747 = vsel %vm3132, %v3744, %v3746
      %v3748 = vrot.slane %v3712, 2
      %v3749 = vsel %vm3132, %v3746, %v3748
      %v3753 = vunpack.c.l.b16 %v3617
      %v3754 = vunpack.c.l.b16 %v3618
      %v3755 = vunpack.c.l.b16 %v3619
      %v3756 = vpack.c.b16 %v3754, %v3753
      %v3757 = vpack.c.b16 %v3755, %v3755
      %v3760 = vsel %vm649, %v3715, 0
      %v3763 = vsel %vm649, %v3717, 0
      %v3766 = vsel %vm649, %v3719, 0
      %v3769 = vsel %vm649, %v3721, 0
      %v3772 = vsel %vm649, %v3723, 0
      %v3775 = vsel %vm649, %v3725, 0
      %v3778 = vsel %vm649, %v3727, 0
      %v3781 = vsel %vm649, %v3729, 0
      %v3784 = vsel %vm649, %v3731, 0
      %v3787 = vsel %vm649, %v3733, 0
      %v3790 = vsel %vm649, %v3735, 0
      %v3793 = vsel %vm649, %v3737, 0
      %v3796 = vsel %vm649, %v3739, 0
      %v3799 = vsel %vm649, %v3741, 0
      %v3802 = vsel %vm649, %v3743, 0
      %v3805 = vsel %vm649, %v3745, 0
      %v3808 = vsel %vm649, %v3747, 0
      %v3811 = vsel %vm649, %v3749, 0
      %v3814 = vsel %vm704, %v3757, 0
      %3816 = vmatprep.subr.bf16.mxu0 0
      %3817 = vmatpush1.bf16.msra.mxu0 0
      %3818 = vmatprep.subr.bf16.mxu0 0
      %3819 = vmatpush1.bf16.msra.mxu0 0
      %3820 = vmatprep.subr.bf16.mxu0 0
      %3821 = vmatpush1.bf16.msra.mxu0 0
      %3822 = vmatprep.subr.bf16.mxu0 0
      %3823 = vmatpush1.bf16.msra.mxu0 0
      %3824 = vmatprep.subr.bf16.mxu0 0
      %3825 = vmatpush1.bf16.msra.mxu0 0
      %3826 = vmatprep.subr.bf16.mxu0 0
      %3827 = vmatpush1.bf16.msra.mxu0 0
      %3828 = vmatprep.subr.bf16.mxu0 0
      %3829 = vmatpush1.bf16.msra.mxu0 %v3814
      %3830 = vmatprep.subr.bf16.mxu0 0
      %3831 = vmatpush1.bf16.msra.mxu0 %v3756
      %3832 = vmatprep.subr.bf16.mxu0 0
      %3833 = vmatpush2.bf16.msra.mxu0 0
      %3834 = vmatprep.subr.bf16.mxu0 0
      %3835 = vmatpush2.bf16.msra.mxu0 0
      %3836 = vmatprep.subr.bf16.mxu0 0
      %3837 = vmatpush2.bf16.msra.mxu0 0
      %3838 = vmatprep.subr.bf16.mxu0 0
      %3839 = vmatpush2.bf16.msra.mxu0 0
      %3840 = vmatprep.subr.bf16.mxu0 0
      %3841 = vmatpush2.bf16.msra.mxu0 0
      %3842 = vmatprep.subr.bf16.mxu0 0
      %3843 = vmatpush2.bf16.msra.mxu0 0
      %3844 = vmatprep.subr.bf16.mxu0 0
      %3845 = vmatpush2.bf16.msra.mxu0 0
      %3846 = vmatprep.subr.bf16.mxu0 0
      %3847 = vmatpush2.bf16.msra.mxu0 0
      %3848 = vmatprep.mubr.bf16.mxu0 0
      %3849 = vmatmul.mubr.bf16.gmra.mxu0 %v3760
      %v3850 = vpop.f32.mrf.mxu0
      %v3851 = vadd.f32 0.0, %v3850
      %v3852 = vpop.f32.mrf.mxu0
      %v3853 = vpop.f32.mrf.mxu0
      %v3854 = vadd.f32 0.0, %v3853
      %v3855 = vpop.f32.mrf.mxu0
      %3856 = vmatprep.mubr.bf16.mxu0 0
      %3857 = vmatmul.mubr.bf16.gmra.mxu0 %v3763
      %v3858 = vpop.f32.mrf.mxu0
      %v3859 = vadd.f32 0.0, %v3858
      %v3860 = vpop.f32.mrf.mxu0
      %v3861 = vpop.f32.mrf.mxu0
      %v3862 = vadd.f32 0.0, %v3861
      %v3863 = vpop.f32.mrf.mxu0
      %3864 = vmatprep.mubr.bf16.mxu0 0
      %3865 = vmatmul.mubr.bf16.gmra.mxu0 %v3766
      %v3866 = vpop.f32.mrf.mxu0
      %v3867 = vadd.f32 0.0, %v3866
      %v3868 = vpop.f32.mrf.mxu0
      %v3869 = vpop.f32.mrf.mxu0
      %v3870 = vadd.f32 0.0, %v3869
      %v3871 = vpop.f32.mrf.mxu0
      %3872 = vmatprep.mubr.bf16.mxu0 0
      %3873 = vmatmul.mubr.bf16.gmra.mxu0 %v3769
      %v3874 = vpop.f32.mrf.mxu0
      %v3875 = vadd.f32 0.0, %v3874
      %v3876 = vpop.f32.mrf.mxu0
      %v3877 = vpop.f32.mrf.mxu0
      %v3878 = vadd.f32 0.0, %v3877
      %v3879 = vpop.f32.mrf.mxu0
      %3880 = vmatprep.mubr.bf16.mxu0 0
      %3881 = vmatmul.mubr.bf16.gmra.mxu0 %v3772
      %v3882 = vpop.f32.mrf.mxu0
      %v3883 = vadd.f32 0.0, %v3882
      %v3884 = vpop.f32.mrf.mxu0
      %v3885 = vpop.f32.mrf.mxu0
      %v3886 = vadd.f32 0.0, %v3885
      %v3887 = vpop.f32.mrf.mxu0
      %3888 = vmatprep.mubr.bf16.mxu0 0
      %3889 = vmatmul.mubr.bf16.gmra.mxu0 %v3775
      %v3890 = vpop.f32.mrf.mxu0
      %v3891 = vadd.f32 0.0, %v3890
      %v3892 = vpop.f32.mrf.mxu0
      %v3893 = vpop.f32.mrf.mxu0
      %v3894 = vadd.f32 0.0, %v3893
      %v3895 = vpop.f32.mrf.mxu0
      %3896 = vmatprep.mubr.bf16.mxu0 0
      %3897 = vmatmul.mubr.bf16.gmra.mxu0 %v3778
      %v3898 = vpop.f32.mrf.mxu0
      %v3899 = vadd.f32 0.0, %v3898
      %v3900 = vpop.f32.mrf.mxu0
      %v3901 = vpop.f32.mrf.mxu0
      %v3902 = vadd.f32 0.0, %v3901
      %v3903 = vpop.f32.mrf.mxu0
      %3904 = vmatprep.mubr.bf16.mxu0 0
      %3905 = vmatmul.mubr.bf16.gmra.mxu0 %v3781
      %v3906 = vpop.f32.mrf.mxu0
      %v3907 = vadd.f32 0.0, %v3906
      %v3908 = vpop.f32.mrf.mxu0
      %v3909 = vpop.f32.mrf.mxu0
      %v3910 = vadd.f32 0.0, %v3909
      %v3911 = vpop.f32.mrf.mxu0
      %3912 = vmatprep.mubr.bf16.mxu0 0
      %3913 = vmatmul.mubr.bf16.gmra.mxu0 %v3784
      %v3914 = vpop.f32.mrf.mxu0
      %v3915 = vadd.f32 0.0, %v3914
      %v3916 = vpop.f32.mrf.mxu0
      %v3917 = vpop.f32.mrf.mxu0
      %v3918 = vadd.f32 0.0, %v3917
      %v3919 = vpop.f32.mrf.mxu0
      %3920 = vmatprep.mubr.bf16.mxu0 0
      %3921 = vmatmul.mubr.bf16.gmra.mxu0 %v3787
      %v3922 = vpop.f32.mrf.mxu0
      %v3923 = vadd.f32 0.0, %v3922
      %v3924 = vpop.f32.mrf.mxu0
      %v3925 = vpop.f32.mrf.mxu0
      %v3926 = vadd.f32 0.0, %v3925
      %v3927 = vpop.f32.mrf.mxu0
      %3928 = vmatprep.mubr.bf16.mxu0 0
      %3929 = vmatmul.mubr.bf16.gmra.mxu0 %v3790
      %v3930 = vpop.f32.mrf.mxu0
      %v3931 = vadd.f32 0.0, %v3930
      %v3932 = vpop.f32.mrf.mxu0
      %v3933 = vpop.f32.mrf.mxu0
      %v3934 = vadd.f32 0.0, %v3933
      %v3935 = vpop.f32.mrf.mxu0
      %3936 = vmatprep.mubr.bf16.mxu0 0
      %3937 = vmatmul.mubr.bf16.gmra.mxu0 %v3793
      %v3938 = vpop.f32.mrf.mxu0
      %v3939 = vadd.f32 0.0, %v3938
      %v3940 = vpop.f32.mrf.mxu0
      %v3941 = vpop.f32.mrf.mxu0
      %v3942 = vadd.f32 0.0, %v3941
      %v3943 = vpop.f32.mrf.mxu0
      %3944 = vmatprep.mubr.bf16.mxu0 0
      %3945 = vmatmul.mubr.bf16.gmra.mxu0 %v3796
      %v3946 = vpop.f32.mrf.mxu0
      %v3947 = vadd.f32 0.0, %v3946
      %v3948 = vpop.f32.mrf.mxu0
      %v3949 = vpop.f32.mrf.mxu0
      %v3950 = vadd.f32 0.0, %v3949
      %v3951 = vpop.f32.mrf.mxu0
      %3952 = vmatprep.mubr.bf16.mxu0 0
      %3953 = vmatmul.mubr.bf16.gmra.mxu0 %v3799
      %v3954 = vpop.f32.mrf.mxu0
      %v3955 = vadd.f32 0.0, %v3954
      %v3956 = vpop.f32.mrf.mxu0
      %v3957 = vpop.f32.mrf.mxu0
      %v3958 = vadd.f32 0.0, %v3957
      %v3959 = vpop.f32.mrf.mxu0
      %3960 = vmatprep.mubr.bf16.mxu0 0
      %3961 = vmatmul.mubr.bf16.gmra.mxu0 %v3802
      %v3962 = vpop.f32.mrf.mxu0
      %v3963 = vadd.f32 0.0, %v3962
      %v3964 = vpop.f32.mrf.mxu0
      %v3965 = vpop.f32.mrf.mxu0
      %v3966 = vadd.f32 0.0, %v3965
      %v3967 = vpop.f32.mrf.mxu0
      %3968 = vmatprep.mubr.bf16.mxu0 0
      %3969 = vmatmul.mubr.bf16.gmra.mxu0 %v3805
      %v3970 = vpop.f32.mrf.mxu0
      %v3971 = vadd.f32 0.0, %v3970
      %v3972 = vpop.f32.mrf.mxu0
      %v3973 = vpop.f32.mrf.mxu0
      %v3974 = vadd.f32 0.0, %v3973
      %v3975 = vpop.f32.mrf.mxu0
      %3976 = vmatprep.mubr.bf16.mxu0 0
      %3977 = vmatmul.mubr.bf16.gmra.mxu0 %v3808
      %v3978 = vpop.f32.mrf.mxu0
      %v3979 = vadd.f32 0.0, %v3978
      %v3980 = vpop.f32.mrf.mxu0
      %v3981 = vpop.f32.mrf.mxu0
      %v3982 = vadd.f32 0.0, %v3981
      %v3983 = vpop.f32.mrf.mxu0
      %3984 = vmatprep.mubr.bf16.mxu0 0
      %3985 = vmatmul.mubr.bf16.gmra.mxu0 %v3811
      %v3986 = vpop.f32.mrf.mxu0
      %v3987 = vadd.f32 0.0, %v3986
      %v3988 = vpop.f32.mrf.mxu0
      %v3989 = vpop.f32.mrf.mxu0
      %v3990 = vadd.f32 0.0, %v3989
      %v3991 = vpop.f32.mrf.mxu0
      %3992 = vdwg.mxu0
      %v3993 = vadd.f32 %v3413, %v3851
      %v3994 = vadd.f32 %v3414, %v3854
      %v3995 = vadd.f32 %v3415, %v3859
      %v3996 = vadd.f32 %v3416, %v3862
      %v3997 = vadd.f32 %v3417, %v3867
      %v3998 = vadd.f32 %v3418, %v3870
      %v3999 = vadd.f32 %v3419, %v3875
      %v4000 = vadd.f32 %v3420, %v3878
      %v4001 = vadd.f32 %v3421, %v3883
      %v4002 = vadd.f32 %v3422, %v3886
      %v4003 = vadd.f32 %v3423, %v3891
      %v4004 = vadd.f32 %v3424, %v3894
      %v4005 = vadd.f32 %v3425, %v3899
      %v4006 = vadd.f32 %v3426, %v3902
      %v4007 = vadd.f32 %v3427, %v3907
      %v4008 = vadd.f32 %v3428, %v3910
      %v4009 = vadd.f32 %v3429, %v3915
      %v4010 = vadd.f32 %v3430, %v3918
      %v4011 = vadd.f32 %v3431, %v3923
      %v4012 = vadd.f32 %v3432, %v3926
      %v4013 = vadd.f32 %v3433, %v3931
      %v4014 = vadd.f32 %v3434, %v3934
      %v4015 = vadd.f32 %v3435, %v3939
      %v4016 = vadd.f32 %v3436, %v3942
      %v4017 = vadd.f32 %v3437, %v3947
      %v4018 = vadd.f32 %v3438, %v3950
      %v4019 = vadd.f32 %v3439, %v3955
      %v4020 = vadd.f32 %v3440, %v3958
      %v4021 = vadd.f32 %v3441, %v3963
      %v4022 = vadd.f32 %v3442, %v3966
      %v4023 = vadd.f32 %v3443, %v3971
      %v4024 = vadd.f32 %v3444, %v3974
      %v4025 = vadd.f32 %v3445, %v3979
      %v4026 = vadd.f32 %v3446, %v3982
      %v4027 = vadd.f32 %v3447, %v3987
      %v4028 = vadd.f32 %v3448, %v3990
      %v4029 = vld [vmem:[%s328 + $0x8] sm:$0xc]
      %v4030 = vld [vmem:[%s328 + $0xc] sm:$0xf]
      %v4031 = vld [vmem:[%s328 + $0x10] sm:$0xf]
      %v4032 = vld [vmem:[%s328 + $0x14] sm:$0xf]
      %v4033 = vld [vmem:[%s328 + $0x18] sm:$0xf]
      %v4034 = vld [vmem:[%s328 + $0x1c] sm:$0xf]
      %v4035 = vld [vmem:[%s328 + $0x20] sm:$0xf]
      %v4036 = vld [vmem:[%s328 + $0x24] sm:$0xf]
      %v4037 = vld [vmem:[%s328 + $0x28] sm:$0xf]
      %v4038 = vld [vmem:[%s328 + $0x2c] sm:$0xf]
      %v4039 = vld [vmem:[%s328 + $0x30] sm:$0x3]
      %s4040 = scalar_lea.vmem %s3, 96
      %v4041 = vld [vmem:[%s4040] sm:$0xf]
      %v4042 = vld [vmem:[%s4040 + $0x4] sm:$0xf]
      %v4043 = vld [vmem:[%s4040 + $0x8] sm:$0xf]
      %v4044 = vld [vmem:[%s4040 + $0xc] sm:$0xf]
      %v4056 = vunpack.c.l.b16 %v4029
      %v4057 = vunpack.c.l.b16 %v4030
      %v4058 = vunpack.c.l.b16 %v4031
      %v4059 = vunpack.c.l.b16 %v4032
      %v4060 = vunpack.c.l.b16 %v4033
      %v4061 = vunpack.c.l.b16 %v4034
      %v4062 = vunpack.c.l.b16 %v4035
      %v4063 = vunpack.c.l.b16 %v4036
      %v4064 = vunpack.c.l.b16 %v4037
      %v4065 = vunpack.c.l.b16 %v4038
      %v4066 = vunpack.c.l.b16 %v4039
      %v4067 = vpack.c.b16 %v4057, %v4056
      %v4068 = vpack.c.b16 %v4059, %v4058
      %v4069 = vpack.c.b16 %v4061, %v4060
      %v4070 = vpack.c.b16 %v4063, %v4062
      %v4071 = vpack.c.b16 %v4065, %v4064
      %v4072 = vpack.c.b16 %v4066, %v4066
      %v4073 = vrot.slane %v4067, 2
      %v4074 = vrot.slane %v4068, 2
      %v4075 = vsel %vm3132, %v4073, %v4074
      %v4076 = vrot.slane %v4069, 2
      %v4077 = vsel %vm3132, %v4074, %v4076
      %v4078 = vrot.slane %v4070, 2
      %v4079 = vsel %vm3132, %v4076, %v4078
      %v4080 = vrot.slane %v4071, 2
      %v4081 = vsel %vm3132, %v4078, %v4080
      %v4082 = vrot.slane %v4072, 2
      %v4083 = vsel %vm3132, %v4080, %v4082
      %v4088 = vunpack.c.l.b16 %v4041
      %v4089 = vunpack.c.l.b16 %v4042
      %v4090 = vunpack.c.l.b16 %v4043
      %v4091 = vunpack.c.l.b16 %v4044
      %v4092 = vpack.c.b16 %v4089, %v4088
      %v4093 = vpack.c.b16 %v4091, %v4090
      %v4097 = vsel %vm1210, %v4075, 0
      %v4100 = vsel %vm1210, %v4077, 0
      %v4103 = vsel %vm1210, %v4079, 0
      %v4106 = vsel %vm1210, %v4081, 0
      %v4109 = vsel %vm1210, %v4083, 0
      %4111 = vmatprep.subr.bf16.mxu0 0
      %4112 = vmatpush1.bf16.msra.mxu0 0
      %4113 = vmatprep.subr.bf16.mxu0 0
      %4114 = vmatpush1.bf16.msra.mxu0 0
      %4115 = vmatprep.subr.bf16.mxu0 0
      %4116 = vmatpush1.bf16.msra.mxu0 0
      %4117 = vmatprep.subr.bf16.mxu0 0
      %4118 = vmatpush1.bf16.msra.mxu0 0
      %4119 = vmatprep.subr.bf16.mxu0 0
      %4120 = vmatpush1.bf16.msra.mxu0 0
      %4121 = vmatprep.subr.bf16.mxu0 0
      %4122 = vmatpush1.bf16.msra.mxu0 0
      %4123 = vmatprep.subr.bf16.mxu0 0
      %4124 = vmatpush1.bf16.msra.mxu0 %v4093
      %4125 = vmatprep.subr.bf16.mxu0 0
      %4126 = vmatpush1.bf16.msra.mxu0 %v4092
      %4127 = vmatprep.subr.bf16.mxu0 0
      %4128 = vmatpush2.bf16.msra.mxu0 0
      %4129 = vmatprep.subr.bf16.mxu0 0
      %4130 = vmatpush2.bf16.msra.mxu0 0
      %4131 = vmatprep.subr.bf16.mxu0 0
      %4132 = vmatpush2.bf16.msra.mxu0 0
      %4133 = vmatprep.subr.bf16.mxu0 0
      %4134 = vmatpush2.bf16.msra.mxu0 0
      %4135 = vmatprep.subr.bf16.mxu0 0
      %4136 = vmatpush2.bf16.msra.mxu0 0
      %4137 = vmatprep.subr.bf16.mxu0 0
      %4138 = vmatpush2.bf16.msra.mxu0 0
      %4139 = vmatprep.subr.bf16.mxu0 0
      %4140 = vmatpush2.bf16.msra.mxu0 0
      %4141 = vmatprep.subr.bf16.mxu0 0
      %4142 = vmatpush2.bf16.msra.mxu0 0
      %4143 = vmatprep.mubr.bf16.mxu0 0
      %4144 = vmatmul.mubr.bf16.gmra.mxu0 %v4097
      %v4145 = vpop.f32.mrf.mxu0
      %v4146 = vadd.f32 0.0, %v4145
      %v4147 = vpop.f32.mrf.mxu0
      %v4148 = vpop.f32.mrf.mxu0
      %v4149 = vadd.f32 0.0, %v4148
      %v4150 = vpop.f32.mrf.mxu0
      %4151 = vmatprep.mubr.bf16.mxu0 0
      %4152 = vmatmul.mubr.bf16.gmra.mxu0 %v4100
      %v4153 = vpop.f32.mrf.mxu0
      %v4154 = vadd.f32 0.0, %v4153
      %v4155 = vpop.f32.mrf.mxu0
      %v4156 = vpop.f32.mrf.mxu0
      %v4157 = vadd.f32 0.0, %v4156
      %v4158 = vpop.f32.mrf.mxu0
      %4159 = vmatprep.mubr.bf16.mxu0 0
      %4160 = vmatmul.mubr.bf16.gmra.mxu0 %v4103
      %v4161 = vpop.f32.mrf.mxu0
      %v4162 = vadd.f32 0.0, %v4161
      %v4163 = vpop.f32.mrf.mxu0
      %v4164 = vpop.f32.mrf.mxu0
      %v4165 = vadd.f32 0.0, %v4164
      %v4166 = vpop.f32.mrf.mxu0
      %4167 = vmatprep.mubr.bf16.mxu0 0
      %4168 = vmatmul.mubr.bf16.gmra.mxu0 %v4106
      %v4169 = vpop.f32.mrf.mxu0
      %v4170 = vadd.f32 0.0, %v4169
      %v4171 = vpop.f32.mrf.mxu0
      %v4172 = vpop.f32.mrf.mxu0
      %v4173 = vadd.f32 0.0, %v4172
      %v4174 = vpop.f32.mrf.mxu0
      %4175 = vmatprep.mubr.bf16.mxu0 0
      %4176 = vmatmul.mubr.bf16.gmra.mxu0 %v4109
      %v4177 = vpop.f32.mrf.mxu0
      %v4178 = vadd.f32 0.0, %v4177
      %v4179 = vpop.f32.mrf.mxu0
      %v4180 = vpop.f32.mrf.mxu0
      %v4181 = vadd.f32 0.0, %v4180
      %v4182 = vpop.f32.mrf.mxu0
      %4183 = vdwg.mxu0
      %v4184 = vadd.f32 %v3569, %v4146
      %v4185 = vadd.f32 %v3570, %v4149
      %v4186 = vadd.f32 %v3571, %v4154
      %v4187 = vadd.f32 %v3572, %v4157
      %v4188 = vadd.f32 %v3573, %v4162
      %v4189 = vadd.f32 %v3574, %v4165
      %v4190 = vadd.f32 %v3575, %v4170
      %v4191 = vadd.f32 %v3576, %v4173
      %v4192 = vadd.f32 %v3577, %v4178
      %v4193 = vadd.f32 %v3578, %v4181
      %v4194 = vld [vmem:[%s323 + $0xa0] sm:$0x7]
      %s4195 = scalar_lea.vmem %s2, 84
      %v4196 = vld [vmem:[%s4195] sm:$0xf]
      %v4197 = vld [vmem:[%s4195 + $0x4] sm:$0xf]
      %v4198 = vld [vmem:[%s4195 + $0x8] sm:$0xf]
      %v4200 = vunpack.c.l.b16 %v4194
      %v4201 = vpack.c.b16 %v4200, %v4200
      %vm4202 = vsmask.f32 5376
      %v4204 = vshrl.u32 %v3694, 16
      %v4206 = vrot.slane %v4204, 2
      %v4207 = vshll.u32 %v3694, 16
      %v4209 = vrot.slane %v4207, 3
      %v4210 = vor.u32 %v4206, %v4209
      %v4212 = vshrl.u32 %v3695, 16
      %v4214 = vrot.slane %v4212, 2
      %v4215 = vshll.u32 %v3695, 16
      %v4217 = vrot.slane %v4215, 3
      %v4218 = vor.u32 %v4214, %v4217
      %v4219 = vsel %vm4202, %v4210, %v4218
      %v4221 = vshrl.u32 %v3696, 16
      %v4223 = vrot.slane %v4221, 2
      %v4224 = vshll.u32 %v3696, 16
      %v4226 = vrot.slane %v4224, 3
      %v4227 = vor.u32 %v4223, %v4226
      %v4228 = vsel %vm4202, %v4218, %v4227
      %v4230 = vshrl.u32 %v3697, 16
      %v4232 = vrot.slane %v4230, 2
      %v4233 = vshll.u32 %v3697, 16
      %v4235 = vrot.slane %v4233, 3
      %v4236 = vor.u32 %v4232, %v4235
      %v4237 = vsel %vm4202, %v4227, %v4236
      %v4239 = vshrl.u32 %v3698, 16
      %v4241 = vrot.slane %v4239, 2
      %v4242 = vshll.u32 %v3698, 16
      %v4244 = vrot.slane %v4242, 3
      %v4245 = vor.u32 %v4241, %v4244
      %v4246 = vsel %vm4202, %v4236, %v4245
      %v4248 = vshrl.u32 %v3699, 16
      %v4250 = vrot.slane %v4248, 2
      %v4251 = vshll.u32 %v3699, 16
      %v4253 = vrot.slane %v4251, 3
      %v4254 = vor.u32 %v4250, %v4253
      %v4255 = vsel %vm4202, %v4245, %v4254
      %v4257 = vshrl.u32 %v3700, 16
      %v4259 = vrot.slane %v4257, 2
      %v4260 = vshll.u32 %v3700, 16
      %v4262 = vrot.slane %v4260, 3
      %v4263 = vor.u32 %v4259, %v4262
      %v4264 = vsel %vm4202, %v4254, %v4263
      %v4266 = vshrl.u32 %v3701, 16
      %v4268 = vrot.slane %v4266, 2
      %v4269 = vshll.u32 %v3701, 16
      %v4271 = vrot.slane %v4269, 3
      %v4272 = vor.u32 %v4268, %v4271
      %v4273 = vsel %vm4202, %v4263, %v4272
      %v4275 = vshrl.u32 %v3702, 16
      %v4277 = vrot.slane %v4275, 2
      %v4278 = vshll.u32 %v3702, 16
      %v4280 = vrot.slane %v4278, 3
      %v4281 = vor.u32 %v4277, %v4280
      %v4282 = vsel %vm4202, %v4272, %v4281
      %v4284 = vshrl.u32 %v3703, 16
      %v4286 = vrot.slane %v4284, 2
      %v4287 = vshll.u32 %v3703, 16
      %v4289 = vrot.slane %v4287, 3
      %v4290 = vor.u32 %v4286, %v4289
      %v4291 = vsel %vm4202, %v4281, %v4290
      %v4293 = vshrl.u32 %v3704, 16
      %v4295 = vrot.slane %v4293, 2
      %v4296 = vshll.u32 %v3704, 16
      %v4298 = vrot.slane %v4296, 3
      %v4299 = vor.u32 %v4295, %v4298
      %v4300 = vsel %vm4202, %v4290, %v4299
      %v4302 = vshrl.u32 %v3705, 16
      %v4304 = vrot.slane %v4302, 2
      %v4305 = vshll.u32 %v3705, 16
      %v4307 = vrot.slane %v4305, 3
      %v4308 = vor.u32 %v4304, %v4307
      %v4309 = vsel %vm4202, %v4299, %v4308
      %v4311 = vshrl.u32 %v3706, 16
      %v4313 = vrot.slane %v4311, 2
      %v4314 = vshll.u32 %v3706, 16
      %v4316 = vrot.slane %v4314, 3
      %v4317 = vor.u32 %v4313, %v4316
      %v4318 = vsel %vm4202, %v4308, %v4317
      %v4320 = vshrl.u32 %v3707, 16
      %v4322 = vrot.slane %v4320, 2
      %v4323 = vshll.u32 %v3707, 16
      %v4325 = vrot.slane %v4323, 3
      %v4326 = vor.u32 %v4322, %v4325
      %v4327 = vsel %vm4202, %v4317, %v4326
      %v4329 = vshrl.u32 %v3708, 16
      %v4331 = vrot.slane %v4329, 2
      %v4332 = vshll.u32 %v3708, 16
      %v4334 = vrot.slane %v4332, 3
      %v4335 = vor.u32 %v4331, %v4334
      %v4336 = vsel %vm4202, %v4326, %v4335
      %v4338 = vshrl.u32 %v3709, 16
      %v4340 = vrot.slane %v4338, 2
      %v4341 = vshll.u32 %v3709, 16
      %v4343 = vrot.slane %v4341, 3
      %v4344 = vor.u32 %v4340, %v4343
      %v4345 = vsel %vm4202, %v4335, %v4344
      %v4347 = vshrl.u32 %v3710, 16
      %v4349 = vrot.slane %v4347, 2
      %v4350 = vshll.u32 %v3710, 16
      %v4352 = vrot.slane %v4350, 3
      %v4353 = vor.u32 %v4349, %v4352
      %v4354 = vsel %vm4202, %v4344, %v4353
      %v4356 = vshrl.u32 %v3711, 16
      %v4358 = vrot.slane %v4356, 2
      %v4359 = vshll.u32 %v3711, 16
      %v4361 = vrot.slane %v4359, 3
      %v4362 = vor.u32 %v4358, %v4361
      %v4363 = vsel %vm4202, %v4353, %v4362
      %v4365 = vshrl.u32 %v4201, 16
      %v4367 = vrot.slane %v4365, 2
      %v4368 = vshll.u32 %v4201, 16
      %v4370 = vrot.slane %v4368, 3
      %v4371 = vor.u32 %v4367, %v4370
      %v4372 = vsel %vm4202, %v4362, %v4371
      %v4376 = vunpack.c.l.b16 %v4196
      %v4377 = vunpack.c.l.b16 %v4197
      %v4378 = vunpack.c.l.b16 %v4198
      %v4379 = vpack.c.b16 %v4377, %v4376
      %v4380 = vpack.c.b16 %v4378, %v4378
      %v4383 = vsel %vm649, %v4219, 0
      %v4386 = vsel %vm649, %v4228, 0
      %v4389 = vsel %vm649, %v4237, 0
      %v4392 = vsel %vm649, %v4246, 0
      %v4395 = vsel %vm649, %v4255, 0
      %v4398 = vsel %vm649, %v4264, 0
      %v4401 = vsel %vm649, %v4273, 0
      %v4404 = vsel %vm649, %v4282, 0
      %v4407 = vsel %vm649, %v4291, 0
      %v4410 = vsel %vm649, %v4300, 0
      %v4413 = vsel %vm649, %v4309, 0
      %v4416 = vsel %vm649, %v4318, 0
      %v4419 = vsel %vm649, %v4327, 0
      %v4422 = vsel %vm649, %v4336, 0
      %v4425 = vsel %vm649, %v4345, 0
      %v4428 = vsel %vm649, %v4354, 0
      %v4431 = vsel %vm649, %v4363, 0
      %v4434 = vsel %vm649, %v4372, 0
      %v4437 = vsel %vm704, %v4380, 0
      %4439 = vmatprep.subr.bf16.mxu0 0
      %4440 = vmatpush1.bf16.msra.mxu0 0
      %4441 = vmatprep.subr.bf16.mxu0 0
      %4442 = vmatpush1.bf16.msra.mxu0 0
      %4443 = vmatprep.subr.bf16.mxu0 0
      %4444 = vmatpush1.bf16.msra.mxu0 0
      %4445 = vmatprep.subr.bf16.mxu0 0
      %4446 = vmatpush1.bf16.msra.mxu0 0
      %4447 = vmatprep.subr.bf16.mxu0 0
      %4448 = vmatpush1.bf16.msra.mxu0 0
      %4449 = vmatprep.subr.bf16.mxu0 0
      %4450 = vmatpush1.bf16.msra.mxu0 0
      %4451 = vmatprep.subr.bf16.mxu0 0
      %4452 = vmatpush1.bf16.msra.mxu0 %v4437
      %4453 = vmatprep.subr.bf16.mxu0 0
      %4454 = vmatpush1.bf16.msra.mxu0 %v4379
      %4455 = vmatprep.subr.bf16.mxu0 0
      %4456 = vmatpush2.bf16.msra.mxu0 0
      %4457 = vmatprep.subr.bf16.mxu0 0
      %4458 = vmatpush2.bf16.msra.mxu0 0
      %4459 = vmatprep.subr.bf16.mxu0 0
      %4460 = vmatpush2.bf16.msra.mxu0 0
      %4461 = vmatprep.subr.bf16.mxu0 0
      %4462 = vmatpush2.bf16.msra.mxu0 0
      %4463 = vmatprep.subr.bf16.mxu0 0
      %4464 = vmatpush2.bf16.msra.mxu0 0
      %4465 = vmatprep.subr.bf16.mxu0 0
      %4466 = vmatpush2.bf16.msra.mxu0 0
      %4467 = vmatprep.subr.bf16.mxu0 0
      %4468 = vmatpush2.bf16.msra.mxu0 0
      %4469 = vmatprep.subr.bf16.mxu0 0
      %4470 = vmatpush2.bf16.msra.mxu0 0
      %4471 = vmatprep.mubr.bf16.mxu0 0
      %4472 = vmatmul.mubr.bf16.gmra.mxu0 %v4383
      %v4473 = vpop.f32.mrf.mxu0
      %v4474 = vadd.f32 0.0, %v4473
      %v4475 = vpop.f32.mrf.mxu0
      %v4476 = vpop.f32.mrf.mxu0
      %v4477 = vadd.f32 0.0, %v4476
      %v4478 = vpop.f32.mrf.mxu0
      %4479 = vmatprep.mubr.bf16.mxu0 0
      %4480 = vmatmul.mubr.bf16.gmra.mxu0 %v4386
      %v4481 = vpop.f32.mrf.mxu0
      %v4482 = vadd.f32 0.0, %v4481
      %v4483 = vpop.f32.mrf.mxu0
      %v4484 = vpop.f32.mrf.mxu0
      %v4485 = vadd.f32 0.0, %v4484
      %v4486 = vpop.f32.mrf.mxu0
      %4487 = vmatprep.mubr.bf16.mxu0 0
      %4488 = vmatmul.mubr.bf16.gmra.mxu0 %v4389
      %v4489 = vpop.f32.mrf.mxu0
      %v4490 = vadd.f32 0.0, %v4489
      %v4491 = vpop.f32.mrf.mxu0
      %v4492 = vpop.f32.mrf.mxu0
      %v4493 = vadd.f32 0.0, %v4492
      %v4494 = vpop.f32.mrf.mxu0
      %4495 = vmatprep.mubr.bf16.mxu0 0
      %4496 = vmatmul.mubr.bf16.gmra.mxu0 %v4392
      %v4497 = vpop.f32.mrf.mxu0
      %v4498 = vadd.f32 0.0, %v4497
      %v4499 = vpop.f32.mrf.mxu0
      %v4500 = vpop.f32.mrf.mxu0
      %v4501 = vadd.f32 0.0, %v4500
      %v4502 = vpop.f32.mrf.mxu0
      %4503 = vmatprep.mubr.bf16.mxu0 0
      %4504 = vmatmul.mubr.bf16.gmra.mxu0 %v4395
      %v4505 = vpop.f32.mrf.mxu0
      %v4506 = vadd.f32 0.0, %v4505
      %v4507 = vpop.f32.mrf.mxu0
      %v4508 = vpop.f32.mrf.mxu0
      %v4509 = vadd.f32 0.0, %v4508
      %v4510 = vpop.f32.mrf.mxu0
      %4511 = vmatprep.mubr.bf16.mxu0 0
      %4512 = vmatmul.mubr.bf16.gmra.mxu0 %v4398
      %v4513 = vpop.f32.mrf.mxu0
      %v4514 = vadd.f32 0.0, %v4513
      %v4515 = vpop.f32.mrf.mxu0
      %v4516 = vpop.f32.mrf.mxu0
      %v4517 = vadd.f32 0.0, %v4516
      %v4518 = vpop.f32.mrf.mxu0
      %4519 = vmatprep.mubr.bf16.mxu0 0
      %4520 = vmatmul.mubr.bf16.gmra.mxu0 %v4401
      %v4521 = vpop.f32.mrf.mxu0
      %v4522 = vadd.f32 0.0, %v4521
      %v4523 = vpop.f32.mrf.mxu0
      %v4524 = vpop.f32.mrf.mxu0
      %v4525 = vadd.f32 0.0, %v4524
      %v4526 = vpop.f32.mrf.mxu0
      %4527 = vmatprep.mubr.bf16.mxu0 0
      %4528 = vmatmul.mubr.bf16.gmra.mxu0 %v4404
      %v4529 = vpop.f32.mrf.mxu0
      %v4530 = vadd.f32 0.0, %v4529
      %v4531 = vpop.f32.mrf.mxu0
      %v4532 = vpop.f32.mrf.mxu0
      %v4533 = vadd.f32 0.0, %v4532
      %v4534 = vpop.f32.mrf.mxu0
      %4535 = vmatprep.mubr.bf16.mxu0 0
      %4536 = vmatmul.mubr.bf16.gmra.mxu0 %v4407
      %v4537 = vpop.f32.mrf.mxu0
      %v4538 = vadd.f32 0.0, %v4537
      %v4539 = vpop.f32.mrf.mxu0
      %v4540 = vpop.f32.mrf.mxu0
      %v4541 = vadd.f32 0.0, %v4540
      %v4542 = vpop.f32.mrf.mxu0
      %4543 = vmatprep.mubr.bf16.mxu0 0
      %4544 = vmatmul.mubr.bf16.gmra.mxu0 %v4410
      %v4545 = vpop.f32.mrf.mxu0
      %v4546 = vadd.f32 0.0, %v4545
      %v4547 = vpop.f32.mrf.mxu0
      %v4548 = vpop.f32.mrf.mxu0
      %v4549 = vadd.f32 0.0, %v4548
      %v4550 = vpop.f32.mrf.mxu0
      %4551 = vmatprep.mubr.bf16.mxu0 0
      %4552 = vmatmul.mubr.bf16.gmra.mxu0 %v4413
      %v4553 = vpop.f32.mrf.mxu0
      %v4554 = vadd.f32 0.0, %v4553
      %v4555 = vpop.f32.mrf.mxu0
      %v4556 = vpop.f32.mrf.mxu0
      %v4557 = vadd.f32 0.0, %v4556
      %v4558 = vpop.f32.mrf.mxu0
      %4559 = vmatprep.mubr.bf16.mxu0 0
      %4560 = vmatmul.mubr.bf16.gmra.mxu0 %v4416
      %v4561 = vpop.f32.mrf.mxu0
      %v4562 = vadd.f32 0.0, %v4561
      %v4563 = vpop.f32.mrf.mxu0
      %v4564 = vpop.f32.mrf.mxu0
      %v4565 = vadd.f32 0.0, %v4564
      %v4566 = vpop.f32.mrf.mxu0
      %4567 = vmatprep.mubr.bf16.mxu0 0
      %4568 = vmatmul.mubr.bf16.gmra.mxu0 %v4419
      %v4569 = vpop.f32.mrf.mxu0
      %v4570 = vadd.f32 0.0, %v4569
      %v4571 = vpop.f32.mrf.mxu0
      %v4572 = vpop.f32.mrf.mxu0
      %v4573 = vadd.f32 0.0, %v4572
      %v4574 = vpop.f32.mrf.mxu0
      %4575 = vmatprep.mubr.bf16.mxu0 0
      %4576 = vmatmul.mubr.bf16.gmra.mxu0 %v4422
      %v4577 = vpop.f32.mrf.mxu0
      %v4578 = vadd.f32 0.0, %v4577
      %v4579 = vpop.f32.mrf.mxu0
      %v4580 = vpop.f32.mrf.mxu0
      %v4581 = vadd.f32 0.0, %v4580
      %v4582 = vpop.f32.mrf.mxu0
      %4583 = vmatprep.mubr.bf16.mxu0 0
      %4584 = vmatmul.mubr.bf16.gmra.mxu0 %v4425
      %v4585 = vpop.f32.mrf.mxu0
      %v4586 = vadd.f32 0.0, %v4585
      %v4587 = vpop.f32.mrf.mxu0
      %v4588 = vpop.f32.mrf.mxu0
      %v4589 = vadd.f32 0.0, %v4588
      %v4590 = vpop.f32.mrf.mxu0
      %4591 = vmatprep.mubr.bf16.mxu0 0
      %4592 = vmatmul.mubr.bf16.gmra.mxu0 %v4428
      %v4593 = vpop.f32.mrf.mxu0
      %v4594 = vadd.f32 0.0, %v4593
      %v4595 = vpop.f32.mrf.mxu0
      %v4596 = vpop.f32.mrf.mxu0
      %v4597 = vadd.f32 0.0, %v4596
      %v4598 = vpop.f32.mrf.mxu0
      %4599 = vmatprep.mubr.bf16.mxu0 0
      %4600 = vmatmul.mubr.bf16.gmra.mxu0 %v4431
      %v4601 = vpop.f32.mrf.mxu0
      %v4602 = vadd.f32 0.0, %v4601
      %v4603 = vpop.f32.mrf.mxu0
      %v4604 = vpop.f32.mrf.mxu0
      %v4605 = vadd.f32 0.0, %v4604
      %v4606 = vpop.f32.mrf.mxu0
      %4607 = vmatprep.mubr.bf16.mxu0 0
      %4608 = vmatmul.mubr.bf16.gmra.mxu0 %v4434
      %v4609 = vpop.f32.mrf.mxu0
      %v4610 = vadd.f32 0.0, %v4609
      %v4611 = vpop.f32.mrf.mxu0
      %v4612 = vpop.f32.mrf.mxu0
      %v4613 = vadd.f32 0.0, %v4612
      %v4614 = vpop.f32.mrf.mxu0
      %4615 = vdwg.mxu0
      %v4616 = vadd.f32 %v3993, %v4474
      %v4617 = vadd.f32 %v3994, %v4477
      %v4618 = vadd.f32 %v3995, %v4482
      %v4619 = vadd.f32 %v3996, %v4485
      %v4620 = vadd.f32 %v3997, %v4490
      %v4621 = vadd.f32 %v3998, %v4493
      %v4622 = vadd.f32 %v3999, %v4498
      %v4623 = vadd.f32 %v4000, %v4501
      %v4624 = vadd.f32 %v4001, %v4506
      %v4625 = vadd.f32 %v4002, %v4509
      %v4626 = vadd.f32 %v4003, %v4514
      %v4627 = vadd.f32 %v4004, %v4517
      %v4628 = vadd.f32 %v4005, %v4522
      %v4629 = vadd.f32 %v4006, %v4525
      %v4630 = vadd.f32 %v4007, %v4530
      %v4631 = vadd.f32 %v4008, %v4533
      %v4632 = vadd.f32 %v4009, %v4538
      %v4633 = vadd.f32 %v4010, %v4541
      %v4634 = vadd.f32 %v4011, %v4546
      %v4635 = vadd.f32 %v4012, %v4549
      %v4636 = vadd.f32 %v4013, %v4554
      %v4637 = vadd.f32 %v4014, %v4557
      %v4638 = vadd.f32 %v4015, %v4562
      %v4639 = vadd.f32 %v4016, %v4565
      %v4640 = vadd.f32 %v4017, %v4570
      %v4641 = vadd.f32 %v4018, %v4573
      %v4642 = vadd.f32 %v4019, %v4578
      %v4643 = vadd.f32 %v4020, %v4581
      %v4644 = vadd.f32 %v4021, %v4586
      %v4645 = vadd.f32 %v4022, %v4589
      %v4646 = vadd.f32 %v4023, %v4594
      %v4647 = vadd.f32 %v4024, %v4597
      %v4648 = vadd.f32 %v4025, %v4602
      %v4649 = vadd.f32 %v4026, %v4605
      %v4650 = vadd.f32 %v4027, %v4610
      %v4651 = vadd.f32 %v4028, %v4613
      %v4652 = vld [vmem:[%s328 + $0x30] sm:$0x7]
      %s4653 = scalar_lea.vmem %s3, 112
      %v4654 = vld [vmem:[%s4653] sm:$0xf]
      %v4655 = vld [vmem:[%s4653 + $0x4] sm:$0xf]
      %v4656 = vld [vmem:[%s4653 + $0x8] sm:$0xf]
      %v4657 = vld [vmem:[%s4653 + $0xc] sm:$0xf]
      %v4659 = vunpack.c.l.b16 %v4652
      %v4660 = vpack.c.b16 %v4659, %v4659
      %v4662 = vshrl.u32 %v4067, 16
      %v4664 = vrot.slane %v4662, 2
      %v4665 = vshll.u32 %v4067, 16
      %v4667 = vrot.slane %v4665, 3
      %v4668 = vor.u32 %v4664, %v4667
      %v4670 = vshrl.u32 %v4068, 16
      %v4672 = vrot.slane %v4670, 2
      %v4673 = vshll.u32 %v4068, 16
      %v4675 = vrot.slane %v4673, 3
      %v4676 = vor.u32 %v4672, %v4675
      %v4677 = vsel %vm4202, %v4668, %v4676
      %v4679 = vshrl.u32 %v4069, 16
      %v4681 = vrot.slane %v4679, 2
      %v4682 = vshll.u32 %v4069, 16
      %v4684 = vrot.slane %v4682, 3
      %v4685 = vor.u32 %v4681, %v4684
      %v4686 = vsel %vm4202, %v4676, %v4685
      %v4688 = vshrl.u32 %v4070, 16
      %v4690 = vrot.slane %v4688, 2
      %v4691 = vshll.u32 %v4070, 16
      %v4693 = vrot.slane %v4691, 3
      %v4694 = vor.u32 %v4690, %v4693
      %v4695 = vsel %vm4202, %v4685, %v4694
      %v4697 = vshrl.u32 %v4071, 16
      %v4699 = vrot.slane %v4697, 2
      %v4700 = vshll.u32 %v4071, 16
      %v4702 = vrot.slane %v4700, 3
      %v4703 = vor.u32 %v4699, %v4702
      %v4704 = vsel %vm4202, %v4694, %v4703
      %v4706 = vshrl.u32 %v4660, 16
      %v4708 = vrot.slane %v4706, 2
      %v4709 = vshll.u32 %v4660, 16
      %v4711 = vrot.slane %v4709, 3
      %v4712 = vor.u32 %v4708, %v4711
      %v4713 = vsel %vm4202, %v4703, %v4712
      %v4718 = vunpack.c.l.b16 %v4654
      %v4719 = vunpack.c.l.b16 %v4655
      %v4720 = vunpack.c.l.b16 %v4656
      %v4721 = vunpack.c.l.b16 %v4657
      %v4722 = vpack.c.b16 %v4719, %v4718
      %v4723 = vpack.c.b16 %v4721, %v4720
      %v4727 = vsel %vm1210, %v4677, 0
      %v4730 = vsel %vm1210, %v4686, 0
      %v4733 = vsel %vm1210, %v4695, 0
      %v4736 = vsel %vm1210, %v4704, 0
      %v4739 = vsel %vm1210, %v4713, 0
      %4741 = vmatprep.subr.bf16.mxu0 0
      %4742 = vmatpush1.bf16.msra.mxu0 0
      %4743 = vmatprep.subr.bf16.mxu0 0
      %4744 = vmatpush1.bf16.msra.mxu0 0
      %4745 = vmatprep.subr.bf16.mxu0 0
      %4746 = vmatpush1.bf16.msra.mxu0 0
      %4747 = vmatprep.subr.bf16.mxu0 0
      %4748 = vmatpush1.bf16.msra.mxu0 0
      %4749 = vmatprep.subr.bf16.mxu0 0
      %4750 = vmatpush1.bf16.msra.mxu0 0
      %4751 = vmatprep.subr.bf16.mxu0 0
      %4752 = vmatpush1.bf16.msra.mxu0 0
      %4753 = vmatprep.subr.bf16.mxu0 0
      %4754 = vmatpush1.bf16.msra.mxu0 %v4723
      %4755 = vmatprep.subr.bf16.mxu0 0
      %4756 = vmatpush1.bf16.msra.mxu0 %v4722
      %4757 = vmatprep.subr.bf16.mxu0 0
      %4758 = vmatpush2.bf16.msra.mxu0 0
      %4759 = vmatprep.subr.bf16.mxu0 0
      %4760 = vmatpush2.bf16.msra.mxu0 0
      %4761 = vmatprep.subr.bf16.mxu0 0
      %4762 = vmatpush2.bf16.msra.mxu0 0
      %4763 = vmatprep.subr.bf16.mxu0 0
      %4764 = vmatpush2.bf16.msra.mxu0 0
      %4765 = vmatprep.subr.bf16.mxu0 0
      %4766 = vmatpush2.bf16.msra.mxu0 0
      %4767 = vmatprep.subr.bf16.mxu0 0
      %4768 = vmatpush2.bf16.msra.mxu0 0
      %4769 = vmatprep.subr.bf16.mxu0 0
      %4770 = vmatpush2.bf16.msra.mxu0 0
      %4771 = vmatprep.subr.bf16.mxu0 0
      %4772 = vmatpush2.bf16.msra.mxu0 0
      %4773 = vmatprep.mubr.bf16.mxu0 0
      %4774 = vmatmul.mubr.bf16.gmra.mxu0 %v4727
      %v4775 = vpop.f32.mrf.mxu0
      %v4776 = vadd.f32 0.0, %v4775
      %v4777 = vpop.f32.mrf.mxu0
      %v4778 = vpop.f32.mrf.mxu0
      %v4779 = vadd.f32 0.0, %v4778
      %v4780 = vpop.f32.mrf.mxu0
      %4781 = vmatprep.mubr.bf16.mxu0 0
      %4782 = vmatmul.mubr.bf16.gmra.mxu0 %v4730
      %v4783 = vpop.f32.mrf.mxu0
      %v4784 = vadd.f32 0.0, %v4783
      %v4785 = vpop.f32.mrf.mxu0
      %v4786 = vpop.f32.mrf.mxu0
      %v4787 = vadd.f32 0.0, %v4786
      %v4788 = vpop.f32.mrf.mxu0
      %4789 = vmatprep.mubr.bf16.mxu0 0
      %4790 = vmatmul.mubr.bf16.gmra.mxu0 %v4733
      %v4791 = vpop.f32.mrf.mxu0
      %v4792 = vadd.f32 0.0, %v4791
      %v4793 = vpop.f32.mrf.mxu0
      %v4794 = vpop.f32.mrf.mxu0
      %v4795 = vadd.f32 0.0, %v4794
      %v4796 = vpop.f32.mrf.mxu0
      %4797 = vmatprep.mubr.bf16.mxu0 0
      %4798 = vmatmul.mubr.bf16.gmra.mxu0 %v4736
      %v4799 = vpop.f32.mrf.mxu0
      %v4800 = vadd.f32 0.0, %v4799
      %v4801 = vpop.f32.mrf.mxu0
      %v4802 = vpop.f32.mrf.mxu0
      %v4803 = vadd.f32 0.0, %v4802
      %v4804 = vpop.f32.mrf.mxu0
      %4805 = vmatprep.mubr.bf16.mxu0 0
      %4806 = vmatmul.mubr.bf16.gmra.mxu0 %v4739
      %v4807 = vpop.f32.mrf.mxu0
      %v4808 = vadd.f32 0.0, %v4807
      %v4809 = vpop.f32.mrf.mxu0
      %v4810 = vpop.f32.mrf.mxu0
      %v4811 = vadd.f32 0.0, %v4810
      %v4812 = vpop.f32.mrf.mxu0
      %4813 = vdwg.mxu0
      %v4814 = vadd.f32 %v4184, %v4776
      %v4815 = vadd.f32 %v4185, %v4779
      %v4816 = vadd.f32 %v4186, %v4784
      %v4817 = vadd.f32 %v4187, %v4787
      %v4818 = vadd.f32 %v4188, %v4792
      %v4819 = vadd.f32 %v4189, %v4795
      %v4820 = vadd.f32 %v4190, %v4800
      %v4821 = vadd.f32 %v4191, %v4803
      %v4822 = vadd.f32 %v4192, %v4808
      %v4823 = vadd.f32 %v4193, %v4811
      %v4824 = vld [vmem:[%s323 + $0x10] sm:$0x8]
      %s4825 = scalar_lea.vmem %s2, 96
      %v4826 = vld [vmem:[%s4825] sm:$0xf]
      %v4827 = vld [vmem:[%s4825 + $0x4] sm:$0xf]
      %v4828 = vld [vmem:[%s4825 + $0x8] sm:$0xf]
      %v4830 = vunpack.c.l.b16 %v4824
      %v4831 = vpack.c.b16 %v3658, %v4830
      %vm4832 = vcmask 1044480
      %v4833 = vrot.slane %v4831, 3
      %v4834 = vrot.slane %v3695, 3
      %v4835 = vsel %vm4832, %v4833, %v4834
      %v4836 = vrot.slane %v3696, 3
      %v4837 = vsel %vm4832, %v4834, %v4836
      %v4838 = vrot.slane %v3697, 3
      %v4839 = vsel %vm4832, %v4836, %v4838
      %v4840 = vrot.slane %v3698, 3
      %v4841 = vsel %vm4832, %v4838, %v4840
      %v4842 = vrot.slane %v3699, 3
      %v4843 = vsel %vm4832, %v4840, %v4842
      %v4844 = vrot.slane %v3700, 3
      %v4845 = vsel %vm4832, %v4842, %v4844
      %v4846 = vrot.slane %v3701, 3
      %v4847 = vsel %vm4832, %v4844, %v4846
      %v4848 = vrot.slane %v3702, 3
      %v4849 = vsel %vm4832, %v4846, %v4848
      %v4850 = vrot.slane %v3703, 3
      %v4851 = vsel %vm4832, %v4848, %v4850
      %v4852 = vrot.slane %v3704, 3
      %v4853 = vsel %vm4832, %v4850, %v4852
      %v4854 = vrot.slane %v3705, 3
      %v4855 = vsel %vm4832, %v4852, %v4854
      %v4856 = vrot.slane %v3706, 3
      %v4857 = vsel %vm4832, %v4854, %v4856
      %v4858 = vrot.slane %v3707, 3
      %v4859 = vsel %vm4832, %v4856, %v4858
      %v4860 = vrot.slane %v3708, 3
      %v4861 = vsel %vm4832, %v4858, %v4860
      %v4862 = vrot.slane %v3709, 3
      %v4863 = vsel %vm4832, %v4860, %v4862
      %v4864 = vrot.slane %v3710, 3
      %v4865 = vsel %vm4832, %v4862, %v4864
      %v4866 = vrot.slane %v3711, 3
      %v4867 = vsel %vm4832, %v4864, %v4866
      %v4868 = vrot.slane %v4201, 3
      %v4869 = vsel %vm4832, %v4866, %v4868
      %v4873 = vunpack.c.l.b16 %v4826
      %v4874 = vunpack.c.l.b16 %v4827
      %v4875 = vunpack.c.l.b16 %v4828
      %v4876 = vpack.c.b16 %v4874, %v4873
      %v4877 = vpack.c.b16 %v4875, %v4875
      %v4880 = vsel %vm649, %v4835, 0
      %v4883 = vsel %vm649, %v4837, 0
      %v4886 = vsel %vm649, %v4839, 0
      %v4889 = vsel %vm649, %v4841, 0
      %v4892 = vsel %vm649, %v4843, 0
      %v4895 = vsel %vm649, %v4845, 0
      %v4898 = vsel %vm649, %v4847, 0
      %v4901 = vsel %vm649, %v4849, 0
      %v4904 = vsel %vm649, %v4851, 0
      %v4907 = vsel %vm649, %v4853, 0
      %v4910 = vsel %vm649, %v4855, 0
      %v4913 = vsel %vm649, %v4857, 0
      %v4916 = vsel %vm649, %v4859, 0
      %v4919 = vsel %vm649, %v4861, 0
      %v4922 = vsel %vm649, %v4863, 0
      %v4925 = vsel %vm649, %v4865, 0
      %v4928 = vsel %vm649, %v4867, 0
      %v4931 = vsel %vm649, %v4869, 0
      %v4934 = vsel %vm704, %v4877, 0
      %4936 = vmatprep.subr.bf16.mxu0 0
      %4937 = vmatpush1.bf16.msra.mxu0 0
      %4938 = vmatprep.subr.bf16.mxu0 0
      %4939 = vmatpush1.bf16.msra.mxu0 0
      %4940 = vmatprep.subr.bf16.mxu0 0
      %4941 = vmatpush1.bf16.msra.mxu0 0
      %4942 = vmatprep.subr.bf16.mxu0 0
      %4943 = vmatpush1.bf16.msra.mxu0 0
      %4944 = vmatprep.subr.bf16.mxu0 0
      %4945 = vmatpush1.bf16.msra.mxu0 0
      %4946 = vmatprep.subr.bf16.mxu0 0
      %4947 = vmatpush1.bf16.msra.mxu0 0
      %4948 = vmatprep.subr.bf16.mxu0 0
      %4949 = vmatpush1.bf16.msra.mxu0 %v4934
      %4950 = vmatprep.subr.bf16.mxu0 0
      %4951 = vmatpush1.bf16.msra.mxu0 %v4876
      %4952 = vmatprep.subr.bf16.mxu0 0
      %4953 = vmatpush2.bf16.msra.mxu0 0
      %4954 = vmatprep.subr.bf16.mxu0 0
      %4955 = vmatpush2.bf16.msra.mxu0 0
      %4956 = vmatprep.subr.bf16.mxu0 0
      %4957 = vmatpush2.bf16.msra.mxu0 0
      %4958 = vmatprep.subr.bf16.mxu0 0
      %4959 = vmatpush2.bf16.msra.mxu0 0
      %4960 = vmatprep.subr.bf16.mxu0 0
      %4961 = vmatpush2.bf16.msra.mxu0 0
      %4962 = vmatprep.subr.bf16.mxu0 0
      %4963 = vmatpush2.bf16.msra.mxu0 0
      %4964 = vmatprep.subr.bf16.mxu0 0
      %4965 = vmatpush2.bf16.msra.mxu0 0
      %4966 = vmatprep.subr.bf16.mxu0 0
      %4967 = vmatpush2.bf16.msra.mxu0 0
      %4968 = vmatprep.mubr.bf16.mxu0 0
      %4969 = vmatmul.mubr.bf16.gmra.mxu0 %v4880
      %v4970 = vpop.f32.mrf.mxu0
      %v4971 = vadd.f32 0.0, %v4970
      %v4972 = vpop.f32.mrf.mxu0
      %v4973 = vpop.f32.mrf.mxu0
      %v4974 = vadd.f32 0.0, %v4973
      %v4975 = vpop.f32.mrf.mxu0
      %4976 = vmatprep.mubr.bf16.mxu0 0
      %4977 = vmatmul.mubr.bf16.gmra.mxu0 %v4883
      %v4978 = vpop.f32.mrf.mxu0
      %v4979 = vadd.f32 0.0, %v4978
      %v4980 = vpop.f32.mrf.mxu0
      %v4981 = vpop.f32.mrf.mxu0
      %v4982 = vadd.f32 0.0, %v4981
      %v4983 = vpop.f32.mrf.mxu0
      %4984 = vmatprep.mubr.bf16.mxu0 0
      %4985 = vmatmul.mubr.bf16.gmra.mxu0 %v4886
      %v4986 = vpop.f32.mrf.mxu0
      %v4987 = vadd.f32 0.0, %v4986
      %v4988 = vpop.f32.mrf.mxu0
      %v4989 = vpop.f32.mrf.mxu0
      %v4990 = vadd.f32 0.0, %v4989
      %v4991 = vpop.f32.mrf.mxu0
      %4992 = vmatprep.mubr.bf16.mxu0 0
      %4993 = vmatmul.mubr.bf16.gmra.mxu0 %v4889
      %v4994 = vpop.f32.mrf.mxu0
      %v4995 = vadd.f32 0.0, %v4994
      %v4996 = vpop.f32.mrf.mxu0
      %v4997 = vpop.f32.mrf.mxu0
      %v4998 = vadd.f32 0.0, %v4997
      %v4999 = vpop.f32.mrf.mxu0
      %5000 = vmatprep.mubr.bf16.mxu0 0
      %5001 = vmatmul.mubr.bf16.gmra.mxu0 %v4892
      %v5002 = vpop.f32.mrf.mxu0
      %v5003 = vadd.f32 0.0, %v5002
      %v5004 = vpop.f32.mrf.mxu0
      %v5005 = vpop.f32.mrf.mxu0
      %v5006 = vadd.f32 0.0, %v5005
      %v5007 = vpop.f32.mrf.mxu0
      %5008 = vmatprep.mubr.bf16.mxu0 0
      %5009 = vmatmul.mubr.bf16.gmra.mxu0 %v4895
      %v5010 = vpop.f32.mrf.mxu0
      %v5011 = vadd.f32 0.0, %v5010
      %v5012 = vpop.f32.mrf.mxu0
      %v5013 = vpop.f32.mrf.mxu0
      %v5014 = vadd.f32 0.0, %v5013
      %v5015 = vpop.f32.mrf.mxu0
      %5016 = vmatprep.mubr.bf16.mxu0 0
      %5017 = vmatmul.mubr.bf16.gmra.mxu0 %v4898
      %v5018 = vpop.f32.mrf.mxu0
      %v5019 = vadd.f32 0.0, %v5018
      %v5020 = vpop.f32.mrf.mxu0
      %v5021 = vpop.f32.mrf.mxu0
      %v5022 = vadd.f32 0.0, %v5021
      %v5023 = vpop.f32.mrf.mxu0
      %5024 = vmatprep.mubr.bf16.mxu0 0
      %5025 = vmatmul.mubr.bf16.gmra.mxu0 %v4901
      %v5026 = vpop.f32.mrf.mxu0
      %v5027 = vadd.f32 0.0, %v5026
      %v5028 = vpop.f32.mrf.mxu0
      %v5029 = vpop.f32.mrf.mxu0
      %v5030 = vadd.f32 0.0, %v5029
      %v5031 = vpop.f32.mrf.mxu0
      %5032 = vmatprep.mubr.bf16.mxu0 0
      %5033 = vmatmul.mubr.bf16.gmra.mxu0 %v4904
      %v5034 = vpop.f32.mrf.mxu0
      %v5035 = vadd.f32 0.0, %v5034
      %v5036 = vpop.f32.mrf.mxu0
      %v5037 = vpop.f32.mrf.mxu0
      %v5038 = vadd.f32 0.0, %v5037
      %v5039 = vpop.f32.mrf.mxu0
      %5040 = vmatprep.mubr.bf16.mxu0 0
      %5041 = vmatmul.mubr.bf16.gmra.mxu0 %v4907
      %v5042 = vpop.f32.mrf.mxu0
      %v5043 = vadd.f32 0.0, %v5042
      %v5044 = vpop.f32.mrf.mxu0
      %v5045 = vpop.f32.mrf.mxu0
      %v5046 = vadd.f32 0.0, %v5045
      %v5047 = vpop.f32.mrf.mxu0
      %5048 = vmatprep.mubr.bf16.mxu0 0
      %5049 = vmatmul.mubr.bf16.gmra.mxu0 %v4910
      %v5050 = vpop.f32.mrf.mxu0
      %v5051 = vadd.f32 0.0, %v5050
      %v5052 = vpop.f32.mrf.mxu0
      %v5053 = vpop.f32.mrf.mxu0
      %v5054 = vadd.f32 0.0, %v5053
      %v5055 = vpop.f32.mrf.mxu0
      %5056 = vmatprep.mubr.bf16.mxu0 0
      %5057 = vmatmul.mubr.bf16.gmra.mxu0 %v4913
      %v5058 = vpop.f32.mrf.mxu0
      %v5059 = vadd.f32 0.0, %v5058
      %v5060 = vpop.f32.mrf.mxu0
      %v5061 = vpop.f32.mrf.mxu0
      %v5062 = vadd.f32 0.0, %v5061
      %v5063 = vpop.f32.mrf.mxu0
      %5064 = vmatprep.mubr.bf16.mxu0 0
      %5065 = vmatmul.mubr.bf16.gmra.mxu0 %v4916
      %v5066 = vpop.f32.mrf.mxu0
      %v5067 = vadd.f32 0.0, %v5066
      %v5068 = vpop.f32.mrf.mxu0
      %v5069 = vpop.f32.mrf.mxu0
      %v5070 = vadd.f32 0.0, %v5069
      %v5071 = vpop.f32.mrf.mxu0
      %5072 = vmatprep.mubr.bf16.mxu0 0
      %5073 = vmatmul.mubr.bf16.gmra.mxu0 %v4919
      %v5074 = vpop.f32.mrf.mxu0
      %v5075 = vadd.f32 0.0, %v5074
      %v5076 = vpop.f32.mrf.mxu0
      %v5077 = vpop.f32.mrf.mxu0
      %v5078 = vadd.f32 0.0, %v5077
      %v5079 = vpop.f32.mrf.mxu0
      %5080 = vmatprep.mubr.bf16.mxu0 0
      %5081 = vmatmul.mubr.bf16.gmra.mxu0 %v4922
      %v5082 = vpop.f32.mrf.mxu0
      %v5083 = vadd.f32 0.0, %v5082
      %v5084 = vpop.f32.mrf.mxu0
      %v5085 = vpop.f32.mrf.mxu0
      %v5086 = vadd.f32 0.0, %v5085
      %v5087 = vpop.f32.mrf.mxu0
      %5088 = vmatprep.mubr.bf16.mxu0 0
      %5089 = vmatmul.mubr.bf16.gmra.mxu0 %v4925
      %v5090 = vpop.f32.mrf.mxu0
      %v5091 = vadd.f32 0.0, %v5090
      %v5092 = vpop.f32.mrf.mxu0
      %v5093 = vpop.f32.mrf.mxu0
      %v5094 = vadd.f32 0.0, %v5093
      %v5095 = vpop.f32.mrf.mxu0
      %5096 = vmatprep.mubr.bf16.mxu0 0
      %5097 = vmatmul.mubr.bf16.gmra.mxu0 %v4928
      %v5098 = vpop.f32.mrf.mxu0
      %v5099 = vadd.f32 0.0, %v5098
      %v5100 = vpop.f32.mrf.mxu0
      %v5101 = vpop.f32.mrf.mxu0
      %v5102 = vadd.f32 0.0, %v5101
      %v5103 = vpop.f32.mrf.mxu0
      %5104 = vmatprep.mubr.bf16.mxu0 0
      %5105 = vmatmul.mubr.bf16.gmra.mxu0 %v4931
      %v5106 = vpop.f32.mrf.mxu0
      %v5107 = vadd.f32 0.0, %v5106
      %v5108 = vpop.f32.mrf.mxu0
      %v5109 = vpop.f32.mrf.mxu0
      %v5110 = vadd.f32 0.0, %v5109
      %v5111 = vpop.f32.mrf.mxu0
      %5112 = vdwg.mxu0
      %v5113 = vadd.f32 %v4616, %v4971
      %v5114 = vadd.f32 %v4617, %v4974
      %v5115 = vadd.f32 %v4618, %v4979
      %v5116 = vadd.f32 %v4619, %v4982
      %v5117 = vadd.f32 %v4620, %v4987
      %v5118 = vadd.f32 %v4621, %v4990
      %v5119 = vadd.f32 %v4622, %v4995
      %v5120 = vadd.f32 %v4623, %v4998
      %v5121 = vadd.f32 %v4624, %v5003
      %v5122 = vadd.f32 %v4625, %v5006
      %v5123 = vadd.f32 %v4626, %v5011
      %v5124 = vadd.f32 %v4627, %v5014
      %v5125 = vadd.f32 %v4628, %v5019
      %v5126 = vadd.f32 %v4629, %v5022
      %v5127 = vadd.f32 %v4630, %v5027
      %v5128 = vadd.f32 %v4631, %v5030
      %v5129 = vadd.f32 %v4632, %v5035
      %v5130 = vadd.f32 %v4633, %v5038
      %v5131 = vadd.f32 %v4634, %v5043
      %v5132 = vadd.f32 %v4635, %v5046
      %v5133 = vadd.f32 %v4636, %v5051
      %v5134 = vadd.f32 %v4637, %v5054
      %v5135 = vadd.f32 %v4638, %v5059
      %v5136 = vadd.f32 %v4639, %v5062
      %v5137 = vadd.f32 %v4640, %v5067
      %v5138 = vadd.f32 %v4641, %v5070
      %v5139 = vadd.f32 %v4642, %v5075
      %v5140 = vadd.f32 %v4643, %v5078
      %v5141 = vadd.f32 %v4644, %v5083
      %v5142 = vadd.f32 %v4645, %v5086
      %v5143 = vadd.f32 %v4646, %v5091
      %v5144 = vadd.f32 %v4647, %v5094
      %v5145 = vadd.f32 %v4648, %v5099
      %v5146 = vadd.f32 %v4649, %v5102
      %v5147 = vadd.f32 %v4650, %v5107
      %v5148 = vadd.f32 %v4651, %v5110
      %v5149 = vld [vmem:[%s328 + $0x8] sm:$0x8]
      %s5150 = scalar_lea.vmem %s3, 128
      %v5151 = vld [vmem:[%s5150] sm:$0xf]
      %v5152 = vld [vmem:[%s5150 + $0x4] sm:$0xf]
      %v5153 = vld [vmem:[%s5150 + $0x8] sm:$0xf]
      %v5154 = vld [vmem:[%s5150 + $0xc] sm:$0xf]
      %v5156 = vunpack.c.l.b16 %v5149
      %v5157 = vpack.c.b16 %v4057, %v5156
      %v5158 = vrot.slane %v5157, 3
      %v5159 = vrot.slane %v4068, 3
      %v5160 = vsel %vm4832, %v5158, %v5159
      %v5161 = vrot.slane %v4069, 3
      %v5162 = vsel %vm4832, %v5159, %v5161
      %v5163 = vrot.slane %v4070, 3
      %v5164 = vsel %vm4832, %v5161, %v5163
      %v5165 = vrot.slane %v4071, 3
      %v5166 = vsel %vm4832, %v5163, %v5165
      %v5167 = vrot.slane %v4660, 3
      %v5168 = vsel %vm4832, %v5165, %v5167
      %v5173 = vunpack.c.l.b16 %v5151
      %v5174 = vunpack.c.l.b16 %v5152
      %v5175 = vunpack.c.l.b16 %v5153
      %v5176 = vunpack.c.l.b16 %v5154
      %v5177 = vpack.c.b16 %v5174, %v5173
      %v5178 = vpack.c.b16 %v5176, %v5175
      %v5182 = vsel %vm1210, %v5160, 0
      %v5185 = vsel %vm1210, %v5162, 0
      %v5188 = vsel %vm1210, %v5164, 0
      %v5191 = vsel %vm1210, %v5166, 0
      %v5194 = vsel %vm1210, %v5168, 0
      %5196 = vmatprep.subr.bf16.mxu0 0
      %5197 = vmatpush1.bf16.msra.mxu0 0
      %5198 = vmatprep.subr.bf16.mxu0 0
      %5199 = vmatpush1.bf16.msra.mxu0 0
      %5200 = vmatprep.subr.bf16.mxu0 0
      %5201 = vmatpush1.bf16.msra.mxu0 0
      %5202 = vmatprep.subr.bf16.mxu0 0
      %5203 = vmatpush1.bf16.msra.mxu0 0
      %5204 = vmatprep.subr.bf16.mxu0 0
      %5205 = vmatpush1.bf16.msra.mxu0 0
      %5206 = vmatprep.subr.bf16.mxu0 0
      %5207 = vmatpush1.bf16.msra.mxu0 0
      %5208 = vmatprep.subr.bf16.mxu0 0
      %5209 = vmatpush1.bf16.msra.mxu0 %v5178
      %5210 = vmatprep.subr.bf16.mxu0 0
      %5211 = vmatpush1.bf16.msra.mxu0 %v5177
      %5212 = vmatprep.subr.bf16.mxu0 0
      %5213 = vmatpush2.bf16.msra.mxu0 0
      %5214 = vmatprep.subr.bf16.mxu0 0
      %5215 = vmatpush2.bf16.msra.mxu0 0
      %5216 = vmatprep.subr.bf16.mxu0 0
      %5217 = vmatpush2.bf16.msra.mxu0 0
      %5218 = vmatprep.subr.bf16.mxu0 0
      %5219 = vmatpush2.bf16.msra.mxu0 0
      %5220 = vmatprep.subr.bf16.mxu0 0
      %5221 = vmatpush2.bf16.msra.mxu0 0
      %5222 = vmatprep.subr.bf16.mxu0 0
      %5223 = vmatpush2.bf16.msra.mxu0 0
      %5224 = vmatprep.subr.bf16.mxu0 0
      %5225 = vmatpush2.bf16.msra.mxu0 0
      %5226 = vmatprep.subr.bf16.mxu0 0
      %5227 = vmatpush2.bf16.msra.mxu0 0
      %5228 = vmatprep.mubr.bf16.mxu0 0
      %5229 = vmatmul.mubr.bf16.gmra.mxu0 %v5182
      %v5230 = vpop.f32.mrf.mxu0
      %v5231 = vadd.f32 0.0, %v5230
      %v5232 = vpop.f32.mrf.mxu0
      %v5233 = vpop.f32.mrf.mxu0
      %v5234 = vadd.f32 0.0, %v5233
      %v5235 = vpop.f32.mrf.mxu0
      %5236 = vmatprep.mubr.bf16.mxu0 0
      %5237 = vmatmul.mubr.bf16.gmra.mxu0 %v5185
      %v5238 = vpop.f32.mrf.mxu0
      %v5239 = vadd.f32 0.0, %v5238
      %v5240 = vpop.f32.mrf.mxu0
      %v5241 = vpop.f32.mrf.mxu0
      %v5242 = vadd.f32 0.0, %v5241
      %v5243 = vpop.f32.mrf.mxu0
      %5244 = vmatprep.mubr.bf16.mxu0 0
      %5245 = vmatmul.mubr.bf16.gmra.mxu0 %v5188
      %v5246 = vpop.f32.mrf.mxu0
      %v5247 = vadd.f32 0.0, %v5246
      %v5248 = vpop.f32.mrf.mxu0
      %v5249 = vpop.f32.mrf.mxu0
      %v5250 = vadd.f32 0.0, %v5249
      %v5251 = vpop.f32.mrf.mxu0
      %5252 = vmatprep.mubr.bf16.mxu0 0
      %5253 = vmatmul.mubr.bf16.gmra.mxu0 %v5191
      %v5254 = vpop.f32.mrf.mxu0
      %v5255 = vadd.f32 0.0, %v5254
      %v5256 = vpop.f32.mrf.mxu0
      %v5257 = vpop.f32.mrf.mxu0
      %v5258 = vadd.f32 0.0, %v5257
      %v5259 = vpop.f32.mrf.mxu0
      %5260 = vmatprep.mubr.bf16.mxu0 0
      %5261 = vmatmul.mubr.bf16.gmra.mxu0 %v5194
      %v5262 = vpop.f32.mrf.mxu0
      %v5263 = vadd.f32 0.0, %v5262
      %v5264 = vpop.f32.mrf.mxu0
      %v5265 = vpop.f32.mrf.mxu0
      %v5266 = vadd.f32 0.0, %v5265
      %v5267 = vpop.f32.mrf.mxu0
      %5268 = vdwg.mxu0
      %v5269 = vadd.f32 %v4814, %v5231
      %v5270 = vadd.f32 %v4815, %v5234
      %v5271 = vadd.f32 %v4816, %v5239
      %v5272 = vadd.f32 %v4817, %v5242
      %v5273 = vadd.f32 %v4818, %v5247
      %v5274 = vadd.f32 %v4819, %v5250
      %v5275 = vadd.f32 %v4820, %v5255
      %v5276 = vadd.f32 %v4821, %v5258
      %v5277 = vadd.f32 %v4822, %v5263
      %v5278 = vadd.f32 %v4823, %v5266
      %v5279 = vld [vmem:[%s6] sm:$0x1]
      %v5281 = vlaneseq
      %v5282 = vshrl.u32 %v5281, 7
      %v5283 = vsub.s32 0, %v5282
      %v5284 = vrot.slane %v5279, %v5283
      %5285 = vrot.lane.b32.xlu0 %v5284, 24
      %v5286 = vpop.permute.xlu0 %5285
      %v5288 = vadd.f32 %v5269, %v5286
      %v5289 = vadd.f32 %v5270, %v5286
      %v5290 = vadd.f32 %v5271, %v5286
      %v5291 = vadd.f32 %v5272, %v5286
      %v5292 = vadd.f32 %v5273, %v5286
      %v5293 = vadd.f32 %v5274, %v5286
      %v5294 = vadd.f32 %v5275, %v5286
      %v5295 = vadd.f32 %v5276, %v5286
      %v5296 = vadd.f32 %v5277, %v5286
      %v5297 = vadd.f32 %v5278, %v5286
      %v5298 = vmax.f32 %v5288, 0.0
      %v5299 = vmax.f32 %v5289, 0.0
      %v5300 = vmax.f32 %v5290, 0.0
      %v5301 = vmax.f32 %v5291, 0.0
      %v5302 = vmax.f32 %v5292, 0.0
      %v5303 = vmax.f32 %v5293, 0.0
      %v5304 = vmax.f32 %v5294, 0.0
      %v5305 = vmax.f32 %v5295, 0.0
      %v5306 = vmax.f32 %v5296, 0.0
      %v5307 = vmax.f32 %v5297, 0.0
      %v5308 = vpack.c.bf16 %v5299, %v5298
      %v5309 = vpack.c.bf16 %v5301, %v5300
      %v5310 = vpack.c.bf16 %v5303, %v5302
      %v5311 = vpack.c.bf16 %v5305, %v5304
      %v5312 = vpack.c.bf16 %v5307, %v5306
      %v5318 = vunpack.c.l.b16 %v5308
      %v5319 = vunpack.c.h.b16 %v5308
      %v5320 = vunpack.c.l.b16 %v5309
      %v5321 = vunpack.c.h.b16 %v5309
      %v5322 = vunpack.c.l.b16 %v5310
      %v5323 = vunpack.c.h.b16 %v5310
      %v5324 = vunpack.c.l.b16 %v5311
      %v5325 = vunpack.c.h.b16 %v5311
      %v5326 = vunpack.c.l.b16 %v5312
      %v5327 = vunpack.c.h.b16 %v5312
      %v5328 = vpack.c.b16 %v5318, %v5318
      %v5329 = vpack.c.b16 %v5319, %v5319
      %v5330 = vpack.c.b16 %v5320, %v5320
      %v5331 = vpack.c.b16 %v5321, %v5321
      %v5332 = vpack.c.b16 %v5322, %v5322
      %v5333 = vpack.c.b16 %v5323, %v5323
      %v5334 = vpack.c.b16 %v5324, %v5324
      %v5335 = vpack.c.b16 %v5325, %v5325
      %v5336 = vpack.c.b16 %v5326, %v5326
      %v5337 = vpack.c.b16 %v5327, %v5327
      %5338 = vrot.lane.b32.xlu0 %v5328, 104
      %v5339 = vpop.permute.xlu0 %5338
      %5340 = vrot.lane.b32.xlu0 %v5329, 104
      %v5341 = vpop.permute.xlu0 %5340
      %5342 = vrot.lane.b32.xlu0 %v5330, 104
      %v5343 = vpop.permute.xlu0 %5342
      %5344 = vrot.lane.b32.xlu0 %v5331, 104
      %v5345 = vpop.permute.xlu0 %5344
      %5346 = vrot.lane.b32.xlu0 %v5332, 104
      %v5347 = vpop.permute.xlu0 %5346
      %5348 = vrot.lane.b32.xlu0 %v5333, 104
      %v5349 = vpop.permute.xlu0 %5348
      %5350 = vrot.lane.b32.xlu0 %v5334, 104
      %v5351 = vpop.permute.xlu0 %5350
      %5352 = vrot.lane.b32.xlu0 %v5335, 104
      %v5353 = vpop.permute.xlu0 %5352
      %5354 = vrot.lane.b32.xlu0 %v5336, 104
      %v5355 = vpop.permute.xlu0 %5354
      %5356 = vrot.lane.b32.xlu0 %v5337, 104
      %v5357 = vpop.permute.xlu0 %5356
      %vm5368 = vcmask 60416
      %5369 = vst.msk [vmem:[%s338] sm:$0xf] %vm5368, %v5339
      %5370 = vst.msk [vmem:[%s338 + $0x4] sm:$0xf] %vm5368, %v5341
      %5371 = vst.msk [vmem:[%s338 + $0x8] sm:$0xf] %vm5368, %v5343
      %5372 = vst.msk [vmem:[%s338 + $0xc] sm:$0xf] %vm5368, %v5345
      %5373 = vst.msk [vmem:[%s338 + $0x10] sm:$0xf] %vm5368, %v5347
      %5374 = vst.msk [vmem:[%s338 + $0x14] sm:$0xf] %vm5368, %v5349
      %5375 = vst.msk [vmem:[%s338 + $0x18] sm:$0xf] %vm5368, %v5351
      %5376 = vst.msk [vmem:[%s338 + $0x1c] sm:$0xf] %vm5368, %v5353
      %5377 = vst.msk [vmem:[%s338 + $0x20] sm:$0xf] %vm5368, %v5355
      %5378 = vst.msk [vmem:[%s338 + $0x24] sm:$0xf] %vm5368, %v5357
      %v5379 = vpack.c.bf16 %v5270, %v5269
      %v5380 = vpack.c.bf16 %v5272, %v5271
      %v5381 = vpack.c.bf16 %v5274, %v5273
      %v5382 = vpack.c.bf16 %v5276, %v5275
      %v5383 = vpack.c.bf16 %v5278, %v5277
      %v5384 = vld [vmem:[%s4] sm:$0xf]
      %v5385 = vld [vmem:[%s4 + $0x4] sm:$0xf]
      %v5386 = vld [vmem:[%s4 + $0x8] sm:$0xf]
      %v5387 = vld [vmem:[%s4 + $0xc] sm:$0xf]
      %v5388 = vld [vmem:[%s4 + $0x10] sm:$0xf]
      %v5389 = vld [vmem:[%s4 + $0x14] sm:$0xf]
      %v5390 = vld [vmem:[%s4 + $0x18] sm:$0xf]
      %v5391 = vld [vmem:[%s4 + $0x1c] sm:$0xf]
      %v5392 = vld [vmem:[%s4 + $0x20] sm:$0xf]
      %v5393 = vld [vmem:[%s4 + $0x24] sm:$0xf]
      %v5394 = vld [vmem:[%s4 + $0x28] sm:$0xf]
      %v5395 = vld [vmem:[%s4 + $0x2c] sm:$0xf]
      %v5396 = vld [vmem:[%s4 + $0x30] sm:$0xf]
      %v5397 = vld [vmem:[%s4 + $0x34] sm:$0xf]
      %v5398 = vld [vmem:[%s4 + $0x38] sm:$0xf]
      %v5399 = vld [vmem:[%s4 + $0x3c] sm:$0xf]
      %v5400 = vld [vmem:[%s4 + $0x40] sm:$0xf]
      %v5401 = vld [vmem:[%s4 + $0x44] sm:$0xf]
      %v5402 = vld [vmem:[%s4 + $0x48] sm:$0xf]
      %v5403 = vld [vmem:[%s4 + $0x4c] sm:$0xf]
      %v5404 = vld [vmem:[%s4 + $0x50] sm:$0xf]
      %v5405 = vld [vmem:[%s4 + $0x54] sm:$0xf]
      %v5406 = vld [vmem:[%s4 + $0x58] sm:$0xf]
      %v5407 = vld [vmem:[%s4 + $0x5c] sm:$0xf]
      %v5408 = vld [vmem:[%s4 + $0x60] sm:$0xf]
      %v5409 = vld [vmem:[%s4 + $0x64] sm:$0xf]
      %v5410 = vld [vmem:[%s4 + $0x68] sm:$0xf]
      %v5411 = vld [vmem:[%s4 + $0x6c] sm:$0xf]
      %v5412 = vld [vmem:[%s4 + $0x70] sm:$0xf]
      %v5413 = vld [vmem:[%s4 + $0x74] sm:$0xf]
      %v5414 = vld [vmem:[%s4 + $0x78] sm:$0xf]
      %v5415 = vld [vmem:[%s4 + $0x7c] sm:$0xf]
      %v5416 = vld [vmem:[%s4 + $0x80] sm:$0xf]
      %v5417 = vld [vmem:[%s4 + $0x84] sm:$0xf]
      %v5418 = vld [vmem:[%s4 + $0x88] sm:$0xf]
      %v5419 = vld [vmem:[%s4 + $0x8c] sm:$0xf]
      %v5456 = vunpack.c.l.b16 %v5384
      %v5457 = vunpack.c.l.b16 %v5385
      %v5458 = vunpack.c.l.b16 %v5386
      %v5459 = vunpack.c.l.b16 %v5387
      %v5460 = vunpack.c.l.b16 %v5388
      %v5461 = vunpack.c.l.b16 %v5389
      %v5462 = vunpack.c.l.b16 %v5390
      %v5463 = vunpack.c.l.b16 %v5391
      %v5464 = vunpack.c.l.b16 %v5392
      %v5465 = vunpack.c.l.b16 %v5393
      %v5466 = vunpack.c.l.b16 %v5394
      %v5467 = vunpack.c.l.b16 %v5395
      %v5468 = vunpack.c.l.b16 %v5396
      %v5469 = vunpack.c.l.b16 %v5397
      %v5470 = vunpack.c.l.b16 %v5398
      %v5471 = vunpack.c.l.b16 %v5399
      %v5472 = vunpack.c.l.b16 %v5400
      %v5473 = vunpack.c.l.b16 %v5401
      %v5474 = vunpack.c.l.b16 %v5402
      %v5475 = vunpack.c.l.b16 %v5403
      %v5476 = vunpack.c.l.b16 %v5404
      %v5477 = vunpack.c.l.b16 %v5405
      %v5478 = vunpack.c.l.b16 %v5406
      %v5479 = vunpack.c.l.b16 %v5407
      %v5480 = vunpack.c.l.b16 %v5408
      %v5481 = vunpack.c.l.b16 %v5409
      %v5482 = vunpack.c.l.b16 %v5410
      %v5483 = vunpack.c.l.b16 %v5411
      %v5484 = vunpack.c.l.b16 %v5412
      %v5485 = vunpack.c.l.b16 %v5413
      %v5486 = vunpack.c.l.b16 %v5414
      %v5487 = vunpack.c.l.b16 %v5415
      %v5488 = vunpack.c.l.b16 %v5416
      %v5489 = vunpack.c.l.b16 %v5417
      %v5490 = vunpack.c.l.b16 %v5418
      %v5491 = vunpack.c.l.b16 %v5419
      %v5492 = vpack.c.b16 %v5457, %v5456
      %v5493 = vpack.c.b16 %v5459, %v5458
      %v5494 = vpack.c.b16 %v5461, %v5460
      %v5495 = vpack.c.b16 %v5463, %v5462
      %v5496 = vpack.c.b16 %v5465, %v5464
      %v5497 = vpack.c.b16 %v5467, %v5466
      %v5498 = vpack.c.b16 %v5469, %v5468
      %v5499 = vpack.c.b16 %v5471, %v5470
      %v5500 = vpack.c.b16 %v5473, %v5472
      %v5501 = vpack.c.b16 %v5475, %v5474
      %v5502 = vpack.c.b16 %v5477, %v5476
      %v5503 = vpack.c.b16 %v5479, %v5478
      %v5504 = vpack.c.b16 %v5481, %v5480
      %v5505 = vpack.c.b16 %v5483, %v5482
      %v5506 = vpack.c.b16 %v5485, %v5484
      %v5507 = vpack.c.b16 %v5487, %v5486
      %v5508 = vpack.c.b16 %v5489, %v5488
      %v5509 = vpack.c.b16 %v5491, %v5490
      %vm5510 = vcmask 654336
      %v5512 = vsel %vm5510, %v5492, 0
      %v5515 = vsel %vm5510, %v5493, 0
      %v5518 = vsel %vm5510, %v5494, 0
      %v5521 = vsel %vm5510, %v5495, 0
      %v5524 = vsel %vm5510, %v5496, 0
      %v5527 = vsel %vm5510, %v5497, 0
      %v5530 = vsel %vm5510, %v5498, 0
      %v5533 = vsel %vm5510, %v5499, 0
      %v5536 = vsel %vm5510, %v5500, 0
      %v5539 = vsel %vm5510, %v5501, 0
      %v5542 = vsel %vm5510, %v5502, 0
      %v5545 = vsel %vm5510, %v5503, 0
      %v5548 = vsel %vm5510, %v5504, 0
      %v5551 = vsel %vm5510, %v5505, 0
      %v5554 = vsel %vm5510, %v5506, 0
      %v5557 = vsel %vm5510, %v5507, 0
      %v5560 = vsel %vm5510, %v5508, 0
      %v5563 = vsel %vm5510, %v5509, 0
      %5565 = vmatprep.subr.bf16.mxu0 0
      %5566 = vmatpush1.bf16.msra.mxu0 0
      %5567 = vmatprep.subr.bf16.mxu0 0
      %5568 = vmatpush1.bf16.msra.mxu0 0
      %5569 = vmatprep.subr.bf16.mxu0 0
      %5570 = vmatpush1.bf16.msra.mxu0 0
      %5571 = vmatprep.subr.bf16.mxu0 0
      %5572 = vmatpush1.bf16.msra.mxu0 %v5383
      %5573 = vmatprep.subr.bf16.mxu0 0
      %5574 = vmatpush1.bf16.msra.mxu0 %v5382
      %5575 = vmatprep.subr.bf16.mxu0 0
      %5576 = vmatpush1.bf16.msra.mxu0 %v5381
      %5577 = vmatprep.subr.bf16.mxu0 0
      %5578 = vmatpush1.bf16.msra.mxu0 %v5380
      %5579 = vmatprep.subr.bf16.mxu0 0
      %5580 = vmatpush1.bf16.msra.mxu0 %v5379
      %5581 = vmatprep.subr.bf16.mxu0 0
      %5582 = vmatpush2.bf16.msra.mxu0 0
      %5583 = vmatprep.subr.bf16.mxu0 0
      %5584 = vmatpush2.bf16.msra.mxu0 0
      %5585 = vmatprep.subr.bf16.mxu0 0
      %5586 = vmatpush2.bf16.msra.mxu0 0
      %5587 = vmatprep.subr.bf16.mxu0 0
      %5588 = vmatpush2.bf16.msra.mxu0 0
      %5589 = vmatprep.subr.bf16.mxu0 0
      %5590 = vmatpush2.bf16.msra.mxu0 0
      %5591 = vmatprep.subr.bf16.mxu0 0
      %5592 = vmatpush2.bf16.msra.mxu0 0
      %5593 = vmatprep.subr.bf16.mxu0 0
      %5594 = vmatpush2.bf16.msra.mxu0 0
      %5595 = vmatprep.subr.bf16.mxu0 0
      %5596 = vmatpush2.bf16.msra.mxu0 0
      %5597 = vmatprep.mubr.bf16.mxu0 0
      %5598 = vmatmul.mubr.bf16.gmra.mxu0 %v5512
      %v5599 = vpop.f32.mrf.mxu0
      %v5600 = vadd.f32 0.0, %v5599
      %v5601 = vpop.f32.mrf.mxu0
      %v5602 = vpop.f32.mrf.mxu0
      %v5603 = vadd.f32 0.0, %v5602
      %v5604 = vpop.f32.mrf.mxu0
      %5605 = vmatprep.mubr.bf16.mxu0 0
      %5606 = vmatmul.mubr.bf16.gmra.mxu0 %v5515
      %v5607 = vpop.f32.mrf.mxu0
      %v5608 = vadd.f32 0.0, %v5607
      %v5609 = vpop.f32.mrf.mxu0
      %v5610 = vpop.f32.mrf.mxu0
      %v5611 = vadd.f32 0.0, %v5610
      %v5612 = vpop.f32.mrf.mxu0
      %5613 = vmatprep.mubr.bf16.mxu0 0
      %5614 = vmatmul.mubr.bf16.gmra.mxu0 %v5518
      %v5615 = vpop.f32.mrf.mxu0
      %v5616 = vadd.f32 0.0, %v5615
      %v5617 = vpop.f32.mrf.mxu0
      %v5618 = vpop.f32.mrf.mxu0
      %v5619 = vadd.f32 0.0, %v5618
      %v5620 = vpop.f32.mrf.mxu0
      %5621 = vmatprep.mubr.bf16.mxu0 0
      %5622 = vmatmul.mubr.bf16.gmra.mxu0 %v5521
      %v5623 = vpop.f32.mrf.mxu0
      %v5624 = vadd.f32 0.0, %v5623
      %v5625 = vpop.f32.mrf.mxu0
      %v5626 = vpop.f32.mrf.mxu0
      %v5627 = vadd.f32 0.0, %v5626
      %v5628 = vpop.f32.mrf.mxu0
      %5629 = vmatprep.mubr.bf16.mxu0 0
      %5630 = vmatmul.mubr.bf16.gmra.mxu0 %v5524
      %v5631 = vpop.f32.mrf.mxu0
      %v5632 = vadd.f32 0.0, %v5631
      %v5633 = vpop.f32.mrf.mxu0
      %v5634 = vpop.f32.mrf.mxu0
      %v5635 = vadd.f32 0.0, %v5634
      %v5636 = vpop.f32.mrf.mxu0
      %5637 = vmatprep.mubr.bf16.mxu0 0
      %5638 = vmatmul.mubr.bf16.gmra.mxu0 %v5527
      %v5639 = vpop.f32.mrf.mxu0
      %v5640 = vadd.f32 0.0, %v5639
      %v5641 = vpop.f32.mrf.mxu0
      %v5642 = vpop.f32.mrf.mxu0
      %v5643 = vadd.f32 0.0, %v5642
      %v5644 = vpop.f32.mrf.mxu0
      %5645 = vmatprep.mubr.bf16.mxu0 0
      %5646 = vmatmul.mubr.bf16.gmra.mxu0 %v5530
      %v5647 = vpop.f32.mrf.mxu0
      %v5648 = vadd.f32 0.0, %v5647
      %v5649 = vpop.f32.mrf.mxu0
      %v5650 = vpop.f32.mrf.mxu0
      %v5651 = vadd.f32 0.0, %v5650
      %v5652 = vpop.f32.mrf.mxu0
      %5653 = vmatprep.mubr.bf16.mxu0 0
      %5654 = vmatmul.mubr.bf16.gmra.mxu0 %v5533
      %v5655 = vpop.f32.mrf.mxu0
      %v5656 = vadd.f32 0.0, %v5655
      %v5657 = vpop.f32.mrf.mxu0
      %v5658 = vpop.f32.mrf.mxu0
      %v5659 = vadd.f32 0.0, %v5658
      %v5660 = vpop.f32.mrf.mxu0
      %5661 = vmatprep.mubr.bf16.mxu0 0
      %5662 = vmatmul.mubr.bf16.gmra.mxu0 %v5536
      %v5663 = vpop.f32.mrf.mxu0
      %v5664 = vadd.f32 0.0, %v5663
      %v5665 = vpop.f32.mrf.mxu0
      %v5666 = vpop.f32.mrf.mxu0
      %v5667 = vadd.f32 0.0, %v5666
      %v5668 = vpop.f32.mrf.mxu0
      %5669 = vmatprep.mubr.bf16.mxu0 0
      %5670 = vmatmul.mubr.bf16.gmra.mxu0 %v5539
      %v5671 = vpop.f32.mrf.mxu0
      %v5672 = vadd.f32 0.0, %v5671
      %v5673 = vpop.f32.mrf.mxu0
      %v5674 = vpop.f32.mrf.mxu0
      %v5675 = vadd.f32 0.0, %v5674
      %v5676 = vpop.f32.mrf.mxu0
      %5677 = vmatprep.mubr.bf16.mxu0 0
      %5678 = vmatmul.mubr.bf16.gmra.mxu0 %v5542
      %v5679 = vpop.f32.mrf.mxu0
      %v5680 = vadd.f32 0.0, %v5679
      %v5681 = vpop.f32.mrf.mxu0
      %v5682 = vpop.f32.mrf.mxu0
      %v5683 = vadd.f32 0.0, %v5682
      %v5684 = vpop.f32.mrf.mxu0
      %5685 = vmatprep.mubr.bf16.mxu0 0
      %5686 = vmatmul.mubr.bf16.gmra.mxu0 %v5545
      %v5687 = vpop.f32.mrf.mxu0
      %v5688 = vadd.f32 0.0, %v5687
      %v5689 = vpop.f32.mrf.mxu0
      %v5690 = vpop.f32.mrf.mxu0
      %v5691 = vadd.f32 0.0, %v5690
      %v5692 = vpop.f32.mrf.mxu0
      %5693 = vmatprep.mubr.bf16.mxu0 0
      %5694 = vmatmul.mubr.bf16.gmra.mxu0 %v5548
      %v5695 = vpop.f32.mrf.mxu0
      %v5696 = vadd.f32 0.0, %v5695
      %v5697 = vpop.f32.mrf.mxu0
      %v5698 = vpop.f32.mrf.mxu0
      %v5699 = vadd.f32 0.0, %v5698
      %v5700 = vpop.f32.mrf.mxu0
      %5701 = vmatprep.mubr.bf16.mxu0 0
      %5702 = vmatmul.mubr.bf16.gmra.mxu0 %v5551
      %v5703 = vpop.f32.mrf.mxu0
      %v5704 = vadd.f32 0.0, %v5703
      %v5705 = vpop.f32.mrf.mxu0
      %v5706 = vpop.f32.mrf.mxu0
      %v5707 = vadd.f32 0.0, %v5706
      %v5708 = vpop.f32.mrf.mxu0
      %5709 = vmatprep.mubr.bf16.mxu0 0
      %5710 = vmatmul.mubr.bf16.gmra.mxu0 %v5554
      %v5711 = vpop.f32.mrf.mxu0
      %v5712 = vadd.f32 0.0, %v5711
      %v5713 = vpop.f32.mrf.mxu0
      %v5714 = vpop.f32.mrf.mxu0
      %v5715 = vadd.f32 0.0, %v5714
      %v5716 = vpop.f32.mrf.mxu0
      %5717 = vmatprep.mubr.bf16.mxu0 0
      %5718 = vmatmul.mubr.bf16.gmra.mxu0 %v5557
      %v5719 = vpop.f32.mrf.mxu0
      %v5720 = vadd.f32 0.0, %v5719
      %v5721 = vpop.f32.mrf.mxu0
      %v5722 = vpop.f32.mrf.mxu0
      %v5723 = vadd.f32 0.0, %v5722
      %v5724 = vpop.f32.mrf.mxu0
      %5725 = vmatprep.mubr.bf16.mxu0 0
      %5726 = vmatmul.mubr.bf16.gmra.mxu0 %v5560
      %v5727 = vpop.f32.mrf.mxu0
      %v5728 = vadd.f32 0.0, %v5727
      %v5729 = vpop.f32.mrf.mxu0
      %v5730 = vpop.f32.mrf.mxu0
      %v5731 = vadd.f32 0.0, %v5730
      %v5732 = vpop.f32.mrf.mxu0
      %5733 = vmatprep.mubr.bf16.mxu0 0
      %5734 = vmatmul.mubr.bf16.gmra.mxu0 %v5563
      %v5735 = vpop.f32.mrf.mxu0
      %v5736 = vadd.f32 0.0, %v5735
      %v5737 = vpop.f32.mrf.mxu0
      %v5738 = vpop.f32.mrf.mxu0
      %v5739 = vadd.f32 0.0, %v5738
      %v5740 = vpop.f32.mrf.mxu0
      %5741 = vdwg.mxu0
      %v5742 = vadd.f32 %v5113, %v5600
      %v5743 = vadd.f32 %v5114, %v5603
      %v5744 = vadd.f32 %v5115, %v5608
      %v5745 = vadd.f32 %v5116, %v5611
      %v5746 = vadd.f32 %v5117, %v5616
      %v5747 = vadd.f32 %v5118, %v5619
      %v5748 = vadd.f32 %v5119, %v5624
      %v5749 = vadd.f32 %v5120, %v5627
      %v5750 = vadd.f32 %v5121, %v5632
      %v5751 = vadd.f32 %v5122, %v5635
      %v5752 = vadd.f32 %v5123, %v5640
      %v5753 = vadd.f32 %v5124, %v5643
      %v5754 = vadd.f32 %v5125, %v5648
      %v5755 = vadd.f32 %v5126, %v5651
      %v5756 = vadd.f32 %v5127, %v5656
      %v5757 = vadd.f32 %v5128, %v5659
      %v5758 = vadd.f32 %v5129, %v5664
      %v5759 = vadd.f32 %v5130, %v5667
      %v5760 = vadd.f32 %v5131, %v5672
      %v5761 = vadd.f32 %v5132, %v5675
      %v5762 = vadd.f32 %v5133, %v5680
      %v5763 = vadd.f32 %v5134, %v5683
      %v5764 = vadd.f32 %v5135, %v5688
      %v5765 = vadd.f32 %v5136, %v5691
      %v5766 = vadd.f32 %v5137, %v5696
      %v5767 = vadd.f32 %v5138, %v5699
      %v5768 = vadd.f32 %v5139, %v5704
      %v5769 = vadd.f32 %v5140, %v5707
      %v5770 = vadd.f32 %v5141, %v5712
      %v5771 = vadd.f32 %v5142, %v5715
      %v5772 = vadd.f32 %v5143, %v5720
      %v5773 = vadd.f32 %v5144, %v5723
      %v5774 = vadd.f32 %v5145, %v5728
      %v5775 = vadd.f32 %v5146, %v5731
      %v5776 = vadd.f32 %v5147, %v5736
      %v5777 = vadd.f32 %v5148, %v5739
      %v5778 = vld [vmem:[%s5] sm:$0x1]
      %v5780 = vlaneseq
      %v5781 = vshrl.u32 %v5780, 7
      %v5782 = vsub.s32 0, %v5781
      %v5783 = vrot.slane %v5778, %v5782
      %v5785 = vadd.f32 %v5742, %v5783
      %v5786 = vadd.f32 %v5743, %v5783
      %v5787 = vadd.f32 %v5744, %v5783
      %v5788 = vadd.f32 %v5745, %v5783
      %v5789 = vadd.f32 %v5746, %v5783
      %v5790 = vadd.f32 %v5747, %v5783
      %v5791 = vadd.f32 %v5748, %v5783
      %v5792 = vadd.f32 %v5749, %v5783
      %v5793 = vadd.f32 %v5750, %v5783
      %v5794 = vadd.f32 %v5751, %v5783
      %v5795 = vadd.f32 %v5752, %v5783
      %v5796 = vadd.f32 %v5753, %v5783
      %v5797 = vadd.f32 %v5754, %v5783
      %v5798 = vadd.f32 %v5755, %v5783
      %v5799 = vadd.f32 %v5756, %v5783
      %v5800 = vadd.f32 %v5757, %v5783
      %v5801 = vadd.f32 %v5758, %v5783
      %v5802 = vadd.f32 %v5759, %v5783
      %v5803 = vadd.f32 %v5760, %v5783
      %v5804 = vadd.f32 %v5761, %v5783
      %v5805 = vadd.f32 %v5762, %v5783
      %v5806 = vadd.f32 %v5763, %v5783
      %v5807 = vadd.f32 %v5764, %v5783
      %v5808 = vadd.f32 %v5765, %v5783
      %v5809 = vadd.f32 %v5766, %v5783
      %v5810 = vadd.f32 %v5767, %v5783
      %v5811 = vadd.f32 %v5768, %v5783
      %v5812 = vadd.f32 %v5769, %v5783
      %v5813 = vadd.f32 %v5770, %v5783
      %v5814 = vadd.f32 %v5771, %v5783
      %v5815 = vadd.f32 %v5772, %v5783
      %v5816 = vadd.f32 %v5773, %v5783
      %v5817 = vadd.f32 %v5774, %v5783
      %v5818 = vadd.f32 %v5775, %v5783
      %v5819 = vadd.f32 %v5776, %v5783
      %v5820 = vadd.f32 %v5777, %v5783
      %v5821 = vmax.f32 %v5785, 0.0
      %v5822 = vmax.f32 %v5786, 0.0
      %v5823 = vmax.f32 %v5787, 0.0
      %v5824 = vmax.f32 %v5788, 0.0
      %v5825 = vmax.f32 %v5789, 0.0
      %v5826 = vmax.f32 %v5790, 0.0
      %v5827 = vmax.f32 %v5791, 0.0
      %v5828 = vmax.f32 %v5792, 0.0
      %v5829 = vmax.f32 %v5793, 0.0
      %v5830 = vmax.f32 %v5794, 0.0
      %v5831 = vmax.f32 %v5795, 0.0
      %v5832 = vmax.f32 %v5796, 0.0
      %v5833 = vmax.f32 %v5797, 0.0
      %v5834 = vmax.f32 %v5798, 0.0
      %v5835 = vmax.f32 %v5799, 0.0
      %v5836 = vmax.f32 %v5800, 0.0
      %v5837 = vmax.f32 %v5801, 0.0
      %v5838 = vmax.f32 %v5802, 0.0
      %v5839 = vmax.f32 %v5803, 0.0
      %v5840 = vmax.f32 %v5804, 0.0
      %v5841 = vmax.f32 %v5805, 0.0
      %v5842 = vmax.f32 %v5806, 0.0
      %v5843 = vmax.f32 %v5807, 0.0
      %v5844 = vmax.f32 %v5808, 0.0
      %v5845 = vmax.f32 %v5809, 0.0
      %v5846 = vmax.f32 %v5810, 0.0
      %v5847 = vmax.f32 %v5811, 0.0
      %v5848 = vmax.f32 %v5812, 0.0
      %v5849 = vmax.f32 %v5813, 0.0
      %v5850 = vmax.f32 %v5814, 0.0
      %v5851 = vmax.f32 %v5815, 0.0
      %v5852 = vmax.f32 %v5816, 0.0
      %v5853 = vmax.f32 %v5817, 0.0
      %v5854 = vmax.f32 %v5818, 0.0
      %v5855 = vmax.f32 %v5819, 0.0
      %v5856 = vmax.f32 %v5820, 0.0
      %v5857 = vpack.c.bf16 %v5822, %v5821
      %v5858 = vpack.c.bf16 %v5824, %v5823
      %v5859 = vpack.c.bf16 %v5826, %v5825
      %v5860 = vpack.c.bf16 %v5828, %v5827
      %v5861 = vpack.c.bf16 %v5830, %v5829
      %v5862 = vpack.c.bf16 %v5832, %v5831
      %v5863 = vpack.c.bf16 %v5834, %v5833
      %v5864 = vpack.c.bf16 %v5836, %v5835
      %v5865 = vpack.c.bf16 %v5838, %v5837
      %v5866 = vpack.c.bf16 %v5840, %v5839
      %v5867 = vpack.c.bf16 %v5842, %v5841
      %v5868 = vpack.c.bf16 %v5844, %v5843
      %v5869 = vpack.c.bf16 %v5846, %v5845
      %v5870 = vpack.c.bf16 %v5848, %v5847
      %v5871 = vpack.c.bf16 %v5850, %v5849
      %v5872 = vpack.c.bf16 %v5852, %v5851
      %v5873 = vpack.c.bf16 %v5854, %v5853
      %v5874 = vpack.c.bf16 %v5856, %v5855
      %v5893 = vunpack.c.l.b16 %v5857
      %v5894 = vunpack.c.h.b16 %v5857
      %v5895 = vunpack.c.l.b16 %v5858
      %v5896 = vunpack.c.h.b16 %v5858
      %v5897 = vunpack.c.l.b16 %v5859
      %v5898 = vunpack.c.h.b16 %v5859
      %v5899 = vunpack.c.l.b16 %v5860
      %v5900 = vunpack.c.h.b16 %v5860
      %v5901 = vunpack.c.l.b16 %v5861
      %v5902 = vunpack.c.h.b16 %v5861
      %v5903 = vunpack.c.l.b16 %v5862
      %v5904 = vunpack.c.h.b16 %v5862
      %v5905 = vunpack.c.l.b16 %v5863
      %v5906 = vunpack.c.h.b16 %v5863
      %v5907 = vunpack.c.l.b16 %v5864
      %v5908 = vunpack.c.h.b16 %v5864
      %v5909 = vunpack.c.l.b16 %v5865
      %v5910 = vunpack.c.h.b16 %v5865
      %v5911 = vunpack.c.l.b16 %v5866
      %v5912 = vunpack.c.h.b16 %v5866
      %v5913 = vunpack.c.l.b16 %v5867
      %v5914 = vunpack.c.h.b16 %v5867
      %v5915 = vunpack.c.l.b16 %v5868
      %v5916 = vunpack.c.h.b16 %v5868
      %v5917 = vunpack.c.l.b16 %v5869
      %v5918 = vunpack.c.h.b16 %v5869
      %v5919 = vunpack.c.l.b16 %v5870
      %v5920 = vunpack.c.h.b16 %v5870
      %v5921 = vunpack.c.l.b16 %v5871
      %v5922 = vunpack.c.h.b16 %v5871
      %v5923 = vunpack.c.l.b16 %v5872
      %v5924 = vunpack.c.h.b16 %v5872
      %v5925 = vunpack.c.l.b16 %v5873
      %v5926 = vunpack.c.h.b16 %v5873
      %v5927 = vunpack.c.l.b16 %v5874
      %v5928 = vunpack.c.h.b16 %v5874
      %v5929 = vpack.c.b16 %v5893, %v5893
      %v5930 = vpack.c.b16 %v5894, %v5894
      %v5931 = vpack.c.b16 %v5895, %v5895
      %v5932 = vpack.c.b16 %v5896, %v5896
      %v5933 = vpack.c.b16 %v5897, %v5897
      %v5934 = vpack.c.b16 %v5898, %v5898
      %v5935 = vpack.c.b16 %v5899, %v5899
      %v5936 = vpack.c.b16 %v5900, %v5900
      %v5937 = vpack.c.b16 %v5901, %v5901
      %v5938 = vpack.c.b16 %v5902, %v5902
      %v5939 = vpack.c.b16 %v5903, %v5903
      %v5940 = vpack.c.b16 %v5904, %v5904
      %v5941 = vpack.c.b16 %v5905, %v5905
      %v5942 = vpack.c.b16 %v5906, %v5906
      %v5943 = vpack.c.b16 %v5907, %v5907
      %v5944 = vpack.c.b16 %v5908, %v5908
      %v5945 = vpack.c.b16 %v5909, %v5909
      %v5946 = vpack.c.b16 %v5910, %v5910
      %v5947 = vpack.c.b16 %v5911, %v5911
      %v5948 = vpack.c.b16 %v5912, %v5912
      %v5949 = vpack.c.b16 %v5913, %v5913
      %v5950 = vpack.c.b16 %v5914, %v5914
      %v5951 = vpack.c.b16 %v5915, %v5915
      %v5952 = vpack.c.b16 %v5916, %v5916
      %v5953 = vpack.c.b16 %v5917, %v5917
      %v5954 = vpack.c.b16 %v5918, %v5918
      %v5955 = vpack.c.b16 %v5919, %v5919
      %v5956 = vpack.c.b16 %v5920, %v5920
      %v5957 = vpack.c.b16 %v5921, %v5921
      %v5958 = vpack.c.b16 %v5922, %v5922
      %v5959 = vpack.c.b16 %v5923, %v5923
      %v5960 = vpack.c.b16 %v5924, %v5924
      %v5961 = vpack.c.b16 %v5925, %v5925
      %v5962 = vpack.c.b16 %v5926, %v5926
      %v5963 = vpack.c.b16 %v5927, %v5927
      %v5964 = vpack.c.b16 %v5928, %v5928
      %vm6001 = vcmask 191488
      %6002 = vst.msk [vmem:[%s333] sm:$0xf] %vm6001, %v5929
      %6003 = vst.msk [vmem:[%s333 + $0x4] sm:$0xf] %vm6001, %v5930
      %6004 = vst.msk [vmem:[%s333 + $0x8] sm:$0xf] %vm6001, %v5931
      %6005 = vst.msk [vmem:[%s333 + $0xc] sm:$0xf] %vm6001, %v5932
      %6006 = vst.msk [vmem:[%s333 + $0x10] sm:$0xf] %vm6001, %v5933
      %6007 = vst.msk [vmem:[%s333 + $0x14] sm:$0xf] %vm6001, %v5934
      %6008 = vst.msk [vmem:[%s333 + $0x18] sm:$0xf] %vm6001, %v5935
      %6009 = vst.msk [vmem:[%s333 + $0x1c] sm:$0xf] %vm6001, %v5936
      %6010 = vst.msk [vmem:[%s333 + $0x20] sm:$0xf] %vm6001, %v5937
      %6011 = vst.msk [vmem:[%s333 + $0x24] sm:$0xf] %vm6001, %v5938
      %6012 = vst.msk [vmem:[%s333 + $0x28] sm:$0xf] %vm6001, %v5939
      %6013 = vst.msk [vmem:[%s333 + $0x2c] sm:$0xf] %vm6001, %v5940
      %6014 = vst.msk [vmem:[%s333 + $0x30] sm:$0xf] %vm6001, %v5941
      %6015 = vst.msk [vmem:[%s333 + $0x34] sm:$0xf] %vm6001, %v5942
      %6016 = vst.msk [vmem:[%s333 + $0x38] sm:$0xf] %vm6001, %v5943
      %6017 = vst.msk [vmem:[%s333 + $0x3c] sm:$0xf] %vm6001, %v5944
      %6018 = vst.msk [vmem:[%s333 + $0x40] sm:$0xf] %vm6001, %v5945
      %6019 = vst.msk [vmem:[%s333 + $0x44] sm:$0xf] %vm6001, %v5946
      %6020 = vst.msk [vmem:[%s333 + $0x48] sm:$0xf] %vm6001, %v5947
      %6021 = vst.msk [vmem:[%s333 + $0x4c] sm:$0xf] %vm6001, %v5948
      %6022 = vst.msk [vmem:[%s333 + $0x50] sm:$0xf] %vm6001, %v5949
      %6023 = vst.msk [vmem:[%s333 + $0x54] sm:$0xf] %vm6001, %v5950
      %6024 = vst.msk [vmem:[%s333 + $0x58] sm:$0xf] %vm6001, %v5951
      %6025 = vst.msk [vmem:[%s333 + $0x5c] sm:$0xf] %vm6001, %v5952
      %6026 = vst.msk [vmem:[%s333 + $0x60] sm:$0xf] %vm6001, %v5953
      %6027 = vst.msk [vmem:[%s333 + $0x64] sm:$0xf] %vm6001, %v5954
      %6028 = vst.msk [vmem:[%s333 + $0x68] sm:$0xf] %vm6001, %v5955
      %6029 = vst.msk [vmem:[%s333 + $0x6c] sm:$0xf] %vm6001, %v5956
      %6030 = vst.msk [vmem:[%s333 + $0x70] sm:$0xf] %vm6001, %v5957
      %6031 = vst.msk [vmem:[%s333 + $0x74] sm:$0xf] %vm6001, %v5958
      %6032 = vst.msk [vmem:[%s333 + $0x78] sm:$0xf] %vm6001, %v5959
      %6033 = vst.msk [vmem:[%s333 + $0x7c] sm:$0xf] %vm6001, %v5960
      %6034 = vst.msk [vmem:[%s333 + $0x80] sm:$0xf] %vm6001, %v5961
      %6035 = vst.msk [vmem:[%s333 + $0x84] sm:$0xf] %vm6001, %v5962
      %6036 = vst.msk [vmem:[%s333 + $0x88] sm:$0xf] %vm6001, %v5963
      %6037 = vst.msk [vmem:[%s333 + $0x8c] sm:$0xf] %vm6001, %v5964
      %p6038 = scmp.lt.s32.totalorder %s20, 1
      %s6039 = scalar_select %p6038, %s20, 1
      %s6040 = smul.addr %s6039, 36
      %s6041 = smul.addr %s6040, 4
      %s6042 = scalar_lea.vmem %s7, %s6041
      %p6043 = scmp.lt.s32.totalorder %s20, 1
      %s6044 = scalar_select %p6043, %s20, 1
      %s6045 = smul.addr %s6044, 10
      %s6046 = smul.addr %s6045, 4
      %s6047 = scalar_lea.vmem %s8, %s6046
      // Predicated region
      $region49: #{basic_block_forward_nchw.2} parent=47 // pred_check
        %p6048 = pneg %p195
      $region50: #{basic_block_forward_nchw.2} parent=47 // pred_check_branch
        %6050 = sbr.rel (%p6048) target = $region52
      $region51: #{basic_block_forward_nchw.2} parent=47 // pred_region
        _
      $region52: #{basic_block_forward_nchw.2} parent=47 // pred_fallthru
        _
      // Predicated region
      $region53: #{basic_block_forward_nchw.2} parent=47 // pred_check
        %p6051 = pneg %p221
      $region54: #{basic_block_forward_nchw.2} parent=47 // pred_check_branch
        %6053 = sbr.rel (%p6051) target = $region56
      $region55: #{basic_block_forward_nchw.2} parent=47 // pred_region
        _
      $region56: #{basic_block_forward_nchw.2} parent=47 // pred_fallthru
        _
    $region48: #{basic_block_forward_nchw.2} parent=5 // pred_fallthru
      _
    %p6054 = scmp.le.s32.totalorder 2, %s15
    // Predicated region
    $region57: #{basic_block_forward_nchw.2} parent=5 // pred_check
      %p6055 = pneg %p6054
    $region58: #{basic_block_forward_nchw.2} parent=5 // pred_check_branch
      %6057 = sbr.rel (%p6055) target = $region60
    $region59: #{basic_block_forward_nchw.2} parent=5 // pred_region
      %s6058 = ssub.s32 %s15, 2
      // Predicated region
      $region61: #{basic_block_forward_nchw.2} parent=59 // pred_check
        %p6059 = pneg %p201
      $region62: #{basic_block_forward_nchw.2} parent=59 // pred_check_branch
        %6061 = sbr.rel (%p6059) target = $region64
      $region63: #{basic_block_forward_nchw.2} parent=59 // pred_region
        %p6062 = scmp.lt.s32.totalorder %s21, 1
        %s6063 = scalar_select %p6062, %s21, 1
        %s6064 = smul.addr %s6063, 36
        %s6065 = smul.addr %s6064, 4
        %s6066 = scalar_lea.vmem %s7, %s6065
      $region64: #{basic_block_forward_nchw.2} parent=59 // pred_fallthru
        _
      // Predicated region
      $region65: #{basic_block_forward_nchw.2} parent=59 // pred_check
        %p6067 = pneg %p227
      $region66: #{basic_block_forward_nchw.2} parent=59 // pred_check_branch
        %6069 = sbr.rel (%p6067) target = $region68
      $region67: #{basic_block_forward_nchw.2} parent=59 // pred_region
        %p6070 = scmp.lt.s32.totalorder %s21, 1
        %s6071 = scalar_select %p6070, %s21, 1
        %s6072 = smul.addr %s6071, 10
        %s6073 = smul.addr %s6072, 4
        %s6074 = scalar_lea.vmem %s8, %s6073
      $region68: #{basic_block_forward_nchw.2} parent=59 // pred_fallthru
        _
    $region60: #{basic_block_forward_nchw.2} parent=5 // pred_fallthru
      _
  $region6: #{basic_block_forward_nchw.2} parent=0 // loop_footer
    %s19 = sadd.s32 1, %s15
  $region7: #{basic_block_forward_nchw.2} parent=0 // loop_footer_branch
    %14 = sbr.rel target = $region3
  $region8: #{basic_block_forward_nchw.2} parent=0 // loop_exit
    _

// kernel: basic_block_forward_nchw.3
$region0: #{basic_block_forward_nchw.3}
  #allocation0 [shape = 'u32[]', space=smem, size = 0x4, offset = 0x4, fixed_abs, tag = 'smem constant byte address 0x4 - core index']
  #allocation1 [shape = 'u32[144,128]{1,0:T(1,128)}', space=vmem, size = 0x12000, scoped, tag = 'internal scratch']
  %s0 = inlined_call_operand.vmem [shape: bf16[2,342,24], index: 0, kind: input, shape index: {}]
  %s1 = inlined_call_operand.vmem [shape: bf16[2,110,32], index: 1, kind: input, shape index: {}]
  %s2 = inlined_call_operand.vmem [shape: bf16[9,24,24], index: 2, kind: input, shape index: {}]
  %s3 = inlined_call_operand.vmem [shape: bf16[9,32,32], index: 3, kind: input, shape index: {}]
  %s4 = inlined_call_operand.vmem [shape: bf16[288,80], index: 4, kind: input, shape index: {}]
  %s5 = inlined_call_operand.vmem [shape: f32[1,24], index: 5, kind: input, shape index: {}]
  %s6 = inlined_call_operand.vmem [shape: f32[1,8], index: 6, kind: input, shape index: {}]
  %s7 = inlined_call_operand.vmem [shape: f32[2,288,24], index: 7, kind: input, shape index: {}]
  %s8 = inlined_call_operand.vmem [shape: f32[2,80,8], index: 8, kind: input, shape index: {}]
  %s9 = inlined_call_operand.vmem [shape: f32[2,288,24], index: 9, kind: output, shape index: {0}]
  %s10 = inlined_call_operand.vmem [shape: f32[2,80,8], index: 10, kind: output, shape index: {1}]
  %11 = xla_tuple %s9, %s10
  %s12 = sld [smem:[#allocation0]]
  $region77: #{basic_block_forward_nchw.3} parent=0
    _
  %s14 = ssub.s32 1, %s12
  %s15 = scalar_select 0, %s14, %s12
  loop: start=0, step=1, limit=4
  $region2: #{basic_block_forward_nchw.3} parent=0 // loop_pre_header
    _
  $region3: #{basic_block_forward_nchw.3} parent=0 // loop_header
    %s17 = sphi 0, %s21
    %p18 = scmp.ge.s32.totalorder %s17, 4
    %s27 = sphi 0, %s29
    %s30 = sphi 0, %s27
    %s31 = sphi 0, %s30
    %s47 = sphi 0, %s31
    %s53 = sphi 0, %s55
    %s56 = sphi 0, %s53
    %s57 = sphi 0, %s56
    %s73 = sphi 0, %s57
    %s77 = sphi 0, %s77
    %s79 = sphi 0, %s77
    %s80 = sphi 0, %s79
    %s94 = sphi 0, %s80
    %s98 = sphi 0, %s98
    %s100 = sphi 0, %s98
    %s101 = sphi 0, %s100
    %s115 = sphi 0, %s101
    %s119 = sphi 0, %s119
    %s121 = sphi 0, %s119
    %s122 = sphi 0, %s121
    %s136 = sphi 0, %s122
    %s140 = sphi 0, %s140
    %s142 = sphi 0, %s140
    %s143 = sphi 0, %s142
    %s157 = sphi 0, %s143
    %s161 = sphi 0, %s161
    %s163 = sphi 0, %s161
    %s164 = sphi 0, %s163
    %s178 = sphi 0, %s164
    %s184 = sphi 0, %s186
    %s187 = sphi 0, %s184
    %s188 = sphi 0, %s187
    %s204 = sphi 0, %s188
    %s210 = sphi 0, %s212
    %s213 = sphi 0, %s210
    %s214 = sphi 0, %s213
    %s230 = sphi 0, %s214
    %s236 = sphi 0, %s238
    %s239 = sphi 0, %s236
    %s240 = sphi 0, %s239
    %s256 = sphi 0, %s240
    %s262 = sphi 0, %s264
    %s265 = sphi 0, %s262
    %s266 = sphi 0, %s265
    %s282 = sphi 0, %s266
  $region4: #{basic_block_forward_nchw.3} parent=0 // loop_header_branch
    %20 = sbr.rel (%p18) target = $region8
  $region5: #{basic_block_forward_nchw.3} parent=0 // loop_body
    %s22 = ssub.s32 %s17, 1
    %s23 = ssub.s32 %s17, 2
    %s24 = sadd.s32 %s17, 1
    %s25 = ssub.s32 %s17, %s24
    %p26 = scmp.eq.s32.totalorder %s25, 0
    %s28 = sadd.s32 %s27, 1
    %s29 = scalar_select %p26, %s27, %s28
    %p32 = pneg %p26
    %p33 = scmp.eq.s32.totalorder %s17, 1
    %p34 = por %p32, %p33
    %p35 = scmp.ne.s32.totalorder %s27, %s30
    %p36 = scmp.eq.s32.totalorder %s17, 0
    %p37 = por %p35, %p36
    %p38 = scmp.ne.s32.totalorder %s27, %s30
    %p39 = scmp.eq.s32.totalorder %s22, 1
    %p40 = por %p38, %p39
    %p41 = scmp.ne.s32.totalorder %s30, %s31
    %p42 = scmp.eq.s32.totalorder %s22, 0
    %p43 = por %p41, %p42
    %p44 = scmp.ne.s32.totalorder %s30, %s31
    %p45 = scmp.eq.s32.totalorder %s23, 1
    %p46 = por %p44, %p45
    %p48 = scmp.ne.s32.totalorder %s31, %s47
    %p49 = scmp.eq.s32.totalorder %s23, 0
    %p50 = por %p48, %p49
    %s51 = ssub.s32 %s17, %s24
    %p52 = scmp.eq.s32.totalorder %s51, 0
    %s54 = sadd.s32 %s53, 1
    %s55 = scalar_select %p52, %s53, %s54
    %p58 = pneg %p52
    %p59 = scmp.eq.s32.totalorder %s17, 1
    %p60 = por %p58, %p59
    %p61 = scmp.ne.s32.totalorder %s53, %s56
    %p62 = scmp.eq.s32.totalorder %s17, 0
    %p63 = por %p61, %p62
    %p64 = scmp.ne.s32.totalorder %s53, %s56
    %p65 = scmp.eq.s32.totalorder %s22, 1
    %p66 = por %p64, %p65
    %p67 = scmp.ne.s32.totalorder %s56, %s57
    %p68 = scmp.eq.s32.totalorder %s22, 0
    %p69 = por %p67, %p68
    %p70 = scmp.ne.s32.totalorder %s56, %s57
    %p71 = scmp.eq.s32.totalorder %s23, 1
    %p72 = por %p70, %p71
    %p74 = scmp.ne.s32.totalorder %s57, %s73
    %p75 = scmp.eq.s32.totalorder %s23, 0
    %p76 = por %p74, %p75
    %s78 = sadd.s32 %s77, 1
    %p81 = scmp.eq.s32.totalorder %s17, 1
    %p82 = scmp.ne.s32.totalorder %s77, %s79
    %p83 = scmp.eq.s32.totalorder %s17, 0
    %p84 = por %p82, %p83
    %p85 = scmp.ne.s32.totalorder %s77, %s79
    %p86 = scmp.eq.s32.totalorder %s22, 1
    %p87 = por %p85, %p86
    %p88 = scmp.ne.s32.totalorder %s79, %s80
    %p89 = scmp.eq.s32.totalorder %s22, 0
    %p90 = por %p88, %p89
    %p91 = scmp.ne.s32.totalorder %s79, %s80
    %p92 = scmp.eq.s32.totalorder %s23, 1
    %p93 = por %p91, %p92
    %p95 = scmp.ne.s32.totalorder %s80, %s94
    %p96 = scmp.eq.s32.totalorder %s23, 0
    %p97 = por %p95, %p96
    %s99 = sadd.s32 %s98, 1
    %p102 = scmp.eq.s32.totalorder %s17, 1
    %p103 = scmp.ne.s32.totalorder %s98, %s100
    %p104 = scmp.eq.s32.totalorder %s17, 0
    %p105 = por %p103, %p104
    %p106 = scmp.ne.s32.totalorder %s98, %s100
    %p107 = scmp.eq.s32.totalorder %s22, 1
    %p108 = por %p106, %p107
    %p109 = scmp.ne.s32.totalorder %s100, %s101
    %p110 = scmp.eq.s32.totalorder %s22, 0
    %p111 = por %p109, %p110
    %p112 = scmp.ne.s32.totalorder %s100, %s101
    %p113 = scmp.eq.s32.totalorder %s23, 1
    %p114 = por %p112, %p113
    %p116 = scmp.ne.s32.totalorder %s101, %s115
    %p117 = scmp.eq.s32.totalorder %s23, 0
    %p118 = por %p116, %p117
    %s120 = sadd.s32 %s119, 1
    %p123 = scmp.eq.s32.totalorder %s17, 1
    %p124 = scmp.ne.s32.totalorder %s119, %s121
    %p125 = scmp.eq.s32.totalorder %s17, 0
    %p126 = por %p124, %p125
    %p127 = scmp.ne.s32.totalorder %s119, %s121
    %p128 = scmp.eq.s32.totalorder %s22, 1
    %p129 = por %p127, %p128
    %p130 = scmp.ne.s32.totalorder %s121, %s122
    %p131 = scmp.eq.s32.totalorder %s22, 0
    %p132 = por %p130, %p131
    %p133 = scmp.ne.s32.totalorder %s121, %s122
    %p134 = scmp.eq.s32.totalorder %s23, 1
    %p135 = por %p133, %p134
    %p137 = scmp.ne.s32.totalorder %s122, %s136
    %p138 = scmp.eq.s32.totalorder %s23, 0
    %p139 = por %p137, %p138
    %s141 = sadd.s32 %s140, 1
    %p144 = scmp.eq.s32.totalorder %s17, 1
    %p145 = scmp.ne.s32.totalorder %s140, %s142
    %p146 = scmp.eq.s32.totalorder %s17, 0
    %p147 = por %p145, %p146
    %p148 = scmp.ne.s32.totalorder %s140, %s142
    %p149 = scmp.eq.s32.totalorder %s22, 1
    %p150 = por %p148, %p149
    %p151 = scmp.ne.s32.totalorder %s142, %s143
    %p152 = scmp.eq.s32.totalorder %s22, 0
    %p153 = por %p151, %p152
    %p154 = scmp.ne.s32.totalorder %s142, %s143
    %p155 = scmp.eq.s32.totalorder %s23, 1
    %p156 = por %p154, %p155
    %p158 = scmp.ne.s32.totalorder %s143, %s157
    %p159 = scmp.eq.s32.totalorder %s23, 0
    %p160 = por %p158, %p159
    %s162 = sadd.s32 %s161, 1
    %p165 = scmp.eq.s32.totalorder %s17, 1
    %p166 = scmp.ne.s32.totalorder %s161, %s163
    %p167 = scmp.eq.s32.totalorder %s17, 0
    %p168 = por %p166, %p167
    %p169 = scmp.ne.s32.totalorder %s161, %s163
    %p170 = scmp.eq.s32.totalorder %s22, 1
    %p171 = por %p169, %p170
    %p172 = scmp.ne.s32.totalorder %s163, %s164
    %p173 = scmp.eq.s32.totalorder %s22, 0
    %p174 = por %p172, %p173
    %p175 = scmp.ne.s32.totalorder %s163, %s164
    %p176 = scmp.eq.s32.totalorder %s23, 1
    %p177 = por %p175, %p176
    %p179 = scmp.ne.s32.totalorder %s164, %s178
    %p180 = scmp.eq.s32.totalorder %s23, 0
    %p181 = por %p179, %p180
    %s182 = ssub.s32 %s17, %s24
    %p183 = scmp.eq.s32.totalorder %s182, 0
    %s185 = sadd.s32 %s184, 1
    %s186 = scalar_select %p183, %s184, %s185
    %p189 = pneg %p183
    %p190 = scmp.eq.s32.totalorder %s17, 1
    %p191 = por %p189, %p190
    %p192 = scmp.ne.s32.totalorder %s184, %s187
    %p193 = scmp.eq.s32.totalorder %s17, 0
    %p194 = por %p192, %p193
    %p195 = scmp.ne.s32.totalorder %s184, %s187
    %p196 = scmp.eq.s32.totalorder %s22, 1
    %p197 = por %p195, %p196
    %p198 = scmp.ne.s32.totalorder %s187, %s188
    %p199 = scmp.eq.s32.totalorder %s22, 0
    %p200 = por %p198, %p199
    %p201 = scmp.ne.s32.totalorder %s187, %s188
    %p202 = scmp.eq.s32.totalorder %s23, 1
    %p203 = por %p201, %p202
    %p205 = scmp.ne.s32.totalorder %s188, %s204
    %p206 = scmp.eq.s32.totalorder %s23, 0
    %p207 = por %p205, %p206
    %s208 = ssub.s32 %s17, %s24
    %p209 = scmp.eq.s32.totalorder %s208, 0
    %s211 = sadd.s32 %s210, 1
    %s212 = scalar_select %p209, %s210, %s211
    %p215 = pneg %p209
    %p216 = scmp.eq.s32.totalorder %s17, 1
    %p217 = por %p215, %p216
    %p218 = scmp.ne.s32.totalorder %s210, %s213
    %p219 = scmp.eq.s32.totalorder %s17, 0
    %p220 = por %p218, %p219
    %p221 = scmp.ne.s32.totalorder %s210, %s213
    %p222 = scmp.eq.s32.totalorder %s22, 1
    %p223 = por %p221, %p222
    %p224 = scmp.ne.s32.totalorder %s213, %s214
    %p225 = scmp.eq.s32.totalorder %s22, 0
    %p226 = por %p224, %p225
    %p227 = scmp.ne.s32.totalorder %s213, %s214
    %p228 = scmp.eq.s32.totalorder %s23, 1
    %p229 = por %p227, %p228
    %p231 = scmp.ne.s32.totalorder %s214, %s230
    %p232 = scmp.eq.s32.totalorder %s23, 0
    %p233 = por %p231, %p232
    %s234 = ssub.s32 %s17, %s24
    %p235 = scmp.eq.s32.totalorder %s234, 0
    %s237 = sadd.s32 %s236, 1
    %s238 = scalar_select %p235, %s236, %s237
    %p241 = pneg %p235
    %p242 = scmp.eq.s32.totalorder %s17, 1
    %p243 = por %p241, %p242
    %p244 = scmp.ne.s32.totalorder %s236, %s239
    %p245 = scmp.eq.s32.totalorder %s17, 0
    %p246 = por %p244, %p245
    %p247 = scmp.ne.s32.totalorder %s236, %s239
    %p248 = scmp.eq.s32.totalorder %s22, 1
    %p249 = por %p247, %p248
    %p250 = scmp.ne.s32.totalorder %s239, %s240
    %p251 = scmp.eq.s32.totalorder %s22, 0
    %p252 = por %p250, %p251
    %p253 = scmp.ne.s32.totalorder %s239, %s240
    %p254 = scmp.eq.s32.totalorder %s23, 1
    %p255 = por %p253, %p254
    %p257 = scmp.ne.s32.totalorder %s240, %s256
    %p258 = scmp.eq.s32.totalorder %s23, 0
    %p259 = por %p257, %p258
    %s260 = ssub.s32 %s17, %s24
    %p261 = scmp.eq.s32.totalorder %s260, 0
    %s263 = sadd.s32 %s262, 1
    %s264 = scalar_select %p261, %s262, %s263
    %p267 = pneg %p261
    %p268 = scmp.eq.s32.totalorder %s17, 1
    %p269 = por %p267, %p268
    %p270 = scmp.ne.s32.totalorder %s262, %s265
    %p271 = scmp.eq.s32.totalorder %s17, 0
    %p272 = por %p270, %p271
    %p273 = scmp.ne.s32.totalorder %s262, %s265
    %p274 = scmp.eq.s32.totalorder %s22, 1
    %p275 = por %p273, %p274
    %p276 = scmp.ne.s32.totalorder %s265, %s266
    %p277 = scmp.eq.s32.totalorder %s22, 0
    %p278 = por %p276, %p277
    %p279 = scmp.ne.s32.totalorder %s265, %s266
    %p280 = scmp.eq.s32.totalorder %s23, 1
    %p281 = por %p279, %p280
    %p283 = scmp.ne.s32.totalorder %s266, %s282
    %p284 = scmp.eq.s32.totalorder %s23, 0
    %p285 = por %p283, %p284
    %p286 = scmp.le.s32.totalorder 1, %s17
    %p287 = scmp.lt.s32.totalorder %s17, 3
    %p288 = pnand %p286, %p287
    %p289 = pneg %p288
    // Predicated region
    $region9: #{basic_block_forward_nchw.3} parent=5 // pred_check
      _
    $region10: #{basic_block_forward_nchw.3} parent=5 // pred_check_branch
      %291 = sbr.rel (%p288) target = $region12
    $region11: #{basic_block_forward_nchw.3} parent=5 // pred_region
      %s292 = ssub.s32 %s17, 1
      // Predicated region
      $region13: #{basic_block_forward_nchw.3} parent=11 // pred_check
        %p293 = pneg %p90
      $region14: #{basic_block_forward_nchw.3} parent=11 // pred_check_branch
        %295 = sbr.rel (%p293) target = $region16
      $region15: #{basic_block_forward_nchw.3} parent=11 // pred_region
        _
      $region16: #{basic_block_forward_nchw.3} parent=11 // pred_fallthru
        _
      // Predicated region
      $region17: #{basic_block_forward_nchw.3} parent=11 // pred_check
        %p296 = pneg %p111
      $region18: #{basic_block_forward_nchw.3} parent=11 // pred_check_branch
        %298 = sbr.rel (%p296) target = $region20
      $region19: #{basic_block_forward_nchw.3} parent=11 // pred_region
        _
      $region20: #{basic_block_forward_nchw.3} parent=11 // pred_fallthru
        _
      // Predicated region
      $region21: #{basic_block_forward_nchw.3} parent=11 // pred_check
        %p299 = pneg %p132
      $region22: #{basic_block_forward_nchw.3} parent=11 // pred_check_branch
        %301 = sbr.rel (%p299) target = $region24
      $region23: #{basic_block_forward_nchw.3} parent=11 // pred_region
        _
      $region24: #{basic_block_forward_nchw.3} parent=11 // pred_fallthru
        _
      // Predicated region
      $region25: #{basic_block_forward_nchw.3} parent=11 // pred_check
        %p302 = pneg %p153
      $region26: #{basic_block_forward_nchw.3} parent=11 // pred_check_branch
        %304 = sbr.rel (%p302) target = $region28
      $region27: #{basic_block_forward_nchw.3} parent=11 // pred_region
        _
      $region28: #{basic_block_forward_nchw.3} parent=11 // pred_fallthru
        _
      // Predicated region
      $region29: #{basic_block_forward_nchw.3} parent=11 // pred_check
        %p305 = pneg %p174
      $region30: #{basic_block_forward_nchw.3} parent=11 // pred_check_branch
        %307 = sbr.rel (%p305) target = $region32
      $region31: #{basic_block_forward_nchw.3} parent=11 // pred_region
        _
      $region32: #{basic_block_forward_nchw.3} parent=11 // pred_fallthru
        _
    $region12: #{basic_block_forward_nchw.3} parent=5 // pred_fallthru
      _
    %p308 = scmp.lt.s32.totalorder %s17, 2
    // Predicated region
    $region33: #{basic_block_forward_nchw.3} parent=5 // pred_check
      %p309 = pneg %p308
    $region34: #{basic_block_forward_nchw.3} parent=5 // pred_check_branch
      %311 = sbr.rel (%p309) target = $region36
    $region35: #{basic_block_forward_nchw.3} parent=5 // pred_region
      // Predicated region
      $region37: #{basic_block_forward_nchw.3} parent=35 // pred_check
        %p312 = pneg %p37
      $region38: #{basic_block_forward_nchw.3} parent=35 // pred_check_branch
        %314 = sbr.rel (%p312) target = $region40
      $region39: #{basic_block_forward_nchw.3} parent=35 // pred_region
        %p315 = scmp.lt.s32.totalorder %s17, 1
        %s316 = scalar_select %p315, %s17, 1
        %s317 = smul.addr %s316, 43
        %s318 = smul.addr %s317, 4
        %s319 = scalar_lea.vmem %s0, %s318
      $region40: #{basic_block_forward_nchw.3} parent=35 // pred_fallthru
        _
      // Predicated region
      $region41: #{basic_block_forward_nchw.3} parent=35 // pred_check
        %p320 = pneg %p63
      $region42: #{basic_block_forward_nchw.3} parent=35 // pred_check_branch
        %322 = sbr.rel (%p320) target = $region44
      $region43: #{basic_block_forward_nchw.3} parent=35 // pred_region
        %p323 = scmp.lt.s32.totalorder %s17, 1
        %s324 = scalar_select %p323, %s17, 1
        %s325 = smul.addr %s324, 14
        %s326 = smul.addr %s325, 4
        %s327 = scalar_lea.vmem %s1, %s326
      $region44: #{basic_block_forward_nchw.3} parent=35 // pred_fallthru
        _
      // Predicated region
      $region45: #{basic_block_forward_nchw.3} parent=35 // pred_check
        %p328 = pneg %p194
      $region46: #{basic_block_forward_nchw.3} parent=35 // pred_check_branch
        %330 = sbr.rel (%p328) target = $region48
      $region47: #{basic_block_forward_nchw.3} parent=35 // pred_region
        %p331 = scmp.lt.s32.totalorder %s17, 1
        %s332 = scalar_select %p331, %s17, 1
        %s333 = smul.addr %s332, 36
        %s334 = smul.addr %s333, 8
        %s335 = scalar_lea.vmem %s7, %s334
      $region48: #{basic_block_forward_nchw.3} parent=35 // pred_fallthru
        _
      // Predicated region
      $region49: #{basic_block_forward_nchw.3} parent=35 // pred_check
        %p336 = pneg %p220
      $region50: #{basic_block_forward_nchw.3} parent=35 // pred_check_branch
        %338 = sbr.rel (%p336) target = $region52
      $region51: #{basic_block_forward_nchw.3} parent=35 // pred_region
        %p339 = scmp.lt.s32.totalorder %s17, 1
        %s340 = scalar_select %p339, %s17, 1
        %s341 = smul.addr %s340, 10
        %s342 = smul.addr %s341, 8
        %s343 = scalar_lea.vmem %s8, %s342
      $region52: #{basic_block_forward_nchw.3} parent=35 // pred_fallthru
        _
    $region36: #{basic_block_forward_nchw.3} parent=5 // pred_fallthru
      _
    %p344 = scmp.le.s32.totalorder 1, %s17
    %p345 = scmp.lt.s32.totalorder %s17, 3
    %p346 = pnand %p344, %p345
    %p347 = pneg %p346
    // Predicated region
    $region53: #{basic_block_forward_nchw.3} parent=5 // pred_check
      _
    $region54: #{basic_block_forward_nchw.3} parent=5 // pred_check_branch
      %349 = sbr.rel (%p346) target = $region56
    $region55: #{basic_block_forward_nchw.3} parent=5 // pred_region
      %s350 = ssub.s32 %s17, 1
      %p351 = scmp.lt.s32.totalorder %s22, 1
      %s352 = scalar_select %p351, %s22, 1
      %s353 = smul.addr %s352, 43
      %s354 = smul.addr %s353, 4
      %s355 = scalar_lea.vmem %s0, %s354
      %p356 = pneg %p43
      %p357 = pneg %p40
      %p358 = scmp.lt.s32.totalorder %s22, 1
      %s359 = scalar_select %p358, %s22, 1
      %s360 = smul.addr %s359, 14
      %s361 = smul.addr %s360, 4
      %s362 = scalar_lea.vmem %s1, %s361
      %p363 = pneg %p69
      %p364 = pneg %p66
      %p365 = pneg %p90
      %p366 = pneg %p87
      %p367 = pneg %p111
      %p368 = pneg %p108
      %p369 = pneg %p132
      %p370 = pneg %p129
      %p371 = pneg %p153
      %p372 = pneg %p150
      %p373 = pneg %p174
      %p374 = pneg %p171
      %p375 = scmp.lt.s32.totalorder %s22, 1
      %s376 = scalar_select %p375, %s22, 1
      %s377 = smul.addr %s376, 36
      %s378 = smul.addr %s377, 8
      %s379 = scalar_lea.vmem %s7, %s378
      %p380 = pneg %p200
      %p381 = pneg %p197
      %p382 = scmp.lt.s32.totalorder %s22, 1
      %s383 = scalar_select %p382, %s22, 1
      %s384 = smul.addr %s383, 10
      %s385 = smul.addr %s384, 8
      %s386 = scalar_lea.vmem %s8, %s385
      %p387 = pneg %p226
      %p388 = pneg %p223
      %p389 = pneg %p252
      %p390 = pneg %p249
      %p391 = scmp.lt.s32.totalorder %s22, 1
      %s392 = scalar_select %p391, %s22, 1
      %s393 = smul.addr %s392, 36
      %s394 = smul.addr %s393, 8
      %s395 = scalar_lea.vmem %s9, %s394
      %p396 = pneg %p278
      %p397 = pneg %p275
      %p398 = scmp.lt.s32.totalorder %s22, 1
      %s399 = scalar_select %p398, %s22, 1
      %s400 = smul.addr %s399, 10
      %s401 = smul.addr %s400, 8
      %s402 = scalar_lea.vmem %s10, %s401
      %p403 = scmp.lt.s32.totalorder %s22, 1
      %s404 = scalar_select %p403, %s22, 1
      %s405 = smul.addr %s404, 43
      %s406 = smul.addr %s405, 4
      %s407 = scalar_lea.vmem %s0, %s406
      %p408 = scmp.lt.s32.totalorder %s22, 1
      %s409 = scalar_select %p408, %s22, 1
      %s410 = smul.addr %s409, 14
      %s411 = smul.addr %s410, 4
      %s412 = scalar_lea.vmem %s1, %s411
      %p413 = scmp.lt.s32.totalorder %s22, 1
      %s414 = scalar_select %p413, %s22, 1
      %s415 = smul.addr %s414, 36
      %s416 = smul.addr %s415, 8
      %s417 = scalar_lea.vmem %s7, %s416
      %p418 = scmp.lt.s32.totalorder %s22, 1
      %s419 = scalar_select %p418, %s22, 1
      %s420 = smul.addr %s419, 10
      %s421 = smul.addr %s420, 8
      %s422 = scalar_lea.vmem %s8, %s421
      %p423 = scmp.lt.s32.totalorder %s22, 1
      %s424 = scalar_select %p423, %s22, 1
      %s425 = smul.addr %s424, 36
      %s426 = smul.addr %s425, 8
      %s427 = scalar_lea.vmem %s9, %s426
      %p428 = scmp.lt.s32.totalorder %s22, 1
      %s429 = scalar_select %p428, %s22, 1
      %s430 = smul.addr %s429, 10
      %s431 = smul.addr %s430, 8
      %s432 = scalar_lea.vmem %s10, %s431
      %v434 = vld [vmem:[%s407] sm:$0xf]
      %v435 = vld [vmem:[%s407 + $0x4] sm:$0xf]
      %v436 = vld [vmem:[%s407 + $0x8] sm:$0xf]
      %v437 = vld [vmem:[%s407 + $0xc] sm:$0xf]
      %v438 = vld [vmem:[%s407 + $0x10] sm:$0xf]
      %v439 = vld [vmem:[%s407 + $0x14] sm:$0xf]
      %v440 = vld [vmem:[%s407 + $0x18] sm:$0xf]
      %v441 = vld [vmem:[%s407 + $0x1c] sm:$0xf]
      %v442 = vld [vmem:[%s407 + $0x20] sm:$0xf]
      %v443 = vld [vmem:[%s407 + $0x24] sm:$0xf]
      %v444 = vld [vmem:[%s407 + $0x28] sm:$0xf]
      %v445 = vld [vmem:[%s407 + $0x2c] sm:$0xf]
      %v446 = vld [vmem:[%s407 + $0x30] sm:$0xf]
      %v447 = vld [vmem:[%s407 + $0x34] sm:$0xf]
      %v448 = vld [vmem:[%s407 + $0x38] sm:$0xf]
      %v449 = vld [vmem:[%s407 + $0x3c] sm:$0xf]
      %v450 = vld [vmem:[%s407 + $0x40] sm:$0xf]
      %v451 = vld [vmem:[%s407 + $0x44] sm:$0xf]
      %v452 = vld [vmem:[%s407 + $0x48] sm:$0xf]
      %v453 = vld [vmem:[%s407 + $0x4c] sm:$0xf]
      %v454 = vld [vmem:[%s407 + $0x50] sm:$0xf]
      %v455 = vld [vmem:[%s407 + $0x54] sm:$0xf]
      %v456 = vld [vmem:[%s407 + $0x58] sm:$0xf]
      %v457 = vld [vmem:[%s407 + $0x5c] sm:$0xf]
      %v458 = vld [vmem:[%s407 + $0x60] sm:$0xf]
      %v459 = vld [vmem:[%s407 + $0x64] sm:$0xf]
      %v460 = vld [vmem:[%s407 + $0x68] sm:$0xf]
      %v461 = vld [vmem:[%s407 + $0x6c] sm:$0xf]
      %v462 = vld [vmem:[%s407 + $0x70] sm:$0xf]
      %v463 = vld [vmem:[%s407 + $0x74] sm:$0xf]
      %v464 = vld [vmem:[%s407 + $0x78] sm:$0xf]
      %v465 = vld [vmem:[%s407 + $0x7c] sm:$0xf]
      %v466 = vld [vmem:[%s407 + $0x80] sm:$0xf]
      %v467 = vld [vmem:[%s407 + $0x84] sm:$0xf]
      %v468 = vld [vmem:[%s407 + $0x88] sm:$0xf]
      %v469 = vld [vmem:[%s407 + $0x8c] sm:$0xf]
      %v470 = vld [vmem:[%s2] sm:$0xf]
      %v471 = vld [vmem:[%s2 + $0x4] sm:$0xf]
      %v472 = vld [vmem:[%s2 + $0x8] sm:$0xf]
      %v473 = vld [vmem:[%s412] sm:$0xf]
      %v474 = vld [vmem:[%s412 + $0x4] sm:$0xf]
      %v475 = vld [vmem:[%s412 + $0x8] sm:$0xf]
      %v476 = vld [vmem:[%s412 + $0xc] sm:$0xf]
      %v477 = vld [vmem:[%s412 + $0x10] sm:$0xf]
      %v478 = vld [vmem:[%s412 + $0x14] sm:$0xf]
      %v479 = vld [vmem:[%s412 + $0x18] sm:$0xf]
      %v480 = vld [vmem:[%s412 + $0x1c] sm:$0xf]
      %v481 = vld [vmem:[%s412 + $0x20] sm:$0xf]
      %v482 = vld [vmem:[%s412 + $0x24] sm:$0xf]
      %v483 = vld [vmem:[%s3] sm:$0xf]
      %v484 = vld [vmem:[%s3 + $0x4] sm:$0xf]
      %v485 = vld [vmem:[%s3 + $0x8] sm:$0xf]
      %v486 = vld [vmem:[%s3 + $0xc] sm:$0xf]
      %v487 = vld [vmem:[%s407 + $0x90] sm:$0x1]
      %s488 = scalar_lea.vmem %s2, 12
      %v489 = vld [vmem:[%s488] sm:$0xf]
      %v490 = vld [vmem:[%s488 + $0x4] sm:$0xf]
      %v491 = vld [vmem:[%s488 + $0x8] sm:$0xf]
      %v529 = vunpack.c.l.b16 %v434
      %v530 = vunpack.c.l.b16 %v435
      %v531 = vunpack.c.l.b16 %v436
      %v532 = vunpack.c.l.b16 %v437
      %v533 = vunpack.c.l.b16 %v438
      %v534 = vunpack.c.l.b16 %v439
      %v535 = vunpack.c.l.b16 %v440
      %v536 = vunpack.c.l.b16 %v441
      %v537 = vunpack.c.l.b16 %v442
      %v538 = vunpack.c.l.b16 %v443
      %v539 = vunpack.c.l.b16 %v444
      %v540 = vunpack.c.l.b16 %v445
      %v541 = vunpack.c.l.b16 %v446
      %v542 = vunpack.c.l.b16 %v447
      %v543 = vunpack.c.l.b16 %v448
      %v544 = vunpack.c.l.b16 %v449
      %v545 = vunpack.c.l.b16 %v450
      %v546 = vunpack.c.l.b16 %v451
      %v547 = vunpack.c.l.b16 %v452
      %v548 = vunpack.c.l.b16 %v453
      %v549 = vunpack.c.l.b16 %v454
      %v550 = vunpack.c.l.b16 %v455
      %v551 = vunpack.c.l.b16 %v456
      %v552 = vunpack.c.l.b16 %v457
      %v553 = vunpack.c.l.b16 %v458
      %v554 = vunpack.c.l.b16 %v459
      %v555 = vunpack.c.l.b16 %v460
      %v556 = vunpack.c.l.b16 %v461
      %v557 = vunpack.c.l.b16 %v462
      %v558 = vunpack.c.l.b16 %v463
      %v559 = vunpack.c.l.b16 %v464
      %v560 = vunpack.c.l.b16 %v465
      %v561 = vunpack.c.l.b16 %v466
      %v562 = vunpack.c.l.b16 %v467
      %v563 = vunpack.c.l.b16 %v468
      %v564 = vunpack.c.l.b16 %v469
      %v565 = vunpack.c.l.b16 %v487
      %v566 = vpack.c.b16 %v530, %v529
      %v567 = vpack.c.b16 %v532, %v531
      %v568 = vpack.c.b16 %v534, %v533
      %v569 = vpack.c.b16 %v536, %v535
      %v570 = vpack.c.b16 %v538, %v537
      %v571 = vpack.c.b16 %v540, %v539
      %v572 = vpack.c.b16 %v542, %v541
      %v573 = vpack.c.b16 %v544, %v543
      %v574 = vpack.c.b16 %v546, %v545
      %v575 = vpack.c.b16 %v548, %v547
      %v576 = vpack.c.b16 %v550, %v549
      %v577 = vpack.c.b16 %v552, %v551
      %v578 = vpack.c.b16 %v554, %v553
      %v579 = vpack.c.b16 %v556, %v555
      %v580 = vpack.c.b16 %v558, %v557
      %v581 = vpack.c.b16 %v560, %v559
      %v582 = vpack.c.b16 %v562, %v561
      %v583 = vpack.c.b16 %v564, %v563
      %v584 = vpack.c.b16 %v565, %v565
      %vm585 = vsmask.f32 7424
      %v587 = vshrl.u32 %v566, 16
      %v589 = vshll.u32 %v566, 16
      %v591 = vrot.slane %v589, 1
      %v592 = vor.u32 %v587, %v591
      %v594 = vshll.u32 %v567, 16
      %v596 = vrot.slane %v594, 1
      %v597 = vsel %vm585, %v592, %v596
      %v598 = vshrl.u32 %v567, 16
      %v600 = vor.u32 %v598, %v596
      %v602 = vshll.u32 %v568, 16
      %v604 = vrot.slane %v602, 1
      %v605 = vsel %vm585, %v600, %v604
      %v606 = vshrl.u32 %v568, 16
      %v608 = vor.u32 %v606, %v604
      %v610 = vshll.u32 %v569, 16
      %v612 = vrot.slane %v610, 1
      %v613 = vsel %vm585, %v608, %v612
      %v614 = vshrl.u32 %v569, 16
      %v616 = vor.u32 %v614, %v612
      %v618 = vshll.u32 %v570, 16
      %v620 = vrot.slane %v618, 1
      %v621 = vsel %vm585, %v616, %v620
      %v622 = vshrl.u32 %v570, 16
      %v624 = vor.u32 %v622, %v620
      %v626 = vshll.u32 %v571, 16
      %v628 = vrot.slane %v626, 1
      %v629 = vsel %vm585, %v624, %v628
      %v630 = vshrl.u32 %v571, 16
      %v632 = vor.u32 %v630, %v628
      %v634 = vshll.u32 %v572, 16
      %v636 = vrot.slane %v634, 1
      %v637 = vsel %vm585, %v632, %v636
      %v638 = vshrl.u32 %v572, 16
      %v640 = vor.u32 %v638, %v636
      %v642 = vshll.u32 %v573, 16
      %v644 = vrot.slane %v642, 1
      %v645 = vsel %vm585, %v640, %v644
      %v646 = vshrl.u32 %v573, 16
      %v648 = vor.u32 %v646, %v644
      %v650 = vshll.u32 %v574, 16
      %v652 = vrot.slane %v650, 1
      %v653 = vsel %vm585, %v648, %v652
      %v654 = vshrl.u32 %v574, 16
      %v656 = vor.u32 %v654, %v652
      %v658 = vshll.u32 %v575, 16
      %v660 = vrot.slane %v658, 1
      %v661 = vsel %vm585, %v656, %v660
      %v662 = vshrl.u32 %v575, 16
      %v664 = vor.u32 %v662, %v660
      %v666 = vshll.u32 %v576, 16
      %v668 = vrot.slane %v666, 1
      %v669 = vsel %vm585, %v664, %v668
      %v670 = vshrl.u32 %v576, 16
      %v672 = vor.u32 %v670, %v668
      %v674 = vshll.u32 %v577, 16
      %v676 = vrot.slane %v674, 1
      %v677 = vsel %vm585, %v672, %v676
      %v678 = vshrl.u32 %v577, 16
      %v680 = vor.u32 %v678, %v676
      %v682 = vshll.u32 %v578, 16
      %v684 = vrot.slane %v682, 1
      %v685 = vsel %vm585, %v680, %v684
      %v686 = vshrl.u32 %v578, 16
      %v688 = vor.u32 %v686, %v684
      %v690 = vshll.u32 %v579, 16
      %v692 = vrot.slane %v690, 1
      %v693 = vsel %vm585, %v688, %v692
      %v694 = vshrl.u32 %v579, 16
      %v696 = vor.u32 %v694, %v692
      %v698 = vshll.u32 %v580, 16
      %v700 = vrot.slane %v698, 1
      %v701 = vsel %vm585, %v696, %v700
      %v702 = vshrl.u32 %v580, 16
      %v704 = vor.u32 %v702, %v700
      %v706 = vshll.u32 %v581, 16
      %v708 = vrot.slane %v706, 1
      %v709 = vsel %vm585, %v704, %v708
      %v710 = vshrl.u32 %v581, 16
      %v712 = vor.u32 %v710, %v708
      %v714 = vshll.u32 %v582, 16
      %v716 = vrot.slane %v714, 1
      %v717 = vsel %vm585, %v712, %v716
      %v718 = vshrl.u32 %v582, 16
      %v720 = vor.u32 %v718, %v716
      %v722 = vshll.u32 %v583, 16
      %v724 = vrot.slane %v722, 1
      %v725 = vsel %vm585, %v720, %v724
      %v726 = vshrl.u32 %v583, 16
      %v728 = vor.u32 %v726, %v724
      %v730 = vshll.u32 %v584, 16
      %v732 = vrot.slane %v730, 1
      %v733 = vsel %vm585, %v728, %v732
      %v737 = vunpack.c.l.b16 %v489
      %v738 = vunpack.c.l.b16 %v490
      %v739 = vunpack.c.l.b16 %v491
      %v740 = vpack.c.b16 %v738, %v737
      %v741 = vpack.c.b16 %v739, %v739
      %vm743 = vcmask 195584
      %v745 = vsel %vm743, %v597, 0
      %v748 = vsel %vm743, %v605, 0
      %v751 = vsel %vm743, %v613, 0
      %v754 = vsel %vm743, %v621, 0
      %v757 = vsel %vm743, %v629, 0
      %v760 = vsel %vm743, %v637, 0
      %v763 = vsel %vm743, %v645, 0
      %v766 = vsel %vm743, %v653, 0
      %v769 = vsel %vm743, %v661, 0
      %v772 = vsel %vm743, %v669, 0
      %v775 = vsel %vm743, %v677, 0
      %v778 = vsel %vm743, %v685, 0
      %v781 = vsel %vm743, %v693, 0
      %v784 = vsel %vm743, %v701, 0
      %v787 = vsel %vm743, %v709, 0
      %v790 = vsel %vm743, %v717, 0
      %v793 = vsel %vm743, %v725, 0
      %v796 = vsel %vm743, %v733, 0
      %vm798 = vcmask 1043456
      %v800 = vsel %vm798, %v741, 0
      %802 = vmatprep.subr.bf16.mxu0 0
      %803 = vmatpush1.bf16.msra.mxu0 0
      %804 = vmatprep.subr.bf16.mxu0 0
      %805 = vmatpush1.bf16.msra.mxu0 0
      %806 = vmatprep.subr.bf16.mxu0 0
      %807 = vmatpush1.bf16.msra.mxu0 0
      %808 = vmatprep.subr.bf16.mxu0 0
      %809 = vmatpush1.bf16.msra.mxu0 0
      %810 = vmatprep.subr.bf16.mxu0 0
      %811 = vmatpush1.bf16.msra.mxu0 0
      %812 = vmatprep.subr.bf16.mxu0 0
      %813 = vmatpush1.bf16.msra.mxu0 0
      %814 = vmatprep.subr.bf16.mxu0 0
      %815 = vmatpush1.bf16.msra.mxu0 %v800
      %816 = vmatprep.subr.bf16.mxu0 0
      %817 = vmatpush1.bf16.msra.mxu0 %v740
      %818 = vmatprep.subr.bf16.mxu0 0
      %819 = vmatpush2.bf16.msra.mxu0 0
      %820 = vmatprep.subr.bf16.mxu0 0
      %821 = vmatpush2.bf16.msra.mxu0 0
      %822 = vmatprep.subr.bf16.mxu0 0
      %823 = vmatpush2.bf16.msra.mxu0 0
      %824 = vmatprep.subr.bf16.mxu0 0
      %825 = vmatpush2.bf16.msra.mxu0 0
      %826 = vmatprep.subr.bf16.mxu0 0
      %827 = vmatpush2.bf16.msra.mxu0 0
      %828 = vmatprep.subr.bf16.mxu0 0
      %829 = vmatpush2.bf16.msra.mxu0 0
      %830 = vmatprep.subr.bf16.mxu0 0
      %831 = vmatpush2.bf16.msra.mxu0 0
      %832 = vmatprep.subr.bf16.mxu0 0
      %833 = vmatpush2.bf16.msra.mxu0 0
      %834 = vmatprep.mubr.bf16.mxu0 0
      %835 = vmatmul.mubr.bf16.gmra.mxu0 %v745
      %v836 = vpop.f32.mrf.mxu0
      %v837 = vadd.f32 0.0, %v836
      %v838 = vpop.f32.mrf.mxu0
      %v839 = vpop.f32.mrf.mxu0
      %v840 = vadd.f32 0.0, %v839
      %v841 = vpop.f32.mrf.mxu0
      %842 = vmatprep.mubr.bf16.mxu0 0
      %843 = vmatmul.mubr.bf16.gmra.mxu0 %v748
      %v844 = vpop.f32.mrf.mxu0
      %v845 = vadd.f32 0.0, %v844
      %v846 = vpop.f32.mrf.mxu0
      %v847 = vpop.f32.mrf.mxu0
      %v848 = vadd.f32 0.0, %v847
      %v849 = vpop.f32.mrf.mxu0
      %850 = vmatprep.mubr.bf16.mxu0 0
      %851 = vmatmul.mubr.bf16.gmra.mxu0 %v751
      %v852 = vpop.f32.mrf.mxu0
      %v853 = vadd.f32 0.0, %v852
      %v854 = vpop.f32.mrf.mxu0
      %v855 = vpop.f32.mrf.mxu0
      %v856 = vadd.f32 0.0, %v855
      %v857 = vpop.f32.mrf.mxu0
      %858 = vmatprep.mubr.bf16.mxu0 0
      %859 = vmatmul.mubr.bf16.gmra.mxu0 %v754
      %v860 = vpop.f32.mrf.mxu0
      %v861 = vadd.f32 0.0, %v860
      %v862 = vpop.f32.mrf.mxu0
      %v863 = vpop.f32.mrf.mxu0
      %v864 = vadd.f32 0.0, %v863
      %v865 = vpop.f32.mrf.mxu0
      %866 = vmatprep.mubr.bf16.mxu0 0
      %867 = vmatmul.mubr.bf16.gmra.mxu0 %v757
      %v868 = vpop.f32.mrf.mxu0
      %v869 = vadd.f32 0.0, %v868
      %v870 = vpop.f32.mrf.mxu0
      %v871 = vpop.f32.mrf.mxu0
      %v872 = vadd.f32 0.0, %v871
      %v873 = vpop.f32.mrf.mxu0
      %874 = vmatprep.mubr.bf16.mxu0 0
      %875 = vmatmul.mubr.bf16.gmra.mxu0 %v760
      %v876 = vpop.f32.mrf.mxu0
      %v877 = vadd.f32 0.0, %v876
      %v878 = vpop.f32.mrf.mxu0
      %v879 = vpop.f32.mrf.mxu0
      %v880 = vadd.f32 0.0, %v879
      %v881 = vpop.f32.mrf.mxu0
      %882 = vmatprep.mubr.bf16.mxu0 0
      %883 = vmatmul.mubr.bf16.gmra.mxu0 %v763
      %v884 = vpop.f32.mrf.mxu0
      %v885 = vadd.f32 0.0, %v884
      %v886 = vpop.f32.mrf.mxu0
      %v887 = vpop.f32.mrf.mxu0
      %v888 = vadd.f32 0.0, %v887
      %v889 = vpop.f32.mrf.mxu0
      %890 = vmatprep.mubr.bf16.mxu0 0
      %891 = vmatmul.mubr.bf16.gmra.mxu0 %v766
      %v892 = vpop.f32.mrf.mxu0
      %v893 = vadd.f32 0.0, %v892
      %v894 = vpop.f32.mrf.mxu0
      %v895 = vpop.f32.mrf.mxu0
      %v896 = vadd.f32 0.0, %v895
      %v897 = vpop.f32.mrf.mxu0
      %898 = vmatprep.mubr.bf16.mxu0 0
      %899 = vmatmul.mubr.bf16.gmra.mxu0 %v769
      %v900 = vpop.f32.mrf.mxu0
      %v901 = vadd.f32 0.0, %v900
      %v902 = vpop.f32.mrf.mxu0
      %v903 = vpop.f32.mrf.mxu0
      %v904 = vadd.f32 0.0, %v903
      %v905 = vpop.f32.mrf.mxu0
      %906 = vmatprep.mubr.bf16.mxu0 0
      %907 = vmatmul.mubr.bf16.gmra.mxu0 %v772
      %v908 = vpop.f32.mrf.mxu0
      %v909 = vadd.f32 0.0, %v908
      %v910 = vpop.f32.mrf.mxu0
      %v911 = vpop.f32.mrf.mxu0
      %v912 = vadd.f32 0.0, %v911
      %v913 = vpop.f32.mrf.mxu0
      %914 = vmatprep.mubr.bf16.mxu0 0
      %915 = vmatmul.mubr.bf16.gmra.mxu0 %v775
      %v916 = vpop.f32.mrf.mxu0
      %v917 = vadd.f32 0.0, %v916
      %v918 = vpop.f32.mrf.mxu0
      %v919 = vpop.f32.mrf.mxu0
      %v920 = vadd.f32 0.0, %v919
      %v921 = vpop.f32.mrf.mxu0
      %922 = vmatprep.mubr.bf16.mxu0 0
      %923 = vmatmul.mubr.bf16.gmra.mxu0 %v778
      %v924 = vpop.f32.mrf.mxu0
      %v925 = vadd.f32 0.0, %v924
      %v926 = vpop.f32.mrf.mxu0
      %v927 = vpop.f32.mrf.mxu0
      %v928 = vadd.f32 0.0, %v927
      %v929 = vpop.f32.mrf.mxu0
      %930 = vmatprep.mubr.bf16.mxu0 0
      %931 = vmatmul.mubr.bf16.gmra.mxu0 %v781
      %v932 = vpop.f32.mrf.mxu0
      %v933 = vadd.f32 0.0, %v932
      %v934 = vpop.f32.mrf.mxu0
      %v935 = vpop.f32.mrf.mxu0
      %v936 = vadd.f32 0.0, %v935
      %v937 = vpop.f32.mrf.mxu0
      %938 = vmatprep.mubr.bf16.mxu0 0
      %939 = vmatmul.mubr.bf16.gmra.mxu0 %v784
      %v940 = vpop.f32.mrf.mxu0
      %v941 = vadd.f32 0.0, %v940
      %v942 = vpop.f32.mrf.mxu0
      %v943 = vpop.f32.mrf.mxu0
      %v944 = vadd.f32 0.0, %v943
      %v945 = vpop.f32.mrf.mxu0
      %946 = vmatprep.mubr.bf16.mxu0 0
      %947 = vmatmul.mubr.bf16.gmra.mxu0 %v787
      %v948 = vpop.f32.mrf.mxu0
      %v949 = vadd.f32 0.0, %v948
      %v950 = vpop.f32.mrf.mxu0
      %v951 = vpop.f32.mrf.mxu0
      %v952 = vadd.f32 0.0, %v951
      %v953 = vpop.f32.mrf.mxu0
      %954 = vmatprep.mubr.bf16.mxu0 0
      %955 = vmatmul.mubr.bf16.gmra.mxu0 %v790
      %v956 = vpop.f32.mrf.mxu0
      %v957 = vadd.f32 0.0, %v956
      %v958 = vpop.f32.mrf.mxu0
      %v959 = vpop.f32.mrf.mxu0
      %v960 = vadd.f32 0.0, %v959
      %v961 = vpop.f32.mrf.mxu0
      %962 = vmatprep.mubr.bf16.mxu0 0
      %963 = vmatmul.mubr.bf16.gmra.mxu0 %v793
      %v964 = vpop.f32.mrf.mxu0
      %v965 = vadd.f32 0.0, %v964
      %v966 = vpop.f32.mrf.mxu0
      %v967 = vpop.f32.mrf.mxu0
      %v968 = vadd.f32 0.0, %v967
      %v969 = vpop.f32.mrf.mxu0
      %970 = vmatprep.mubr.bf16.mxu0 0
      %971 = vmatmul.mubr.bf16.gmra.mxu0 %v796
      %v972 = vpop.f32.mrf.mxu0
      %v973 = vadd.f32 0.0, %v972
      %v974 = vpop.f32.mrf.mxu0
      %v975 = vpop.f32.mrf.mxu0
      %v976 = vadd.f32 0.0, %v975
      %v977 = vpop.f32.mrf.mxu0
      %978 = vdwg.mxu0
      %v982 = vunpack.c.l.b16 %v470
      %v983 = vunpack.c.l.b16 %v471
      %v984 = vunpack.c.l.b16 %v472
      %v985 = vpack.c.b16 %v983, %v982
      %v986 = vpack.c.b16 %v984, %v984
      %v988 = vsel %vm743, %v566, 0
      %v990 = vsel %vm743, %v567, 0
      %v992 = vsel %vm743, %v568, 0
      %v994 = vsel %vm743, %v569, 0
      %v996 = vsel %vm743, %v570, 0
      %v998 = vsel %vm743, %v571, 0
      %v1000 = vsel %vm743, %v572, 0
      %v1002 = vsel %vm743, %v573, 0
      %v1004 = vsel %vm743, %v574, 0
      %v1006 = vsel %vm743, %v575, 0
      %v1008 = vsel %vm743, %v576, 0
      %v1010 = vsel %vm743, %v577, 0
      %v1012 = vsel %vm743, %v578, 0
      %v1014 = vsel %vm743, %v579, 0
      %v1016 = vsel %vm743, %v580, 0
      %v1018 = vsel %vm743, %v581, 0
      %v1020 = vsel %vm743, %v582, 0
      %v1022 = vsel %vm743, %v583, 0
      %v1025 = vsel %vm798, %v986, 0
      %1027 = vmatprep.subr.bf16.mxu0 0
      %1028 = vmatpush1.bf16.msra.mxu0 0
      %1029 = vmatprep.subr.bf16.mxu0 0
      %1030 = vmatpush1.bf16.msra.mxu0 0
      %1031 = vmatprep.subr.bf16.mxu0 0
      %1032 = vmatpush1.bf16.msra.mxu0 0
      %1033 = vmatprep.subr.bf16.mxu0 0
      %1034 = vmatpush1.bf16.msra.mxu0 0
      %1035 = vmatprep.subr.bf16.mxu0 0
      %1036 = vmatpush1.bf16.msra.mxu0 0
      %1037 = vmatprep.subr.bf16.mxu0 0
      %1038 = vmatpush1.bf16.msra.mxu0 0
      %1039 = vmatprep.subr.bf16.mxu0 0
      %1040 = vmatpush1.bf16.msra.mxu0 %v1025
      %1041 = vmatprep.subr.bf16.mxu0 0
      %1042 = vmatpush1.bf16.msra.mxu0 %v985
      %1043 = vmatprep.subr.bf16.mxu0 0
      %1044 = vmatpush2.bf16.msra.mxu0 0
      %1045 = vmatprep.subr.bf16.mxu0 0
      %1046 = vmatpush2.bf16.msra.mxu0 0
      %1047 = vmatprep.subr.bf16.mxu0 0
      %1048 = vmatpush2.bf16.msra.mxu0 0
      %1049 = vmatprep.subr.bf16.mxu0 0
      %1050 = vmatpush2.bf16.msra.mxu0 0
      %1051 = vmatprep.subr.bf16.mxu0 0
      %1052 = vmatpush2.bf16.msra.mxu0 0
      %1053 = vmatprep.subr.bf16.mxu0 0
      %1054 = vmatpush2.bf16.msra.mxu0 0
      %1055 = vmatprep.subr.bf16.mxu0 0
      %1056 = vmatpush2.bf16.msra.mxu0 0
      %1057 = vmatprep.subr.bf16.mxu0 0
      %1058 = vmatpush2.bf16.msra.mxu0 0
      %1059 = vmatprep.mubr.bf16.mxu0 0
      %1060 = vmatmul.mubr.bf16.gmra.mxu0 %v988
      %v1061 = vpop.f32.mrf.mxu0
      %v1062 = vadd.f32 %v837, %v1061
      %v1063 = vpop.f32.mrf.mxu0
      %v1064 = vpop.f32.mrf.mxu0
      %v1065 = vadd.f32 %v840, %v1064
      %v1066 = vpop.f32.mrf.mxu0
      %1067 = vmatprep.mubr.bf16.mxu0 0
      %1068 = vmatmul.mubr.bf16.gmra.mxu0 %v990
      %v1069 = vpop.f32.mrf.mxu0
      %v1070 = vadd.f32 %v845, %v1069
      %v1071 = vpop.f32.mrf.mxu0
      %v1072 = vpop.f32.mrf.mxu0
      %v1073 = vadd.f32 %v848, %v1072
      %v1074 = vpop.f32.mrf.mxu0
      %1075 = vmatprep.mubr.bf16.mxu0 0
      %1076 = vmatmul.mubr.bf16.gmra.mxu0 %v992
      %v1077 = vpop.f32.mrf.mxu0
      %v1078 = vadd.f32 %v853, %v1077
      %v1079 = vpop.f32.mrf.mxu0
      %v1080 = vpop.f32.mrf.mxu0
      %v1081 = vadd.f32 %v856, %v1080
      %v1082 = vpop.f32.mrf.mxu0
      %1083 = vmatprep.mubr.bf16.mxu0 0
      %1084 = vmatmul.mubr.bf16.gmra.mxu0 %v994
      %v1085 = vpop.f32.mrf.mxu0
      %v1086 = vadd.f32 %v861, %v1085
      %v1087 = vpop.f32.mrf.mxu0
      %v1088 = vpop.f32.mrf.mxu0
      %v1089 = vadd.f32 %v864, %v1088
      %v1090 = vpop.f32.mrf.mxu0
      %1091 = vmatprep.mubr.bf16.mxu0 0
      %1092 = vmatmul.mubr.bf16.gmra.mxu0 %v996
      %v1093 = vpop.f32.mrf.mxu0
      %v1094 = vadd.f32 %v869, %v1093
      %v1095 = vpop.f32.mrf.mxu0
      %v1096 = vpop.f32.mrf.mxu0
      %v1097 = vadd.f32 %v872, %v1096
      %v1098 = vpop.f32.mrf.mxu0
      %1099 = vmatprep.mubr.bf16.mxu0 0
      %1100 = vmatmul.mubr.bf16.gmra.mxu0 %v998
      %v1101 = vpop.f32.mrf.mxu0
      %v1102 = vadd.f32 %v877, %v1101
      %v1103 = vpop.f32.mrf.mxu0
      %v1104 = vpop.f32.mrf.mxu0
      %v1105 = vadd.f32 %v880, %v1104
      %v1106 = vpop.f32.mrf.mxu0
      %1107 = vmatprep.mubr.bf16.mxu0 0
      %1108 = vmatmul.mubr.bf16.gmra.mxu0 %v1000
      %v1109 = vpop.f32.mrf.mxu0
      %v1110 = vadd.f32 %v885, %v1109
      %v1111 = vpop.f32.mrf.mxu0
      %v1112 = vpop.f32.mrf.mxu0
      %v1113 = vadd.f32 %v888, %v1112
      %v1114 = vpop.f32.mrf.mxu0
      %1115 = vmatprep.mubr.bf16.mxu0 0
      %1116 = vmatmul.mubr.bf16.gmra.mxu0 %v1002
      %v1117 = vpop.f32.mrf.mxu0
      %v1118 = vadd.f32 %v893, %v1117
      %v1119 = vpop.f32.mrf.mxu0
      %v1120 = vpop.f32.mrf.mxu0
      %v1121 = vadd.f32 %v896, %v1120
      %v1122 = vpop.f32.mrf.mxu0
      %1123 = vmatprep.mubr.bf16.mxu0 0
      %1124 = vmatmul.mubr.bf16.gmra.mxu0 %v1004
      %v1125 = vpop.f32.mrf.mxu0
      %v1126 = vadd.f32 %v901, %v1125
      %v1127 = vpop.f32.mrf.mxu0
      %v1128 = vpop.f32.mrf.mxu0
      %v1129 = vadd.f32 %v904, %v1128
      %v1130 = vpop.f32.mrf.mxu0
      %1131 = vmatprep.mubr.bf16.mxu0 0
      %1132 = vmatmul.mubr.bf16.gmra.mxu0 %v1006
      %v1133 = vpop.f32.mrf.mxu0
      %v1134 = vadd.f32 %v909, %v1133
      %v1135 = vpop.f32.mrf.mxu0
      %v1136 = vpop.f32.mrf.mxu0
      %v1137 = vadd.f32 %v912, %v1136
      %v1138 = vpop.f32.mrf.mxu0
      %1139 = vmatprep.mubr.bf16.mxu0 0
      %1140 = vmatmul.mubr.bf16.gmra.mxu0 %v1008
      %v1141 = vpop.f32.mrf.mxu0
      %v1142 = vadd.f32 %v917, %v1141
      %v1143 = vpop.f32.mrf.mxu0
      %v1144 = vpop.f32.mrf.mxu0
      %v1145 = vadd.f32 %v920, %v1144
      %v1146 = vpop.f32.mrf.mxu0
      %1147 = vmatprep.mubr.bf16.mxu0 0
      %1148 = vmatmul.mubr.bf16.gmra.mxu0 %v1010
      %v1149 = vpop.f32.mrf.mxu0
      %v1150 = vadd.f32 %v925, %v1149
      %v1151 = vpop.f32.mrf.mxu0
      %v1152 = vpop.f32.mrf.mxu0
      %v1153 = vadd.f32 %v928, %v1152
      %v1154 = vpop.f32.mrf.mxu0
      %1155 = vmatprep.mubr.bf16.mxu0 0
      %1156 = vmatmul.mubr.bf16.gmra.mxu0 %v1012
      %v1157 = vpop.f32.mrf.mxu0
      %v1158 = vadd.f32 %v933, %v1157
      %v1159 = vpop.f32.mrf.mxu0
      %v1160 = vpop.f32.mrf.mxu0
      %v1161 = vadd.f32 %v936, %v1160
      %v1162 = vpop.f32.mrf.mxu0
      %1163 = vmatprep.mubr.bf16.mxu0 0
      %1164 = vmatmul.mubr.bf16.gmra.mxu0 %v1014
      %v1165 = vpop.f32.mrf.mxu0
      %v1166 = vadd.f32 %v941, %v1165
      %v1167 = vpop.f32.mrf.mxu0
      %v1168 = vpop.f32.mrf.mxu0
      %v1169 = vadd.f32 %v944, %v1168
      %v1170 = vpop.f32.mrf.mxu0
      %1171 = vmatprep.mubr.bf16.mxu0 0
      %1172 = vmatmul.mubr.bf16.gmra.mxu0 %v1016
      %v1173 = vpop.f32.mrf.mxu0
      %v1174 = vadd.f32 %v949, %v1173
      %v1175 = vpop.f32.mrf.mxu0
      %v1176 = vpop.f32.mrf.mxu0
      %v1177 = vadd.f32 %v952, %v1176
      %v1178 = vpop.f32.mrf.mxu0
      %1179 = vmatprep.mubr.bf16.mxu0 0
      %1180 = vmatmul.mubr.bf16.gmra.mxu0 %v1018
      %v1181 = vpop.f32.mrf.mxu0
      %v1182 = vadd.f32 %v957, %v1181
      %v1183 = vpop.f32.mrf.mxu0
      %v1184 = vpop.f32.mrf.mxu0
      %v1185 = vadd.f32 %v960, %v1184
      %v1186 = vpop.f32.mrf.mxu0
      %1187 = vmatprep.mubr.bf16.mxu0 0
      %1188 = vmatmul.mubr.bf16.gmra.mxu0 %v1020
      %v1189 = vpop.f32.mrf.mxu0
      %v1190 = vadd.f32 %v965, %v1189
      %v1191 = vpop.f32.mrf.mxu0
      %v1192 = vpop.f32.mrf.mxu0
      %v1193 = vadd.f32 %v968, %v1192
      %v1194 = vpop.f32.mrf.mxu0
      %1195 = vmatprep.mubr.bf16.mxu0 0
      %1196 = vmatmul.mubr.bf16.gmra.mxu0 %v1022
      %v1197 = vpop.f32.mrf.mxu0
      %v1198 = vadd.f32 %v973, %v1197
      %v1199 = vpop.f32.mrf.mxu0
      %v1200 = vpop.f32.mrf.mxu0
      %v1201 = vadd.f32 %v976, %v1200
      %v1202 = vpop.f32.mrf.mxu0
      %1203 = vdwg.mxu0
      %v1204 = vld [vmem:[%s412] sm:$0xf]
      %v1205 = vld [vmem:[%s412 + $0x4] sm:$0xf]
      %v1206 = vld [vmem:[%s412 + $0x8] sm:$0xf]
      %v1207 = vld [vmem:[%s412 + $0xc] sm:$0xf]
      %v1208 = vld [vmem:[%s412 + $0x10] sm:$0xf]
      %v1209 = vld [vmem:[%s412 + $0x14] sm:$0xf]
      %v1210 = vld [vmem:[%s412 + $0x18] sm:$0xf]
      %v1211 = vld [vmem:[%s412 + $0x1c] sm:$0xf]
      %v1212 = vld [vmem:[%s412 + $0x20] sm:$0xf]
      %v1213 = vld [vmem:[%s412 + $0x24] sm:$0xf]
      %v1214 = vld [vmem:[%s412 + $0x28] sm:$0x1]
      %s1215 = scalar_lea.vmem %s3, 16
      %v1216 = vld [vmem:[%s1215] sm:$0xf]
      %v1217 = vld [vmem:[%s1215 + $0x4] sm:$0xf]
      %v1218 = vld [vmem:[%s1215 + $0x8] sm:$0xf]
      %v1219 = vld [vmem:[%s1215 + $0xc] sm:$0xf]
      %v1231 = vunpack.c.l.b16 %v1204
      %v1232 = vunpack.c.l.b16 %v1205
      %v1233 = vunpack.c.l.b16 %v1206
      %v1234 = vunpack.c.l.b16 %v1207
      %v1235 = vunpack.c.l.b16 %v1208
      %v1236 = vunpack.c.l.b16 %v1209
      %v1237 = vunpack.c.l.b16 %v1210
      %v1238 = vunpack.c.l.b16 %v1211
      %v1239 = vunpack.c.l.b16 %v1212
      %v1240 = vunpack.c.l.b16 %v1213
      %v1241 = vunpack.c.l.b16 %v1214
      %v1242 = vpack.c.b16 %v1232, %v1231
      %v1243 = vpack.c.b16 %v1234, %v1233
      %v1244 = vpack.c.b16 %v1236, %v1235
      %v1245 = vpack.c.b16 %v1238, %v1237
      %v1246 = vpack.c.b16 %v1240, %v1239
      %v1247 = vpack.c.b16 %v1241, %v1241
      %v1249 = vshrl.u32 %v1242, 16
      %v1251 = vshll.u32 %v1242, 16
      %v1253 = vrot.slane %v1251, 1
      %v1254 = vor.u32 %v1249, %v1253
      %v1256 = vshll.u32 %v1243, 16
      %v1258 = vrot.slane %v1256, 1
      %v1259 = vsel %vm585, %v1254, %v1258
      %v1260 = vshrl.u32 %v1243, 16
      %v1262 = vor.u32 %v1260, %v1258
      %v1264 = vshll.u32 %v1244, 16
      %v1266 = vrot.slane %v1264, 1
      %v1267 = vsel %vm585, %v1262, %v1266
      %v1268 = vshrl.u32 %v1244, 16
      %v1270 = vor.u32 %v1268, %v1266
      %v1272 = vshll.u32 %v1245, 16
      %v1274 = vrot.slane %v1272, 1
      %v1275 = vsel %vm585, %v1270, %v1274
      %v1276 = vshrl.u32 %v1245, 16
      %v1278 = vor.u32 %v1276, %v1274
      %v1280 = vshll.u32 %v1246, 16
      %v1282 = vrot.slane %v1280, 1
      %v1283 = vsel %vm585, %v1278, %v1282
      %v1284 = vshrl.u32 %v1246, 16
      %v1286 = vor.u32 %v1284, %v1282
      %v1288 = vshll.u32 %v1247, 16
      %v1290 = vrot.slane %v1288, 1
      %v1291 = vsel %vm585, %v1286, %v1290
      %v1296 = vunpack.c.l.b16 %v1216
      %v1297 = vunpack.c.l.b16 %v1217
      %v1298 = vunpack.c.l.b16 %v1218
      %v1299 = vunpack.c.l.b16 %v1219
      %v1300 = vpack.c.b16 %v1297, %v1296
      %v1301 = vpack.c.b16 %v1299, %v1298
      %vm1304 = vcmask 261120
      %v1306 = vsel %vm1304, %v1259, 0
      %v1309 = vsel %vm1304, %v1267, 0
      %v1312 = vsel %vm1304, %v1275, 0
      %v1315 = vsel %vm1304, %v1283, 0
      %v1318 = vsel %vm1304, %v1291, 0
      %1320 = vmatprep.subr.bf16.mxu0 0
      %1321 = vmatpush1.bf16.msra.mxu0 0
      %1322 = vmatprep.subr.bf16.mxu0 0
      %1323 = vmatpush1.bf16.msra.mxu0 0
      %1324 = vmatprep.subr.bf16.mxu0 0
      %1325 = vmatpush1.bf16.msra.mxu0 0
      %1326 = vmatprep.subr.bf16.mxu0 0
      %1327 = vmatpush1.bf16.msra.mxu0 0
      %1328 = vmatprep.subr.bf16.mxu0 0
      %1329 = vmatpush1.bf16.msra.mxu0 0
      %1330 = vmatprep.subr.bf16.mxu0 0
      %1331 = vmatpush1.bf16.msra.mxu0 0
      %1332 = vmatprep.subr.bf16.mxu0 0
      %1333 = vmatpush1.bf16.msra.mxu0 %v1301
      %1334 = vmatprep.subr.bf16.mxu0 0
      %1335 = vmatpush1.bf16.msra.mxu0 %v1300
      %1336 = vmatprep.subr.bf16.mxu0 0
      %1337 = vmatpush2.bf16.msra.mxu0 0
      %1338 = vmatprep.subr.bf16.mxu0 0
      %1339 = vmatpush2.bf16.msra.mxu0 0
      %1340 = vmatprep.subr.bf16.mxu0 0
      %1341 = vmatpush2.bf16.msra.mxu0 0
      %1342 = vmatprep.subr.bf16.mxu0 0
      %1343 = vmatpush2.bf16.msra.mxu0 0
      %1344 = vmatprep.subr.bf16.mxu0 0
      %1345 = vmatpush2.bf16.msra.mxu0 0
      %1346 = vmatprep.subr.bf16.mxu0 0
      %1347 = vmatpush2.bf16.msra.mxu0 0
      %1348 = vmatprep.subr.bf16.mxu0 0
      %1349 = vmatpush2.bf16.msra.mxu0 0
      %1350 = vmatprep.subr.bf16.mxu0 0
      %1351 = vmatpush2.bf16.msra.mxu0 0
      %1352 = vmatprep.mubr.bf16.mxu0 0
      %1353 = vmatmul.mubr.bf16.gmra.mxu0 %v1306
      %v1354 = vpop.f32.mrf.mxu0
      %v1355 = vadd.f32 0.0, %v1354
      %v1356 = vpop.f32.mrf.mxu0
      %v1357 = vpop.f32.mrf.mxu0
      %v1358 = vadd.f32 0.0, %v1357
      %v1359 = vpop.f32.mrf.mxu0
      %1360 = vmatprep.mubr.bf16.mxu0 0
      %1361 = vmatmul.mubr.bf16.gmra.mxu0 %v1309
      %v1362 = vpop.f32.mrf.mxu0
      %v1363 = vadd.f32 0.0, %v1362
      %v1364 = vpop.f32.mrf.mxu0
      %v1365 = vpop.f32.mrf.mxu0
      %v1366 = vadd.f32 0.0, %v1365
      %v1367 = vpop.f32.mrf.mxu0
      %1368 = vmatprep.mubr.bf16.mxu0 0
      %1369 = vmatmul.mubr.bf16.gmra.mxu0 %v1312
      %v1370 = vpop.f32.mrf.mxu0
      %v1371 = vadd.f32 0.0, %v1370
      %v1372 = vpop.f32.mrf.mxu0
      %v1373 = vpop.f32.mrf.mxu0
      %v1374 = vadd.f32 0.0, %v1373
      %v1375 = vpop.f32.mrf.mxu0
      %1376 = vmatprep.mubr.bf16.mxu0 0
      %1377 = vmatmul.mubr.bf16.gmra.mxu0 %v1315
      %v1378 = vpop.f32.mrf.mxu0
      %v1379 = vadd.f32 0.0, %v1378
      %v1380 = vpop.f32.mrf.mxu0
      %v1381 = vpop.f32.mrf.mxu0
      %v1382 = vadd.f32 0.0, %v1381
      %v1383 = vpop.f32.mrf.mxu0
      %1384 = vmatprep.mubr.bf16.mxu0 0
      %1385 = vmatmul.mubr.bf16.gmra.mxu0 %v1318
      %v1386 = vpop.f32.mrf.mxu0
      %v1387 = vadd.f32 0.0, %v1386
      %v1388 = vpop.f32.mrf.mxu0
      %v1389 = vpop.f32.mrf.mxu0
      %v1390 = vadd.f32 0.0, %v1389
      %v1391 = vpop.f32.mrf.mxu0
      %1392 = vdwg.mxu0
      %v1403 = vunpack.c.l.b16 %v473
      %v1404 = vunpack.c.l.b16 %v474
      %v1405 = vunpack.c.l.b16 %v475
      %v1406 = vunpack.c.l.b16 %v476
      %v1407 = vunpack.c.l.b16 %v477
      %v1408 = vunpack.c.l.b16 %v478
      %v1409 = vunpack.c.l.b16 %v479
      %v1410 = vunpack.c.l.b16 %v480
      %v1411 = vunpack.c.l.b16 %v481
      %v1412 = vunpack.c.l.b16 %v482
      %v1413 = vpack.c.b16 %v1404, %v1403
      %v1414 = vpack.c.b16 %v1406, %v1405
      %v1415 = vpack.c.b16 %v1408, %v1407
      %v1416 = vpack.c.b16 %v1410, %v1409
      %v1417 = vpack.c.b16 %v1412, %v1411
      %v1422 = vunpack.c.l.b16 %v483
      %v1423 = vunpack.c.l.b16 %v484
      %v1424 = vunpack.c.l.b16 %v485
      %v1425 = vunpack.c.l.b16 %v486
      %v1426 = vpack.c.b16 %v1423, %v1422
      %v1427 = vpack.c.b16 %v1425, %v1424
      %v1431 = vsel %vm1304, %v1413, 0
      %v1434 = vsel %vm1304, %v1414, 0
      %v1437 = vsel %vm1304, %v1415, 0
      %v1440 = vsel %vm1304, %v1416, 0
      %v1443 = vsel %vm1304, %v1417, 0
      %1445 = vmatprep.subr.bf16.mxu0 0
      %1446 = vmatpush1.bf16.msra.mxu0 0
      %1447 = vmatprep.subr.bf16.mxu0 0
      %1448 = vmatpush1.bf16.msra.mxu0 0
      %1449 = vmatprep.subr.bf16.mxu0 0
      %1450 = vmatpush1.bf16.msra.mxu0 0
      %1451 = vmatprep.subr.bf16.mxu0 0
      %1452 = vmatpush1.bf16.msra.mxu0 0
      %1453 = vmatprep.subr.bf16.mxu0 0
      %1454 = vmatpush1.bf16.msra.mxu0 0
      %1455 = vmatprep.subr.bf16.mxu0 0
      %1456 = vmatpush1.bf16.msra.mxu0 0
      %1457 = vmatprep.subr.bf16.mxu0 0
      %1458 = vmatpush1.bf16.msra.mxu0 %v1427
      %1459 = vmatprep.subr.bf16.mxu0 0
      %1460 = vmatpush1.bf16.msra.mxu0 %v1426
      %1461 = vmatprep.subr.bf16.mxu0 0
      %1462 = vmatpush2.bf16.msra.mxu0 0
      %1463 = vmatprep.subr.bf16.mxu0 0
      %1464 = vmatpush2.bf16.msra.mxu0 0
      %1465 = vmatprep.subr.bf16.mxu0 0
      %1466 = vmatpush2.bf16.msra.mxu0 0
      %1467 = vmatprep.subr.bf16.mxu0 0
      %1468 = vmatpush2.bf16.msra.mxu0 0
      %1469 = vmatprep.subr.bf16.mxu0 0
      %1470 = vmatpush2.bf16.msra.mxu0 0
      %1471 = vmatprep.subr.bf16.mxu0 0
      %1472 = vmatpush2.bf16.msra.mxu0 0
      %1473 = vmatprep.subr.bf16.mxu0 0
      %1474 = vmatpush2.bf16.msra.mxu0 0
      %1475 = vmatprep.subr.bf16.mxu0 0
      %1476 = vmatpush2.bf16.msra.mxu0 0
      %1477 = vmatprep.mubr.bf16.mxu0 0
      %1478 = vmatmul.mubr.bf16.gmra.mxu0 %v1431
      %v1479 = vpop.f32.mrf.mxu0
      %v1480 = vadd.f32 %v1355, %v1479
      %v1481 = vpop.f32.mrf.mxu0
      %v1482 = vpop.f32.mrf.mxu0
      %v1483 = vadd.f32 %v1358, %v1482
      %v1484 = vpop.f32.mrf.mxu0
      %1485 = vmatprep.mubr.bf16.mxu0 0
      %1486 = vmatmul.mubr.bf16.gmra.mxu0 %v1434
      %v1487 = vpop.f32.mrf.mxu0
      %v1488 = vadd.f32 %v1363, %v1487
      %v1489 = vpop.f32.mrf.mxu0
      %v1490 = vpop.f32.mrf.mxu0
      %v1491 = vadd.f32 %v1366, %v1490
      %v1492 = vpop.f32.mrf.mxu0
      %1493 = vmatprep.mubr.bf16.mxu0 0
      %1494 = vmatmul.mubr.bf16.gmra.mxu0 %v1437
      %v1495 = vpop.f32.mrf.mxu0
      %v1496 = vadd.f32 %v1371, %v1495
      %v1497 = vpop.f32.mrf.mxu0
      %v1498 = vpop.f32.mrf.mxu0
      %v1499 = vadd.f32 %v1374, %v1498
      %v1500 = vpop.f32.mrf.mxu0
      %1501 = vmatprep.mubr.bf16.mxu0 0
      %1502 = vmatmul.mubr.bf16.gmra.mxu0 %v1440
      %v1503 = vpop.f32.mrf.mxu0
      %v1504 = vadd.f32 %v1379, %v1503
      %v1505 = vpop.f32.mrf.mxu0
      %v1506 = vpop.f32.mrf.mxu0
      %v1507 = vadd.f32 %v1382, %v1506
      %v1508 = vpop.f32.mrf.mxu0
      %1509 = vmatprep.mubr.bf16.mxu0 0
      %1510 = vmatmul.mubr.bf16.gmra.mxu0 %v1443
      %v1511 = vpop.f32.mrf.mxu0
      %v1512 = vadd.f32 %v1387, %v1511
      %v1513 = vpop.f32.mrf.mxu0
      %v1514 = vpop.f32.mrf.mxu0
      %v1515 = vadd.f32 %v1390, %v1514
      %v1516 = vpop.f32.mrf.mxu0
      %1517 = vdwg.mxu0
      %v1518 = vld [vmem:[%s407] sm:$0xe]
      %s1519 = scalar_lea.vmem %s2, 24
      %v1520 = vld [vmem:[%s1519] sm:$0xf]
      %v1521 = vld [vmem:[%s1519 + $0x4] sm:$0xf]
      %v1522 = vld [vmem:[%s1519 + $0x8] sm:$0xf]
      %v1524 = vunpack.c.l.b16 %v1518
      %v1525 = vpack.c.b16 %v530, %v1524
      %vm1526 = vcmask 1046528
      %v1527 = vrot.slane %v1525, 1
      %v1528 = vrot.slane %v567, 1
      %v1529 = vsel %vm1526, %v1527, %v1528
      %v1530 = vrot.slane %v568, 1
      %v1531 = vsel %vm1526, %v1528, %v1530
      %v1532 = vrot.slane %v569, 1
      %v1533 = vsel %vm1526, %v1530, %v1532
      %v1534 = vrot.slane %v570, 1
      %v1535 = vsel %vm1526, %v1532, %v1534
      %v1536 = vrot.slane %v571, 1
      %v1537 = vsel %vm1526, %v1534, %v1536
      %v1538 = vrot.slane %v572, 1
      %v1539 = vsel %vm1526, %v1536, %v1538
      %v1540 = vrot.slane %v573, 1
      %v1541 = vsel %vm1526, %v1538, %v1540
      %v1542 = vrot.slane %v574, 1
      %v1543 = vsel %vm1526, %v1540, %v1542
      %v1544 = vrot.slane %v575, 1
      %v1545 = vsel %vm1526, %v1542, %v1544
      %v1546 = vrot.slane %v576, 1
      %v1547 = vsel %vm1526, %v1544, %v1546
      %v1548 = vrot.slane %v577, 1
      %v1549 = vsel %vm1526, %v1546, %v1548
      %v1550 = vrot.slane %v578, 1
      %v1551 = vsel %vm1526, %v1548, %v1550
      %v1552 = vrot.slane %v579, 1
      %v1553 = vsel %vm1526, %v1550, %v1552
      %v1554 = vrot.slane %v580, 1
      %v1555 = vsel %vm1526, %v1552, %v1554
      %v1556 = vrot.slane %v581, 1
      %v1557 = vsel %vm1526, %v1554, %v1556
      %v1558 = vrot.slane %v582, 1
      %v1559 = vsel %vm1526, %v1556, %v1558
      %v1560 = vrot.slane %v583, 1
      %v1561 = vsel %vm1526, %v1558, %v1560
      %v1562 = vrot.slane %v584, 1
      %v1563 = vsel %vm1526, %v1560, %v1562
      %v1567 = vunpack.c.l.b16 %v1520
      %v1568 = vunpack.c.l.b16 %v1521
      %v1569 = vunpack.c.l.b16 %v1522
      %v1570 = vpack.c.b16 %v1568, %v1567
      %v1571 = vpack.c.b16 %v1569, %v1569
      %v1574 = vsel %vm743, %v1529, 0
      %v1577 = vsel %vm743, %v1531, 0
      %v1580 = vsel %vm743, %v1533, 0
      %v1583 = vsel %vm743, %v1535, 0
      %v1586 = vsel %vm743, %v1537, 0
      %v1589 = vsel %vm743, %v1539, 0
      %v1592 = vsel %vm743, %v1541, 0
      %v1595 = vsel %vm743, %v1543, 0
      %v1598 = vsel %vm743, %v1545, 0
      %v1601 = vsel %vm743, %v1547, 0
      %v1604 = vsel %vm743, %v1549, 0
      %v1607 = vsel %vm743, %v1551, 0
      %v1610 = vsel %vm743, %v1553, 0
      %v1613 = vsel %vm743, %v1555, 0
      %v1616 = vsel %vm743, %v1557, 0
      %v1619 = vsel %vm743, %v1559, 0
      %v1622 = vsel %vm743, %v1561, 0
      %v1625 = vsel %vm743, %v1563, 0
      %v1628 = vsel %vm798, %v1571, 0
      %1630 = vmatprep.subr.bf16.mxu0 0
      %1631 = vmatpush1.bf16.msra.mxu0 0
      %1632 = vmatprep.subr.bf16.mxu0 0
      %1633 = vmatpush1.bf16.msra.mxu0 0
      %1634 = vmatprep.subr.bf16.mxu0 0
      %1635 = vmatpush1.bf16.msra.mxu0 0
      %1636 = vmatprep.subr.bf16.mxu0 0
      %1637 = vmatpush1.bf16.msra.mxu0 0
      %1638 = vmatprep.subr.bf16.mxu0 0
      %1639 = vmatpush1.bf16.msra.mxu0 0
      %1640 = vmatprep.subr.bf16.mxu0 0
      %1641 = vmatpush1.bf16.msra.mxu0 0
      %1642 = vmatprep.subr.bf16.mxu0 0
      %1643 = vmatpush1.bf16.msra.mxu0 %v1628
      %1644 = vmatprep.subr.bf16.mxu0 0
      %1645 = vmatpush1.bf16.msra.mxu0 %v1570
      %1646 = vmatprep.subr.bf16.mxu0 0
      %1647 = vmatpush2.bf16.msra.mxu0 0
      %1648 = vmatprep.subr.bf16.mxu0 0
      %1649 = vmatpush2.bf16.msra.mxu0 0
      %1650 = vmatprep.subr.bf16.mxu0 0
      %1651 = vmatpush2.bf16.msra.mxu0 0
      %1652 = vmatprep.subr.bf16.mxu0 0
      %1653 = vmatpush2.bf16.msra.mxu0 0
      %1654 = vmatprep.subr.bf16.mxu0 0
      %1655 = vmatpush2.bf16.msra.mxu0 0
      %1656 = vmatprep.subr.bf16.mxu0 0
      %1657 = vmatpush2.bf16.msra.mxu0 0
      %1658 = vmatprep.subr.bf16.mxu0 0
      %1659 = vmatpush2.bf16.msra.mxu0 0
      %1660 = vmatprep.subr.bf16.mxu0 0
      %1661 = vmatpush2.bf16.msra.mxu0 0
      %1662 = vmatprep.mubr.bf16.mxu0 0
      %1663 = vmatmul.mubr.bf16.gmra.mxu0 %v1574
      %v1664 = vpop.f32.mrf.mxu0
      %v1665 = vadd.f32 0.0, %v1664
      %v1666 = vpop.f32.mrf.mxu0
      %v1667 = vpop.f32.mrf.mxu0
      %v1668 = vadd.f32 0.0, %v1667
      %v1669 = vpop.f32.mrf.mxu0
      %1670 = vmatprep.mubr.bf16.mxu0 0
      %1671 = vmatmul.mubr.bf16.gmra.mxu0 %v1577
      %v1672 = vpop.f32.mrf.mxu0
      %v1673 = vadd.f32 0.0, %v1672
      %v1674 = vpop.f32.mrf.mxu0
      %v1675 = vpop.f32.mrf.mxu0
      %v1676 = vadd.f32 0.0, %v1675
      %v1677 = vpop.f32.mrf.mxu0
      %1678 = vmatprep.mubr.bf16.mxu0 0
      %1679 = vmatmul.mubr.bf16.gmra.mxu0 %v1580
      %v1680 = vpop.f32.mrf.mxu0
      %v1681 = vadd.f32 0.0, %v1680
      %v1682 = vpop.f32.mrf.mxu0
      %v1683 = vpop.f32.mrf.mxu0
      %v1684 = vadd.f32 0.0, %v1683
      %v1685 = vpop.f32.mrf.mxu0
      %1686 = vmatprep.mubr.bf16.mxu0 0
      %1687 = vmatmul.mubr.bf16.gmra.mxu0 %v1583
      %v1688 = vpop.f32.mrf.mxu0
      %v1689 = vadd.f32 0.0, %v1688
      %v1690 = vpop.f32.mrf.mxu0
      %v1691 = vpop.f32.mrf.mxu0
      %v1692 = vadd.f32 0.0, %v1691
      %v1693 = vpop.f32.mrf.mxu0
      %1694 = vmatprep.mubr.bf16.mxu0 0
      %1695 = vmatmul.mubr.bf16.gmra.mxu0 %v1586
      %v1696 = vpop.f32.mrf.mxu0
      %v1697 = vadd.f32 0.0, %v1696
      %v1698 = vpop.f32.mrf.mxu0
      %v1699 = vpop.f32.mrf.mxu0
      %v1700 = vadd.f32 0.0, %v1699
      %v1701 = vpop.f32.mrf.mxu0
      %1702 = vmatprep.mubr.bf16.mxu0 0
      %1703 = vmatmul.mubr.bf16.gmra.mxu0 %v1589
      %v1704 = vpop.f32.mrf.mxu0
      %v1705 = vadd.f32 0.0, %v1704
      %v1706 = vpop.f32.mrf.mxu0
      %v1707 = vpop.f32.mrf.mxu0
      %v1708 = vadd.f32 0.0, %v1707
      %v1709 = vpop.f32.mrf.mxu0
      %1710 = vmatprep.mubr.bf16.mxu0 0
      %1711 = vmatmul.mubr.bf16.gmra.mxu0 %v1592
      %v1712 = vpop.f32.mrf.mxu0
      %v1713 = vadd.f32 0.0, %v1712
      %v1714 = vpop.f32.mrf.mxu0
      %v1715 = vpop.f32.mrf.mxu0
      %v1716 = vadd.f32 0.0, %v1715
      %v1717 = vpop.f32.mrf.mxu0
      %1718 = vmatprep.mubr.bf16.mxu0 0
      %1719 = vmatmul.mubr.bf16.gmra.mxu0 %v1595
      %v1720 = vpop.f32.mrf.mxu0
      %v1721 = vadd.f32 0.0, %v1720
      %v1722 = vpop.f32.mrf.mxu0
      %v1723 = vpop.f32.mrf.mxu0
      %v1724 = vadd.f32 0.0, %v1723
      %v1725 = vpop.f32.mrf.mxu0
      %1726 = vmatprep.mubr.bf16.mxu0 0
      %1727 = vmatmul.mubr.bf16.gmra.mxu0 %v1598
      %v1728 = vpop.f32.mrf.mxu0
      %v1729 = vadd.f32 0.0, %v1728
      %v1730 = vpop.f32.mrf.mxu0
      %v1731 = vpop.f32.mrf.mxu0
      %v1732 = vadd.f32 0.0, %v1731
      %v1733 = vpop.f32.mrf.mxu0
      %1734 = vmatprep.mubr.bf16.mxu0 0
      %1735 = vmatmul.mubr.bf16.gmra.mxu0 %v1601
      %v1736 = vpop.f32.mrf.mxu0
      %v1737 = vadd.f32 0.0, %v1736
      %v1738 = vpop.f32.mrf.mxu0
      %v1739 = vpop.f32.mrf.mxu0
      %v1740 = vadd.f32 0.0, %v1739
      %v1741 = vpop.f32.mrf.mxu0
      %1742 = vmatprep.mubr.bf16.mxu0 0
      %1743 = vmatmul.mubr.bf16.gmra.mxu0 %v1604
      %v1744 = vpop.f32.mrf.mxu0
      %v1745 = vadd.f32 0.0, %v1744
      %v1746 = vpop.f32.mrf.mxu0
      %v1747 = vpop.f32.mrf.mxu0
      %v1748 = vadd.f32 0.0, %v1747
      %v1749 = vpop.f32.mrf.mxu0
      %1750 = vmatprep.mubr.bf16.mxu0 0
      %1751 = vmatmul.mubr.bf16.gmra.mxu0 %v1607
      %v1752 = vpop.f32.mrf.mxu0
      %v1753 = vadd.f32 0.0, %v1752
      %v1754 = vpop.f32.mrf.mxu0
      %v1755 = vpop.f32.mrf.mxu0
      %v1756 = vadd.f32 0.0, %v1755
      %v1757 = vpop.f32.mrf.mxu0
      %1758 = vmatprep.mubr.bf16.mxu0 0
      %1759 = vmatmul.mubr.bf16.gmra.mxu0 %v1610
      %v1760 = vpop.f32.mrf.mxu0
      %v1761 = vadd.f32 0.0, %v1760
      %v1762 = vpop.f32.mrf.mxu0
      %v1763 = vpop.f32.mrf.mxu0
      %v1764 = vadd.f32 0.0, %v1763
      %v1765 = vpop.f32.mrf.mxu0
      %1766 = vmatprep.mubr.bf16.mxu0 0
      %1767 = vmatmul.mubr.bf16.gmra.mxu0 %v1613
      %v1768 = vpop.f32.mrf.mxu0
      %v1769 = vadd.f32 0.0, %v1768
      %v1770 = vpop.f32.mrf.mxu0
      %v1771 = vpop.f32.mrf.mxu0
      %v1772 = vadd.f32 0.0, %v1771
      %v1773 = vpop.f32.mrf.mxu0
      %1774 = vmatprep.mubr.bf16.mxu0 0
      %1775 = vmatmul.mubr.bf16.gmra.mxu0 %v1616
      %v1776 = vpop.f32.mrf.mxu0
      %v1777 = vadd.f32 0.0, %v1776
      %v1778 = vpop.f32.mrf.mxu0
      %v1779 = vpop.f32.mrf.mxu0
      %v1780 = vadd.f32 0.0, %v1779
      %v1781 = vpop.f32.mrf.mxu0
      %1782 = vmatprep.mubr.bf16.mxu0 0
      %1783 = vmatmul.mubr.bf16.gmra.mxu0 %v1619
      %v1784 = vpop.f32.mrf.mxu0
      %v1785 = vadd.f32 0.0, %v1784
      %v1786 = vpop.f32.mrf.mxu0
      %v1787 = vpop.f32.mrf.mxu0
      %v1788 = vadd.f32 0.0, %v1787
      %v1789 = vpop.f32.mrf.mxu0
      %1790 = vmatprep.mubr.bf16.mxu0 0
      %1791 = vmatmul.mubr.bf16.gmra.mxu0 %v1622
      %v1792 = vpop.f32.mrf.mxu0
      %v1793 = vadd.f32 0.0, %v1792
      %v1794 = vpop.f32.mrf.mxu0
      %v1795 = vpop.f32.mrf.mxu0
      %v1796 = vadd.f32 0.0, %v1795
      %v1797 = vpop.f32.mrf.mxu0
      %1798 = vmatprep.mubr.bf16.mxu0 0
      %1799 = vmatmul.mubr.bf16.gmra.mxu0 %v1625
      %v1800 = vpop.f32.mrf.mxu0
      %v1801 = vadd.f32 0.0, %v1800
      %v1802 = vpop.f32.mrf.mxu0
      %v1803 = vpop.f32.mrf.mxu0
      %v1804 = vadd.f32 0.0, %v1803
      %v1805 = vpop.f32.mrf.mxu0
      %1806 = vdwg.mxu0
      %v1807 = vadd.f32 %v1062, %v1665
      %v1808 = vadd.f32 %v1065, %v1668
      %v1809 = vadd.f32 %v1070, %v1673
      %v1810 = vadd.f32 %v1073, %v1676
      %v1811 = vadd.f32 %v1078, %v1681
      %v1812 = vadd.f32 %v1081, %v1684
      %v1813 = vadd.f32 %v1086, %v1689
      %v1814 = vadd.f32 %v1089, %v1692
      %v1815 = vadd.f32 %v1094, %v1697
      %v1816 = vadd.f32 %v1097, %v1700
      %v1817 = vadd.f32 %v1102, %v1705
      %v1818 = vadd.f32 %v1105, %v1708
      %v1819 = vadd.f32 %v1110, %v1713
      %v1820 = vadd.f32 %v1113, %v1716
      %v1821 = vadd.f32 %v1118, %v1721
      %v1822 = vadd.f32 %v1121, %v1724
      %v1823 = vadd.f32 %v1126, %v1729
      %v1824 = vadd.f32 %v1129, %v1732
      %v1825 = vadd.f32 %v1134, %v1737
      %v1826 = vadd.f32 %v1137, %v1740
      %v1827 = vadd.f32 %v1142, %v1745
      %v1828 = vadd.f32 %v1145, %v1748
      %v1829 = vadd.f32 %v1150, %v1753
      %v1830 = vadd.f32 %v1153, %v1756
      %v1831 = vadd.f32 %v1158, %v1761
      %v1832 = vadd.f32 %v1161, %v1764
      %v1833 = vadd.f32 %v1166, %v1769
      %v1834 = vadd.f32 %v1169, %v1772
      %v1835 = vadd.f32 %v1174, %v1777
      %v1836 = vadd.f32 %v1177, %v1780
      %v1837 = vadd.f32 %v1182, %v1785
      %v1838 = vadd.f32 %v1185, %v1788
      %v1839 = vadd.f32 %v1190, %v1793
      %v1840 = vadd.f32 %v1193, %v1796
      %v1841 = vadd.f32 %v1198, %v1801
      %v1842 = vadd.f32 %v1201, %v1804
      %v1843 = vld [vmem:[%s412] sm:$0xe]
      %s1844 = scalar_lea.vmem %s3, 32
      %v1845 = vld [vmem:[%s1844] sm:$0xf]
      %v1846 = vld [vmem:[%s1844 + $0x4] sm:$0xf]
      %v1847 = vld [vmem:[%s1844 + $0x8] sm:$0xf]
      %v1848 = vld [vmem:[%s1844 + $0xc] sm:$0xf]
      %v1850 = vunpack.c.l.b16 %v1843
      %v1851 = vpack.c.b16 %v1232, %v1850
      %v1852 = vrot.slane %v1851, 1
      %v1853 = vrot.slane %v1243, 1
      %v1854 = vsel %vm1526, %v1852, %v1853
      %v1855 = vrot.slane %v1244, 1
      %v1856 = vsel %vm1526, %v1853, %v1855
      %v1857 = vrot.slane %v1245, 1
      %v1858 = vsel %vm1526, %v1855, %v1857
      %v1859 = vrot.slane %v1246, 1
      %v1860 = vsel %vm1526, %v1857, %v1859
      %v1861 = vrot.slane %v1247, 1
      %v1862 = vsel %vm1526, %v1859, %v1861
      %v1867 = vunpack.c.l.b16 %v1845
      %v1868 = vunpack.c.l.b16 %v1846
      %v1869 = vunpack.c.l.b16 %v1847
      %v1870 = vunpack.c.l.b16 %v1848
      %v1871 = vpack.c.b16 %v1868, %v1867
      %v1872 = vpack.c.b16 %v1870, %v1869
      %v1876 = vsel %vm1304, %v1854, 0
      %v1879 = vsel %vm1304, %v1856, 0
      %v1882 = vsel %vm1304, %v1858, 0
      %v1885 = vsel %vm1304, %v1860, 0
      %v1888 = vsel %vm1304, %v1862, 0
      %1890 = vmatprep.subr.bf16.mxu0 0
      %1891 = vmatpush1.bf16.msra.mxu0 0
      %1892 = vmatprep.subr.bf16.mxu0 0
      %1893 = vmatpush1.bf16.msra.mxu0 0
      %1894 = vmatprep.subr.bf16.mxu0 0
      %1895 = vmatpush1.bf16.msra.mxu0 0
      %1896 = vmatprep.subr.bf16.mxu0 0
      %1897 = vmatpush1.bf16.msra.mxu0 0
      %1898 = vmatprep.subr.bf16.mxu0 0
      %1899 = vmatpush1.bf16.msra.mxu0 0
      %1900 = vmatprep.subr.bf16.mxu0 0
      %1901 = vmatpush1.bf16.msra.mxu0 0
      %1902 = vmatprep.subr.bf16.mxu0 0
      %1903 = vmatpush1.bf16.msra.mxu0 %v1872
      %1904 = vmatprep.subr.bf16.mxu0 0
      %1905 = vmatpush1.bf16.msra.mxu0 %v1871
      %1906 = vmatprep.subr.bf16.mxu0 0
      %1907 = vmatpush2.bf16.msra.mxu0 0
      %1908 = vmatprep.subr.bf16.mxu0 0
      %1909 = vmatpush2.bf16.msra.mxu0 0
      %1910 = vmatprep.subr.bf16.mxu0 0
      %1911 = vmatpush2.bf16.msra.mxu0 0
      %1912 = vmatprep.subr.bf16.mxu0 0
      %1913 = vmatpush2.bf16.msra.mxu0 0
      %1914 = vmatprep.subr.bf16.mxu0 0
      %1915 = vmatpush2.bf16.msra.mxu0 0
      %1916 = vmatprep.subr.bf16.mxu0 0
      %1917 = vmatpush2.bf16.msra.mxu0 0
      %1918 = vmatprep.subr.bf16.mxu0 0
      %1919 = vmatpush2.bf16.msra.mxu0 0
      %1920 = vmatprep.subr.bf16.mxu0 0
      %1921 = vmatpush2.bf16.msra.mxu0 0
      %1922 = vmatprep.mubr.bf16.mxu0 0
      %1923 = vmatmul.mubr.bf16.gmra.mxu0 %v1876
      %v1924 = vpop.f32.mrf.mxu0
      %v1925 = vadd.f32 0.0, %v1924
      %v1926 = vpop.f32.mrf.mxu0
      %v1927 = vpop.f32.mrf.mxu0
      %v1928 = vadd.f32 0.0, %v1927
      %v1929 = vpop.f32.mrf.mxu0
      %1930 = vmatprep.mubr.bf16.mxu0 0
      %1931 = vmatmul.mubr.bf16.gmra.mxu0 %v1879
      %v1932 = vpop.f32.mrf.mxu0
      %v1933 = vadd.f32 0.0, %v1932
      %v1934 = vpop.f32.mrf.mxu0
      %v1935 = vpop.f32.mrf.mxu0
      %v1936 = vadd.f32 0.0, %v1935
      %v1937 = vpop.f32.mrf.mxu0
      %1938 = vmatprep.mubr.bf16.mxu0 0
      %1939 = vmatmul.mubr.bf16.gmra.mxu0 %v1882
      %v1940 = vpop.f32.mrf.mxu0
      %v1941 = vadd.f32 0.0, %v1940
      %v1942 = vpop.f32.mrf.mxu0
      %v1943 = vpop.f32.mrf.mxu0
      %v1944 = vadd.f32 0.0, %v1943
      %v1945 = vpop.f32.mrf.mxu0
      %1946 = vmatprep.mubr.bf16.mxu0 0
      %1947 = vmatmul.mubr.bf16.gmra.mxu0 %v1885
      %v1948 = vpop.f32.mrf.mxu0
      %v1949 = vadd.f32 0.0, %v1948
      %v1950 = vpop.f32.mrf.mxu0
      %v1951 = vpop.f32.mrf.mxu0
      %v1952 = vadd.f32 0.0, %v1951
      %v1953 = vpop.f32.mrf.mxu0
      %1954 = vmatprep.mubr.bf16.mxu0 0
      %1955 = vmatmul.mubr.bf16.gmra.mxu0 %v1888
      %v1956 = vpop.f32.mrf.mxu0
      %v1957 = vadd.f32 0.0, %v1956
      %v1958 = vpop.f32.mrf.mxu0
      %v1959 = vpop.f32.mrf.mxu0
      %v1960 = vadd.f32 0.0, %v1959
      %v1961 = vpop.f32.mrf.mxu0
      %1962 = vdwg.mxu0
      %v1963 = vadd.f32 %v1480, %v1925
      %v1964 = vadd.f32 %v1483, %v1928
      %v1965 = vadd.f32 %v1488, %v1933
      %v1966 = vadd.f32 %v1491, %v1936
      %v1967 = vadd.f32 %v1496, %v1941
      %v1968 = vadd.f32 %v1499, %v1944
      %v1969 = vadd.f32 %v1504, %v1949
      %v1970 = vadd.f32 %v1507, %v1952
      %v1971 = vadd.f32 %v1512, %v1957
      %v1972 = vadd.f32 %v1515, %v1960
      %v1973 = vld [vmem:[%s407 + $0x8] sm:$0xe]
      %v1974 = vld [vmem:[%s407 + $0xc] sm:$0xf]
      %v1975 = vld [vmem:[%s407 + $0x10] sm:$0xf]
      %v1976 = vld [vmem:[%s407 + $0x14] sm:$0xf]
      %v1977 = vld [vmem:[%s407 + $0x18] sm:$0xf]
      %v1978 = vld [vmem:[%s407 + $0x1c] sm:$0xf]
      %v1979 = vld [vmem:[%s407 + $0x20] sm:$0xf]
      %v1980 = vld [vmem:[%s407 + $0x24] sm:$0xf]
      %v1981 = vld [vmem:[%s407 + $0x28] sm:$0xf]
      %v1982 = vld [vmem:[%s407 + $0x2c] sm:$0xf]
      %v1983 = vld [vmem:[%s407 + $0x30] sm:$0xf]
      %v1984 = vld [vmem:[%s407 + $0x34] sm:$0xf]
      %v1985 = vld [vmem:[%s407 + $0x38] sm:$0xf]
      %v1986 = vld [vmem:[%s407 + $0x3c] sm:$0xf]
      %v1987 = vld [vmem:[%s407 + $0x40] sm:$0xf]
      %v1988 = vld [vmem:[%s407 + $0x44] sm:$0xf]
      %v1989 = vld [vmem:[%s407 + $0x48] sm:$0xf]
      %v1990 = vld [vmem:[%s407 + $0x4c] sm:$0xf]
      %v1991 = vld [vmem:[%s407 + $0x50] sm:$0xf]
      %v1992 = vld [vmem:[%s407 + $0x54] sm:$0xf]
      %v1993 = vld [vmem:[%s407 + $0x58] sm:$0xf]
      %v1994 = vld [vmem:[%s407 + $0x5c] sm:$0xf]
      %v1995 = vld [vmem:[%s407 + $0x60] sm:$0xf]
      %v1996 = vld [vmem:[%s407 + $0x64] sm:$0xf]
      %v1997 = vld [vmem:[%s407 + $0x68] sm:$0xf]
      %v1998 = vld [vmem:[%s407 + $0x6c] sm:$0xf]
      %v1999 = vld [vmem:[%s407 + $0x70] sm:$0xf]
      %v2000 = vld [vmem:[%s407 + $0x74] sm:$0xf]
      %v2001 = vld [vmem:[%s407 + $0x78] sm:$0xf]
      %v2002 = vld [vmem:[%s407 + $0x7c] sm:$0xf]
      %v2003 = vld [vmem:[%s407 + $0x80] sm:$0xf]
      %v2004 = vld [vmem:[%s407 + $0x84] sm:$0xf]
      %v2005 = vld [vmem:[%s407 + $0x88] sm:$0xf]
      %v2006 = vld [vmem:[%s407 + $0x8c] sm:$0xf]
      %v2007 = vld [vmem:[%s407 + $0x90] sm:$0xf]
      %v2008 = vld [vmem:[%s407 + $0x94] sm:$0xf]
      %v2009 = vld [vmem:[%s407 + $0x98] sm:$0x1]
      %s2010 = scalar_lea.vmem %s2, 36
      %v2011 = vld [vmem:[%s2010] sm:$0xf]
      %v2012 = vld [vmem:[%s2010 + $0x4] sm:$0xf]
      %v2013 = vld [vmem:[%s2010 + $0x8] sm:$0xf]
      %v2051 = vunpack.c.l.b16 %v1973
      %v2052 = vunpack.c.l.b16 %v1974
      %v2053 = vunpack.c.l.b16 %v1975
      %v2054 = vunpack.c.l.b16 %v1976
      %v2055 = vunpack.c.l.b16 %v1977
      %v2056 = vunpack.c.l.b16 %v1978
      %v2057 = vunpack.c.l.b16 %v1979
      %v2058 = vunpack.c.l.b16 %v1980
      %v2059 = vunpack.c.l.b16 %v1981
      %v2060 = vunpack.c.l.b16 %v1982
      %v2061 = vunpack.c.l.b16 %v1983
      %v2062 = vunpack.c.l.b16 %v1984
      %v2063 = vunpack.c.l.b16 %v1985
      %v2064 = vunpack.c.l.b16 %v1986
      %v2065 = vunpack.c.l.b16 %v1987
      %v2066 = vunpack.c.l.b16 %v1988
      %v2067 = vunpack.c.l.b16 %v1989
      %v2068 = vunpack.c.l.b16 %v1990
      %v2069 = vunpack.c.l.b16 %v1991
      %v2070 = vunpack.c.l.b16 %v1992
      %v2071 = vunpack.c.l.b16 %v1993
      %v2072 = vunpack.c.l.b16 %v1994
      %v2073 = vunpack.c.l.b16 %v1995
      %v2074 = vunpack.c.l.b16 %v1996
      %v2075 = vunpack.c.l.b16 %v1997
      %v2076 = vunpack.c.l.b16 %v1998
      %v2077 = vunpack.c.l.b16 %v1999
      %v2078 = vunpack.c.l.b16 %v2000
      %v2079 = vunpack.c.l.b16 %v2001
      %v2080 = vunpack.c.l.b16 %v2002
      %v2081 = vunpack.c.l.b16 %v2003
      %v2082 = vunpack.c.l.b16 %v2004
      %v2083 = vunpack.c.l.b16 %v2005
      %v2084 = vunpack.c.l.b16 %v2006
      %v2085 = vunpack.c.l.b16 %v2007
      %v2086 = vunpack.c.l.b16 %v2008
      %v2087 = vunpack.c.l.b16 %v2009
      %v2088 = vpack.c.b16 %v2052, %v2051
      %v2089 = vpack.c.b16 %v2054, %v2053
      %v2090 = vpack.c.b16 %v2056, %v2055
      %v2091 = vpack.c.b16 %v2058, %v2057
      %v2092 = vpack.c.b16 %v2060, %v2059
      %v2093 = vpack.c.b16 %v2062, %v2061
      %v2094 = vpack.c.b16 %v2064, %v2063
      %v2095 = vpack.c.b16 %v2066, %v2065
      %v2096 = vpack.c.b16 %v2068, %v2067
      %v2097 = vpack.c.b16 %v2070, %v2069
      %v2098 = vpack.c.b16 %v2072, %v2071
      %v2099 = vpack.c.b16 %v2074, %v2073
      %v2100 = vpack.c.b16 %v2076, %v2075
      %v2101 = vpack.c.b16 %v2078, %v2077
      %v2102 = vpack.c.b16 %v2080, %v2079
      %v2103 = vpack.c.b16 %v2082, %v2081
      %v2104 = vpack.c.b16 %v2084, %v2083
      %v2105 = vpack.c.b16 %v2086, %v2085
      %v2106 = vpack.c.b16 %v2087, %v2087
      %v2107 = vrot.slane %v2088, 1
      %v2108 = vrot.slane %v2089, 1
      %v2109 = vsel %vm1526, %v2107, %v2108
      %v2110 = vrot.slane %v2090, 1
      %v2111 = vsel %vm1526, %v2108, %v2110
      %v2112 = vrot.slane %v2091, 1
      %v2113 = vsel %vm1526, %v2110, %v2112
      %v2114 = vrot.slane %v2092, 1
      %v2115 = vsel %vm1526, %v2112, %v2114
      %v2116 = vrot.slane %v2093, 1
      %v2117 = vsel %vm1526, %v2114, %v2116
      %v2118 = vrot.slane %v2094, 1
      %v2119 = vsel %vm1526, %v2116, %v2118
      %v2120 = vrot.slane %v2095, 1
      %v2121 = vsel %vm1526, %v2118, %v2120
      %v2122 = vrot.slane %v2096, 1
      %v2123 = vsel %vm1526, %v2120, %v2122
      %v2124 = vrot.slane %v2097, 1
      %v2125 = vsel %vm1526, %v2122, %v2124
      %v2126 = vrot.slane %v2098, 1
      %v2127 = vsel %vm1526, %v2124, %v2126
      %v2128 = vrot.slane %v2099, 1
      %v2129 = vsel %vm1526, %v2126, %v2128
      %v2130 = vrot.slane %v2100, 1
      %v2131 = vsel %vm1526, %v2128, %v2130
      %v2132 = vrot.slane %v2101, 1
      %v2133 = vsel %vm1526, %v2130, %v2132
      %v2134 = vrot.slane %v2102, 1
      %v2135 = vsel %vm1526, %v2132, %v2134
      %v2136 = vrot.slane %v2103, 1
      %v2137 = vsel %vm1526, %v2134, %v2136
      %v2138 = vrot.slane %v2104, 1
      %v2139 = vsel %vm1526, %v2136, %v2138
      %v2140 = vrot.slane %v2105, 1
      %v2141 = vsel %vm1526, %v2138, %v2140
      %v2142 = vrot.slane %v2106, 1
      %v2143 = vsel %vm1526, %v2140, %v2142
      %v2147 = vunpack.c.l.b16 %v2011
      %v2148 = vunpack.c.l.b16 %v2012
      %v2149 = vunpack.c.l.b16 %v2013
      %v2150 = vpack.c.b16 %v2148, %v2147
      %v2151 = vpack.c.b16 %v2149, %v2149
      %v2154 = vsel %vm743, %v2109, 0
      %v2157 = vsel %vm743, %v2111, 0
      %v2160 = vsel %vm743, %v2113, 0
      %v2163 = vsel %vm743, %v2115, 0
      %v2166 = vsel %vm743, %v2117, 0
      %v2169 = vsel %vm743, %v2119, 0
      %v2172 = vsel %vm743, %v2121, 0
      %v2175 = vsel %vm743, %v2123, 0
      %v2178 = vsel %vm743, %v2125, 0
      %v2181 = vsel %vm743, %v2127, 0
      %v2184 = vsel %vm743, %v2129, 0
      %v2187 = vsel %vm743, %v2131, 0
      %v2190 = vsel %vm743, %v2133, 0
      %v2193 = vsel %vm743, %v2135, 0
      %v2196 = vsel %vm743, %v2137, 0
      %v2199 = vsel %vm743, %v2139, 0
      %v2202 = vsel %vm743, %v2141, 0
      %v2205 = vsel %vm743, %v2143, 0
      %v2208 = vsel %vm798, %v2151, 0
      %2210 = vmatprep.subr.bf16.mxu0 0
      %2211 = vmatpush1.bf16.msra.mxu0 0
      %2212 = vmatprep.subr.bf16.mxu0 0
      %2213 = vmatpush1.bf16.msra.mxu0 0
      %2214 = vmatprep.subr.bf16.mxu0 0
      %2215 = vmatpush1.bf16.msra.mxu0 0
      %2216 = vmatprep.subr.bf16.mxu0 0
      %2217 = vmatpush1.bf16.msra.mxu0 0
      %2218 = vmatprep.subr.bf16.mxu0 0
      %2219 = vmatpush1.bf16.msra.mxu0 0
      %2220 = vmatprep.subr.bf16.mxu0 0
      %2221 = vmatpush1.bf16.msra.mxu0 0
      %2222 = vmatprep.subr.bf16.mxu0 0
      %2223 = vmatpush1.bf16.msra.mxu0 %v2208
      %2224 = vmatprep.subr.bf16.mxu0 0
      %2225 = vmatpush1.bf16.msra.mxu0 %v2150
      %2226 = vmatprep.subr.bf16.mxu0 0
      %2227 = vmatpush2.bf16.msra.mxu0 0
      %2228 = vmatprep.subr.bf16.mxu0 0
      %2229 = vmatpush2.bf16.msra.mxu0 0
      %2230 = vmatprep.subr.bf16.mxu0 0
      %2231 = vmatpush2.bf16.msra.mxu0 0
      %2232 = vmatprep.subr.bf16.mxu0 0
      %2233 = vmatpush2.bf16.msra.mxu0 0
      %2234 = vmatprep.subr.bf16.mxu0 0
      %2235 = vmatpush2.bf16.msra.mxu0 0
      %2236 = vmatprep.subr.bf16.mxu0 0
      %2237 = vmatpush2.bf16.msra.mxu0 0
      %2238 = vmatprep.subr.bf16.mxu0 0
      %2239 = vmatpush2.bf16.msra.mxu0 0
      %2240 = vmatprep.subr.bf16.mxu0 0
      %2241 = vmatpush2.bf16.msra.mxu0 0
      %2242 = vmatprep.mubr.bf16.mxu0 0
      %2243 = vmatmul.mubr.bf16.gmra.mxu0 %v2154
      %v2244 = vpop.f32.mrf.mxu0
      %v2245 = vadd.f32 0.0, %v2244
      %v2246 = vpop.f32.mrf.mxu0
      %v2247 = vpop.f32.mrf.mxu0
      %v2248 = vadd.f32 0.0, %v2247
      %v2249 = vpop.f32.mrf.mxu0
      %2250 = vmatprep.mubr.bf16.mxu0 0
      %2251 = vmatmul.mubr.bf16.gmra.mxu0 %v2157
      %v2252 = vpop.f32.mrf.mxu0
      %v2253 = vadd.f32 0.0, %v2252
      %v2254 = vpop.f32.mrf.mxu0
      %v2255 = vpop.f32.mrf.mxu0
      %v2256 = vadd.f32 0.0, %v2255
      %v2257 = vpop.f32.mrf.mxu0
      %2258 = vmatprep.mubr.bf16.mxu0 0
      %2259 = vmatmul.mubr.bf16.gmra.mxu0 %v2160
      %v2260 = vpop.f32.mrf.mxu0
      %v2261 = vadd.f32 0.0, %v2260
      %v2262 = vpop.f32.mrf.mxu0
      %v2263 = vpop.f32.mrf.mxu0
      %v2264 = vadd.f32 0.0, %v2263
      %v2265 = vpop.f32.mrf.mxu0
      %2266 = vmatprep.mubr.bf16.mxu0 0
      %2267 = vmatmul.mubr.bf16.gmra.mxu0 %v2163
      %v2268 = vpop.f32.mrf.mxu0
      %v2269 = vadd.f32 0.0, %v2268
      %v2270 = vpop.f32.mrf.mxu0
      %v2271 = vpop.f32.mrf.mxu0
      %v2272 = vadd.f32 0.0, %v2271
      %v2273 = vpop.f32.mrf.mxu0
      %2274 = vmatprep.mubr.bf16.mxu0 0
      %2275 = vmatmul.mubr.bf16.gmra.mxu0 %v2166
      %v2276 = vpop.f32.mrf.mxu0
      %v2277 = vadd.f32 0.0, %v2276
      %v2278 = vpop.f32.mrf.mxu0
      %v2279 = vpop.f32.mrf.mxu0
      %v2280 = vadd.f32 0.0, %v2279
      %v2281 = vpop.f32.mrf.mxu0
      %2282 = vmatprep.mubr.bf16.mxu0 0
      %2283 = vmatmul.mubr.bf16.gmra.mxu0 %v2169
      %v2284 = vpop.f32.mrf.mxu0
      %v2285 = vadd.f32 0.0, %v2284
      %v2286 = vpop.f32.mrf.mxu0
      %v2287 = vpop.f32.mrf.mxu0
      %v2288 = vadd.f32 0.0, %v2287
      %v2289 = vpop.f32.mrf.mxu0
      %2290 = vmatprep.mubr.bf16.mxu0 0
      %2291 = vmatmul.mubr.bf16.gmra.mxu0 %v2172
      %v2292 = vpop.f32.mrf.mxu0
      %v2293 = vadd.f32 0.0, %v2292
      %v2294 = vpop.f32.mrf.mxu0
      %v2295 = vpop.f32.mrf.mxu0
      %v2296 = vadd.f32 0.0, %v2295
      %v2297 = vpop.f32.mrf.mxu0
      %2298 = vmatprep.mubr.bf16.mxu0 0
      %2299 = vmatmul.mubr.bf16.gmra.mxu0 %v2175
      %v2300 = vpop.f32.mrf.mxu0
      %v2301 = vadd.f32 0.0, %v2300
      %v2302 = vpop.f32.mrf.mxu0
      %v2303 = vpop.f32.mrf.mxu0
      %v2304 = vadd.f32 0.0, %v2303
      %v2305 = vpop.f32.mrf.mxu0
      %2306 = vmatprep.mubr.bf16.mxu0 0
      %2307 = vmatmul.mubr.bf16.gmra.mxu0 %v2178
      %v2308 = vpop.f32.mrf.mxu0
      %v2309 = vadd.f32 0.0, %v2308
      %v2310 = vpop.f32.mrf.mxu0
      %v2311 = vpop.f32.mrf.mxu0
      %v2312 = vadd.f32 0.0, %v2311
      %v2313 = vpop.f32.mrf.mxu0
      %2314 = vmatprep.mubr.bf16.mxu0 0
      %2315 = vmatmul.mubr.bf16.gmra.mxu0 %v2181
      %v2316 = vpop.f32.mrf.mxu0
      %v2317 = vadd.f32 0.0, %v2316
      %v2318 = vpop.f32.mrf.mxu0
      %v2319 = vpop.f32.mrf.mxu0
      %v2320 = vadd.f32 0.0, %v2319
      %v2321 = vpop.f32.mrf.mxu0
      %2322 = vmatprep.mubr.bf16.mxu0 0
      %2323 = vmatmul.mubr.bf16.gmra.mxu0 %v2184
      %v2324 = vpop.f32.mrf.mxu0
      %v2325 = vadd.f32 0.0, %v2324
      %v2326 = vpop.f32.mrf.mxu0
      %v2327 = vpop.f32.mrf.mxu0
      %v2328 = vadd.f32 0.0, %v2327
      %v2329 = vpop.f32.mrf.mxu0
      %2330 = vmatprep.mubr.bf16.mxu0 0
      %2331 = vmatmul.mubr.bf16.gmra.mxu0 %v2187
      %v2332 = vpop.f32.mrf.mxu0
      %v2333 = vadd.f32 0.0, %v2332
      %v2334 = vpop.f32.mrf.mxu0
      %v2335 = vpop.f32.mrf.mxu0
      %v2336 = vadd.f32 0.0, %v2335
      %v2337 = vpop.f32.mrf.mxu0
      %2338 = vmatprep.mubr.bf16.mxu0 0
      %2339 = vmatmul.mubr.bf16.gmra.mxu0 %v2190
      %v2340 = vpop.f32.mrf.mxu0
      %v2341 = vadd.f32 0.0, %v2340
      %v2342 = vpop.f32.mrf.mxu0
      %v2343 = vpop.f32.mrf.mxu0
      %v2344 = vadd.f32 0.0, %v2343
      %v2345 = vpop.f32.mrf.mxu0
      %2346 = vmatprep.mubr.bf16.mxu0 0
      %2347 = vmatmul.mubr.bf16.gmra.mxu0 %v2193
      %v2348 = vpop.f32.mrf.mxu0
      %v2349 = vadd.f32 0.0, %v2348
      %v2350 = vpop.f32.mrf.mxu0
      %v2351 = vpop.f32.mrf.mxu0
      %v2352 = vadd.f32 0.0, %v2351
      %v2353 = vpop.f32.mrf.mxu0
      %2354 = vmatprep.mubr.bf16.mxu0 0
      %2355 = vmatmul.mubr.bf16.gmra.mxu0 %v2196
      %v2356 = vpop.f32.mrf.mxu0
      %v2357 = vadd.f32 0.0, %v2356
      %v2358 = vpop.f32.mrf.mxu0
      %v2359 = vpop.f32.mrf.mxu0
      %v2360 = vadd.f32 0.0, %v2359
      %v2361 = vpop.f32.mrf.mxu0
      %2362 = vmatprep.mubr.bf16.mxu0 0
      %2363 = vmatmul.mubr.bf16.gmra.mxu0 %v2199
      %v2364 = vpop.f32.mrf.mxu0
      %v2365 = vadd.f32 0.0, %v2364
      %v2366 = vpop.f32.mrf.mxu0
      %v2367 = vpop.f32.mrf.mxu0
      %v2368 = vadd.f32 0.0, %v2367
      %v2369 = vpop.f32.mrf.mxu0
      %2370 = vmatprep.mubr.bf16.mxu0 0
      %2371 = vmatmul.mubr.bf16.gmra.mxu0 %v2202
      %v2372 = vpop.f32.mrf.mxu0
      %v2373 = vadd.f32 0.0, %v2372
      %v2374 = vpop.f32.mrf.mxu0
      %v2375 = vpop.f32.mrf.mxu0
      %v2376 = vadd.f32 0.0, %v2375
      %v2377 = vpop.f32.mrf.mxu0
      %2378 = vmatprep.mubr.bf16.mxu0 0
      %2379 = vmatmul.mubr.bf16.gmra.mxu0 %v2205
      %v2380 = vpop.f32.mrf.mxu0
      %v2381 = vadd.f32 0.0, %v2380
      %v2382 = vpop.f32.mrf.mxu0
      %v2383 = vpop.f32.mrf.mxu0
      %v2384 = vadd.f32 0.0, %v2383
      %v2385 = vpop.f32.mrf.mxu0
      %2386 = vdwg.mxu0
      %v2387 = vadd.f32 %v1807, %v2245
      %v2388 = vadd.f32 %v1808, %v2248
      %v2389 = vadd.f32 %v1809, %v2253
      %v2390 = vadd.f32 %v1810, %v2256
      %v2391 = vadd.f32 %v1811, %v2261
      %v2392 = vadd.f32 %v1812, %v2264
      %v2393 = vadd.f32 %v1813, %v2269
      %v2394 = vadd.f32 %v1814, %v2272
      %v2395 = vadd.f32 %v1815, %v2277
      %v2396 = vadd.f32 %v1816, %v2280
      %v2397 = vadd.f32 %v1817, %v2285
      %v2398 = vadd.f32 %v1818, %v2288
      %v2399 = vadd.f32 %v1819, %v2293
      %v2400 = vadd.f32 %v1820, %v2296
      %v2401 = vadd.f32 %v1821, %v2301
      %v2402 = vadd.f32 %v1822, %v2304
      %v2403 = vadd.f32 %v1823, %v2309
      %v2404 = vadd.f32 %v1824, %v2312
      %v2405 = vadd.f32 %v1825, %v2317
      %v2406 = vadd.f32 %v1826, %v2320
      %v2407 = vadd.f32 %v1827, %v2325
      %v2408 = vadd.f32 %v1828, %v2328
      %v2409 = vadd.f32 %v1829, %v2333
      %v2410 = vadd.f32 %v1830, %v2336
      %v2411 = vadd.f32 %v1831, %v2341
      %v2412 = vadd.f32 %v1832, %v2344
      %v2413 = vadd.f32 %v1833, %v2349
      %v2414 = vadd.f32 %v1834, %v2352
      %v2415 = vadd.f32 %v1835, %v2357
      %v2416 = vadd.f32 %v1836, %v2360
      %v2417 = vadd.f32 %v1837, %v2365
      %v2418 = vadd.f32 %v1838, %v2368
      %v2419 = vadd.f32 %v1839, %v2373
      %v2420 = vadd.f32 %v1840, %v2376
      %v2421 = vadd.f32 %v1841, %v2381
      %v2422 = vadd.f32 %v1842, %v2384
      %v2423 = vld [vmem:[%s412 + $0x4] sm:$0xe]
      %v2424 = vld [vmem:[%s412 + $0x8] sm:$0xf]
      %v2425 = vld [vmem:[%s412 + $0xc] sm:$0xf]
      %v2426 = vld [vmem:[%s412 + $0x10] sm:$0xf]
      %v2427 = vld [vmem:[%s412 + $0x14] sm:$0xf]
      %v2428 = vld [vmem:[%s412 + $0x18] sm:$0xf]
      %v2429 = vld [vmem:[%s412 + $0x1c] sm:$0xf]
      %v2430 = vld [vmem:[%s412 + $0x20] sm:$0xf]
      %v2431 = vld [vmem:[%s412 + $0x24] sm:$0xf]
      %v2432 = vld [vmem:[%s412 + $0x28] sm:$0xf]
      %v2433 = vld [vmem:[%s412 + $0x2c] sm:$0x1]
      %s2434 = scalar_lea.vmem %s3, 48
      %v2435 = vld [vmem:[%s2434] sm:$0xf]
      %v2436 = vld [vmem:[%s2434 + $0x4] sm:$0xf]
      %v2437 = vld [vmem:[%s2434 + $0x8] sm:$0xf]
      %v2438 = vld [vmem:[%s2434 + $0xc] sm:$0xf]
      %v2450 = vunpack.c.l.b16 %v2423
      %v2451 = vunpack.c.l.b16 %v2424
      %v2452 = vunpack.c.l.b16 %v2425
      %v2453 = vunpack.c.l.b16 %v2426
      %v2454 = vunpack.c.l.b16 %v2427
      %v2455 = vunpack.c.l.b16 %v2428
      %v2456 = vunpack.c.l.b16 %v2429
      %v2457 = vunpack.c.l.b16 %v2430
      %v2458 = vunpack.c.l.b16 %v2431
      %v2459 = vunpack.c.l.b16 %v2432
      %v2460 = vunpack.c.l.b16 %v2433
      %v2461 = vpack.c.b16 %v2451, %v2450
      %v2462 = vpack.c.b16 %v2453, %v2452
      %v2463 = vpack.c.b16 %v2455, %v2454
      %v2464 = vpack.c.b16 %v2457, %v2456
      %v2465 = vpack.c.b16 %v2459, %v2458
      %v2466 = vpack.c.b16 %v2460, %v2460
      %v2467 = vrot.slane %v2461, 1
      %v2468 = vrot.slane %v2462, 1
      %v2469 = vsel %vm1526, %v2467, %v2468
      %v2470 = vrot.slane %v2463, 1
      %v2471 = vsel %vm1526, %v2468, %v2470
      %v2472 = vrot.slane %v2464, 1
      %v2473 = vsel %vm1526, %v2470, %v2472
      %v2474 = vrot.slane %v2465, 1
      %v2475 = vsel %vm1526, %v2472, %v2474
      %v2476 = vrot.slane %v2466, 1
      %v2477 = vsel %vm1526, %v2474, %v2476
      %v2482 = vunpack.c.l.b16 %v2435
      %v2483 = vunpack.c.l.b16 %v2436
      %v2484 = vunpack.c.l.b16 %v2437
      %v2485 = vunpack.c.l.b16 %v2438
      %v2486 = vpack.c.b16 %v2483, %v2482
      %v2487 = vpack.c.b16 %v2485, %v2484
      %v2491 = vsel %vm1304, %v2469, 0
      %v2494 = vsel %vm1304, %v2471, 0
      %v2497 = vsel %vm1304, %v2473, 0
      %v2500 = vsel %vm1304, %v2475, 0
      %v2503 = vsel %vm1304, %v2477, 0
      %2505 = vmatprep.subr.bf16.mxu0 0
      %2506 = vmatpush1.bf16.msra.mxu0 0
      %2507 = vmatprep.subr.bf16.mxu0 0
      %2508 = vmatpush1.bf16.msra.mxu0 0
      %2509 = vmatprep.subr.bf16.mxu0 0
      %2510 = vmatpush1.bf16.msra.mxu0 0
      %2511 = vmatprep.subr.bf16.mxu0 0
      %2512 = vmatpush1.bf16.msra.mxu0 0
      %2513 = vmatprep.subr.bf16.mxu0 0
      %2514 = vmatpush1.bf16.msra.mxu0 0
      %2515 = vmatprep.subr.bf16.mxu0 0
      %2516 = vmatpush1.bf16.msra.mxu0 0
      %2517 = vmatprep.subr.bf16.mxu0 0
      %2518 = vmatpush1.bf16.msra.mxu0 %v2487
      %2519 = vmatprep.subr.bf16.mxu0 0
      %2520 = vmatpush1.bf16.msra.mxu0 %v2486
      %2521 = vmatprep.subr.bf16.mxu0 0
      %2522 = vmatpush2.bf16.msra.mxu0 0
      %2523 = vmatprep.subr.bf16.mxu0 0
      %2524 = vmatpush2.bf16.msra.mxu0 0
      %2525 = vmatprep.subr.bf16.mxu0 0
      %2526 = vmatpush2.bf16.msra.mxu0 0
      %2527 = vmatprep.subr.bf16.mxu0 0
      %2528 = vmatpush2.bf16.msra.mxu0 0
      %2529 = vmatprep.subr.bf16.mxu0 0
      %2530 = vmatpush2.bf16.msra.mxu0 0
      %2531 = vmatprep.subr.bf16.mxu0 0
      %2532 = vmatpush2.bf16.msra.mxu0 0
      %2533 = vmatprep.subr.bf16.mxu0 0
      %2534 = vmatpush2.bf16.msra.mxu0 0
      %2535 = vmatprep.subr.bf16.mxu0 0
      %2536 = vmatpush2.bf16.msra.mxu0 0
      %2537 = vmatprep.mubr.bf16.mxu0 0
      %2538 = vmatmul.mubr.bf16.gmra.mxu0 %v2491
      %v2539 = vpop.f32.mrf.mxu0
      %v2540 = vadd.f32 0.0, %v2539
      %v2541 = vpop.f32.mrf.mxu0
      %v2542 = vpop.f32.mrf.mxu0
      %v2543 = vadd.f32 0.0, %v2542
      %v2544 = vpop.f32.mrf.mxu0
      %2545 = vmatprep.mubr.bf16.mxu0 0
      %2546 = vmatmul.mubr.bf16.gmra.mxu0 %v2494
      %v2547 = vpop.f32.mrf.mxu0
      %v2548 = vadd.f32 0.0, %v2547
      %v2549 = vpop.f32.mrf.mxu0
      %v2550 = vpop.f32.mrf.mxu0
      %v2551 = vadd.f32 0.0, %v2550
      %v2552 = vpop.f32.mrf.mxu0
      %2553 = vmatprep.mubr.bf16.mxu0 0
      %2554 = vmatmul.mubr.bf16.gmra.mxu0 %v2497
      %v2555 = vpop.f32.mrf.mxu0
      %v2556 = vadd.f32 0.0, %v2555
      %v2557 = vpop.f32.mrf.mxu0
      %v2558 = vpop.f32.mrf.mxu0
      %v2559 = vadd.f32 0.0, %v2558
      %v2560 = vpop.f32.mrf.mxu0
      %2561 = vmatprep.mubr.bf16.mxu0 0
      %2562 = vmatmul.mubr.bf16.gmra.mxu0 %v2500
      %v2563 = vpop.f32.mrf.mxu0
      %v2564 = vadd.f32 0.0, %v2563
      %v2565 = vpop.f32.mrf.mxu0
      %v2566 = vpop.f32.mrf.mxu0
      %v2567 = vadd.f32 0.0, %v2566
      %v2568 = vpop.f32.mrf.mxu0
      %2569 = vmatprep.mubr.bf16.mxu0 0
      %2570 = vmatmul.mubr.bf16.gmra.mxu0 %v2503
      %v2571 = vpop.f32.mrf.mxu0
      %v2572 = vadd.f32 0.0, %v2571
      %v2573 = vpop.f32.mrf.mxu0
      %v2574 = vpop.f32.mrf.mxu0
      %v2575 = vadd.f32 0.0, %v2574
      %v2576 = vpop.f32.mrf.mxu0
      %2577 = vdwg.mxu0
      %v2578 = vadd.f32 %v1963, %v2540
      %v2579 = vadd.f32 %v1964, %v2543
      %v2580 = vadd.f32 %v1965, %v2548
      %v2581 = vadd.f32 %v1966, %v2551
      %v2582 = vadd.f32 %v1967, %v2556
      %v2583 = vadd.f32 %v1968, %v2559
      %v2584 = vadd.f32 %v1969, %v2564
      %v2585 = vadd.f32 %v1970, %v2567
      %v2586 = vadd.f32 %v1971, %v2572
      %v2587 = vadd.f32 %v1972, %v2575
      %v2588 = vld [vmem:[%s407 + $0x98] sm:$0x3]
      %s2589 = scalar_lea.vmem %s2, 48
      %v2590 = vld [vmem:[%s2589] sm:$0xf]
      %v2591 = vld [vmem:[%s2589 + $0x4] sm:$0xf]
      %v2592 = vld [vmem:[%s2589 + $0x8] sm:$0xf]
      %v2594 = vunpack.c.l.b16 %v2588
      %v2595 = vpack.c.b16 %v2594, %v2594
      %vm2596 = vsmask.f32 6400
      %v2598 = vshrl.u32 %v2088, 16
      %v2600 = vrot.slane %v2598, 1
      %v2601 = vshll.u32 %v2088, 16
      %v2603 = vrot.slane %v2601, 2
      %v2604 = vor.u32 %v2600, %v2603
      %v2606 = vshrl.u32 %v2089, 16
      %v2608 = vrot.slane %v2606, 1
      %v2609 = vshll.u32 %v2089, 16
      %v2611 = vrot.slane %v2609, 2
      %v2612 = vor.u32 %v2608, %v2611
      %v2613 = vsel %vm2596, %v2604, %v2612
      %v2615 = vshrl.u32 %v2090, 16
      %v2617 = vrot.slane %v2615, 1
      %v2618 = vshll.u32 %v2090, 16
      %v2620 = vrot.slane %v2618, 2
      %v2621 = vor.u32 %v2617, %v2620
      %v2622 = vsel %vm2596, %v2612, %v2621
      %v2624 = vshrl.u32 %v2091, 16
      %v2626 = vrot.slane %v2624, 1
      %v2627 = vshll.u32 %v2091, 16
      %v2629 = vrot.slane %v2627, 2
      %v2630 = vor.u32 %v2626, %v2629
      %v2631 = vsel %vm2596, %v2621, %v2630
      %v2633 = vshrl.u32 %v2092, 16
      %v2635 = vrot.slane %v2633, 1
      %v2636 = vshll.u32 %v2092, 16
      %v2638 = vrot.slane %v2636, 2
      %v2639 = vor.u32 %v2635, %v2638
      %v2640 = vsel %vm2596, %v2630, %v2639
      %v2642 = vshrl.u32 %v2093, 16
      %v2644 = vrot.slane %v2642, 1
      %v2645 = vshll.u32 %v2093, 16
      %v2647 = vrot.slane %v2645, 2
      %v2648 = vor.u32 %v2644, %v2647
      %v2649 = vsel %vm2596, %v2639, %v2648
      %v2651 = vshrl.u32 %v2094, 16
      %v2653 = vrot.slane %v2651, 1
      %v2654 = vshll.u32 %v2094, 16
      %v2656 = vrot.slane %v2654, 2
      %v2657 = vor.u32 %v2653, %v2656
      %v2658 = vsel %vm2596, %v2648, %v2657
      %v2660 = vshrl.u32 %v2095, 16
      %v2662 = vrot.slane %v2660, 1
      %v2663 = vshll.u32 %v2095, 16
      %v2665 = vrot.slane %v2663, 2
      %v2666 = vor.u32 %v2662, %v2665
      %v2667 = vsel %vm2596, %v2657, %v2666
      %v2669 = vshrl.u32 %v2096, 16
      %v2671 = vrot.slane %v2669, 1
      %v2672 = vshll.u32 %v2096, 16
      %v2674 = vrot.slane %v2672, 2
      %v2675 = vor.u32 %v2671, %v2674
      %v2676 = vsel %vm2596, %v2666, %v2675
      %v2678 = vshrl.u32 %v2097, 16
      %v2680 = vrot.slane %v2678, 1
      %v2681 = vshll.u32 %v2097, 16
      %v2683 = vrot.slane %v2681, 2
      %v2684 = vor.u32 %v2680, %v2683
      %v2685 = vsel %vm2596, %v2675, %v2684
      %v2687 = vshrl.u32 %v2098, 16
      %v2689 = vrot.slane %v2687, 1
      %v2690 = vshll.u32 %v2098, 16
      %v2692 = vrot.slane %v2690, 2
      %v2693 = vor.u32 %v2689, %v2692
      %v2694 = vsel %vm2596, %v2684, %v2693
      %v2696 = vshrl.u32 %v2099, 16
      %v2698 = vrot.slane %v2696, 1
      %v2699 = vshll.u32 %v2099, 16
      %v2701 = vrot.slane %v2699, 2
      %v2702 = vor.u32 %v2698, %v2701
      %v2703 = vsel %vm2596, %v2693, %v2702
      %v2705 = vshrl.u32 %v2100, 16
      %v2707 = vrot.slane %v2705, 1
      %v2708 = vshll.u32 %v2100, 16
      %v2710 = vrot.slane %v2708, 2
      %v2711 = vor.u32 %v2707, %v2710
      %v2712 = vsel %vm2596, %v2702, %v2711
      %v2714 = vshrl.u32 %v2101, 16
      %v2716 = vrot.slane %v2714, 1
      %v2717 = vshll.u32 %v2101, 16
      %v2719 = vrot.slane %v2717, 2
      %v2720 = vor.u32 %v2716, %v2719
      %v2721 = vsel %vm2596, %v2711, %v2720
      %v2723 = vshrl.u32 %v2102, 16
      %v2725 = vrot.slane %v2723, 1
      %v2726 = vshll.u32 %v2102, 16
      %v2728 = vrot.slane %v2726, 2
      %v2729 = vor.u32 %v2725, %v2728
      %v2730 = vsel %vm2596, %v2720, %v2729
      %v2732 = vshrl.u32 %v2103, 16
      %v2734 = vrot.slane %v2732, 1
      %v2735 = vshll.u32 %v2103, 16
      %v2737 = vrot.slane %v2735, 2
      %v2738 = vor.u32 %v2734, %v2737
      %v2739 = vsel %vm2596, %v2729, %v2738
      %v2741 = vshrl.u32 %v2104, 16
      %v2743 = vrot.slane %v2741, 1
      %v2744 = vshll.u32 %v2104, 16
      %v2746 = vrot.slane %v2744, 2
      %v2747 = vor.u32 %v2743, %v2746
      %v2748 = vsel %vm2596, %v2738, %v2747
      %v2750 = vshrl.u32 %v2105, 16
      %v2752 = vrot.slane %v2750, 1
      %v2753 = vshll.u32 %v2105, 16
      %v2755 = vrot.slane %v2753, 2
      %v2756 = vor.u32 %v2752, %v2755
      %v2757 = vsel %vm2596, %v2747, %v2756
      %v2759 = vshrl.u32 %v2595, 16
      %v2761 = vrot.slane %v2759, 1
      %v2762 = vshll.u32 %v2595, 16
      %v2764 = vrot.slane %v2762, 2
      %v2765 = vor.u32 %v2761, %v2764
      %v2766 = vsel %vm2596, %v2756, %v2765
      %v2770 = vunpack.c.l.b16 %v2590
      %v2771 = vunpack.c.l.b16 %v2591
      %v2772 = vunpack.c.l.b16 %v2592
      %v2773 = vpack.c.b16 %v2771, %v2770
      %v2774 = vpack.c.b16 %v2772, %v2772
      %v2777 = vsel %vm743, %v2613, 0
      %v2780 = vsel %vm743, %v2622, 0
      %v2783 = vsel %vm743, %v2631, 0
      %v2786 = vsel %vm743, %v2640, 0
      %v2789 = vsel %vm743, %v2649, 0
      %v2792 = vsel %vm743, %v2658, 0
      %v2795 = vsel %vm743, %v2667, 0
      %v2798 = vsel %vm743, %v2676, 0
      %v2801 = vsel %vm743, %v2685, 0
      %v2804 = vsel %vm743, %v2694, 0
      %v2807 = vsel %vm743, %v2703, 0
      %v2810 = vsel %vm743, %v2712, 0
      %v2813 = vsel %vm743, %v2721, 0
      %v2816 = vsel %vm743, %v2730, 0
      %v2819 = vsel %vm743, %v2739, 0
      %v2822 = vsel %vm743, %v2748, 0
      %v2825 = vsel %vm743, %v2757, 0
      %v2828 = vsel %vm743, %v2766, 0
      %v2831 = vsel %vm798, %v2774, 0
      %2833 = vmatprep.subr.bf16.mxu0 0
      %2834 = vmatpush1.bf16.msra.mxu0 0
      %2835 = vmatprep.subr.bf16.mxu0 0
      %2836 = vmatpush1.bf16.msra.mxu0 0
      %2837 = vmatprep.subr.bf16.mxu0 0
      %2838 = vmatpush1.bf16.msra.mxu0 0
      %2839 = vmatprep.subr.bf16.mxu0 0
      %2840 = vmatpush1.bf16.msra.mxu0 0
      %2841 = vmatprep.subr.bf16.mxu0 0
      %2842 = vmatpush1.bf16.msra.mxu0 0
      %2843 = vmatprep.subr.bf16.mxu0 0
      %2844 = vmatpush1.bf16.msra.mxu0 0
      %2845 = vmatprep.subr.bf16.mxu0 0
      %2846 = vmatpush1.bf16.msra.mxu0 %v2831
      %2847 = vmatprep.subr.bf16.mxu0 0
      %2848 = vmatpush1.bf16.msra.mxu0 %v2773
      %2849 = vmatprep.subr.bf16.mxu0 0
      %2850 = vmatpush2.bf16.msra.mxu0 0
      %2851 = vmatprep.subr.bf16.mxu0 0
      %2852 = vmatpush2.bf16.msra.mxu0 0
      %2853 = vmatprep.subr.bf16.mxu0 0
      %2854 = vmatpush2.bf16.msra.mxu0 0
      %2855 = vmatprep.subr.bf16.mxu0 0
      %2856 = vmatpush2.bf16.msra.mxu0 0
      %2857 = vmatprep.subr.bf16.mxu0 0
      %2858 = vmatpush2.bf16.msra.mxu0 0
      %2859 = vmatprep.subr.bf16.mxu0 0
      %2860 = vmatpush2.bf16.msra.mxu0 0
      %2861 = vmatprep.subr.bf16.mxu0 0
      %2862 = vmatpush2.bf16.msra.mxu0 0
      %2863 = vmatprep.subr.bf16.mxu0 0
      %2864 = vmatpush2.bf16.msra.mxu0 0
      %2865 = vmatprep.mubr.bf16.mxu0 0
      %2866 = vmatmul.mubr.bf16.gmra.mxu0 %v2777
      %v2867 = vpop.f32.mrf.mxu0
      %v2868 = vadd.f32 0.0, %v2867
      %v2869 = vpop.f32.mrf.mxu0
      %v2870 = vpop.f32.mrf.mxu0
      %v2871 = vadd.f32 0.0, %v2870
      %v2872 = vpop.f32.mrf.mxu0
      %2873 = vmatprep.mubr.bf16.mxu0 0
      %2874 = vmatmul.mubr.bf16.gmra.mxu0 %v2780
      %v2875 = vpop.f32.mrf.mxu0
      %v2876 = vadd.f32 0.0, %v2875
      %v2877 = vpop.f32.mrf.mxu0
      %v2878 = vpop.f32.mrf.mxu0
      %v2879 = vadd.f32 0.0, %v2878
      %v2880 = vpop.f32.mrf.mxu0
      %2881 = vmatprep.mubr.bf16.mxu0 0
      %2882 = vmatmul.mubr.bf16.gmra.mxu0 %v2783
      %v2883 = vpop.f32.mrf.mxu0
      %v2884 = vadd.f32 0.0, %v2883
      %v2885 = vpop.f32.mrf.mxu0
      %v2886 = vpop.f32.mrf.mxu0
      %v2887 = vadd.f32 0.0, %v2886
      %v2888 = vpop.f32.mrf.mxu0
      %2889 = vmatprep.mubr.bf16.mxu0 0
      %2890 = vmatmul.mubr.bf16.gmra.mxu0 %v2786
      %v2891 = vpop.f32.mrf.mxu0
      %v2892 = vadd.f32 0.0, %v2891
      %v2893 = vpop.f32.mrf.mxu0
      %v2894 = vpop.f32.mrf.mxu0
      %v2895 = vadd.f32 0.0, %v2894
      %v2896 = vpop.f32.mrf.mxu0
      %2897 = vmatprep.mubr.bf16.mxu0 0
      %2898 = vmatmul.mubr.bf16.gmra.mxu0 %v2789
      %v2899 = vpop.f32.mrf.mxu0
      %v2900 = vadd.f32 0.0, %v2899
      %v2901 = vpop.f32.mrf.mxu0
      %v2902 = vpop.f32.mrf.mxu0
      %v2903 = vadd.f32 0.0, %v2902
      %v2904 = vpop.f32.mrf.mxu0
      %2905 = vmatprep.mubr.bf16.mxu0 0
      %2906 = vmatmul.mubr.bf16.gmra.mxu0 %v2792
      %v2907 = vpop.f32.mrf.mxu0
      %v2908 = vadd.f32 0.0, %v2907
      %v2909 = vpop.f32.mrf.mxu0
      %v2910 = vpop.f32.mrf.mxu0
      %v2911 = vadd.f32 0.0, %v2910
      %v2912 = vpop.f32.mrf.mxu0
      %2913 = vmatprep.mubr.bf16.mxu0 0
      %2914 = vmatmul.mubr.bf16.gmra.mxu0 %v2795
      %v2915 = vpop.f32.mrf.mxu0
      %v2916 = vadd.f32 0.0, %v2915
      %v2917 = vpop.f32.mrf.mxu0
      %v2918 = vpop.f32.mrf.mxu0
      %v2919 = vadd.f32 0.0, %v2918
      %v2920 = vpop.f32.mrf.mxu0
      %2921 = vmatprep.mubr.bf16.mxu0 0
      %2922 = vmatmul.mubr.bf16.gmra.mxu0 %v2798
      %v2923 = vpop.f32.mrf.mxu0
      %v2924 = vadd.f32 0.0, %v2923
      %v2925 = vpop.f32.mrf.mxu0
      %v2926 = vpop.f32.mrf.mxu0
      %v2927 = vadd.f32 0.0, %v2926
      %v2928 = vpop.f32.mrf.mxu0
      %2929 = vmatprep.mubr.bf16.mxu0 0
      %2930 = vmatmul.mubr.bf16.gmra.mxu0 %v2801
      %v2931 = vpop.f32.mrf.mxu0
      %v2932 = vadd.f32 0.0, %v2931
      %v2933 = vpop.f32.mrf.mxu0
      %v2934 = vpop.f32.mrf.mxu0
      %v2935 = vadd.f32 0.0, %v2934
      %v2936 = vpop.f32.mrf.mxu0
      %2937 = vmatprep.mubr.bf16.mxu0 0
      %2938 = vmatmul.mubr.bf16.gmra.mxu0 %v2804
      %v2939 = vpop.f32.mrf.mxu0
      %v2940 = vadd.f32 0.0, %v2939
      %v2941 = vpop.f32.mrf.mxu0
      %v2942 = vpop.f32.mrf.mxu0
      %v2943 = vadd.f32 0.0, %v2942
      %v2944 = vpop.f32.mrf.mxu0
      %2945 = vmatprep.mubr.bf16.mxu0 0
      %2946 = vmatmul.mubr.bf16.gmra.mxu0 %v2807
      %v2947 = vpop.f32.mrf.mxu0
      %v2948 = vadd.f32 0.0, %v2947
      %v2949 = vpop.f32.mrf.mxu0
      %v2950 = vpop.f32.mrf.mxu0
      %v2951 = vadd.f32 0.0, %v2950
      %v2952 = vpop.f32.mrf.mxu0
      %2953 = vmatprep.mubr.bf16.mxu0 0
      %2954 = vmatmul.mubr.bf16.gmra.mxu0 %v2810
      %v2955 = vpop.f32.mrf.mxu0
      %v2956 = vadd.f32 0.0, %v2955
      %v2957 = vpop.f32.mrf.mxu0
      %v2958 = vpop.f32.mrf.mxu0
      %v2959 = vadd.f32 0.0, %v2958
      %v2960 = vpop.f32.mrf.mxu0
      %2961 = vmatprep.mubr.bf16.mxu0 0
      %2962 = vmatmul.mubr.bf16.gmra.mxu0 %v2813
      %v2963 = vpop.f32.mrf.mxu0
      %v2964 = vadd.f32 0.0, %v2963
      %v2965 = vpop.f32.mrf.mxu0
      %v2966 = vpop.f32.mrf.mxu0
      %v2967 = vadd.f32 0.0, %v2966
      %v2968 = vpop.f32.mrf.mxu0
      %2969 = vmatprep.mubr.bf16.mxu0 0
      %2970 = vmatmul.mubr.bf16.gmra.mxu0 %v2816
      %v2971 = vpop.f32.mrf.mxu0
      %v2972 = vadd.f32 0.0, %v2971
      %v2973 = vpop.f32.mrf.mxu0
      %v2974 = vpop.f32.mrf.mxu0
      %v2975 = vadd.f32 0.0, %v2974
      %v2976 = vpop.f32.mrf.mxu0
      %2977 = vmatprep.mubr.bf16.mxu0 0
      %2978 = vmatmul.mubr.bf16.gmra.mxu0 %v2819
      %v2979 = vpop.f32.mrf.mxu0
      %v2980 = vadd.f32 0.0, %v2979
      %v2981 = vpop.f32.mrf.mxu0
      %v2982 = vpop.f32.mrf.mxu0
      %v2983 = vadd.f32 0.0, %v2982
      %v2984 = vpop.f32.mrf.mxu0
      %2985 = vmatprep.mubr.bf16.mxu0 0
      %2986 = vmatmul.mubr.bf16.gmra.mxu0 %v2822
      %v2987 = vpop.f32.mrf.mxu0
      %v2988 = vadd.f32 0.0, %v2987
      %v2989 = vpop.f32.mrf.mxu0
      %v2990 = vpop.f32.mrf.mxu0
      %v2991 = vadd.f32 0.0, %v2990
      %v2992 = vpop.f32.mrf.mxu0
      %2993 = vmatprep.mubr.bf16.mxu0 0
      %2994 = vmatmul.mubr.bf16.gmra.mxu0 %v2825
      %v2995 = vpop.f32.mrf.mxu0
      %v2996 = vadd.f32 0.0, %v2995
      %v2997 = vpop.f32.mrf.mxu0
      %v2998 = vpop.f32.mrf.mxu0
      %v2999 = vadd.f32 0.0, %v2998
      %v3000 = vpop.f32.mrf.mxu0
      %3001 = vmatprep.mubr.bf16.mxu0 0
      %3002 = vmatmul.mubr.bf16.gmra.mxu0 %v2828
      %v3003 = vpop.f32.mrf.mxu0
      %v3004 = vadd.f32 0.0, %v3003
      %v3005 = vpop.f32.mrf.mxu0
      %v3006 = vpop.f32.mrf.mxu0
      %v3007 = vadd.f32 0.0, %v3006
      %v3008 = vpop.f32.mrf.mxu0
      %3009 = vdwg.mxu0
      %v3010 = vadd.f32 %v2387, %v2868
      %v3011 = vadd.f32 %v2388, %v2871
      %v3012 = vadd.f32 %v2389, %v2876
      %v3013 = vadd.f32 %v2390, %v2879
      %v3014 = vadd.f32 %v2391, %v2884
      %v3015 = vadd.f32 %v2392, %v2887
      %v3016 = vadd.f32 %v2393, %v2892
      %v3017 = vadd.f32 %v2394, %v2895
      %v3018 = vadd.f32 %v2395, %v2900
      %v3019 = vadd.f32 %v2396, %v2903
      %v3020 = vadd.f32 %v2397, %v2908
      %v3021 = vadd.f32 %v2398, %v2911
      %v3022 = vadd.f32 %v2399, %v2916
      %v3023 = vadd.f32 %v2400, %v2919
      %v3024 = vadd.f32 %v2401, %v2924
      %v3025 = vadd.f32 %v2402, %v2927
      %v3026 = vadd.f32 %v2403, %v2932
      %v3027 = vadd.f32 %v2404, %v2935
      %v3028 = vadd.f32 %v2405, %v2940
      %v3029 = vadd.f32 %v2406, %v2943
      %v3030 = vadd.f32 %v2407, %v2948
      %v3031 = vadd.f32 %v2408, %v2951
      %v3032 = vadd.f32 %v2409, %v2956
      %v3033 = vadd.f32 %v2410, %v2959
      %v3034 = vadd.f32 %v2411, %v2964
      %v3035 = vadd.f32 %v2412, %v2967
      %v3036 = vadd.f32 %v2413, %v2972
      %v3037 = vadd.f32 %v2414, %v2975
      %v3038 = vadd.f32 %v2415, %v2980
      %v3039 = vadd.f32 %v2416, %v2983
      %v3040 = vadd.f32 %v2417, %v2988
      %v3041 = vadd.f32 %v2418, %v2991
      %v3042 = vadd.f32 %v2419, %v2996
      %v3043 = vadd.f32 %v2420, %v2999
      %v3044 = vadd.f32 %v2421, %v3004
      %v3045 = vadd.f32 %v2422, %v3007
      %v3046 = vld [vmem:[%s412 + $0x2c] sm:$0x3]
      %s3047 = scalar_lea.vmem %s3, 64
      %v3048 = vld [vmem:[%s3047] sm:$0xf]
      %v3049 = vld [vmem:[%s3047 + $0x4] sm:$0xf]
      %v3050 = vld [vmem:[%s3047 + $0x8] sm:$0xf]
      %v3051 = vld [vmem:[%s3047 + $0xc] sm:$0xf]
      %v3053 = vunpack.c.l.b16 %v3046
      %v3054 = vpack.c.b16 %v3053, %v3053
      %v3056 = vshrl.u32 %v2461, 16
      %v3058 = vrot.slane %v3056, 1
      %v3059 = vshll.u32 %v2461, 16
      %v3061 = vrot.slane %v3059, 2
      %v3062 = vor.u32 %v3058, %v3061
      %v3064 = vshrl.u32 %v2462, 16
      %v3066 = vrot.slane %v3064, 1
      %v3067 = vshll.u32 %v2462, 16
      %v3069 = vrot.slane %v3067, 2
      %v3070 = vor.u32 %v3066, %v3069
      %v3071 = vsel %vm2596, %v3062, %v3070
      %v3073 = vshrl.u32 %v2463, 16
      %v3075 = vrot.slane %v3073, 1
      %v3076 = vshll.u32 %v2463, 16
      %v3078 = vrot.slane %v3076, 2
      %v3079 = vor.u32 %v3075, %v3078
      %v3080 = vsel %vm2596, %v3070, %v3079
      %v3082 = vshrl.u32 %v2464, 16
      %v3084 = vrot.slane %v3082, 1
      %v3085 = vshll.u32 %v2464, 16
      %v3087 = vrot.slane %v3085, 2
      %v3088 = vor.u32 %v3084, %v3087
      %v3089 = vsel %vm2596, %v3079, %v3088
      %v3091 = vshrl.u32 %v2465, 16
      %v3093 = vrot.slane %v3091, 1
      %v3094 = vshll.u32 %v2465, 16
      %v3096 = vrot.slane %v3094, 2
      %v3097 = vor.u32 %v3093, %v3096
      %v3098 = vsel %vm2596, %v3088, %v3097
      %v3100 = vshrl.u32 %v3054, 16
      %v3102 = vrot.slane %v3100, 1
      %v3103 = vshll.u32 %v3054, 16
      %v3105 = vrot.slane %v3103, 2
      %v3106 = vor.u32 %v3102, %v3105
      %v3107 = vsel %vm2596, %v3097, %v3106
      %v3112 = vunpack.c.l.b16 %v3048
      %v3113 = vunpack.c.l.b16 %v3049
      %v3114 = vunpack.c.l.b16 %v3050
      %v3115 = vunpack.c.l.b16 %v3051
      %v3116 = vpack.c.b16 %v3113, %v3112
      %v3117 = vpack.c.b16 %v3115, %v3114
      %v3121 = vsel %vm1304, %v3071, 0
      %v3124 = vsel %vm1304, %v3080, 0
      %v3127 = vsel %vm1304, %v3089, 0
      %v3130 = vsel %vm1304, %v3098, 0
      %v3133 = vsel %vm1304, %v3107, 0
      %3135 = vmatprep.subr.bf16.mxu0 0
      %3136 = vmatpush1.bf16.msra.mxu0 0
      %3137 = vmatprep.subr.bf16.mxu0 0
      %3138 = vmatpush1.bf16.msra.mxu0 0
      %3139 = vmatprep.subr.bf16.mxu0 0
      %3140 = vmatpush1.bf16.msra.mxu0 0
      %3141 = vmatprep.subr.bf16.mxu0 0
      %3142 = vmatpush1.bf16.msra.mxu0 0
      %3143 = vmatprep.subr.bf16.mxu0 0
      %3144 = vmatpush1.bf16.msra.mxu0 0
      %3145 = vmatprep.subr.bf16.mxu0 0
      %3146 = vmatpush1.bf16.msra.mxu0 0
      %3147 = vmatprep.subr.bf16.mxu0 0
      %3148 = vmatpush1.bf16.msra.mxu0 %v3117
      %3149 = vmatprep.subr.bf16.mxu0 0
      %3150 = vmatpush1.bf16.msra.mxu0 %v3116
      %3151 = vmatprep.subr.bf16.mxu0 0
      %3152 = vmatpush2.bf16.msra.mxu0 0
      %3153 = vmatprep.subr.bf16.mxu0 0
      %3154 = vmatpush2.bf16.msra.mxu0 0
      %3155 = vmatprep.subr.bf16.mxu0 0
      %3156 = vmatpush2.bf16.msra.mxu0 0
      %3157 = vmatprep.subr.bf16.mxu0 0
      %3158 = vmatpush2.bf16.msra.mxu0 0
      %3159 = vmatprep.subr.bf16.mxu0 0
      %3160 = vmatpush2.bf16.msra.mxu0 0
      %3161 = vmatprep.subr.bf16.mxu0 0
      %3162 = vmatpush2.bf16.msra.mxu0 0
      %3163 = vmatprep.subr.bf16.mxu0 0
      %3164 = vmatpush2.bf16.msra.mxu0 0
      %3165 = vmatprep.subr.bf16.mxu0 0
      %3166 = vmatpush2.bf16.msra.mxu0 0
      %3167 = vmatprep.mubr.bf16.mxu0 0
      %3168 = vmatmul.mubr.bf16.gmra.mxu0 %v3121
      %v3169 = vpop.f32.mrf.mxu0
      %v3170 = vadd.f32 0.0, %v3169
      %v3171 = vpop.f32.mrf.mxu0
      %v3172 = vpop.f32.mrf.mxu0
      %v3173 = vadd.f32 0.0, %v3172
      %v3174 = vpop.f32.mrf.mxu0
      %3175 = vmatprep.mubr.bf16.mxu0 0
      %3176 = vmatmul.mubr.bf16.gmra.mxu0 %v3124
      %v3177 = vpop.f32.mrf.mxu0
      %v3178 = vadd.f32 0.0, %v3177
      %v3179 = vpop.f32.mrf.mxu0
      %v3180 = vpop.f32.mrf.mxu0
      %v3181 = vadd.f32 0.0, %v3180
      %v3182 = vpop.f32.mrf.mxu0
      %3183 = vmatprep.mubr.bf16.mxu0 0
      %3184 = vmatmul.mubr.bf16.gmra.mxu0 %v3127
      %v3185 = vpop.f32.mrf.mxu0
      %v3186 = vadd.f32 0.0, %v3185
      %v3187 = vpop.f32.mrf.mxu0
      %v3188 = vpop.f32.mrf.mxu0
      %v3189 = vadd.f32 0.0, %v3188
      %v3190 = vpop.f32.mrf.mxu0
      %3191 = vmatprep.mubr.bf16.mxu0 0
      %3192 = vmatmul.mubr.bf16.gmra.mxu0 %v3130
      %v3193 = vpop.f32.mrf.mxu0
      %v3194 = vadd.f32 0.0, %v3193
      %v3195 = vpop.f32.mrf.mxu0
      %v3196 = vpop.f32.mrf.mxu0
      %v3197 = vadd.f32 0.0, %v3196
      %v3198 = vpop.f32.mrf.mxu0
      %3199 = vmatprep.mubr.bf16.mxu0 0
      %3200 = vmatmul.mubr.bf16.gmra.mxu0 %v3133
      %v3201 = vpop.f32.mrf.mxu0
      %v3202 = vadd.f32 0.0, %v3201
      %v3203 = vpop.f32.mrf.mxu0
      %v3204 = vpop.f32.mrf.mxu0
      %v3205 = vadd.f32 0.0, %v3204
      %v3206 = vpop.f32.mrf.mxu0
      %3207 = vdwg.mxu0
      %v3208 = vadd.f32 %v2578, %v3170
      %v3209 = vadd.f32 %v2579, %v3173
      %v3210 = vadd.f32 %v2580, %v3178
      %v3211 = vadd.f32 %v2581, %v3181
      %v3212 = vadd.f32 %v2582, %v3186
      %v3213 = vadd.f32 %v2583, %v3189
      %v3214 = vadd.f32 %v2584, %v3194
      %v3215 = vadd.f32 %v2585, %v3197
      %v3216 = vadd.f32 %v2586, %v3202
      %v3217 = vadd.f32 %v2587, %v3205
      %v3218 = vld [vmem:[%s407 + $0x8] sm:$0xc]
      %s3219 = scalar_lea.vmem %s2, 60
      %v3220 = vld [vmem:[%s3219] sm:$0xf]
      %v3221 = vld [vmem:[%s3219 + $0x4] sm:$0xf]
      %v3222 = vld [vmem:[%s3219 + $0x8] sm:$0xf]
      %v3224 = vunpack.c.l.b16 %v3218
      %v3225 = vpack.c.b16 %v2052, %v3224
      %vm3226 = vcmask 1045504
      %v3227 = vrot.slane %v3225, 2
      %v3228 = vrot.slane %v2089, 2
      %v3229 = vsel %vm3226, %v3227, %v3228
      %v3230 = vrot.slane %v2090, 2
      %v3231 = vsel %vm3226, %v3228, %v3230
      %v3232 = vrot.slane %v2091, 2
      %v3233 = vsel %vm3226, %v3230, %v3232
      %v3234 = vrot.slane %v2092, 2
      %v3235 = vsel %vm3226, %v3232, %v3234
      %v3236 = vrot.slane %v2093, 2
      %v3237 = vsel %vm3226, %v3234, %v3236
      %v3238 = vrot.slane %v2094, 2
      %v3239 = vsel %vm3226, %v3236, %v3238
      %v3240 = vrot.slane %v2095, 2
      %v3241 = vsel %vm3226, %v3238, %v3240
      %v3242 = vrot.slane %v2096, 2
      %v3243 = vsel %vm3226, %v3240, %v3242
      %v3244 = vrot.slane %v2097, 2
      %v3245 = vsel %vm3226, %v3242, %v3244
      %v3246 = vrot.slane %v2098, 2
      %v3247 = vsel %vm3226, %v3244, %v3246
      %v3248 = vrot.slane %v2099, 2
      %v3249 = vsel %vm3226, %v3246, %v3248
      %v3250 = vrot.slane %v2100, 2
      %v3251 = vsel %vm3226, %v3248, %v3250
      %v3252 = vrot.slane %v2101, 2
      %v3253 = vsel %vm3226, %v3250, %v3252
      %v3254 = vrot.slane %v2102, 2
      %v3255 = vsel %vm3226, %v3252, %v3254
      %v3256 = vrot.slane %v2103, 2
      %v3257 = vsel %vm3226, %v3254, %v3256
      %v3258 = vrot.slane %v2104, 2
      %v3259 = vsel %vm3226, %v3256, %v3258
      %v3260 = vrot.slane %v2105, 2
      %v3261 = vsel %vm3226, %v3258, %v3260
      %v3262 = vrot.slane %v2595, 2
      %v3263 = vsel %vm3226, %v3260, %v3262
      %v3267 = vunpack.c.l.b16 %v3220
      %v3268 = vunpack.c.l.b16 %v3221
      %v3269 = vunpack.c.l.b16 %v3222
      %v3270 = vpack.c.b16 %v3268, %v3267
      %v3271 = vpack.c.b16 %v3269, %v3269
      %v3274 = vsel %vm743, %v3229, 0
      %v3277 = vsel %vm743, %v3231, 0
      %v3280 = vsel %vm743, %v3233, 0
      %v3283 = vsel %vm743, %v3235, 0
      %v3286 = vsel %vm743, %v3237, 0
      %v3289 = vsel %vm743, %v3239, 0
      %v3292 = vsel %vm743, %v3241, 0
      %v3295 = vsel %vm743, %v3243, 0
      %v3298 = vsel %vm743, %v3245, 0
      %v3301 = vsel %vm743, %v3247, 0
      %v3304 = vsel %vm743, %v3249, 0
      %v3307 = vsel %vm743, %v3251, 0
      %v3310 = vsel %vm743, %v3253, 0
      %v3313 = vsel %vm743, %v3255, 0
      %v3316 = vsel %vm743, %v3257, 0
      %v3319 = vsel %vm743, %v3259, 0
      %v3322 = vsel %vm743, %v3261, 0
      %v3325 = vsel %vm743, %v3263, 0
      %v3328 = vsel %vm798, %v3271, 0
      %3330 = vmatprep.subr.bf16.mxu0 0
      %3331 = vmatpush1.bf16.msra.mxu0 0
      %3332 = vmatprep.subr.bf16.mxu0 0
      %3333 = vmatpush1.bf16.msra.mxu0 0
      %3334 = vmatprep.subr.bf16.mxu0 0
      %3335 = vmatpush1.bf16.msra.mxu0 0
      %3336 = vmatprep.subr.bf16.mxu0 0
      %3337 = vmatpush1.bf16.msra.mxu0 0
      %3338 = vmatprep.subr.bf16.mxu0 0
      %3339 = vmatpush1.bf16.msra.mxu0 0
      %3340 = vmatprep.subr.bf16.mxu0 0
      %3341 = vmatpush1.bf16.msra.mxu0 0
      %3342 = vmatprep.subr.bf16.mxu0 0
      %3343 = vmatpush1.bf16.msra.mxu0 %v3328
      %3344 = vmatprep.subr.bf16.mxu0 0
      %3345 = vmatpush1.bf16.msra.mxu0 %v3270
      %3346 = vmatprep.subr.bf16.mxu0 0
      %3347 = vmatpush2.bf16.msra.mxu0 0
      %3348 = vmatprep.subr.bf16.mxu0 0
      %3349 = vmatpush2.bf16.msra.mxu0 0
      %3350 = vmatprep.subr.bf16.mxu0 0
      %3351 = vmatpush2.bf16.msra.mxu0 0
      %3352 = vmatprep.subr.bf16.mxu0 0
      %3353 = vmatpush2.bf16.msra.mxu0 0
      %3354 = vmatprep.subr.bf16.mxu0 0
      %3355 = vmatpush2.bf16.msra.mxu0 0
      %3356 = vmatprep.subr.bf16.mxu0 0
      %3357 = vmatpush2.bf16.msra.mxu0 0
      %3358 = vmatprep.subr.bf16.mxu0 0
      %3359 = vmatpush2.bf16.msra.mxu0 0
      %3360 = vmatprep.subr.bf16.mxu0 0
      %3361 = vmatpush2.bf16.msra.mxu0 0
      %3362 = vmatprep.mubr.bf16.mxu0 0
      %3363 = vmatmul.mubr.bf16.gmra.mxu0 %v3274
      %v3364 = vpop.f32.mrf.mxu0
      %v3365 = vadd.f32 0.0, %v3364
      %v3366 = vpop.f32.mrf.mxu0
      %v3367 = vpop.f32.mrf.mxu0
      %v3368 = vadd.f32 0.0, %v3367
      %v3369 = vpop.f32.mrf.mxu0
      %3370 = vmatprep.mubr.bf16.mxu0 0
      %3371 = vmatmul.mubr.bf16.gmra.mxu0 %v3277
      %v3372 = vpop.f32.mrf.mxu0
      %v3373 = vadd.f32 0.0, %v3372
      %v3374 = vpop.f32.mrf.mxu0
      %v3375 = vpop.f32.mrf.mxu0
      %v3376 = vadd.f32 0.0, %v3375
      %v3377 = vpop.f32.mrf.mxu0
      %3378 = vmatprep.mubr.bf16.mxu0 0
      %3379 = vmatmul.mubr.bf16.gmra.mxu0 %v3280
      %v3380 = vpop.f32.mrf.mxu0
      %v3381 = vadd.f32 0.0, %v3380
      %v3382 = vpop.f32.mrf.mxu0
      %v3383 = vpop.f32.mrf.mxu0
      %v3384 = vadd.f32 0.0, %v3383
      %v3385 = vpop.f32.mrf.mxu0
      %3386 = vmatprep.mubr.bf16.mxu0 0
      %3387 = vmatmul.mubr.bf16.gmra.mxu0 %v3283
      %v3388 = vpop.f32.mrf.mxu0
      %v3389 = vadd.f32 0.0, %v3388
      %v3390 = vpop.f32.mrf.mxu0
      %v3391 = vpop.f32.mrf.mxu0
      %v3392 = vadd.f32 0.0, %v3391
      %v3393 = vpop.f32.mrf.mxu0
      %3394 = vmatprep.mubr.bf16.mxu0 0
      %3395 = vmatmul.mubr.bf16.gmra.mxu0 %v3286
      %v3396 = vpop.f32.mrf.mxu0
      %v3397 = vadd.f32 0.0, %v3396
      %v3398 = vpop.f32.mrf.mxu0
      %v3399 = vpop.f32.mrf.mxu0
      %v3400 = vadd.f32 0.0, %v3399
      %v3401 = vpop.f32.mrf.mxu0
      %3402 = vmatprep.mubr.bf16.mxu0 0
      %3403 = vmatmul.mubr.bf16.gmra.mxu0 %v3289
      %v3404 = vpop.f32.mrf.mxu0
      %v3405 = vadd.f32 0.0, %v3404
      %v3406 = vpop.f32.mrf.mxu0
      %v3407 = vpop.f32.mrf.mxu0
      %v3408 = vadd.f32 0.0, %v3407
      %v3409 = vpop.f32.mrf.mxu0
      %3410 = vmatprep.mubr.bf16.mxu0 0
      %3411 = vmatmul.mubr.bf16.gmra.mxu0 %v3292
      %v3412 = vpop.f32.mrf.mxu0
      %v3413 = vadd.f32 0.0, %v3412
      %v3414 = vpop.f32.mrf.mxu0
      %v3415 = vpop.f32.mrf.mxu0
      %v3416 = vadd.f32 0.0, %v3415
      %v3417 = vpop.f32.mrf.mxu0
      %3418 = vmatprep.mubr.bf16.mxu0 0
      %3419 = vmatmul.mubr.bf16.gmra.mxu0 %v3295
      %v3420 = vpop.f32.mrf.mxu0
      %v3421 = vadd.f32 0.0, %v3420
      %v3422 = vpop.f32.mrf.mxu0
      %v3423 = vpop.f32.mrf.mxu0
      %v3424 = vadd.f32 0.0, %v3423
      %v3425 = vpop.f32.mrf.mxu0
      %3426 = vmatprep.mubr.bf16.mxu0 0
      %3427 = vmatmul.mubr.bf16.gmra.mxu0 %v3298
      %v3428 = vpop.f32.mrf.mxu0
      %v3429 = vadd.f32 0.0, %v3428
      %v3430 = vpop.f32.mrf.mxu0
      %v3431 = vpop.f32.mrf.mxu0
      %v3432 = vadd.f32 0.0, %v3431
      %v3433 = vpop.f32.mrf.mxu0
      %3434 = vmatprep.mubr.bf16.mxu0 0
      %3435 = vmatmul.mubr.bf16.gmra.mxu0 %v3301
      %v3436 = vpop.f32.mrf.mxu0
      %v3437 = vadd.f32 0.0, %v3436
      %v3438 = vpop.f32.mrf.mxu0
      %v3439 = vpop.f32.mrf.mxu0
      %v3440 = vadd.f32 0.0, %v3439
      %v3441 = vpop.f32.mrf.mxu0
      %3442 = vmatprep.mubr.bf16.mxu0 0
      %3443 = vmatmul.mubr.bf16.gmra.mxu0 %v3304
      %v3444 = vpop.f32.mrf.mxu0
      %v3445 = vadd.f32 0.0, %v3444
      %v3446 = vpop.f32.mrf.mxu0
      %v3447 = vpop.f32.mrf.mxu0
      %v3448 = vadd.f32 0.0, %v3447
      %v3449 = vpop.f32.mrf.mxu0
      %3450 = vmatprep.mubr.bf16.mxu0 0
      %3451 = vmatmul.mubr.bf16.gmra.mxu0 %v3307
      %v3452 = vpop.f32.mrf.mxu0
      %v3453 = vadd.f32 0.0, %v3452
      %v3454 = vpop.f32.mrf.mxu0
      %v3455 = vpop.f32.mrf.mxu0
      %v3456 = vadd.f32 0.0, %v3455
      %v3457 = vpop.f32.mrf.mxu0
      %3458 = vmatprep.mubr.bf16.mxu0 0
      %3459 = vmatmul.mubr.bf16.gmra.mxu0 %v3310
      %v3460 = vpop.f32.mrf.mxu0
      %v3461 = vadd.f32 0.0, %v3460
      %v3462 = vpop.f32.mrf.mxu0
      %v3463 = vpop.f32.mrf.mxu0
      %v3464 = vadd.f32 0.0, %v3463
      %v3465 = vpop.f32.mrf.mxu0
      %3466 = vmatprep.mubr.bf16.mxu0 0
      %3467 = vmatmul.mubr.bf16.gmra.mxu0 %v3313
      %v3468 = vpop.f32.mrf.mxu0
      %v3469 = vadd.f32 0.0, %v3468
      %v3470 = vpop.f32.mrf.mxu0
      %v3471 = vpop.f32.mrf.mxu0
      %v3472 = vadd.f32 0.0, %v3471
      %v3473 = vpop.f32.mrf.mxu0
      %3474 = vmatprep.mubr.bf16.mxu0 0
      %3475 = vmatmul.mubr.bf16.gmra.mxu0 %v3316
      %v3476 = vpop.f32.mrf.mxu0
      %v3477 = vadd.f32 0.0, %v3476
      %v3478 = vpop.f32.mrf.mxu0
      %v3479 = vpop.f32.mrf.mxu0
      %v3480 = vadd.f32 0.0, %v3479
      %v3481 = vpop.f32.mrf.mxu0
      %3482 = vmatprep.mubr.bf16.mxu0 0
      %3483 = vmatmul.mubr.bf16.gmra.mxu0 %v3319
      %v3484 = vpop.f32.mrf.mxu0
      %v3485 = vadd.f32 0.0, %v3484
      %v3486 = vpop.f32.mrf.mxu0
      %v3487 = vpop.f32.mrf.mxu0
      %v3488 = vadd.f32 0.0, %v3487
      %v3489 = vpop.f32.mrf.mxu0
      %3490 = vmatprep.mubr.bf16.mxu0 0
      %3491 = vmatmul.mubr.bf16.gmra.mxu0 %v3322
      %v3492 = vpop.f32.mrf.mxu0
      %v3493 = vadd.f32 0.0, %v3492
      %v3494 = vpop.f32.mrf.mxu0
      %v3495 = vpop.f32.mrf.mxu0
      %v3496 = vadd.f32 0.0, %v3495
      %v3497 = vpop.f32.mrf.mxu0
      %3498 = vmatprep.mubr.bf16.mxu0 0
      %3499 = vmatmul.mubr.bf16.gmra.mxu0 %v3325
      %v3500 = vpop.f32.mrf.mxu0
      %v3501 = vadd.f32 0.0, %v3500
      %v3502 = vpop.f32.mrf.mxu0
      %v3503 = vpop.f32.mrf.mxu0
      %v3504 = vadd.f32 0.0, %v3503
      %v3505 = vpop.f32.mrf.mxu0
      %3506 = vdwg.mxu0
      %v3507 = vadd.f32 %v3010, %v3365
      %v3508 = vadd.f32 %v3011, %v3368
      %v3509 = vadd.f32 %v3012, %v3373
      %v3510 = vadd.f32 %v3013, %v3376
      %v3511 = vadd.f32 %v3014, %v3381
      %v3512 = vadd.f32 %v3015, %v3384
      %v3513 = vadd.f32 %v3016, %v3389
      %v3514 = vadd.f32 %v3017, %v3392
      %v3515 = vadd.f32 %v3018, %v3397
      %v3516 = vadd.f32 %v3019, %v3400
      %v3517 = vadd.f32 %v3020, %v3405
      %v3518 = vadd.f32 %v3021, %v3408
      %v3519 = vadd.f32 %v3022, %v3413
      %v3520 = vadd.f32 %v3023, %v3416
      %v3521 = vadd.f32 %v3024, %v3421
      %v3522 = vadd.f32 %v3025, %v3424
      %v3523 = vadd.f32 %v3026, %v3429
      %v3524 = vadd.f32 %v3027, %v3432
      %v3525 = vadd.f32 %v3028, %v3437
      %v3526 = vadd.f32 %v3029, %v3440
      %v3527 = vadd.f32 %v3030, %v3445
      %v3528 = vadd.f32 %v3031, %v3448
      %v3529 = vadd.f32 %v3032, %v3453
      %v3530 = vadd.f32 %v3033, %v3456
      %v3531 = vadd.f32 %v3034, %v3461
      %v3532 = vadd.f32 %v3035, %v3464
      %v3533 = vadd.f32 %v3036, %v3469
      %v3534 = vadd.f32 %v3037, %v3472
      %v3535 = vadd.f32 %v3038, %v3477
      %v3536 = vadd.f32 %v3039, %v3480
      %v3537 = vadd.f32 %v3040, %v3485
      %v3538 = vadd.f32 %v3041, %v3488
      %v3539 = vadd.f32 %v3042, %v3493
      %v3540 = vadd.f32 %v3043, %v3496
      %v3541 = vadd.f32 %v3044, %v3501
      %v3542 = vadd.f32 %v3045, %v3504
      %v3543 = vld [vmem:[%s412 + $0x4] sm:$0xc]
      %s3544 = scalar_lea.vmem %s3, 80
      %v3545 = vld [vmem:[%s3544] sm:$0xf]
      %v3546 = vld [vmem:[%s3544 + $0x4] sm:$0xf]
      %v3547 = vld [vmem:[%s3544 + $0x8] sm:$0xf]
      %v3548 = vld [vmem:[%s3544 + $0xc] sm:$0xf]
      %v3550 = vunpack.c.l.b16 %v3543
      %v3551 = vpack.c.b16 %v2451, %v3550
      %v3552 = vrot.slane %v3551, 2
      %v3553 = vrot.slane %v2462, 2
      %v3554 = vsel %vm3226, %v3552, %v3553
      %v3555 = vrot.slane %v2463, 2
      %v3556 = vsel %vm3226, %v3553, %v3555
      %v3557 = vrot.slane %v2464, 2
      %v3558 = vsel %vm3226, %v3555, %v3557
      %v3559 = vrot.slane %v2465, 2
      %v3560 = vsel %vm3226, %v3557, %v3559
      %v3561 = vrot.slane %v3054, 2
      %v3562 = vsel %vm3226, %v3559, %v3561
      %v3567 = vunpack.c.l.b16 %v3545
      %v3568 = vunpack.c.l.b16 %v3546
      %v3569 = vunpack.c.l.b16 %v3547
      %v3570 = vunpack.c.l.b16 %v3548
      %v3571 = vpack.c.b16 %v3568, %v3567
      %v3572 = vpack.c.b16 %v3570, %v3569
      %v3576 = vsel %vm1304, %v3554, 0
      %v3579 = vsel %vm1304, %v3556, 0
      %v3582 = vsel %vm1304, %v3558, 0
      %v3585 = vsel %vm1304, %v3560, 0
      %v3588 = vsel %vm1304, %v3562, 0
      %3590 = vmatprep.subr.bf16.mxu0 0
      %3591 = vmatpush1.bf16.msra.mxu0 0
      %3592 = vmatprep.subr.bf16.mxu0 0
      %3593 = vmatpush1.bf16.msra.mxu0 0
      %3594 = vmatprep.subr.bf16.mxu0 0
      %3595 = vmatpush1.bf16.msra.mxu0 0
      %3596 = vmatprep.subr.bf16.mxu0 0
      %3597 = vmatpush1.bf16.msra.mxu0 0
      %3598 = vmatprep.subr.bf16.mxu0 0
      %3599 = vmatpush1.bf16.msra.mxu0 0
      %3600 = vmatprep.subr.bf16.mxu0 0
      %3601 = vmatpush1.bf16.msra.mxu0 0
      %3602 = vmatprep.subr.bf16.mxu0 0
      %3603 = vmatpush1.bf16.msra.mxu0 %v3572
      %3604 = vmatprep.subr.bf16.mxu0 0
      %3605 = vmatpush1.bf16.msra.mxu0 %v3571
      %3606 = vmatprep.subr.bf16.mxu0 0
      %3607 = vmatpush2.bf16.msra.mxu0 0
      %3608 = vmatprep.subr.bf16.mxu0 0
      %3609 = vmatpush2.bf16.msra.mxu0 0
      %3610 = vmatprep.subr.bf16.mxu0 0
      %3611 = vmatpush2.bf16.msra.mxu0 0
      %3612 = vmatprep.subr.bf16.mxu0 0
      %3613 = vmatpush2.bf16.msra.mxu0 0
      %3614 = vmatprep.subr.bf16.mxu0 0
      %3615 = vmatpush2.bf16.msra.mxu0 0
      %3616 = vmatprep.subr.bf16.mxu0 0
      %3617 = vmatpush2.bf16.msra.mxu0 0
      %3618 = vmatprep.subr.bf16.mxu0 0
      %3619 = vmatpush2.bf16.msra.mxu0 0
      %3620 = vmatprep.subr.bf16.mxu0 0
      %3621 = vmatpush2.bf16.msra.mxu0 0
      %3622 = vmatprep.mubr.bf16.mxu0 0
      %3623 = vmatmul.mubr.bf16.gmra.mxu0 %v3576
      %v3624 = vpop.f32.mrf.mxu0
      %v3625 = vadd.f32 0.0, %v3624
      %v3626 = vpop.f32.mrf.mxu0
      %v3627 = vpop.f32.mrf.mxu0
      %v3628 = vadd.f32 0.0, %v3627
      %v3629 = vpop.f32.mrf.mxu0
      %3630 = vmatprep.mubr.bf16.mxu0 0
      %3631 = vmatmul.mubr.bf16.gmra.mxu0 %v3579
      %v3632 = vpop.f32.mrf.mxu0
      %v3633 = vadd.f32 0.0, %v3632
      %v3634 = vpop.f32.mrf.mxu0
      %v3635 = vpop.f32.mrf.mxu0
      %v3636 = vadd.f32 0.0, %v3635
      %v3637 = vpop.f32.mrf.mxu0
      %3638 = vmatprep.mubr.bf16.mxu0 0
      %3639 = vmatmul.mubr.bf16.gmra.mxu0 %v3582
      %v3640 = vpop.f32.mrf.mxu0
      %v3641 = vadd.f32 0.0, %v3640
      %v3642 = vpop.f32.mrf.mxu0
      %v3643 = vpop.f32.mrf.mxu0
      %v3644 = vadd.f32 0.0, %v3643
      %v3645 = vpop.f32.mrf.mxu0
      %3646 = vmatprep.mubr.bf16.mxu0 0
      %3647 = vmatmul.mubr.bf16.gmra.mxu0 %v3585
      %v3648 = vpop.f32.mrf.mxu0
      %v3649 = vadd.f32 0.0, %v3648
      %v3650 = vpop.f32.mrf.mxu0
      %v3651 = vpop.f32.mrf.mxu0
      %v3652 = vadd.f32 0.0, %v3651
      %v3653 = vpop.f32.mrf.mxu0
      %3654 = vmatprep.mubr.bf16.mxu0 0
      %3655 = vmatmul.mubr.bf16.gmra.mxu0 %v3588
      %v3656 = vpop.f32.mrf.mxu0
      %v3657 = vadd.f32 0.0, %v3656
      %v3658 = vpop.f32.mrf.mxu0
      %v3659 = vpop.f32.mrf.mxu0
      %v3660 = vadd.f32 0.0, %v3659
      %v3661 = vpop.f32.mrf.mxu0
      %3662 = vdwg.mxu0
      %v3663 = vadd.f32 %v3208, %v3625
      %v3664 = vadd.f32 %v3209, %v3628
      %v3665 = vadd.f32 %v3210, %v3633
      %v3666 = vadd.f32 %v3211, %v3636
      %v3667 = vadd.f32 %v3212, %v3641
      %v3668 = vadd.f32 %v3213, %v3644
      %v3669 = vadd.f32 %v3214, %v3649
      %v3670 = vadd.f32 %v3215, %v3652
      %v3671 = vadd.f32 %v3216, %v3657
      %v3672 = vadd.f32 %v3217, %v3660
      %v3673 = vld [vmem:[%s407 + $0x10] sm:$0xc]
      %v3674 = vld [vmem:[%s407 + $0x14] sm:$0xf]
      %v3675 = vld [vmem:[%s407 + $0x18] sm:$0xf]
      %v3676 = vld [vmem:[%s407 + $0x1c] sm:$0xf]
      %v3677 = vld [vmem:[%s407 + $0x20] sm:$0xf]
      %v3678 = vld [vmem:[%s407 + $0x24] sm:$0xf]
      %v3679 = vld [vmem:[%s407 + $0x28] sm:$0xf]
      %v3680 = vld [vmem:[%s407 + $0x2c] sm:$0xf]
      %v3681 = vld [vmem:[%s407 + $0x30] sm:$0xf]
      %v3682 = vld [vmem:[%s407 + $0x34] sm:$0xf]
      %v3683 = vld [vmem:[%s407 + $0x38] sm:$0xf]
      %v3684 = vld [vmem:[%s407 + $0x3c] sm:$0xf]
      %v3685 = vld [vmem:[%s407 + $0x40] sm:$0xf]
      %v3686 = vld [vmem:[%s407 + $0x44] sm:$0xf]
      %v3687 = vld [vmem:[%s407 + $0x48] sm:$0xf]
      %v3688 = vld [vmem:[%s407 + $0x4c] sm:$0xf]
      %v3689 = vld [vmem:[%s407 + $0x50] sm:$0xf]
      %v3690 = vld [vmem:[%s407 + $0x54] sm:$0xf]
      %v3691 = vld [vmem:[%s407 + $0x58] sm:$0xf]
      %v3692 = vld [vmem:[%s407 + $0x5c] sm:$0xf]
      %v3693 = vld [vmem:[%s407 + $0x60] sm:$0xf]
      %v3694 = vld [vmem:[%s407 + $0x64] sm:$0xf]
      %v3695 = vld [vmem:[%s407 + $0x68] sm:$0xf]
      %v3696 = vld [vmem:[%s407 + $0x6c] sm:$0xf]
      %v3697 = vld [vmem:[%s407 + $0x70] sm:$0xf]
      %v3698 = vld [vmem:[%s407 + $0x74] sm:$0xf]
      %v3699 = vld [vmem:[%s407 + $0x78] sm:$0xf]
      %v3700 = vld [vmem:[%s407 + $0x7c] sm:$0xf]
      %v3701 = vld [vmem:[%s407 + $0x80] sm:$0xf]
      %v3702 = vld [vmem:[%s407 + $0x84] sm:$0xf]
      %v3703 = vld [vmem:[%s407 + $0x88] sm:$0xf]
      %v3704 = vld [vmem:[%s407 + $0x8c] sm:$0xf]
      %v3705 = vld [vmem:[%s407 + $0x90] sm:$0xf]
      %v3706 = vld [vmem:[%s407 + $0x94] sm:$0xf]
      %v3707 = vld [vmem:[%s407 + $0x98] sm:$0xf]
      %v3708 = vld [vmem:[%s407 + $0x9c] sm:$0xf]
      %v3709 = vld [vmem:[%s407 + $0xa0] sm:$0x3]
      %s3710 = scalar_lea.vmem %s2, 72
      %v3711 = vld [vmem:[%s3710] sm:$0xf]
      %v3712 = vld [vmem:[%s3710 + $0x4] sm:$0xf]
      %v3713 = vld [vmem:[%s3710 + $0x8] sm:$0xf]
      %v3751 = vunpack.c.l.b16 %v3673
      %v3752 = vunpack.c.l.b16 %v3674
      %v3753 = vunpack.c.l.b16 %v3675
      %v3754 = vunpack.c.l.b16 %v3676
      %v3755 = vunpack.c.l.b16 %v3677
      %v3756 = vunpack.c.l.b16 %v3678
      %v3757 = vunpack.c.l.b16 %v3679
      %v3758 = vunpack.c.l.b16 %v3680
      %v3759 = vunpack.c.l.b16 %v3681
      %v3760 = vunpack.c.l.b16 %v3682
      %v3761 = vunpack.c.l.b16 %v3683
      %v3762 = vunpack.c.l.b16 %v3684
      %v3763 = vunpack.c.l.b16 %v3685
      %v3764 = vunpack.c.l.b16 %v3686
      %v3765 = vunpack.c.l.b16 %v3687
      %v3766 = vunpack.c.l.b16 %v3688
      %v3767 = vunpack.c.l.b16 %v3689
      %v3768 = vunpack.c.l.b16 %v3690
      %v3769 = vunpack.c.l.b16 %v3691
      %v3770 = vunpack.c.l.b16 %v3692
      %v3771 = vunpack.c.l.b16 %v3693
      %v3772 = vunpack.c.l.b16 %v3694
      %v3773 = vunpack.c.l.b16 %v3695
      %v3774 = vunpack.c.l.b16 %v3696
      %v3775 = vunpack.c.l.b16 %v3697
      %v3776 = vunpack.c.l.b16 %v3698
      %v3777 = vunpack.c.l.b16 %v3699
      %v3778 = vunpack.c.l.b16 %v3700
      %v3779 = vunpack.c.l.b16 %v3701
      %v3780 = vunpack.c.l.b16 %v3702
      %v3781 = vunpack.c.l.b16 %v3703
      %v3782 = vunpack.c.l.b16 %v3704
      %v3783 = vunpack.c.l.b16 %v3705
      %v3784 = vunpack.c.l.b16 %v3706
      %v3785 = vunpack.c.l.b16 %v3707
      %v3786 = vunpack.c.l.b16 %v3708
      %v3787 = vunpack.c.l.b16 %v3709
      %v3788 = vpack.c.b16 %v3752, %v3751
      %v3789 = vpack.c.b16 %v3754, %v3753
      %v3790 = vpack.c.b16 %v3756, %v3755
      %v3791 = vpack.c.b16 %v3758, %v3757
      %v3792 = vpack.c.b16 %v3760, %v3759
      %v3793 = vpack.c.b16 %v3762, %v3761
      %v3794 = vpack.c.b16 %v3764, %v3763
      %v3795 = vpack.c.b16 %v3766, %v3765
      %v3796 = vpack.c.b16 %v3768, %v3767
      %v3797 = vpack.c.b16 %v3770, %v3769
      %v3798 = vpack.c.b16 %v3772, %v3771
      %v3799 = vpack.c.b16 %v3774, %v3773
      %v3800 = vpack.c.b16 %v3776, %v3775
      %v3801 = vpack.c.b16 %v3778, %v3777
      %v3802 = vpack.c.b16 %v3780, %v3779
      %v3803 = vpack.c.b16 %v3782, %v3781
      %v3804 = vpack.c.b16 %v3784, %v3783
      %v3805 = vpack.c.b16 %v3786, %v3785
      %v3806 = vpack.c.b16 %v3787, %v3787
      %v3807 = vrot.slane %v3788, 2
      %v3808 = vrot.slane %v3789, 2
      %v3809 = vsel %vm3226, %v3807, %v3808
      %v3810 = vrot.slane %v3790, 2
      %v3811 = vsel %vm3226, %v3808, %v3810
      %v3812 = vrot.slane %v3791, 2
      %v3813 = vsel %vm3226, %v3810, %v3812
      %v3814 = vrot.slane %v3792, 2
      %v3815 = vsel %vm3226, %v3812, %v3814
      %v3816 = vrot.slane %v3793, 2
      %v3817 = vsel %vm3226, %v3814, %v3816
      %v3818 = vrot.slane %v3794, 2
      %v3819 = vsel %vm3226, %v3816, %v3818
      %v3820 = vrot.slane %v3795, 2
      %v3821 = vsel %vm3226, %v3818, %v3820
      %v3822 = vrot.slane %v3796, 2
      %v3823 = vsel %vm3226, %v3820, %v3822
      %v3824 = vrot.slane %v3797, 2
      %v3825 = vsel %vm3226, %v3822, %v3824
      %v3826 = vrot.slane %v3798, 2
      %v3827 = vsel %vm3226, %v3824, %v3826
      %v3828 = vrot.slane %v3799, 2
      %v3829 = vsel %vm3226, %v3826, %v3828
      %v3830 = vrot.slane %v3800, 2
      %v3831 = vsel %vm3226, %v3828, %v3830
      %v3832 = vrot.slane %v3801, 2
      %v3833 = vsel %vm3226, %v3830, %v3832
      %v3834 = vrot.slane %v3802, 2
      %v3835 = vsel %vm3226, %v3832, %v3834
      %v3836 = vrot.slane %v3803, 2
      %v3837 = vsel %vm3226, %v3834, %v3836
      %v3838 = vrot.slane %v3804, 2
      %v3839 = vsel %vm3226, %v3836, %v3838
      %v3840 = vrot.slane %v3805, 2
      %v3841 = vsel %vm3226, %v3838, %v3840
      %v3842 = vrot.slane %v3806, 2
      %v3843 = vsel %vm3226, %v3840, %v3842
      %v3847 = vunpack.c.l.b16 %v3711
      %v3848 = vunpack.c.l.b16 %v3712
      %v3849 = vunpack.c.l.b16 %v3713
      %v3850 = vpack.c.b16 %v3848, %v3847
      %v3851 = vpack.c.b16 %v3849, %v3849
      %v3854 = vsel %vm743, %v3809, 0
      %v3857 = vsel %vm743, %v3811, 0
      %v3860 = vsel %vm743, %v3813, 0
      %v3863 = vsel %vm743, %v3815, 0
      %v3866 = vsel %vm743, %v3817, 0
      %v3869 = vsel %vm743, %v3819, 0
      %v3872 = vsel %vm743, %v3821, 0
      %v3875 = vsel %vm743, %v3823, 0
      %v3878 = vsel %vm743, %v3825, 0
      %v3881 = vsel %vm743, %v3827, 0
      %v3884 = vsel %vm743, %v3829, 0
      %v3887 = vsel %vm743, %v3831, 0
      %v3890 = vsel %vm743, %v3833, 0
      %v3893 = vsel %vm743, %v3835, 0
      %v3896 = vsel %vm743, %v3837, 0
      %v3899 = vsel %vm743, %v3839, 0
      %v3902 = vsel %vm743, %v3841, 0
      %v3905 = vsel %vm743, %v3843, 0
      %v3908 = vsel %vm798, %v3851, 0
      %3910 = vmatprep.subr.bf16.mxu0 0
      %3911 = vmatpush1.bf16.msra.mxu0 0
      %3912 = vmatprep.subr.bf16.mxu0 0
      %3913 = vmatpush1.bf16.msra.mxu0 0
      %3914 = vmatprep.subr.bf16.mxu0 0
      %3915 = vmatpush1.bf16.msra.mxu0 0
      %3916 = vmatprep.subr.bf16.mxu0 0
      %3917 = vmatpush1.bf16.msra.mxu0 0
      %3918 = vmatprep.subr.bf16.mxu0 0
      %3919 = vmatpush1.bf16.msra.mxu0 0
      %3920 = vmatprep.subr.bf16.mxu0 0
      %3921 = vmatpush1.bf16.msra.mxu0 0
      %3922 = vmatprep.subr.bf16.mxu0 0
      %3923 = vmatpush1.bf16.msra.mxu0 %v3908
      %3924 = vmatprep.subr.bf16.mxu0 0
      %3925 = vmatpush1.bf16.msra.mxu0 %v3850
      %3926 = vmatprep.subr.bf16.mxu0 0
      %3927 = vmatpush2.bf16.msra.mxu0 0
      %3928 = vmatprep.subr.bf16.mxu0 0
      %3929 = vmatpush2.bf16.msra.mxu0 0
      %3930 = vmatprep.subr.bf16.mxu0 0
      %3931 = vmatpush2.bf16.msra.mxu0 0
      %3932 = vmatprep.subr.bf16.mxu0 0
      %3933 = vmatpush2.bf16.msra.mxu0 0
      %3934 = vmatprep.subr.bf16.mxu0 0
      %3935 = vmatpush2.bf16.msra.mxu0 0
      %3936 = vmatprep.subr.bf16.mxu0 0
      %3937 = vmatpush2.bf16.msra.mxu0 0
      %3938 = vmatprep.subr.bf16.mxu0 0
      %3939 = vmatpush2.bf16.msra.mxu0 0
      %3940 = vmatprep.subr.bf16.mxu0 0
      %3941 = vmatpush2.bf16.msra.mxu0 0
      %3942 = vmatprep.mubr.bf16.mxu0 0
      %3943 = vmatmul.mubr.bf16.gmra.mxu0 %v3854
      %v3944 = vpop.f32.mrf.mxu0
      %v3945 = vadd.f32 0.0, %v3944
      %v3946 = vpop.f32.mrf.mxu0
      %v3947 = vpop.f32.mrf.mxu0
      %v3948 = vadd.f32 0.0, %v3947
      %v3949 = vpop.f32.mrf.mxu0
      %3950 = vmatprep.mubr.bf16.mxu0 0
      %3951 = vmatmul.mubr.bf16.gmra.mxu0 %v3857
      %v3952 = vpop.f32.mrf.mxu0
      %v3953 = vadd.f32 0.0, %v3952
      %v3954 = vpop.f32.mrf.mxu0
      %v3955 = vpop.f32.mrf.mxu0
      %v3956 = vadd.f32 0.0, %v3955
      %v3957 = vpop.f32.mrf.mxu0
      %3958 = vmatprep.mubr.bf16.mxu0 0
      %3959 = vmatmul.mubr.bf16.gmra.mxu0 %v3860
      %v3960 = vpop.f32.mrf.mxu0
      %v3961 = vadd.f32 0.0, %v3960
      %v3962 = vpop.f32.mrf.mxu0
      %v3963 = vpop.f32.mrf.mxu0
      %v3964 = vadd.f32 0.0, %v3963
      %v3965 = vpop.f32.mrf.mxu0
      %3966 = vmatprep.mubr.bf16.mxu0 0
      %3967 = vmatmul.mubr.bf16.gmra.mxu0 %v3863
      %v3968 = vpop.f32.mrf.mxu0
      %v3969 = vadd.f32 0.0, %v3968
      %v3970 = vpop.f32.mrf.mxu0
      %v3971 = vpop.f32.mrf.mxu0
      %v3972 = vadd.f32 0.0, %v3971
      %v3973 = vpop.f32.mrf.mxu0
      %3974 = vmatprep.mubr.bf16.mxu0 0
      %3975 = vmatmul.mubr.bf16.gmra.mxu0 %v3866
      %v3976 = vpop.f32.mrf.mxu0
      %v3977 = vadd.f32 0.0, %v3976
      %v3978 = vpop.f32.mrf.mxu0
      %v3979 = vpop.f32.mrf.mxu0
      %v3980 = vadd.f32 0.0, %v3979
      %v3981 = vpop.f32.mrf.mxu0
      %3982 = vmatprep.mubr.bf16.mxu0 0
      %3983 = vmatmul.mubr.bf16.gmra.mxu0 %v3869
      %v3984 = vpop.f32.mrf.mxu0
      %v3985 = vadd.f32 0.0, %v3984
      %v3986 = vpop.f32.mrf.mxu0
      %v3987 = vpop.f32.mrf.mxu0
      %v3988 = vadd.f32 0.0, %v3987
      %v3989 = vpop.f32.mrf.mxu0
      %3990 = vmatprep.mubr.bf16.mxu0 0
      %3991 = vmatmul.mubr.bf16.gmra.mxu0 %v3872
      %v3992 = vpop.f32.mrf.mxu0
      %v3993 = vadd.f32 0.0, %v3992
      %v3994 = vpop.f32.mrf.mxu0
      %v3995 = vpop.f32.mrf.mxu0
      %v3996 = vadd.f32 0.0, %v3995
      %v3997 = vpop.f32.mrf.mxu0
      %3998 = vmatprep.mubr.bf16.mxu0 0
      %3999 = vmatmul.mubr.bf16.gmra.mxu0 %v3875
      %v4000 = vpop.f32.mrf.mxu0
      %v4001 = vadd.f32 0.0, %v4000
      %v4002 = vpop.f32.mrf.mxu0
      %v4003 = vpop.f32.mrf.mxu0
      %v4004 = vadd.f32 0.0, %v4003
      %v4005 = vpop.f32.mrf.mxu0
      %4006 = vmatprep.mubr.bf16.mxu0 0
      %4007 = vmatmul.mubr.bf16.gmra.mxu0 %v3878
      %v4008 = vpop.f32.mrf.mxu0
      %v4009 = vadd.f32 0.0, %v4008
      %v4010 = vpop.f32.mrf.mxu0
      %v4011 = vpop.f32.mrf.mxu0
      %v4012 = vadd.f32 0.0, %v4011
      %v4013 = vpop.f32.mrf.mxu0
      %4014 = vmatprep.mubr.bf16.mxu0 0
      %4015 = vmatmul.mubr.bf16.gmra.mxu0 %v3881
      %v4016 = vpop.f32.mrf.mxu0
      %v4017 = vadd.f32 0.0, %v4016
      %v4018 = vpop.f32.mrf.mxu0
      %v4019 = vpop.f32.mrf.mxu0
      %v4020 = vadd.f32 0.0, %v4019
      %v4021 = vpop.f32.mrf.mxu0
      %4022 = vmatprep.mubr.bf16.mxu0 0
      %4023 = vmatmul.mubr.bf16.gmra.mxu0 %v3884
      %v4024 = vpop.f32.mrf.mxu0
      %v4025 = vadd.f32 0.0, %v4024
      %v4026 = vpop.f32.mrf.mxu0
      %v4027 = vpop.f32.mrf.mxu0
      %v4028 = vadd.f32 0.0, %v4027
      %v4029 = vpop.f32.mrf.mxu0
      %4030 = vmatprep.mubr.bf16.mxu0 0
      %4031 = vmatmul.mubr.bf16.gmra.mxu0 %v3887
      %v4032 = vpop.f32.mrf.mxu0
      %v4033 = vadd.f32 0.0, %v4032
      %v4034 = vpop.f32.mrf.mxu0
      %v4035 = vpop.f32.mrf.mxu0
      %v4036 = vadd.f32 0.0, %v4035
      %v4037 = vpop.f32.mrf.mxu0
      %4038 = vmatprep.mubr.bf16.mxu0 0
      %4039 = vmatmul.mubr.bf16.gmra.mxu0 %v3890
      %v4040 = vpop.f32.mrf.mxu0
      %v4041 = vadd.f32 0.0, %v4040
      %v4042 = vpop.f32.mrf.mxu0
      %v4043 = vpop.f32.mrf.mxu0
      %v4044 = vadd.f32 0.0, %v4043
      %v4045 = vpop.f32.mrf.mxu0
      %4046 = vmatprep.mubr.bf16.mxu0 0
      %4047 = vmatmul.mubr.bf16.gmra.mxu0 %v3893
      %v4048 = vpop.f32.mrf.mxu0
      %v4049 = vadd.f32 0.0, %v4048
      %v4050 = vpop.f32.mrf.mxu0
      %v4051 = vpop.f32.mrf.mxu0
      %v4052 = vadd.f32 0.0, %v4051
      %v4053 = vpop.f32.mrf.mxu0
      %4054 = vmatprep.mubr.bf16.mxu0 0
      %4055 = vmatmul.mubr.bf16.gmra.mxu0 %v3896
      %v4056 = vpop.f32.mrf.mxu0
      %v4057 = vadd.f32 0.0, %v4056
      %v4058 = vpop.f32.mrf.mxu0
      %v4059 = vpop.f32.mrf.mxu0
      %v4060 = vadd.f32 0.0, %v4059
      %v4061 = vpop.f32.mrf.mxu0
      %4062 = vmatprep.mubr.bf16.mxu0 0
      %4063 = vmatmul.mubr.bf16.gmra.mxu0 %v3899
      %v4064 = vpop.f32.mrf.mxu0
      %v4065 = vadd.f32 0.0, %v4064
      %v4066 = vpop.f32.mrf.mxu0
      %v4067 = vpop.f32.mrf.mxu0
      %v4068 = vadd.f32 0.0, %v4067
      %v4069 = vpop.f32.mrf.mxu0
      %4070 = vmatprep.mubr.bf16.mxu0 0
      %4071 = vmatmul.mubr.bf16.gmra.mxu0 %v3902
      %v4072 = vpop.f32.mrf.mxu0
      %v4073 = vadd.f32 0.0, %v4072
      %v4074 = vpop.f32.mrf.mxu0
      %v4075 = vpop.f32.mrf.mxu0
      %v4076 = vadd.f32 0.0, %v4075
      %v4077 = vpop.f32.mrf.mxu0
      %4078 = vmatprep.mubr.bf16.mxu0 0
      %4079 = vmatmul.mubr.bf16.gmra.mxu0 %v3905
      %v4080 = vpop.f32.mrf.mxu0
      %v4081 = vadd.f32 0.0, %v4080
      %v4082 = vpop.f32.mrf.mxu0
      %v4083 = vpop.f32.mrf.mxu0
      %v4084 = vadd.f32 0.0, %v4083
      %v4085 = vpop.f32.mrf.mxu0
      %4086 = vdwg.mxu0
      %v4087 = vadd.f32 %v3507, %v3945
      %v4088 = vadd.f32 %v3508, %v3948
      %v4089 = vadd.f32 %v3509, %v3953
      %v4090 = vadd.f32 %v3510, %v3956
      %v4091 = vadd.f32 %v3511, %v3961
      %v4092 = vadd.f32 %v3512, %v3964
      %v4093 = vadd.f32 %v3513, %v3969
      %v4094 = vadd.f32 %v3514, %v3972
      %v4095 = vadd.f32 %v3515, %v3977
      %v4096 = vadd.f32 %v3516, %v3980
      %v4097 = vadd.f32 %v3517, %v3985
      %v4098 = vadd.f32 %v3518, %v3988
      %v4099 = vadd.f32 %v3519, %v3993
      %v4100 = vadd.f32 %v3520, %v3996
      %v4101 = vadd.f32 %v3521, %v4001
      %v4102 = vadd.f32 %v3522, %v4004
      %v4103 = vadd.f32 %v3523, %v4009
      %v4104 = vadd.f32 %v3524, %v4012
      %v4105 = vadd.f32 %v3525, %v4017
      %v4106 = vadd.f32 %v3526, %v4020
      %v4107 = vadd.f32 %v3527, %v4025
      %v4108 = vadd.f32 %v3528, %v4028
      %v4109 = vadd.f32 %v3529, %v4033
      %v4110 = vadd.f32 %v3530, %v4036
      %v4111 = vadd.f32 %v3531, %v4041
      %v4112 = vadd.f32 %v3532, %v4044
      %v4113 = vadd.f32 %v3533, %v4049
      %v4114 = vadd.f32 %v3534, %v4052
      %v4115 = vadd.f32 %v3535, %v4057
      %v4116 = vadd.f32 %v3536, %v4060
      %v4117 = vadd.f32 %v3537, %v4065
      %v4118 = vadd.f32 %v3538, %v4068
      %v4119 = vadd.f32 %v3539, %v4073
      %v4120 = vadd.f32 %v3540, %v4076
      %v4121 = vadd.f32 %v3541, %v4081
      %v4122 = vadd.f32 %v3542, %v4084
      %v4123 = vld [vmem:[%s412 + $0x8] sm:$0xc]
      %v4124 = vld [vmem:[%s412 + $0xc] sm:$0xf]
      %v4125 = vld [vmem:[%s412 + $0x10] sm:$0xf]
      %v4126 = vld [vmem:[%s412 + $0x14] sm:$0xf]
      %v4127 = vld [vmem:[%s412 + $0x18] sm:$0xf]
      %v4128 = vld [vmem:[%s412 + $0x1c] sm:$0xf]
      %v4129 = vld [vmem:[%s412 + $0x20] sm:$0xf]
      %v4130 = vld [vmem:[%s412 + $0x24] sm:$0xf]
      %v4131 = vld [vmem:[%s412 + $0x28] sm:$0xf]
      %v4132 = vld [vmem:[%s412 + $0x2c] sm:$0xf]
      %v4133 = vld [vmem:[%s412 + $0x30] sm:$0x3]
      %s4134 = scalar_lea.vmem %s3, 96
      %v4135 = vld [vmem:[%s4134] sm:$0xf]
      %v4136 = vld [vmem:[%s4134 + $0x4] sm:$0xf]
      %v4137 = vld [vmem:[%s4134 + $0x8] sm:$0xf]
      %v4138 = vld [vmem:[%s4134 + $0xc] sm:$0xf]
      %v4150 = vunpack.c.l.b16 %v4123
      %v4151 = vunpack.c.l.b16 %v4124
      %v4152 = vunpack.c.l.b16 %v4125
      %v4153 = vunpack.c.l.b16 %v4126
      %v4154 = vunpack.c.l.b16 %v4127
      %v4155 = vunpack.c.l.b16 %v4128
      %v4156 = vunpack.c.l.b16 %v4129
      %v4157 = vunpack.c.l.b16 %v4130
      %v4158 = vunpack.c.l.b16 %v4131
      %v4159 = vunpack.c.l.b16 %v4132
      %v4160 = vunpack.c.l.b16 %v4133
      %v4161 = vpack.c.b16 %v4151, %v4150
      %v4162 = vpack.c.b16 %v4153, %v4152
      %v4163 = vpack.c.b16 %v4155, %v4154
      %v4164 = vpack.c.b16 %v4157, %v4156
      %v4165 = vpack.c.b16 %v4159, %v4158
      %v4166 = vpack.c.b16 %v4160, %v4160
      %v4167 = vrot.slane %v4161, 2
      %v4168 = vrot.slane %v4162, 2
      %v4169 = vsel %vm3226, %v4167, %v4168
      %v4170 = vrot.slane %v4163, 2
      %v4171 = vsel %vm3226, %v4168, %v4170
      %v4172 = vrot.slane %v4164, 2
      %v4173 = vsel %vm3226, %v4170, %v4172
      %v4174 = vrot.slane %v4165, 2
      %v4175 = vsel %vm3226, %v4172, %v4174
      %v4176 = vrot.slane %v4166, 2
      %v4177 = vsel %vm3226, %v4174, %v4176
      %v4182 = vunpack.c.l.b16 %v4135
      %v4183 = vunpack.c.l.b16 %v4136
      %v4184 = vunpack.c.l.b16 %v4137
      %v4185 = vunpack.c.l.b16 %v4138
      %v4186 = vpack.c.b16 %v4183, %v4182
      %v4187 = vpack.c.b16 %v4185, %v4184
      %v4191 = vsel %vm1304, %v4169, 0
      %v4194 = vsel %vm1304, %v4171, 0
      %v4197 = vsel %vm1304, %v4173, 0
      %v4200 = vsel %vm1304, %v4175, 0
      %v4203 = vsel %vm1304, %v4177, 0
      %4205 = vmatprep.subr.bf16.mxu0 0
      %4206 = vmatpush1.bf16.msra.mxu0 0
      %4207 = vmatprep.subr.bf16.mxu0 0
      %4208 = vmatpush1.bf16.msra.mxu0 0
      %4209 = vmatprep.subr.bf16.mxu0 0
      %4210 = vmatpush1.bf16.msra.mxu0 0
      %4211 = vmatprep.subr.bf16.mxu0 0
      %4212 = vmatpush1.bf16.msra.mxu0 0
      %4213 = vmatprep.subr.bf16.mxu0 0
      %4214 = vmatpush1.bf16.msra.mxu0 0
      %4215 = vmatprep.subr.bf16.mxu0 0
      %4216 = vmatpush1.bf16.msra.mxu0 0
      %4217 = vmatprep.subr.bf16.mxu0 0
      %4218 = vmatpush1.bf16.msra.mxu0 %v4187
      %4219 = vmatprep.subr.bf16.mxu0 0
      %4220 = vmatpush1.bf16.msra.mxu0 %v4186
      %4221 = vmatprep.subr.bf16.mxu0 0
      %4222 = vmatpush2.bf16.msra.mxu0 0
      %4223 = vmatprep.subr.bf16.mxu0 0
      %4224 = vmatpush2.bf16.msra.mxu0 0
      %4225 = vmatprep.subr.bf16.mxu0 0
      %4226 = vmatpush2.bf16.msra.mxu0 0
      %4227 = vmatprep.subr.bf16.mxu0 0
      %4228 = vmatpush2.bf16.msra.mxu0 0
      %4229 = vmatprep.subr.bf16.mxu0 0
      %4230 = vmatpush2.bf16.msra.mxu0 0
      %4231 = vmatprep.subr.bf16.mxu0 0
      %4232 = vmatpush2.bf16.msra.mxu0 0
      %4233 = vmatprep.subr.bf16.mxu0 0
      %4234 = vmatpush2.bf16.msra.mxu0 0
      %4235 = vmatprep.subr.bf16.mxu0 0
      %4236 = vmatpush2.bf16.msra.mxu0 0
      %4237 = vmatprep.mubr.bf16.mxu0 0
      %4238 = vmatmul.mubr.bf16.gmra.mxu0 %v4191
      %v4239 = vpop.f32.mrf.mxu0
      %v4240 = vadd.f32 0.0, %v4239
      %v4241 = vpop.f32.mrf.mxu0
      %v4242 = vpop.f32.mrf.mxu0
      %v4243 = vadd.f32 0.0, %v4242
      %v4244 = vpop.f32.mrf.mxu0
      %4245 = vmatprep.mubr.bf16.mxu0 0
      %4246 = vmatmul.mubr.bf16.gmra.mxu0 %v4194
      %v4247 = vpop.f32.mrf.mxu0
      %v4248 = vadd.f32 0.0, %v4247
      %v4249 = vpop.f32.mrf.mxu0
      %v4250 = vpop.f32.mrf.mxu0
      %v4251 = vadd.f32 0.0, %v4250
      %v4252 = vpop.f32.mrf.mxu0
      %4253 = vmatprep.mubr.bf16.mxu0 0
      %4254 = vmatmul.mubr.bf16.gmra.mxu0 %v4197
      %v4255 = vpop.f32.mrf.mxu0
      %v4256 = vadd.f32 0.0, %v4255
      %v4257 = vpop.f32.mrf.mxu0
      %v4258 = vpop.f32.mrf.mxu0
      %v4259 = vadd.f32 0.0, %v4258
      %v4260 = vpop.f32.mrf.mxu0
      %4261 = vmatprep.mubr.bf16.mxu0 0
      %4262 = vmatmul.mubr.bf16.gmra.mxu0 %v4200
      %v4263 = vpop.f32.mrf.mxu0
      %v4264 = vadd.f32 0.0, %v4263
      %v4265 = vpop.f32.mrf.mxu0
      %v4266 = vpop.f32.mrf.mxu0
      %v4267 = vadd.f32 0.0, %v4266
      %v4268 = vpop.f32.mrf.mxu0
      %4269 = vmatprep.mubr.bf16.mxu0 0
      %4270 = vmatmul.mubr.bf16.gmra.mxu0 %v4203
      %v4271 = vpop.f32.mrf.mxu0
      %v4272 = vadd.f32 0.0, %v4271
      %v4273 = vpop.f32.mrf.mxu0
      %v4274 = vpop.f32.mrf.mxu0
      %v4275 = vadd.f32 0.0, %v4274
      %v4276 = vpop.f32.mrf.mxu0
      %4277 = vdwg.mxu0
      %v4278 = vadd.f32 %v3663, %v4240
      %v4279 = vadd.f32 %v3664, %v4243
      %v4280 = vadd.f32 %v3665, %v4248
      %v4281 = vadd.f32 %v3666, %v4251
      %v4282 = vadd.f32 %v3667, %v4256
      %v4283 = vadd.f32 %v3668, %v4259
      %v4284 = vadd.f32 %v3669, %v4264
      %v4285 = vadd.f32 %v3670, %v4267
      %v4286 = vadd.f32 %v3671, %v4272
      %v4287 = vadd.f32 %v3672, %v4275
      %v4288 = vld [vmem:[%s407 + $0xa0] sm:$0x7]
      %s4289 = scalar_lea.vmem %s2, 84
      %v4290 = vld [vmem:[%s4289] sm:$0xf]
      %v4291 = vld [vmem:[%s4289 + $0x4] sm:$0xf]
      %v4292 = vld [vmem:[%s4289 + $0x8] sm:$0xf]
      %v4294 = vunpack.c.l.b16 %v4288
      %v4295 = vpack.c.b16 %v4294, %v4294
      %vm4296 = vsmask.f32 5376
      %v4298 = vshrl.u32 %v3788, 16
      %v4300 = vrot.slane %v4298, 2
      %v4301 = vshll.u32 %v3788, 16
      %v4303 = vrot.slane %v4301, 3
      %v4304 = vor.u32 %v4300, %v4303
      %v4306 = vshrl.u32 %v3789, 16
      %v4308 = vrot.slane %v4306, 2
      %v4309 = vshll.u32 %v3789, 16
      %v4311 = vrot.slane %v4309, 3
      %v4312 = vor.u32 %v4308, %v4311
      %v4313 = vsel %vm4296, %v4304, %v4312
      %v4315 = vshrl.u32 %v3790, 16
      %v4317 = vrot.slane %v4315, 2
      %v4318 = vshll.u32 %v3790, 16
      %v4320 = vrot.slane %v4318, 3
      %v4321 = vor.u32 %v4317, %v4320
      %v4322 = vsel %vm4296, %v4312, %v4321
      %v4324 = vshrl.u32 %v3791, 16
      %v4326 = vrot.slane %v4324, 2
      %v4327 = vshll.u32 %v3791, 16
      %v4329 = vrot.slane %v4327, 3
      %v4330 = vor.u32 %v4326, %v4329
      %v4331 = vsel %vm4296, %v4321, %v4330
      %v4333 = vshrl.u32 %v3792, 16
      %v4335 = vrot.slane %v4333, 2
      %v4336 = vshll.u32 %v3792, 16
      %v4338 = vrot.slane %v4336, 3
      %v4339 = vor.u32 %v4335, %v4338
      %v4340 = vsel %vm4296, %v4330, %v4339
      %v4342 = vshrl.u32 %v3793, 16
      %v4344 = vrot.slane %v4342, 2
      %v4345 = vshll.u32 %v3793, 16
      %v4347 = vrot.slane %v4345, 3
      %v4348 = vor.u32 %v4344, %v4347
      %v4349 = vsel %vm4296, %v4339, %v4348
      %v4351 = vshrl.u32 %v3794, 16
      %v4353 = vrot.slane %v4351, 2
      %v4354 = vshll.u32 %v3794, 16
      %v4356 = vrot.slane %v4354, 3
      %v4357 = vor.u32 %v4353, %v4356
      %v4358 = vsel %vm4296, %v4348, %v4357
      %v4360 = vshrl.u32 %v3795, 16
      %v4362 = vrot.slane %v4360, 2
      %v4363 = vshll.u32 %v3795, 16
      %v4365 = vrot.slane %v4363, 3
      %v4366 = vor.u32 %v4362, %v4365
      %v4367 = vsel %vm4296, %v4357, %v4366
      %v4369 = vshrl.u32 %v3796, 16
      %v4371 = vrot.slane %v4369, 2
      %v4372 = vshll.u32 %v3796, 16
      %v4374 = vrot.slane %v4372, 3
      %v4375 = vor.u32 %v4371, %v4374
      %v4376 = vsel %vm4296, %v4366, %v4375
      %v4378 = vshrl.u32 %v3797, 16
      %v4380 = vrot.slane %v4378, 2
      %v4381 = vshll.u32 %v3797, 16
      %v4383 = vrot.slane %v4381, 3
      %v4384 = vor.u32 %v4380, %v4383
      %v4385 = vsel %vm4296, %v4375, %v4384
      %v4387 = vshrl.u32 %v3798, 16
      %v4389 = vrot.slane %v4387, 2
      %v4390 = vshll.u32 %v3798, 16
      %v4392 = vrot.slane %v4390, 3
      %v4393 = vor.u32 %v4389, %v4392
      %v4394 = vsel %vm4296, %v4384, %v4393
      %v4396 = vshrl.u32 %v3799, 16
      %v4398 = vrot.slane %v4396, 2
      %v4399 = vshll.u32 %v3799, 16
      %v4401 = vrot.slane %v4399, 3
      %v4402 = vor.u32 %v4398, %v4401
      %v4403 = vsel %vm4296, %v4393, %v4402
      %v4405 = vshrl.u32 %v3800, 16
      %v4407 = vrot.slane %v4405, 2
      %v4408 = vshll.u32 %v3800, 16
      %v4410 = vrot.slane %v4408, 3
      %v4411 = vor.u32 %v4407, %v4410
      %v4412 = vsel %vm4296, %v4402, %v4411
      %v4414 = vshrl.u32 %v3801, 16
      %v4416 = vrot.slane %v4414, 2
      %v4417 = vshll.u32 %v3801, 16
      %v4419 = vrot.slane %v4417, 3
      %v4420 = vor.u32 %v4416, %v4419
      %v4421 = vsel %vm4296, %v4411, %v4420
      %v4423 = vshrl.u32 %v3802, 16
      %v4425 = vrot.slane %v4423, 2
      %v4426 = vshll.u32 %v3802, 16
      %v4428 = vrot.slane %v4426, 3
      %v4429 = vor.u32 %v4425, %v4428
      %v4430 = vsel %vm4296, %v4420, %v4429
      %v4432 = vshrl.u32 %v3803, 16
      %v4434 = vrot.slane %v4432, 2
      %v4435 = vshll.u32 %v3803, 16
      %v4437 = vrot.slane %v4435, 3
      %v4438 = vor.u32 %v4434, %v4437
      %v4439 = vsel %vm4296, %v4429, %v4438
      %v4441 = vshrl.u32 %v3804, 16
      %v4443 = vrot.slane %v4441, 2
      %v4444 = vshll.u32 %v3804, 16
      %v4446 = vrot.slane %v4444, 3
      %v4447 = vor.u32 %v4443, %v4446
      %v4448 = vsel %vm4296, %v4438, %v4447
      %v4450 = vshrl.u32 %v3805, 16
      %v4452 = vrot.slane %v4450, 2
      %v4453 = vshll.u32 %v3805, 16
      %v4455 = vrot.slane %v4453, 3
      %v4456 = vor.u32 %v4452, %v4455
      %v4457 = vsel %vm4296, %v4447, %v4456
      %v4459 = vshrl.u32 %v4295, 16
      %v4461 = vrot.slane %v4459, 2
      %v4462 = vshll.u32 %v4295, 16
      %v4464 = vrot.slane %v4462, 3
      %v4465 = vor.u32 %v4461, %v4464
      %v4466 = vsel %vm4296, %v4456, %v4465
      %v4470 = vunpack.c.l.b16 %v4290
      %v4471 = vunpack.c.l.b16 %v4291
      %v4472 = vunpack.c.l.b16 %v4292
      %v4473 = vpack.c.b16 %v4471, %v4470
      %v4474 = vpack.c.b16 %v4472, %v4472
      %v4477 = vsel %vm743, %v4313, 0
      %v4480 = vsel %vm743, %v4322, 0
      %v4483 = vsel %vm743, %v4331, 0
      %v4486 = vsel %vm743, %v4340, 0
      %v4489 = vsel %vm743, %v4349, 0
      %v4492 = vsel %vm743, %v4358, 0
      %v4495 = vsel %vm743, %v4367, 0
      %v4498 = vsel %vm743, %v4376, 0
      %v4501 = vsel %vm743, %v4385, 0
      %v4504 = vsel %vm743, %v4394, 0
      %v4507 = vsel %vm743, %v4403, 0
      %v4510 = vsel %vm743, %v4412, 0
      %v4513 = vsel %vm743, %v4421, 0
      %v4516 = vsel %vm743, %v4430, 0
      %v4519 = vsel %vm743, %v4439, 0
      %v4522 = vsel %vm743, %v4448, 0
      %v4525 = vsel %vm743, %v4457, 0
      %v4528 = vsel %vm743, %v4466, 0
      %v4531 = vsel %vm798, %v4474, 0
      %4533 = vmatprep.subr.bf16.mxu0 0
      %4534 = vmatpush1.bf16.msra.mxu0 0
      %4535 = vmatprep.subr.bf16.mxu0 0
      %4536 = vmatpush1.bf16.msra.mxu0 0
      %4537 = vmatprep.subr.bf16.mxu0 0
      %4538 = vmatpush1.bf16.msra.mxu0 0
      %4539 = vmatprep.subr.bf16.mxu0 0
      %4540 = vmatpush1.bf16.msra.mxu0 0
      %4541 = vmatprep.subr.bf16.mxu0 0
      %4542 = vmatpush1.bf16.msra.mxu0 0
      %4543 = vmatprep.subr.bf16.mxu0 0
      %4544 = vmatpush1.bf16.msra.mxu0 0
      %4545 = vmatprep.subr.bf16.mxu0 0
      %4546 = vmatpush1.bf16.msra.mxu0 %v4531
      %4547 = vmatprep.subr.bf16.mxu0 0
      %4548 = vmatpush1.bf16.msra.mxu0 %v4473
      %4549 = vmatprep.subr.bf16.mxu0 0
      %4550 = vmatpush2.bf16.msra.mxu0 0
      %4551 = vmatprep.subr.bf16.mxu0 0
      %4552 = vmatpush2.bf16.msra.mxu0 0
      %4553 = vmatprep.subr.bf16.mxu0 0
      %4554 = vmatpush2.bf16.msra.mxu0 0
      %4555 = vmatprep.subr.bf16.mxu0 0
      %4556 = vmatpush2.bf16.msra.mxu0 0
      %4557 = vmatprep.subr.bf16.mxu0 0
      %4558 = vmatpush2.bf16.msra.mxu0 0
      %4559 = vmatprep.subr.bf16.mxu0 0
      %4560 = vmatpush2.bf16.msra.mxu0 0
      %4561 = vmatprep.subr.bf16.mxu0 0
      %4562 = vmatpush2.bf16.msra.mxu0 0
      %4563 = vmatprep.subr.bf16.mxu0 0
      %4564 = vmatpush2.bf16.msra.mxu0 0
      %4565 = vmatprep.mubr.bf16.mxu0 0
      %4566 = vmatmul.mubr.bf16.gmra.mxu0 %v4477
      %v4567 = vpop.f32.mrf.mxu0
      %v4568 = vadd.f32 0.0, %v4567
      %v4569 = vpop.f32.mrf.mxu0
      %v4570 = vpop.f32.mrf.mxu0
      %v4571 = vadd.f32 0.0, %v4570
      %v4572 = vpop.f32.mrf.mxu0
      %4573 = vmatprep.mubr.bf16.mxu0 0
      %4574 = vmatmul.mubr.bf16.gmra.mxu0 %v4480
      %v4575 = vpop.f32.mrf.mxu0
      %v4576 = vadd.f32 0.0, %v4575
      %v4577 = vpop.f32.mrf.mxu0
      %v4578 = vpop.f32.mrf.mxu0
      %v4579 = vadd.f32 0.0, %v4578
      %v4580 = vpop.f32.mrf.mxu0
      %4581 = vmatprep.mubr.bf16.mxu0 0
      %4582 = vmatmul.mubr.bf16.gmra.mxu0 %v4483
      %v4583 = vpop.f32.mrf.mxu0
      %v4584 = vadd.f32 0.0, %v4583
      %v4585 = vpop.f32.mrf.mxu0
      %v4586 = vpop.f32.mrf.mxu0
      %v4587 = vadd.f32 0.0, %v4586
      %v4588 = vpop.f32.mrf.mxu0
      %4589 = vmatprep.mubr.bf16.mxu0 0
      %4590 = vmatmul.mubr.bf16.gmra.mxu0 %v4486
      %v4591 = vpop.f32.mrf.mxu0
      %v4592 = vadd.f32 0.0, %v4591
      %v4593 = vpop.f32.mrf.mxu0
      %v4594 = vpop.f32.mrf.mxu0
      %v4595 = vadd.f32 0.0, %v4594
      %v4596 = vpop.f32.mrf.mxu0
      %4597 = vmatprep.mubr.bf16.mxu0 0
      %4598 = vmatmul.mubr.bf16.gmra.mxu0 %v4489
      %v4599 = vpop.f32.mrf.mxu0
      %v4600 = vadd.f32 0.0, %v4599
      %v4601 = vpop.f32.mrf.mxu0
      %v4602 = vpop.f32.mrf.mxu0
      %v4603 = vadd.f32 0.0, %v4602
      %v4604 = vpop.f32.mrf.mxu0
      %4605 = vmatprep.mubr.bf16.mxu0 0
      %4606 = vmatmul.mubr.bf16.gmra.mxu0 %v4492
      %v4607 = vpop.f32.mrf.mxu0
      %v4608 = vadd.f32 0.0, %v4607
      %v4609 = vpop.f32.mrf.mxu0
      %v4610 = vpop.f32.mrf.mxu0
      %v4611 = vadd.f32 0.0, %v4610
      %v4612 = vpop.f32.mrf.mxu0
      %4613 = vmatprep.mubr.bf16.mxu0 0
      %4614 = vmatmul.mubr.bf16.gmra.mxu0 %v4495
      %v4615 = vpop.f32.mrf.mxu0
      %v4616 = vadd.f32 0.0, %v4615
      %v4617 = vpop.f32.mrf.mxu0
      %v4618 = vpop.f32.mrf.mxu0
      %v4619 = vadd.f32 0.0, %v4618
      %v4620 = vpop.f32.mrf.mxu0
      %4621 = vmatprep.mubr.bf16.mxu0 0
      %4622 = vmatmul.mubr.bf16.gmra.mxu0 %v4498
      %v4623 = vpop.f32.mrf.mxu0
      %v4624 = vadd.f32 0.0, %v4623
      %v4625 = vpop.f32.mrf.mxu0
      %v4626 = vpop.f32.mrf.mxu0
      %v4627 = vadd.f32 0.0, %v4626
      %v4628 = vpop.f32.mrf.mxu0
      %4629 = vmatprep.mubr.bf16.mxu0 0
      %4630 = vmatmul.mubr.bf16.gmra.mxu0 %v4501
      %v4631 = vpop.f32.mrf.mxu0
      %v4632 = vadd.f32 0.0, %v4631
      %v4633 = vpop.f32.mrf.mxu0
      %v4634 = vpop.f32.mrf.mxu0
      %v4635 = vadd.f32 0.0, %v4634
      %v4636 = vpop.f32.mrf.mxu0
      %4637 = vmatprep.mubr.bf16.mxu0 0
      %4638 = vmatmul.mubr.bf16.gmra.mxu0 %v4504
      %v4639 = vpop.f32.mrf.mxu0
      %v4640 = vadd.f32 0.0, %v4639
      %v4641 = vpop.f32.mrf.mxu0
      %v4642 = vpop.f32.mrf.mxu0
      %v4643 = vadd.f32 0.0, %v4642
      %v4644 = vpop.f32.mrf.mxu0
      %4645 = vmatprep.mubr.bf16.mxu0 0
      %4646 = vmatmul.mubr.bf16.gmra.mxu0 %v4507
      %v4647 = vpop.f32.mrf.mxu0
      %v4648 = vadd.f32 0.0, %v4647
      %v4649 = vpop.f32.mrf.mxu0
      %v4650 = vpop.f32.mrf.mxu0
      %v4651 = vadd.f32 0.0, %v4650
      %v4652 = vpop.f32.mrf.mxu0
      %4653 = vmatprep.mubr.bf16.mxu0 0
      %4654 = vmatmul.mubr.bf16.gmra.mxu0 %v4510
      %v4655 = vpop.f32.mrf.mxu0
      %v4656 = vadd.f32 0.0, %v4655
      %v4657 = vpop.f32.mrf.mxu0
      %v4658 = vpop.f32.mrf.mxu0
      %v4659 = vadd.f32 0.0, %v4658
      %v4660 = vpop.f32.mrf.mxu0
      %4661 = vmatprep.mubr.bf16.mxu0 0
      %4662 = vmatmul.mubr.bf16.gmra.mxu0 %v4513
      %v4663 = vpop.f32.mrf.mxu0
      %v4664 = vadd.f32 0.0, %v4663
      %v4665 = vpop.f32.mrf.mxu0
      %v4666 = vpop.f32.mrf.mxu0
      %v4667 = vadd.f32 0.0, %v4666
      %v4668 = vpop.f32.mrf.mxu0
      %4669 = vmatprep.mubr.bf16.mxu0 0
      %4670 = vmatmul.mubr.bf16.gmra.mxu0 %v4516
      %v4671 = vpop.f32.mrf.mxu0
      %v4672 = vadd.f32 0.0, %v4671
      %v4673 = vpop.f32.mrf.mxu0
      %v4674 = vpop.f32.mrf.mxu0
      %v4675 = vadd.f32 0.0, %v4674
      %v4676 = vpop.f32.mrf.mxu0
      %4677 = vmatprep.mubr.bf16.mxu0 0
      %4678 = vmatmul.mubr.bf16.gmra.mxu0 %v4519
      %v4679 = vpop.f32.mrf.mxu0
      %v4680 = vadd.f32 0.0, %v4679
      %v4681 = vpop.f32.mrf.mxu0
      %v4682 = vpop.f32.mrf.mxu0
      %v4683 = vadd.f32 0.0, %v4682
      %v4684 = vpop.f32.mrf.mxu0
      %4685 = vmatprep.mubr.bf16.mxu0 0
      %4686 = vmatmul.mubr.bf16.gmra.mxu0 %v4522
      %v4687 = vpop.f32.mrf.mxu0
      %v4688 = vadd.f32 0.0, %v4687
      %v4689 = vpop.f32.mrf.mxu0
      %v4690 = vpop.f32.mrf.mxu0
      %v4691 = vadd.f32 0.0, %v4690
      %v4692 = vpop.f32.mrf.mxu0
      %4693 = vmatprep.mubr.bf16.mxu0 0
      %4694 = vmatmul.mubr.bf16.gmra.mxu0 %v4525
      %v4695 = vpop.f32.mrf.mxu0
      %v4696 = vadd.f32 0.0, %v4695
      %v4697 = vpop.f32.mrf.mxu0
      %v4698 = vpop.f32.mrf.mxu0
      %v4699 = vadd.f32 0.0, %v4698
      %v4700 = vpop.f32.mrf.mxu0
      %4701 = vmatprep.mubr.bf16.mxu0 0
      %4702 = vmatmul.mubr.bf16.gmra.mxu0 %v4528
      %v4703 = vpop.f32.mrf.mxu0
      %v4704 = vadd.f32 0.0, %v4703
      %v4705 = vpop.f32.mrf.mxu0
      %v4706 = vpop.f32.mrf.mxu0
      %v4707 = vadd.f32 0.0, %v4706
      %v4708 = vpop.f32.mrf.mxu0
      %4709 = vdwg.mxu0
      %v4710 = vadd.f32 %v4087, %v4568
      %v4711 = vadd.f32 %v4088, %v4571
      %v4712 = vadd.f32 %v4089, %v4576
      %v4713 = vadd.f32 %v4090, %v4579
      %v4714 = vadd.f32 %v4091, %v4584
      %v4715 = vadd.f32 %v4092, %v4587
      %v4716 = vadd.f32 %v4093, %v4592
      %v4717 = vadd.f32 %v4094, %v4595
      %v4718 = vadd.f32 %v4095, %v4600
      %v4719 = vadd.f32 %v4096, %v4603
      %v4720 = vadd.f32 %v4097, %v4608
      %v4721 = vadd.f32 %v4098, %v4611
      %v4722 = vadd.f32 %v4099, %v4616
      %v4723 = vadd.f32 %v4100, %v4619
      %v4724 = vadd.f32 %v4101, %v4624
      %v4725 = vadd.f32 %v4102, %v4627
      %v4726 = vadd.f32 %v4103, %v4632
      %v4727 = vadd.f32 %v4104, %v4635
      %v4728 = vadd.f32 %v4105, %v4640
      %v4729 = vadd.f32 %v4106, %v4643
      %v4730 = vadd.f32 %v4107, %v4648
      %v4731 = vadd.f32 %v4108, %v4651
      %v4732 = vadd.f32 %v4109, %v4656
      %v4733 = vadd.f32 %v4110, %v4659
      %v4734 = vadd.f32 %v4111, %v4664
      %v4735 = vadd.f32 %v4112, %v4667
      %v4736 = vadd.f32 %v4113, %v4672
      %v4737 = vadd.f32 %v4114, %v4675
      %v4738 = vadd.f32 %v4115, %v4680
      %v4739 = vadd.f32 %v4116, %v4683
      %v4740 = vadd.f32 %v4117, %v4688
      %v4741 = vadd.f32 %v4118, %v4691
      %v4742 = vadd.f32 %v4119, %v4696
      %v4743 = vadd.f32 %v4120, %v4699
      %v4744 = vadd.f32 %v4121, %v4704
      %v4745 = vadd.f32 %v4122, %v4707
      %v4746 = vld [vmem:[%s412 + $0x30] sm:$0x7]
      %s4747 = scalar_lea.vmem %s3, 112
      %v4748 = vld [vmem:[%s4747] sm:$0xf]
      %v4749 = vld [vmem:[%s4747 + $0x4] sm:$0xf]
      %v4750 = vld [vmem:[%s4747 + $0x8] sm:$0xf]
      %v4751 = vld [vmem:[%s4747 + $0xc] sm:$0xf]
      %v4753 = vunpack.c.l.b16 %v4746
      %v4754 = vpack.c.b16 %v4753, %v4753
      %v4756 = vshrl.u32 %v4161, 16
      %v4758 = vrot.slane %v4756, 2
      %v4759 = vshll.u32 %v4161, 16
      %v4761 = vrot.slane %v4759, 3
      %v4762 = vor.u32 %v4758, %v4761
      %v4764 = vshrl.u32 %v4162, 16
      %v4766 = vrot.slane %v4764, 2
      %v4767 = vshll.u32 %v4162, 16
      %v4769 = vrot.slane %v4767, 3
      %v4770 = vor.u32 %v4766, %v4769
      %v4771 = vsel %vm4296, %v4762, %v4770
      %v4773 = vshrl.u32 %v4163, 16
      %v4775 = vrot.slane %v4773, 2
      %v4776 = vshll.u32 %v4163, 16
      %v4778 = vrot.slane %v4776, 3
      %v4779 = vor.u32 %v4775, %v4778
      %v4780 = vsel %vm4296, %v4770, %v4779
      %v4782 = vshrl.u32 %v4164, 16
      %v4784 = vrot.slane %v4782, 2
      %v4785 = vshll.u32 %v4164, 16
      %v4787 = vrot.slane %v4785, 3
      %v4788 = vor.u32 %v4784, %v4787
      %v4789 = vsel %vm4296, %v4779, %v4788
      %v4791 = vshrl.u32 %v4165, 16
      %v4793 = vrot.slane %v4791, 2
      %v4794 = vshll.u32 %v4165, 16
      %v4796 = vrot.slane %v4794, 3
      %v4797 = vor.u32 %v4793, %v4796
      %v4798 = vsel %vm4296, %v4788, %v4797
      %v4800 = vshrl.u32 %v4754, 16
      %v4802 = vrot.slane %v4800, 2
      %v4803 = vshll.u32 %v4754, 16
      %v4805 = vrot.slane %v4803, 3
      %v4806 = vor.u32 %v4802, %v4805
      %v4807 = vsel %vm4296, %v4797, %v4806
      %v4812 = vunpack.c.l.b16 %v4748
      %v4813 = vunpack.c.l.b16 %v4749
      %v4814 = vunpack.c.l.b16 %v4750
      %v4815 = vunpack.c.l.b16 %v4751
      %v4816 = vpack.c.b16 %v4813, %v4812
      %v4817 = vpack.c.b16 %v4815, %v4814
      %v4821 = vsel %vm1304, %v4771, 0
      %v4824 = vsel %vm1304, %v4780, 0
      %v4827 = vsel %vm1304, %v4789, 0
      %v4830 = vsel %vm1304, %v4798, 0
      %v4833 = vsel %vm1304, %v4807, 0
      %4835 = vmatprep.subr.bf16.mxu0 0
      %4836 = vmatpush1.bf16.msra.mxu0 0
      %4837 = vmatprep.subr.bf16.mxu0 0
      %4838 = vmatpush1.bf16.msra.mxu0 0
      %4839 = vmatprep.subr.bf16.mxu0 0
      %4840 = vmatpush1.bf16.msra.mxu0 0
      %4841 = vmatprep.subr.bf16.mxu0 0
      %4842 = vmatpush1.bf16.msra.mxu0 0
      %4843 = vmatprep.subr.bf16.mxu0 0
      %4844 = vmatpush1.bf16.msra.mxu0 0
      %4845 = vmatprep.subr.bf16.mxu0 0
      %4846 = vmatpush1.bf16.msra.mxu0 0
      %4847 = vmatprep.subr.bf16.mxu0 0
      %4848 = vmatpush1.bf16.msra.mxu0 %v4817
      %4849 = vmatprep.subr.bf16.mxu0 0
      %4850 = vmatpush1.bf16.msra.mxu0 %v4816
      %4851 = vmatprep.subr.bf16.mxu0 0
      %4852 = vmatpush2.bf16.msra.mxu0 0
      %4853 = vmatprep.subr.bf16.mxu0 0
      %4854 = vmatpush2.bf16.msra.mxu0 0
      %4855 = vmatprep.subr.bf16.mxu0 0
      %4856 = vmatpush2.bf16.msra.mxu0 0
      %4857 = vmatprep.subr.bf16.mxu0 0
      %4858 = vmatpush2.bf16.msra.mxu0 0
      %4859 = vmatprep.subr.bf16.mxu0 0
      %4860 = vmatpush2.bf16.msra.mxu0 0
      %4861 = vmatprep.subr.bf16.mxu0 0
      %4862 = vmatpush2.bf16.msra.mxu0 0
      %4863 = vmatprep.subr.bf16.mxu0 0
      %4864 = vmatpush2.bf16.msra.mxu0 0
      %4865 = vmatprep.subr.bf16.mxu0 0
      %4866 = vmatpush2.bf16.msra.mxu0 0
      %4867 = vmatprep.mubr.bf16.mxu0 0
      %4868 = vmatmul.mubr.bf16.gmra.mxu0 %v4821
      %v4869 = vpop.f32.mrf.mxu0
      %v4870 = vadd.f32 0.0, %v4869
      %v4871 = vpop.f32.mrf.mxu0
      %v4872 = vpop.f32.mrf.mxu0
      %v4873 = vadd.f32 0.0, %v4872
      %v4874 = vpop.f32.mrf.mxu0
      %4875 = vmatprep.mubr.bf16.mxu0 0
      %4876 = vmatmul.mubr.bf16.gmra.mxu0 %v4824
      %v4877 = vpop.f32.mrf.mxu0
      %v4878 = vadd.f32 0.0, %v4877
      %v4879 = vpop.f32.mrf.mxu0
      %v4880 = vpop.f32.mrf.mxu0
      %v4881 = vadd.f32 0.0, %v4880
      %v4882 = vpop.f32.mrf.mxu0
      %4883 = vmatprep.mubr.bf16.mxu0 0
      %4884 = vmatmul.mubr.bf16.gmra.mxu0 %v4827
      %v4885 = vpop.f32.mrf.mxu0
      %v4886 = vadd.f32 0.0, %v4885
      %v4887 = vpop.f32.mrf.mxu0
      %v4888 = vpop.f32.mrf.mxu0
      %v4889 = vadd.f32 0.0, %v4888
      %v4890 = vpop.f32.mrf.mxu0
      %4891 = vmatprep.mubr.bf16.mxu0 0
      %4892 = vmatmul.mubr.bf16.gmra.mxu0 %v4830
      %v4893 = vpop.f32.mrf.mxu0
      %v4894 = vadd.f32 0.0, %v4893
      %v4895 = vpop.f32.mrf.mxu0
      %v4896 = vpop.f32.mrf.mxu0
      %v4897 = vadd.f32 0.0, %v4896
      %v4898 = vpop.f32.mrf.mxu0
      %4899 = vmatprep.mubr.bf16.mxu0 0
      %4900 = vmatmul.mubr.bf16.gmra.mxu0 %v4833
      %v4901 = vpop.f32.mrf.mxu0
      %v4902 = vadd.f32 0.0, %v4901
      %v4903 = vpop.f32.mrf.mxu0
      %v4904 = vpop.f32.mrf.mxu0
      %v4905 = vadd.f32 0.0, %v4904
      %v4906 = vpop.f32.mrf.mxu0
      %4907 = vdwg.mxu0
      %v4908 = vadd.f32 %v4278, %v4870
      %v4909 = vadd.f32 %v4279, %v4873
      %v4910 = vadd.f32 %v4280, %v4878
      %v4911 = vadd.f32 %v4281, %v4881
      %v4912 = vadd.f32 %v4282, %v4886
      %v4913 = vadd.f32 %v4283, %v4889
      %v4914 = vadd.f32 %v4284, %v4894
      %v4915 = vadd.f32 %v4285, %v4897
      %v4916 = vadd.f32 %v4286, %v4902
      %v4917 = vadd.f32 %v4287, %v4905
      %v4918 = vld [vmem:[%s407 + $0x10] sm:$0x8]
      %s4919 = scalar_lea.vmem %s2, 96
      %v4920 = vld [vmem:[%s4919] sm:$0xf]
      %v4921 = vld [vmem:[%s4919 + $0x4] sm:$0xf]
      %v4922 = vld [vmem:[%s4919 + $0x8] sm:$0xf]
      %v4924 = vunpack.c.l.b16 %v4918
      %v4925 = vpack.c.b16 %v3752, %v4924
      %vm4926 = vcmask 1044480
      %v4927 = vrot.slane %v4925, 3
      %v4928 = vrot.slane %v3789, 3
      %v4929 = vsel %vm4926, %v4927, %v4928
      %v4930 = vrot.slane %v3790, 3
      %v4931 = vsel %vm4926, %v4928, %v4930
      %v4932 = vrot.slane %v3791, 3
      %v4933 = vsel %vm4926, %v4930, %v4932
      %v4934 = vrot.slane %v3792, 3
      %v4935 = vsel %vm4926, %v4932, %v4934
      %v4936 = vrot.slane %v3793, 3
      %v4937 = vsel %vm4926, %v4934, %v4936
      %v4938 = vrot.slane %v3794, 3
      %v4939 = vsel %vm4926, %v4936, %v4938
      %v4940 = vrot.slane %v3795, 3
      %v4941 = vsel %vm4926, %v4938, %v4940
      %v4942 = vrot.slane %v3796, 3
      %v4943 = vsel %vm4926, %v4940, %v4942
      %v4944 = vrot.slane %v3797, 3
      %v4945 = vsel %vm4926, %v4942, %v4944
      %v4946 = vrot.slane %v3798, 3
      %v4947 = vsel %vm4926, %v4944, %v4946
      %v4948 = vrot.slane %v3799, 3
      %v4949 = vsel %vm4926, %v4946, %v4948
      %v4950 = vrot.slane %v3800, 3
      %v4951 = vsel %vm4926, %v4948, %v4950
      %v4952 = vrot.slane %v3801, 3
      %v4953 = vsel %vm4926, %v4950, %v4952
      %v4954 = vrot.slane %v3802, 3
      %v4955 = vsel %vm4926, %v4952, %v4954
      %v4956 = vrot.slane %v3803, 3
      %v4957 = vsel %vm4926, %v4954, %v4956
      %v4958 = vrot.slane %v3804, 3
      %v4959 = vsel %vm4926, %v4956, %v4958
      %v4960 = vrot.slane %v3805, 3
      %v4961 = vsel %vm4926, %v4958, %v4960
      %v4962 = vrot.slane %v4295, 3
      %v4963 = vsel %vm4926, %v4960, %v4962
      %v4967 = vunpack.c.l.b16 %v4920
      %v4968 = vunpack.c.l.b16 %v4921
      %v4969 = vunpack.c.l.b16 %v4922
      %v4970 = vpack.c.b16 %v4968, %v4967
      %v4971 = vpack.c.b16 %v4969, %v4969
      %v4974 = vsel %vm743, %v4929, 0
      %v4977 = vsel %vm743, %v4931, 0
      %v4980 = vsel %vm743, %v4933, 0
      %v4983 = vsel %vm743, %v4935, 0
      %v4986 = vsel %vm743, %v4937, 0
      %v4989 = vsel %vm743, %v4939, 0
      %v4992 = vsel %vm743, %v4941, 0
      %v4995 = vsel %vm743, %v4943, 0
      %v4998 = vsel %vm743, %v4945, 0
      %v5001 = vsel %vm743, %v4947, 0
      %v5004 = vsel %vm743, %v4949, 0
      %v5007 = vsel %vm743, %v4951, 0
      %v5010 = vsel %vm743, %v4953, 0
      %v5013 = vsel %vm743, %v4955, 0
      %v5016 = vsel %vm743, %v4957, 0
      %v5019 = vsel %vm743, %v4959, 0
      %v5022 = vsel %vm743, %v4961, 0
      %v5025 = vsel %vm743, %v4963, 0
      %v5028 = vsel %vm798, %v4971, 0
      %5030 = vmatprep.subr.bf16.mxu0 0
      %5031 = vmatpush1.bf16.msra.mxu0 0
      %5032 = vmatprep.subr.bf16.mxu0 0
      %5033 = vmatpush1.bf16.msra.mxu0 0
      %5034 = vmatprep.subr.bf16.mxu0 0
      %5035 = vmatpush1.bf16.msra.mxu0 0
      %5036 = vmatprep.subr.bf16.mxu0 0
      %5037 = vmatpush1.bf16.msra.mxu0 0
      %5038 = vmatprep.subr.bf16.mxu0 0
      %5039 = vmatpush1.bf16.msra.mxu0 0
      %5040 = vmatprep.subr.bf16.mxu0 0
      %5041 = vmatpush1.bf16.msra.mxu0 0
      %5042 = vmatprep.subr.bf16.mxu0 0
      %5043 = vmatpush1.bf16.msra.mxu0 %v5028
      %5044 = vmatprep.subr.bf16.mxu0 0
      %5045 = vmatpush1.bf16.msra.mxu0 %v4970
      %5046 = vmatprep.subr.bf16.mxu0 0
      %5047 = vmatpush2.bf16.msra.mxu0 0
      %5048 = vmatprep.subr.bf16.mxu0 0
      %5049 = vmatpush2.bf16.msra.mxu0 0
      %5050 = vmatprep.subr.bf16.mxu0 0
      %5051 = vmatpush2.bf16.msra.mxu0 0
      %5052 = vmatprep.subr.bf16.mxu0 0
      %5053 = vmatpush2.bf16.msra.mxu0 0
      %5054 = vmatprep.subr.bf16.mxu0 0
      %5055 = vmatpush2.bf16.msra.mxu0 0
      %5056 = vmatprep.subr.bf16.mxu0 0
      %5057 = vmatpush2.bf16.msra.mxu0 0
      %5058 = vmatprep.subr.bf16.mxu0 0
      %5059 = vmatpush2.bf16.msra.mxu0 0
      %5060 = vmatprep.subr.bf16.mxu0 0
      %5061 = vmatpush2.bf16.msra.mxu0 0
      %5062 = vmatprep.mubr.bf16.mxu0 0
      %5063 = vmatmul.mubr.bf16.gmra.mxu0 %v4974
      %v5064 = vpop.f32.mrf.mxu0
      %v5065 = vadd.f32 0.0, %v5064
      %v5066 = vpop.f32.mrf.mxu0
      %v5067 = vpop.f32.mrf.mxu0
      %v5068 = vadd.f32 0.0, %v5067
      %v5069 = vpop.f32.mrf.mxu0
      %5070 = vmatprep.mubr.bf16.mxu0 0
      %5071 = vmatmul.mubr.bf16.gmra.mxu0 %v4977
      %v5072 = vpop.f32.mrf.mxu0
      %v5073 = vadd.f32 0.0, %v5072
      %v5074 = vpop.f32.mrf.mxu0
      %v5075 = vpop.f32.mrf.mxu0
      %v5076 = vadd.f32 0.0, %v5075
      %v5077 = vpop.f32.mrf.mxu0
      %5078 = vmatprep.mubr.bf16.mxu0 0
      %5079 = vmatmul.mubr.bf16.gmra.mxu0 %v4980
      %v5080 = vpop.f32.mrf.mxu0
      %v5081 = vadd.f32 0.0, %v5080
      %v5082 = vpop.f32.mrf.mxu0
      %v5083 = vpop.f32.mrf.mxu0
      %v5084 = vadd.f32 0.0, %v5083
      %v5085 = vpop.f32.mrf.mxu0
      %5086 = vmatprep.mubr.bf16.mxu0 0
      %5087 = vmatmul.mubr.bf16.gmra.mxu0 %v4983
      %v5088 = vpop.f32.mrf.mxu0
      %v5089 = vadd.f32 0.0, %v5088
      %v5090 = vpop.f32.mrf.mxu0
      %v5091 = vpop.f32.mrf.mxu0
      %v5092 = vadd.f32 0.0, %v5091
      %v5093 = vpop.f32.mrf.mxu0
      %5094 = vmatprep.mubr.bf16.mxu0 0
      %5095 = vmatmul.mubr.bf16.gmra.mxu0 %v4986
      %v5096 = vpop.f32.mrf.mxu0
      %v5097 = vadd.f32 0.0, %v5096
      %v5098 = vpop.f32.mrf.mxu0
      %v5099 = vpop.f32.mrf.mxu0
      %v5100 = vadd.f32 0.0, %v5099
      %v5101 = vpop.f32.mrf.mxu0
      %5102 = vmatprep.mubr.bf16.mxu0 0
      %5103 = vmatmul.mubr.bf16.gmra.mxu0 %v4989
      %v5104 = vpop.f32.mrf.mxu0
      %v5105 = vadd.f32 0.0, %v5104
      %v5106 = vpop.f32.mrf.mxu0
      %v5107 = vpop.f32.mrf.mxu0
      %v5108 = vadd.f32 0.0, %v5107
      %v5109 = vpop.f32.mrf.mxu0
      %5110 = vmatprep.mubr.bf16.mxu0 0
      %5111 = vmatmul.mubr.bf16.gmra.mxu0 %v4992
      %v5112 = vpop.f32.mrf.mxu0
      %v5113 = vadd.f32 0.0, %v5112
      %v5114 = vpop.f32.mrf.mxu0
      %v5115 = vpop.f32.mrf.mxu0
      %v5116 = vadd.f32 0.0, %v5115
      %v5117 = vpop.f32.mrf.mxu0
      %5118 = vmatprep.mubr.bf16.mxu0 0
      %5119 = vmatmul.mubr.bf16.gmra.mxu0 %v4995
      %v5120 = vpop.f32.mrf.mxu0
      %v5121 = vadd.f32 0.0, %v5120
      %v5122 = vpop.f32.mrf.mxu0
      %v5123 = vpop.f32.mrf.mxu0
      %v5124 = vadd.f32 0.0, %v5123
      %v5125 = vpop.f32.mrf.mxu0
      %5126 = vmatprep.mubr.bf16.mxu0 0
      %5127 = vmatmul.mubr.bf16.gmra.mxu0 %v4998
      %v5128 = vpop.f32.mrf.mxu0
      %v5129 = vadd.f32 0.0, %v5128
      %v5130 = vpop.f32.mrf.mxu0
      %v5131 = vpop.f32.mrf.mxu0
      %v5132 = vadd.f32 0.0, %v5131
      %v5133 = vpop.f32.mrf.mxu0
      %5134 = vmatprep.mubr.bf16.mxu0 0
      %5135 = vmatmul.mubr.bf16.gmra.mxu0 %v5001
      %v5136 = vpop.f32.mrf.mxu0
      %v5137 = vadd.f32 0.0, %v5136
      %v5138 = vpop.f32.mrf.mxu0
      %v5139 = vpop.f32.mrf.mxu0
      %v5140 = vadd.f32 0.0, %v5139
      %v5141 = vpop.f32.mrf.mxu0
      %5142 = vmatprep.mubr.bf16.mxu0 0
      %5143 = vmatmul.mubr.bf16.gmra.mxu0 %v5004
      %v5144 = vpop.f32.mrf.mxu0
      %v5145 = vadd.f32 0.0, %v5144
      %v5146 = vpop.f32.mrf.mxu0
      %v5147 = vpop.f32.mrf.mxu0
      %v5148 = vadd.f32 0.0, %v5147
      %v5149 = vpop.f32.mrf.mxu0
      %5150 = vmatprep.mubr.bf16.mxu0 0
      %5151 = vmatmul.mubr.bf16.gmra.mxu0 %v5007
      %v5152 = vpop.f32.mrf.mxu0
      %v5153 = vadd.f32 0.0, %v5152
      %v5154 = vpop.f32.mrf.mxu0
      %v5155 = vpop.f32.mrf.mxu0
      %v5156 = vadd.f32 0.0, %v5155
      %v5157 = vpop.f32.mrf.mxu0
      %5158 = vmatprep.mubr.bf16.mxu0 0
      %5159 = vmatmul.mubr.bf16.gmra.mxu0 %v5010
      %v5160 = vpop.f32.mrf.mxu0
      %v5161 = vadd.f32 0.0, %v5160
      %v5162 = vpop.f32.mrf.mxu0
      %v5163 = vpop.f32.mrf.mxu0
      %v5164 = vadd.f32 0.0, %v5163
      %v5165 = vpop.f32.mrf.mxu0
      %5166 = vmatprep.mubr.bf16.mxu0 0
      %5167 = vmatmul.mubr.bf16.gmra.mxu0 %v5013
      %v5168 = vpop.f32.mrf.mxu0
      %v5169 = vadd.f32 0.0, %v5168
      %v5170 = vpop.f32.mrf.mxu0
      %v5171 = vpop.f32.mrf.mxu0
      %v5172 = vadd.f32 0.0, %v5171
      %v5173 = vpop.f32.mrf.mxu0
      %5174 = vmatprep.mubr.bf16.mxu0 0
      %5175 = vmatmul.mubr.bf16.gmra.mxu0 %v5016
      %v5176 = vpop.f32.mrf.mxu0
      %v5177 = vadd.f32 0.0, %v5176
      %v5178 = vpop.f32.mrf.mxu0
      %v5179 = vpop.f32.mrf.mxu0
      %v5180 = vadd.f32 0.0, %v5179
      %v5181 = vpop.f32.mrf.mxu0
      %5182 = vmatprep.mubr.bf16.mxu0 0
      %5183 = vmatmul.mubr.bf16.gmra.mxu0 %v5019
      %v5184 = vpop.f32.mrf.mxu0
      %v5185 = vadd.f32 0.0, %v5184
      %v5186 = vpop.f32.mrf.mxu0
      %v5187 = vpop.f32.mrf.mxu0
      %v5188 = vadd.f32 0.0, %v5187
      %v5189 = vpop.f32.mrf.mxu0
      %5190 = vmatprep.mubr.bf16.mxu0 0
      %5191 = vmatmul.mubr.bf16.gmra.mxu0 %v5022
      %v5192 = vpop.f32.mrf.mxu0
      %v5193 = vadd.f32 0.0, %v5192
      %v5194 = vpop.f32.mrf.mxu0
      %v5195 = vpop.f32.mrf.mxu0
      %v5196 = vadd.f32 0.0, %v5195
      %v5197 = vpop.f32.mrf.mxu0
      %5198 = vmatprep.mubr.bf16.mxu0 0
      %5199 = vmatmul.mubr.bf16.gmra.mxu0 %v5025
      %v5200 = vpop.f32.mrf.mxu0
      %v5201 = vadd.f32 0.0, %v5200
      %v5202 = vpop.f32.mrf.mxu0
      %v5203 = vpop.f32.mrf.mxu0
      %v5204 = vadd.f32 0.0, %v5203
      %v5205 = vpop.f32.mrf.mxu0
      %5206 = vdwg.mxu0
      %v5207 = vadd.f32 %v4710, %v5065
      %v5208 = vadd.f32 %v4711, %v5068
      %v5209 = vadd.f32 %v4712, %v5073
      %v5210 = vadd.f32 %v4713, %v5076
      %v5211 = vadd.f32 %v4714, %v5081
      %v5212 = vadd.f32 %v4715, %v5084
      %v5213 = vadd.f32 %v4716, %v5089
      %v5214 = vadd.f32 %v4717, %v5092
      %v5215 = vadd.f32 %v4718, %v5097
      %v5216 = vadd.f32 %v4719, %v5100
      %v5217 = vadd.f32 %v4720, %v5105
      %v5218 = vadd.f32 %v4721, %v5108
      %v5219 = vadd.f32 %v4722, %v5113
      %v5220 = vadd.f32 %v4723, %v5116
      %v5221 = vadd.f32 %v4724, %v5121
      %v5222 = vadd.f32 %v4725, %v5124
      %v5223 = vadd.f32 %v4726, %v5129
      %v5224 = vadd.f32 %v4727, %v5132
      %v5225 = vadd.f32 %v4728, %v5137
      %v5226 = vadd.f32 %v4729, %v5140
      %v5227 = vadd.f32 %v4730, %v5145
      %v5228 = vadd.f32 %v4731, %v5148
      %v5229 = vadd.f32 %v4732, %v5153
      %v5230 = vadd.f32 %v4733, %v5156
      %v5231 = vadd.f32 %v4734, %v5161
      %v5232 = vadd.f32 %v4735, %v5164
      %v5233 = vadd.f32 %v4736, %v5169
      %v5234 = vadd.f32 %v4737, %v5172
      %v5235 = vadd.f32 %v4738, %v5177
      %v5236 = vadd.f32 %v4739, %v5180
      %v5237 = vadd.f32 %v4740, %v5185
      %v5238 = vadd.f32 %v4741, %v5188
      %v5239 = vadd.f32 %v4742, %v5193
      %v5240 = vadd.f32 %v4743, %v5196
      %v5241 = vadd.f32 %v4744, %v5201
      %v5242 = vadd.f32 %v4745, %v5204
      %v5243 = vld [vmem:[%s412 + $0x8] sm:$0x8]
      %s5244 = scalar_lea.vmem %s3, 128
      %v5245 = vld [vmem:[%s5244] sm:$0xf]
      %v5246 = vld [vmem:[%s5244 + $0x4] sm:$0xf]
      %v5247 = vld [vmem:[%s5244 + $0x8] sm:$0xf]
      %v5248 = vld [vmem:[%s5244 + $0xc] sm:$0xf]
      %v5250 = vunpack.c.l.b16 %v5243
      %v5251 = vpack.c.b16 %v4151, %v5250
      %v5252 = vrot.slane %v5251, 3
      %v5253 = vrot.slane %v4162, 3
      %v5254 = vsel %vm4926, %v5252, %v5253
      %v5255 = vrot.slane %v4163, 3
      %v5256 = vsel %vm4926, %v5253, %v5255
      %v5257 = vrot.slane %v4164, 3
      %v5258 = vsel %vm4926, %v5255, %v5257
      %v5259 = vrot.slane %v4165, 3
      %v5260 = vsel %vm4926, %v5257, %v5259
      %v5261 = vrot.slane %v4754, 3
      %v5262 = vsel %vm4926, %v5259, %v5261
      %v5267 = vunpack.c.l.b16 %v5245
      %v5268 = vunpack.c.l.b16 %v5246
      %v5269 = vunpack.c.l.b16 %v5247
      %v5270 = vunpack.c.l.b16 %v5248
      %v5271 = vpack.c.b16 %v5268, %v5267
      %v5272 = vpack.c.b16 %v5270, %v5269
      %v5276 = vsel %vm1304, %v5254, 0
      %v5279 = vsel %vm1304, %v5256, 0
      %v5282 = vsel %vm1304, %v5258, 0
      %v5285 = vsel %vm1304, %v5260, 0
      %v5288 = vsel %vm1304, %v5262, 0
      %5290 = vmatprep.subr.bf16.mxu0 0
      %5291 = vmatpush1.bf16.msra.mxu0 0
      %5292 = vmatprep.subr.bf16.mxu0 0
      %5293 = vmatpush1.bf16.msra.mxu0 0
      %5294 = vmatprep.subr.bf16.mxu0 0
      %5295 = vmatpush1.bf16.msra.mxu0 0
      %5296 = vmatprep.subr.bf16.mxu0 0
      %5297 = vmatpush1.bf16.msra.mxu0 0
      %5298 = vmatprep.subr.bf16.mxu0 0
      %5299 = vmatpush1.bf16.msra.mxu0 0
      %5300 = vmatprep.subr.bf16.mxu0 0
      %5301 = vmatpush1.bf16.msra.mxu0 0
      %5302 = vmatprep.subr.bf16.mxu0 0
      %5303 = vmatpush1.bf16.msra.mxu0 %v5272
      %5304 = vmatprep.subr.bf16.mxu0 0
      %5305 = vmatpush1.bf16.msra.mxu0 %v5271
      %5306 = vmatprep.subr.bf16.mxu0 0
      %5307 = vmatpush2.bf16.msra.mxu0 0
      %5308 = vmatprep.subr.bf16.mxu0 0
      %5309 = vmatpush2.bf16.msra.mxu0 0
      %5310 = vmatprep.subr.bf16.mxu0 0
      %5311 = vmatpush2.bf16.msra.mxu0 0
      %5312 = vmatprep.subr.bf16.mxu0 0
      %5313 = vmatpush2.bf16.msra.mxu0 0
      %5314 = vmatprep.subr.bf16.mxu0 0
      %5315 = vmatpush2.bf16.msra.mxu0 0
      %5316 = vmatprep.subr.bf16.mxu0 0
      %5317 = vmatpush2.bf16.msra.mxu0 0
      %5318 = vmatprep.subr.bf16.mxu0 0
      %5319 = vmatpush2.bf16.msra.mxu0 0
      %5320 = vmatprep.subr.bf16.mxu0 0
      %5321 = vmatpush2.bf16.msra.mxu0 0
      %5322 = vmatprep.mubr.bf16.mxu0 0
      %5323 = vmatmul.mubr.bf16.gmra.mxu0 %v5276
      %v5324 = vpop.f32.mrf.mxu0
      %v5325 = vadd.f32 0.0, %v5324
      %v5326 = vpop.f32.mrf.mxu0
      %v5327 = vpop.f32.mrf.mxu0
      %v5328 = vadd.f32 0.0, %v5327
      %v5329 = vpop.f32.mrf.mxu0
      %5330 = vmatprep.mubr.bf16.mxu0 0
      %5331 = vmatmul.mubr.bf16.gmra.mxu0 %v5279
      %v5332 = vpop.f32.mrf.mxu0
      %v5333 = vadd.f32 0.0, %v5332
      %v5334 = vpop.f32.mrf.mxu0
      %v5335 = vpop.f32.mrf.mxu0
      %v5336 = vadd.f32 0.0, %v5335
      %v5337 = vpop.f32.mrf.mxu0
      %5338 = vmatprep.mubr.bf16.mxu0 0
      %5339 = vmatmul.mubr.bf16.gmra.mxu0 %v5282
      %v5340 = vpop.f32.mrf.mxu0
      %v5341 = vadd.f32 0.0, %v5340
      %v5342 = vpop.f32.mrf.mxu0
      %v5343 = vpop.f32.mrf.mxu0
      %v5344 = vadd.f32 0.0, %v5343
      %v5345 = vpop.f32.mrf.mxu0
      %5346 = vmatprep.mubr.bf16.mxu0 0
      %5347 = vmatmul.mubr.bf16.gmra.mxu0 %v5285
      %v5348 = vpop.f32.mrf.mxu0
      %v5349 = vadd.f32 0.0, %v5348
      %v5350 = vpop.f32.mrf.mxu0
      %v5351 = vpop.f32.mrf.mxu0
      %v5352 = vadd.f32 0.0, %v5351
      %v5353 = vpop.f32.mrf.mxu0
      %5354 = vmatprep.mubr.bf16.mxu0 0
      %5355 = vmatmul.mubr.bf16.gmra.mxu0 %v5288
      %v5356 = vpop.f32.mrf.mxu0
      %v5357 = vadd.f32 0.0, %v5356
      %v5358 = vpop.f32.mrf.mxu0
      %v5359 = vpop.f32.mrf.mxu0
      %v5360 = vadd.f32 0.0, %v5359
      %v5361 = vpop.f32.mrf.mxu0
      %5362 = vdwg.mxu0
      %v5363 = vadd.f32 %v4908, %v5325
      %v5364 = vadd.f32 %v4909, %v5328
      %v5365 = vadd.f32 %v4910, %v5333
      %v5366 = vadd.f32 %v4911, %v5336
      %v5367 = vadd.f32 %v4912, %v5341
      %v5368 = vadd.f32 %v4913, %v5344
      %v5369 = vadd.f32 %v4914, %v5349
      %v5370 = vadd.f32 %v4915, %v5352
      %v5371 = vadd.f32 %v4916, %v5357
      %v5372 = vadd.f32 %v4917, %v5360
      %v5373 = vld [vmem:[%s6] sm:$0x1]
      %v5375 = vlaneseq
      %v5376 = vshrl.u32 %v5375, 7
      %v5377 = vsub.s32 0, %v5376
      %v5378 = vrot.slane %v5373, %v5377
      %5379 = vrot.lane.b32.xlu0 %v5378, 24
      %v5380 = vpop.permute.xlu0 %5379
      %v5382 = vadd.f32 %v5363, %v5380
      %v5383 = vadd.f32 %v5364, %v5380
      %v5384 = vadd.f32 %v5365, %v5380
      %v5385 = vadd.f32 %v5366, %v5380
      %v5386 = vadd.f32 %v5367, %v5380
      %v5387 = vadd.f32 %v5368, %v5380
      %v5388 = vadd.f32 %v5369, %v5380
      %v5389 = vadd.f32 %v5370, %v5380
      %v5390 = vadd.f32 %v5371, %v5380
      %v5391 = vadd.f32 %v5372, %v5380
      %v5392 = vld [vmem:[%s422] sm:$0xff]
      %v5393 = vld [vmem:[%s422 + $0x8] sm:$0xff]
      %v5394 = vld [vmem:[%s422 + $0x10] sm:$0xff]
      %v5395 = vld [vmem:[%s422 + $0x18] sm:$0xff]
      %v5396 = vld [vmem:[%s422 + $0x20] sm:$0xff]
      %v5397 = vld [vmem:[%s422 + $0x28] sm:$0xff]
      %v5398 = vld [vmem:[%s422 + $0x30] sm:$0xff]
      %v5399 = vld [vmem:[%s422 + $0x38] sm:$0xff]
      %v5400 = vld [vmem:[%s422 + $0x40] sm:$0xff]
      %v5401 = vld [vmem:[%s422 + $0x48] sm:$0xff]
      %5412 = vrot.lane.b32.xlu0 %v5392, 24
      %v5413 = vpop.permute.xlu0 %5412
      %5414 = vrot.lane.b32.xlu0 %v5393, 24
      %v5415 = vpop.permute.xlu0 %5414
      %5416 = vrot.lane.b32.xlu0 %v5394, 24
      %v5417 = vpop.permute.xlu0 %5416
      %5418 = vrot.lane.b32.xlu0 %v5395, 24
      %v5419 = vpop.permute.xlu0 %5418
      %5420 = vrot.lane.b32.xlu0 %v5396, 24
      %v5421 = vpop.permute.xlu0 %5420
      %5422 = vrot.lane.b32.xlu0 %v5397, 24
      %v5423 = vpop.permute.xlu0 %5422
      %5424 = vrot.lane.b32.xlu0 %v5398, 24
      %v5425 = vpop.permute.xlu0 %5424
      %5426 = vrot.lane.b32.xlu0 %v5399, 24
      %v5427 = vpop.permute.xlu0 %5426
      %5428 = vrot.lane.b32.xlu0 %v5400, 24
      %v5429 = vpop.permute.xlu0 %5428
      %5430 = vrot.lane.b32.xlu0 %v5401, 24
      %v5431 = vpop.permute.xlu0 %5430
      %v5442 = vadd.f32 %v5382, %v5413
      %v5443 = vadd.f32 %v5383, %v5415
      %v5444 = vadd.f32 %v5384, %v5417
      %v5445 = vadd.f32 %v5385, %v5419
      %v5446 = vadd.f32 %v5386, %v5421
      %v5447 = vadd.f32 %v5387, %v5423
      %v5448 = vadd.f32 %v5388, %v5425
      %v5449 = vadd.f32 %v5389, %v5427
      %v5450 = vadd.f32 %v5390, %v5429
      %v5451 = vadd.f32 %v5391, %v5431
      %v5452 = vmax.f32 %v5442, 0.0
      %v5453 = vmax.f32 %v5443, 0.0
      %v5454 = vmax.f32 %v5444, 0.0
      %v5455 = vmax.f32 %v5445, 0.0
      %v5456 = vmax.f32 %v5446, 0.0
      %v5457 = vmax.f32 %v5447, 0.0
      %v5458 = vmax.f32 %v5448, 0.0
      %v5459 = vmax.f32 %v5449, 0.0
      %v5460 = vmax.f32 %v5450, 0.0
      %v5461 = vmax.f32 %v5451, 0.0
      %5472 = vrot.lane.b32.xlu0 %v5452, 104
      %v5473 = vpop.permute.xlu0 %5472
      %5474 = vrot.lane.b32.xlu0 %v5453, 104
      %v5475 = vpop.permute.xlu0 %5474
      %5476 = vrot.lane.b32.xlu0 %v5454, 104
      %v5477 = vpop.permute.xlu0 %5476
      %5478 = vrot.lane.b32.xlu0 %v5455, 104
      %v5479 = vpop.permute.xlu0 %5478
      %5480 = vrot.lane.b32.xlu0 %v5456, 104
      %v5481 = vpop.permute.xlu0 %5480
      %5482 = vrot.lane.b32.xlu0 %v5457, 104
      %v5483 = vpop.permute.xlu0 %5482
      %5484 = vrot.lane.b32.xlu0 %v5458, 104
      %v5485 = vpop.permute.xlu0 %5484
      %5486 = vrot.lane.b32.xlu0 %v5459, 104
      %v5487 = vpop.permute.xlu0 %5486
      %5488 = vrot.lane.b32.xlu0 %v5460, 104
      %v5489 = vpop.permute.xlu0 %5488
      %5490 = vrot.lane.b32.xlu0 %v5461, 104
      %v5491 = vpop.permute.xlu0 %5490
      %vm5502 = vcmask 64512
      %5503 = vst.msk [vmem:[%s432] sm:$0xff] %vm5502, %v5473
      %5504 = vst.msk [vmem:[%s432 + $0x8] sm:$0xff] %vm5502, %v5475
      %5505 = vst.msk [vmem:[%s432 + $0x10] sm:$0xff] %vm5502, %v5477
      %5506 = vst.msk [vmem:[%s432 + $0x18] sm:$0xff] %vm5502, %v5479
      %5507 = vst.msk [vmem:[%s432 + $0x20] sm:$0xff] %vm5502, %v5481
      %5508 = vst.msk [vmem:[%s432 + $0x28] sm:$0xff] %vm5502, %v5483
      %5509 = vst.msk [vmem:[%s432 + $0x30] sm:$0xff] %vm5502, %v5485
      %5510 = vst.msk [vmem:[%s432 + $0x38] sm:$0xff] %vm5502, %v5487
      %5511 = vst.msk [vmem:[%s432 + $0x40] sm:$0xff] %vm5502, %v5489
      %5512 = vst.msk [vmem:[%s432 + $0x48] sm:$0xff] %vm5502, %v5491
      %v5513 = vpack.c.bf16 %v5364, %v5363
      %v5514 = vpack.c.bf16 %v5366, %v5365
      %v5515 = vpack.c.bf16 %v5368, %v5367
      %v5516 = vpack.c.bf16 %v5370, %v5369
      %v5517 = vpack.c.bf16 %v5372, %v5371
      %v5518 = vld [vmem:[%s4] sm:$0xf]
      %v5519 = vld [vmem:[%s4 + $0x4] sm:$0xf]
      %v5520 = vld [vmem:[%s4 + $0x8] sm:$0xf]
      %v5521 = vld [vmem:[%s4 + $0xc] sm:$0xf]
      %v5522 = vld [vmem:[%s4 + $0x10] sm:$0xf]
      %v5523 = vld [vmem:[%s4 + $0x14] sm:$0xf]
      %v5524 = vld [vmem:[%s4 + $0x18] sm:$0xf]
      %v5525 = vld [vmem:[%s4 + $0x1c] sm:$0xf]
      %v5526 = vld [vmem:[%s4 + $0x20] sm:$0xf]
      %v5527 = vld [vmem:[%s4 + $0x24] sm:$0xf]
      %v5528 = vld [vmem:[%s4 + $0x28] sm:$0xf]
      %v5529 = vld [vmem:[%s4 + $0x2c] sm:$0xf]
      %v5530 = vld [vmem:[%s4 + $0x30] sm:$0xf]
      %v5531 = vld [vmem:[%s4 + $0x34] sm:$0xf]
      %v5532 = vld [vmem:[%s4 + $0x38] sm:$0xf]
      %v5533 = vld [vmem:[%s4 + $0x3c] sm:$0xf]
      %v5534 = vld [vmem:[%s4 + $0x40] sm:$0xf]
      %v5535 = vld [vmem:[%s4 + $0x44] sm:$0xf]
      %v5536 = vld [vmem:[%s4 + $0x48] sm:$0xf]
      %v5537 = vld [vmem:[%s4 + $0x4c] sm:$0xf]
      %v5538 = vld [vmem:[%s4 + $0x50] sm:$0xf]
      %v5539 = vld [vmem:[%s4 + $0x54] sm:$0xf]
      %v5540 = vld [vmem:[%s4 + $0x58] sm:$0xf]
      %v5541 = vld [vmem:[%s4 + $0x5c] sm:$0xf]
      %v5542 = vld [vmem:[%s4 + $0x60] sm:$0xf]
      %v5543 = vld [vmem:[%s4 + $0x64] sm:$0xf]
      %v5544 = vld [vmem:[%s4 + $0x68] sm:$0xf]
      %v5545 = vld [vmem:[%s4 + $0x6c] sm:$0xf]
      %v5546 = vld [vmem:[%s4 + $0x70] sm:$0xf]
      %v5547 = vld [vmem:[%s4 + $0x74] sm:$0xf]
      %v5548 = vld [vmem:[%s4 + $0x78] sm:$0xf]
      %v5549 = vld [vmem:[%s4 + $0x7c] sm:$0xf]
      %v5550 = vld [vmem:[%s4 + $0x80] sm:$0xf]
      %v5551 = vld [vmem:[%s4 + $0x84] sm:$0xf]
      %v5552 = vld [vmem:[%s4 + $0x88] sm:$0xf]
      %v5553 = vld [vmem:[%s4 + $0x8c] sm:$0xf]
      %v5590 = vunpack.c.l.b16 %v5518
      %v5591 = vunpack.c.l.b16 %v5519
      %v5592 = vunpack.c.l.b16 %v5520
      %v5593 = vunpack.c.l.b16 %v5521
      %v5594 = vunpack.c.l.b16 %v5522
      %v5595 = vunpack.c.l.b16 %v5523
      %v5596 = vunpack.c.l.b16 %v5524
      %v5597 = vunpack.c.l.b16 %v5525
      %v5598 = vunpack.c.l.b16 %v5526
      %v5599 = vunpack.c.l.b16 %v5527
      %v5600 = vunpack.c.l.b16 %v5528
      %v5601 = vunpack.c.l.b16 %v5529
      %v5602 = vunpack.c.l.b16 %v5530
      %v5603 = vunpack.c.l.b16 %v5531
      %v5604 = vunpack.c.l.b16 %v5532
      %v5605 = vunpack.c.l.b16 %v5533
      %v5606 = vunpack.c.l.b16 %v5534
      %v5607 = vunpack.c.l.b16 %v5535
      %v5608 = vunpack.c.l.b16 %v5536
      %v5609 = vunpack.c.l.b16 %v5537
      %v5610 = vunpack.c.l.b16 %v5538
      %v5611 = vunpack.c.l.b16 %v5539
      %v5612 = vunpack.c.l.b16 %v5540
      %v5613 = vunpack.c.l.b16 %v5541
      %v5614 = vunpack.c.l.b16 %v5542
      %v5615 = vunpack.c.l.b16 %v5543
      %v5616 = vunpack.c.l.b16 %v5544
      %v5617 = vunpack.c.l.b16 %v5545
      %v5618 = vunpack.c.l.b16 %v5546
      %v5619 = vunpack.c.l.b16 %v5547
      %v5620 = vunpack.c.l.b16 %v5548
      %v5621 = vunpack.c.l.b16 %v5549
      %v5622 = vunpack.c.l.b16 %v5550
      %v5623 = vunpack.c.l.b16 %v5551
      %v5624 = vunpack.c.l.b16 %v5552
      %v5625 = vunpack.c.l.b16 %v5553
      %v5626 = vpack.c.b16 %v5591, %v5590
      %v5627 = vpack.c.b16 %v5593, %v5592
      %v5628 = vpack.c.b16 %v5595, %v5594
      %v5629 = vpack.c.b16 %v5597, %v5596
      %v5630 = vpack.c.b16 %v5599, %v5598
      %v5631 = vpack.c.b16 %v5601, %v5600
      %v5632 = vpack.c.b16 %v5603, %v5602
      %v5633 = vpack.c.b16 %v5605, %v5604
      %v5634 = vpack.c.b16 %v5607, %v5606
      %v5635 = vpack.c.b16 %v5609, %v5608
      %v5636 = vpack.c.b16 %v5611, %v5610
      %v5637 = vpack.c.b16 %v5613, %v5612
      %v5638 = vpack.c.b16 %v5615, %v5614
      %v5639 = vpack.c.b16 %v5617, %v5616
      %v5640 = vpack.c.b16 %v5619, %v5618
      %v5641 = vpack.c.b16 %v5621, %v5620
      %v5642 = vpack.c.b16 %v5623, %v5622
      %v5643 = vpack.c.b16 %v5625, %v5624
      %vm5644 = vcmask 654336
      %v5646 = vsel %vm5644, %v5626, 0
      %v5649 = vsel %vm5644, %v5627, 0
      %v5652 = vsel %vm5644, %v5628, 0
      %v5655 = vsel %vm5644, %v5629, 0
      %v5658 = vsel %vm5644, %v5630, 0
      %v5661 = vsel %vm5644, %v5631, 0
      %v5664 = vsel %vm5644, %v5632, 0
      %v5667 = vsel %vm5644, %v5633, 0
      %v5670 = vsel %vm5644, %v5634, 0
      %v5673 = vsel %vm5644, %v5635, 0
      %v5676 = vsel %vm5644, %v5636, 0
      %v5679 = vsel %vm5644, %v5637, 0
      %v5682 = vsel %vm5644, %v5638, 0
      %v5685 = vsel %vm5644, %v5639, 0
      %v5688 = vsel %vm5644, %v5640, 0
      %v5691 = vsel %vm5644, %v5641, 0
      %v5694 = vsel %vm5644, %v5642, 0
      %v5697 = vsel %vm5644, %v5643, 0
      %5699 = vmatprep.subr.bf16.mxu0 0
      %5700 = vmatpush1.bf16.msra.mxu0 0
      %5701 = vmatprep.subr.bf16.mxu0 0
      %5702 = vmatpush1.bf16.msra.mxu0 0
      %5703 = vmatprep.subr.bf16.mxu0 0
      %5704 = vmatpush1.bf16.msra.mxu0 0
      %5705 = vmatprep.subr.bf16.mxu0 0
      %5706 = vmatpush1.bf16.msra.mxu0 %v5517
      %5707 = vmatprep.subr.bf16.mxu0 0
      %5708 = vmatpush1.bf16.msra.mxu0 %v5516
      %5709 = vmatprep.subr.bf16.mxu0 0
      %5710 = vmatpush1.bf16.msra.mxu0 %v5515
      %5711 = vmatprep.subr.bf16.mxu0 0
      %5712 = vmatpush1.bf16.msra.mxu0 %v5514
      %5713 = vmatprep.subr.bf16.mxu0 0
      %5714 = vmatpush1.bf16.msra.mxu0 %v5513
      %5715 = vmatprep.subr.bf16.mxu0 0
      %5716 = vmatpush2.bf16.msra.mxu0 0
      %5717 = vmatprep.subr.bf16.mxu0 0
      %5718 = vmatpush2.bf16.msra.mxu0 0
      %5719 = vmatprep.subr.bf16.mxu0 0
      %5720 = vmatpush2.bf16.msra.mxu0 0
      %5721 = vmatprep.subr.bf16.mxu0 0
      %5722 = vmatpush2.bf16.msra.mxu0 0
      %5723 = vmatprep.subr.bf16.mxu0 0
      %5724 = vmatpush2.bf16.msra.mxu0 0
      %5725 = vmatprep.subr.bf16.mxu0 0
      %5726 = vmatpush2.bf16.msra.mxu0 0
      %5727 = vmatprep.subr.bf16.mxu0 0
      %5728 = vmatpush2.bf16.msra.mxu0 0
      %5729 = vmatprep.subr.bf16.mxu0 0
      %5730 = vmatpush2.bf16.msra.mxu0 0
      %5731 = vmatprep.mubr.bf16.mxu0 0
      %5732 = vmatmul.mubr.bf16.gmra.mxu0 %v5646
      %v5733 = vpop.f32.mrf.mxu0
      %v5734 = vadd.f32 0.0, %v5733
      %v5735 = vpop.f32.mrf.mxu0
      %v5736 = vpop.f32.mrf.mxu0
      %v5737 = vadd.f32 0.0, %v5736
      %v5738 = vpop.f32.mrf.mxu0
      %5739 = vmatprep.mubr.bf16.mxu0 0
      %5740 = vmatmul.mubr.bf16.gmra.mxu0 %v5649
      %v5741 = vpop.f32.mrf.mxu0
      %v5742 = vadd.f32 0.0, %v5741
      %v5743 = vpop.f32.mrf.mxu0
      %v5744 = vpop.f32.mrf.mxu0
      %v5745 = vadd.f32 0.0, %v5744
      %v5746 = vpop.f32.mrf.mxu0
      %5747 = vmatprep.mubr.bf16.mxu0 0
      %5748 = vmatmul.mubr.bf16.gmra.mxu0 %v5652
      %v5749 = vpop.f32.mrf.mxu0
      %v5750 = vadd.f32 0.0, %v5749
      %v5751 = vpop.f32.mrf.mxu0
      %v5752 = vpop.f32.mrf.mxu0
      %v5753 = vadd.f32 0.0, %v5752
      %v5754 = vpop.f32.mrf.mxu0
      %5755 = vmatprep.mubr.bf16.mxu0 0
      %5756 = vmatmul.mubr.bf16.gmra.mxu0 %v5655
      %v5757 = vpop.f32.mrf.mxu0
      %v5758 = vadd.f32 0.0, %v5757
      %v5759 = vpop.f32.mrf.mxu0
      %v5760 = vpop.f32.mrf.mxu0
      %v5761 = vadd.f32 0.0, %v5760
      %v5762 = vpop.f32.mrf.mxu0
      %5763 = vmatprep.mubr.bf16.mxu0 0
      %5764 = vmatmul.mubr.bf16.gmra.mxu0 %v5658
      %v5765 = vpop.f32.mrf.mxu0
      %v5766 = vadd.f32 0.0, %v5765
      %v5767 = vpop.f32.mrf.mxu0
      %v5768 = vpop.f32.mrf.mxu0
      %v5769 = vadd.f32 0.0, %v5768
      %v5770 = vpop.f32.mrf.mxu0
      %5771 = vmatprep.mubr.bf16.mxu0 0
      %5772 = vmatmul.mubr.bf16.gmra.mxu0 %v5661
      %v5773 = vpop.f32.mrf.mxu0
      %v5774 = vadd.f32 0.0, %v5773
      %v5775 = vpop.f32.mrf.mxu0
      %v5776 = vpop.f32.mrf.mxu0
      %v5777 = vadd.f32 0.0, %v5776
      %v5778 = vpop.f32.mrf.mxu0
      %5779 = vmatprep.mubr.bf16.mxu0 0
      %5780 = vmatmul.mubr.bf16.gmra.mxu0 %v5664
      %v5781 = vpop.f32.mrf.mxu0
      %v5782 = vadd.f32 0.0, %v5781
      %v5783 = vpop.f32.mrf.mxu0
      %v5784 = vpop.f32.mrf.mxu0
      %v5785 = vadd.f32 0.0, %v5784
      %v5786 = vpop.f32.mrf.mxu0
      %5787 = vmatprep.mubr.bf16.mxu0 0
      %5788 = vmatmul.mubr.bf16.gmra.mxu0 %v5667
      %v5789 = vpop.f32.mrf.mxu0
      %v5790 = vadd.f32 0.0, %v5789
      %v5791 = vpop.f32.mrf.mxu0
      %v5792 = vpop.f32.mrf.mxu0
      %v5793 = vadd.f32 0.0, %v5792
      %v5794 = vpop.f32.mrf.mxu0
      %5795 = vmatprep.mubr.bf16.mxu0 0
      %5796 = vmatmul.mubr.bf16.gmra.mxu0 %v5670
      %v5797 = vpop.f32.mrf.mxu0
      %v5798 = vadd.f32 0.0, %v5797
      %v5799 = vpop.f32.mrf.mxu0
      %v5800 = vpop.f32.mrf.mxu0
      %v5801 = vadd.f32 0.0, %v5800
      %v5802 = vpop.f32.mrf.mxu0
      %5803 = vmatprep.mubr.bf16.mxu0 0
      %5804 = vmatmul.mubr.bf16.gmra.mxu0 %v5673
      %v5805 = vpop.f32.mrf.mxu0
      %v5806 = vadd.f32 0.0, %v5805
      %v5807 = vpop.f32.mrf.mxu0
      %v5808 = vpop.f32.mrf.mxu0
      %v5809 = vadd.f32 0.0, %v5808
      %v5810 = vpop.f32.mrf.mxu0
      %5811 = vmatprep.mubr.bf16.mxu0 0
      %5812 = vmatmul.mubr.bf16.gmra.mxu0 %v5676
      %v5813 = vpop.f32.mrf.mxu0
      %v5814 = vadd.f32 0.0, %v5813
      %v5815 = vpop.f32.mrf.mxu0
      %v5816 = vpop.f32.mrf.mxu0
      %v5817 = vadd.f32 0.0, %v5816
      %v5818 = vpop.f32.mrf.mxu0
      %5819 = vmatprep.mubr.bf16.mxu0 0
      %5820 = vmatmul.mubr.bf16.gmra.mxu0 %v5679
      %v5821 = vpop.f32.mrf.mxu0
      %v5822 = vadd.f32 0.0, %v5821
      %v5823 = vpop.f32.mrf.mxu0
      %v5824 = vpop.f32.mrf.mxu0
      %v5825 = vadd.f32 0.0, %v5824
      %v5826 = vpop.f32.mrf.mxu0
      %5827 = vmatprep.mubr.bf16.mxu0 0
      %5828 = vmatmul.mubr.bf16.gmra.mxu0 %v5682
      %v5829 = vpop.f32.mrf.mxu0
      %v5830 = vadd.f32 0.0, %v5829
      %v5831 = vpop.f32.mrf.mxu0
      %v5832 = vpop.f32.mrf.mxu0
      %v5833 = vadd.f32 0.0, %v5832
      %v5834 = vpop.f32.mrf.mxu0
      %5835 = vmatprep.mubr.bf16.mxu0 0
      %5836 = vmatmul.mubr.bf16.gmra.mxu0 %v5685
      %v5837 = vpop.f32.mrf.mxu0
      %v5838 = vadd.f32 0.0, %v5837
      %v5839 = vpop.f32.mrf.mxu0
      %v5840 = vpop.f32.mrf.mxu0
      %v5841 = vadd.f32 0.0, %v5840
      %v5842 = vpop.f32.mrf.mxu0
      %5843 = vmatprep.mubr.bf16.mxu0 0
      %5844 = vmatmul.mubr.bf16.gmra.mxu0 %v5688
      %v5845 = vpop.f32.mrf.mxu0
      %v5846 = vadd.f32 0.0, %v5845
      %v5847 = vpop.f32.mrf.mxu0
      %v5848 = vpop.f32.mrf.mxu0
      %v5849 = vadd.f32 0.0, %v5848
      %v5850 = vpop.f32.mrf.mxu0
      %5851 = vmatprep.mubr.bf16.mxu0 0
      %5852 = vmatmul.mubr.bf16.gmra.mxu0 %v5691
      %v5853 = vpop.f32.mrf.mxu0
      %v5854 = vadd.f32 0.0, %v5853
      %v5855 = vpop.f32.mrf.mxu0
      %v5856 = vpop.f32.mrf.mxu0
      %v5857 = vadd.f32 0.0, %v5856
      %v5858 = vpop.f32.mrf.mxu0
      %5859 = vmatprep.mubr.bf16.mxu0 0
      %5860 = vmatmul.mubr.bf16.gmra.mxu0 %v5694
      %v5861 = vpop.f32.mrf.mxu0
      %v5862 = vadd.f32 0.0, %v5861
      %v5863 = vpop.f32.mrf.mxu0
      %v5864 = vpop.f32.mrf.mxu0
      %v5865 = vadd.f32 0.0, %v5864
      %v5866 = vpop.f32.mrf.mxu0
      %5867 = vmatprep.mubr.bf16.mxu0 0
      %5868 = vmatmul.mubr.bf16.gmra.mxu0 %v5697
      %v5869 = vpop.f32.mrf.mxu0
      %v5870 = vadd.f32 0.0, %v5869
      %v5871 = vpop.f32.mrf.mxu0
      %v5872 = vpop.f32.mrf.mxu0
      %v5873 = vadd.f32 0.0, %v5872
      %v5874 = vpop.f32.mrf.mxu0
      %5875 = vdwg.mxu0
      %v5876 = vadd.f32 %v5207, %v5734
      %v5877 = vadd.f32 %v5208, %v5737
      %v5878 = vadd.f32 %v5209, %v5742
      %v5879 = vadd.f32 %v5210, %v5745
      %v5880 = vadd.f32 %v5211, %v5750
      %v5881 = vadd.f32 %v5212, %v5753
      %v5882 = vadd.f32 %v5213, %v5758
      %v5883 = vadd.f32 %v5214, %v5761
      %v5884 = vadd.f32 %v5215, %v5766
      %v5885 = vadd.f32 %v5216, %v5769
      %v5886 = vadd.f32 %v5217, %v5774
      %v5887 = vadd.f32 %v5218, %v5777
      %v5888 = vadd.f32 %v5219, %v5782
      %v5889 = vadd.f32 %v5220, %v5785
      %v5890 = vadd.f32 %v5221, %v5790
      %v5891 = vadd.f32 %v5222, %v5793
      %v5892 = vadd.f32 %v5223, %v5798
      %v5893 = vadd.f32 %v5224, %v5801
      %v5894 = vadd.f32 %v5225, %v5806
      %v5895 = vadd.f32 %v5226, %v5809
      %v5896 = vadd.f32 %v5227, %v5814
      %v5897 = vadd.f32 %v5228, %v5817
      %v5898 = vadd.f32 %v5229, %v5822
      %v5899 = vadd.f32 %v5230, %v5825
      %v5900 = vadd.f32 %v5231, %v5830
      %v5901 = vadd.f32 %v5232, %v5833
      %v5902 = vadd.f32 %v5233, %v5838
      %v5903 = vadd.f32 %v5234, %v5841
      %v5904 = vadd.f32 %v5235, %v5846
      %v5905 = vadd.f32 %v5236, %v5849
      %v5906 = vadd.f32 %v5237, %v5854
      %v5907 = vadd.f32 %v5238, %v5857
      %v5908 = vadd.f32 %v5239, %v5862
      %v5909 = vadd.f32 %v5240, %v5865
      %v5910 = vadd.f32 %v5241, %v5870
      %v5911 = vadd.f32 %v5242, %v5873
      %v5912 = vld [vmem:[%s5] sm:$0x1]
      %v5914 = vlaneseq
      %v5915 = vshrl.u32 %v5914, 7
      %v5916 = vsub.s32 0, %v5915
      %v5917 = vrot.slane %v5912, %v5916
      %v5919 = vadd.f32 %v5876, %v5917
      %v5920 = vadd.f32 %v5877, %v5917
      %v5921 = vadd.f32 %v5878, %v5917
      %v5922 = vadd.f32 %v5879, %v5917
      %v5923 = vadd.f32 %v5880, %v5917
      %v5924 = vadd.f32 %v5881, %v5917
      %v5925 = vadd.f32 %v5882, %v5917
      %v5926 = vadd.f32 %v5883, %v5917
      %v5927 = vadd.f32 %v5884, %v5917
      %v5928 = vadd.f32 %v5885, %v5917
      %v5929 = vadd.f32 %v5886, %v5917
      %v5930 = vadd.f32 %v5887, %v5917
      %v5931 = vadd.f32 %v5888, %v5917
      %v5932 = vadd.f32 %v5889, %v5917
      %v5933 = vadd.f32 %v5890, %v5917
      %v5934 = vadd.f32 %v5891, %v5917
      %v5935 = vadd.f32 %v5892, %v5917
      %v5936 = vadd.f32 %v5893, %v5917
      %v5937 = vadd.f32 %v5894, %v5917
      %v5938 = vadd.f32 %v5895, %v5917
      %v5939 = vadd.f32 %v5896, %v5917
      %v5940 = vadd.f32 %v5897, %v5917
      %v5941 = vadd.f32 %v5898, %v5917
      %v5942 = vadd.f32 %v5899, %v5917
      %v5943 = vadd.f32 %v5900, %v5917
      %v5944 = vadd.f32 %v5901, %v5917
      %v5945 = vadd.f32 %v5902, %v5917
      %v5946 = vadd.f32 %v5903, %v5917
      %v5947 = vadd.f32 %v5904, %v5917
      %v5948 = vadd.f32 %v5905, %v5917
      %v5949 = vadd.f32 %v5906, %v5917
      %v5950 = vadd.f32 %v5907, %v5917
      %v5951 = vadd.f32 %v5908, %v5917
      %v5952 = vadd.f32 %v5909, %v5917
      %v5953 = vadd.f32 %v5910, %v5917
      %v5954 = vadd.f32 %v5911, %v5917
      %v5955 = vld [vmem:[%s417] sm:$0xff]
      %v5956 = vld [vmem:[%s417 + $0x8] sm:$0xff]
      %v5957 = vld [vmem:[%s417 + $0x10] sm:$0xff]
      %v5958 = vld [vmem:[%s417 + $0x18] sm:$0xff]
      %v5959 = vld [vmem:[%s417 + $0x20] sm:$0xff]
      %v5960 = vld [vmem:[%s417 + $0x28] sm:$0xff]
      %v5961 = vld [vmem:[%s417 + $0x30] sm:$0xff]
      %v5962 = vld [vmem:[%s417 + $0x38] sm:$0xff]
      %v5963 = vld [vmem:[%s417 + $0x40] sm:$0xff]
      %v5964 = vld [vmem:[%s417 + $0x48] sm:$0xff]
      %v5965 = vld [vmem:[%s417 + $0x50] sm:$0xff]
      %v5966 = vld [vmem:[%s417 + $0x58] sm:$0xff]
      %v5967 = vld [vmem:[%s417 + $0x60] sm:$0xff]
      %v5968 = vld [vmem:[%s417 + $0x68] sm:$0xff]
      %v5969 = vld [vmem:[%s417 + $0x70] sm:$0xff]
      %v5970 = vld [vmem:[%s417 + $0x78] sm:$0xff]
      %v5971 = vld [vmem:[%s417 + $0x80] sm:$0xff]
      %v5972 = vld [vmem:[%s417 + $0x88] sm:$0xff]
      %v5973 = vld [vmem:[%s417 + $0x90] sm:$0xff]
      %v5974 = vld [vmem:[%s417 + $0x98] sm:$0xff]
      %v5975 = vld [vmem:[%s417 + $0xa0] sm:$0xff]
      %v5976 = vld [vmem:[%s417 + $0xa8] sm:$0xff]
      %v5977 = vld [vmem:[%s417 + $0xb0] sm:$0xff]
      %v5978 = vld [vmem:[%s417 + $0xb8] sm:$0xff]
      %v5979 = vld [vmem:[%s417 + $0xc0] sm:$0xff]
      %v5980 = vld [vmem:[%s417 + $0xc8] sm:$0xff]
      %v5981 = vld [vmem:[%s417 + $0xd0] sm:$0xff]
      %v5982 = vld [vmem:[%s417 + $0xd8] sm:$0xff]
      %v5983 = vld [vmem:[%s417 + $0xe0] sm:$0xff]
      %v5984 = vld [vmem:[%s417 + $0xe8] sm:$0xff]
      %v5985 = vld [vmem:[%s417 + $0xf0] sm:$0xff]
      %v5986 = vld [vmem:[%s417 + $0xf8] sm:$0xff]
      %v5987 = vld [vmem:[%s417 + $0x100] sm:$0xff]
      %v5988 = vld [vmem:[%s417 + $0x108] sm:$0xff]
      %v5989 = vld [vmem:[%s417 + $0x110] sm:$0xff]
      %v5990 = vld [vmem:[%s417 + $0x118] sm:$0xff]
      %v5991 = vadd.f32 %v5919, %v5955
      %v5992 = vadd.f32 %v5920, %v5956
      %v5993 = vadd.f32 %v5921, %v5957
      %v5994 = vadd.f32 %v5922, %v5958
      %v5995 = vadd.f32 %v5923, %v5959
      %v5996 = vadd.f32 %v5924, %v5960
      %v5997 = vadd.f32 %v5925, %v5961
      %v5998 = vadd.f32 %v5926, %v5962
      %v5999 = vadd.f32 %v5927, %v5963
      %v6000 = vadd.f32 %v5928, %v5964
      %v6001 = vadd.f32 %v5929, %v5965
      %v6002 = vadd.f32 %v5930, %v5966
      %v6003 = vadd.f32 %v5931, %v5967
      %v6004 = vadd.f32 %v5932, %v5968
      %v6005 = vadd.f32 %v5933, %v5969
      %v6006 = vadd.f32 %v5934, %v5970
      %v6007 = vadd.f32 %v5935, %v5971
      %v6008 = vadd.f32 %v5936, %v5972
      %v6009 = vadd.f32 %v5937, %v5973
      %v6010 = vadd.f32 %v5938, %v5974
      %v6011 = vadd.f32 %v5939, %v5975
      %v6012 = vadd.f32 %v5940, %v5976
      %v6013 = vadd.f32 %v5941, %v5977
      %v6014 = vadd.f32 %v5942, %v5978
      %v6015 = vadd.f32 %v5943, %v5979
      %v6016 = vadd.f32 %v5944, %v5980
      %v6017 = vadd.f32 %v5945, %v5981
      %v6018 = vadd.f32 %v5946, %v5982
      %v6019 = vadd.f32 %v5947, %v5983
      %v6020 = vadd.f32 %v5948, %v5984
      %v6021 = vadd.f32 %v5949, %v5985
      %v6022 = vadd.f32 %v5950, %v5986
      %v6023 = vadd.f32 %v5951, %v5987
      %v6024 = vadd.f32 %v5952, %v5988
      %v6025 = vadd.f32 %v5953, %v5989
      %v6026 = vadd.f32 %v5954, %v5990
      %v6027 = vmax.f32 %v5991, 0.0
      %v6028 = vmax.f32 %v5992, 0.0
      %v6029 = vmax.f32 %v5993, 0.0
      %v6030 = vmax.f32 %v5994, 0.0
      %v6031 = vmax.f32 %v5995, 0.0
      %v6032 = vmax.f32 %v5996, 0.0
      %v6033 = vmax.f32 %v5997, 0.0
      %v6034 = vmax.f32 %v5998, 0.0
      %v6035 = vmax.f32 %v5999, 0.0
      %v6036 = vmax.f32 %v6000, 0.0
      %v6037 = vmax.f32 %v6001, 0.0
      %v6038 = vmax.f32 %v6002, 0.0
      %v6039 = vmax.f32 %v6003, 0.0
      %v6040 = vmax.f32 %v6004, 0.0
      %v6041 = vmax.f32 %v6005, 0.0
      %v6042 = vmax.f32 %v6006, 0.0
      %v6043 = vmax.f32 %v6007, 0.0
      %v6044 = vmax.f32 %v6008, 0.0
      %v6045 = vmax.f32 %v6009, 0.0
      %v6046 = vmax.f32 %v6010, 0.0
      %v6047 = vmax.f32 %v6011, 0.0
      %v6048 = vmax.f32 %v6012, 0.0
      %v6049 = vmax.f32 %v6013, 0.0
      %v6050 = vmax.f32 %v6014, 0.0
      %v6051 = vmax.f32 %v6015, 0.0
      %v6052 = vmax.f32 %v6016, 0.0
      %v6053 = vmax.f32 %v6017, 0.0
      %v6054 = vmax.f32 %v6018, 0.0
      %v6055 = vmax.f32 %v6019, 0.0
      %v6056 = vmax.f32 %v6020, 0.0
      %v6057 = vmax.f32 %v6021, 0.0
      %v6058 = vmax.f32 %v6022, 0.0
      %v6059 = vmax.f32 %v6023, 0.0
      %v6060 = vmax.f32 %v6024, 0.0
      %v6061 = vmax.f32 %v6025, 0.0
      %v6062 = vmax.f32 %v6026, 0.0
      %6063 = vst.msk [vmem:[%s427] sm:$0xff] %vm743, %v6027
      %6064 = vst.msk [vmem:[%s427 + $0x8] sm:$0xff] %vm743, %v6028
      %6065 = vst.msk [vmem:[%s427 + $0x10] sm:$0xff] %vm743, %v6029
      %6066 = vst.msk [vmem:[%s427 + $0x18] sm:$0xff] %vm743, %v6030
      %6067 = vst.msk [vmem:[%s427 + $0x20] sm:$0xff] %vm743, %v6031
      %6068 = vst.msk [vmem:[%s427 + $0x28] sm:$0xff] %vm743, %v6032
      %6069 = vst.msk [vmem:[%s427 + $0x30] sm:$0xff] %vm743, %v6033
      %6070 = vst.msk [vmem:[%s427 + $0x38] sm:$0xff] %vm743, %v6034
      %6071 = vst.msk [vmem:[%s427 + $0x40] sm:$0xff] %vm743, %v6035
      %6072 = vst.msk [vmem:[%s427 + $0x48] sm:$0xff] %vm743, %v6036
      %6073 = vst.msk [vmem:[%s427 + $0x50] sm:$0xff] %vm743, %v6037
      %6074 = vst.msk [vmem:[%s427 + $0x58] sm:$0xff] %vm743, %v6038
      %6075 = vst.msk [vmem:[%s427 + $0x60] sm:$0xff] %vm743, %v6039
      %6076 = vst.msk [vmem:[%s427 + $0x68] sm:$0xff] %vm743, %v6040
      %6077 = vst.msk [vmem:[%s427 + $0x70] sm:$0xff] %vm743, %v6041
      %6078 = vst.msk [vmem:[%s427 + $0x78] sm:$0xff] %vm743, %v6042
      %6079 = vst.msk [vmem:[%s427 + $0x80] sm:$0xff] %vm743, %v6043
      %6080 = vst.msk [vmem:[%s427 + $0x88] sm:$0xff] %vm743, %v6044
      %6081 = vst.msk [vmem:[%s427 + $0x90] sm:$0xff] %vm743, %v6045
      %6082 = vst.msk [vmem:[%s427 + $0x98] sm:$0xff] %vm743, %v6046
      %6083 = vst.msk [vmem:[%s427 + $0xa0] sm:$0xff] %vm743, %v6047
      %6084 = vst.msk [vmem:[%s427 + $0xa8] sm:$0xff] %vm743, %v6048
      %6085 = vst.msk [vmem:[%s427 + $0xb0] sm:$0xff] %vm743, %v6049
      %6086 = vst.msk [vmem:[%s427 + $0xb8] sm:$0xff] %vm743, %v6050
      %6087 = vst.msk [vmem:[%s427 + $0xc0] sm:$0xff] %vm743, %v6051
      %6088 = vst.msk [vmem:[%s427 + $0xc8] sm:$0xff] %vm743, %v6052
      %6089 = vst.msk [vmem:[%s427 + $0xd0] sm:$0xff] %vm743, %v6053
      %6090 = vst.msk [vmem:[%s427 + $0xd8] sm:$0xff] %vm743, %v6054
      %6091 = vst.msk [vmem:[%s427 + $0xe0] sm:$0xff] %vm743, %v6055
      %6092 = vst.msk [vmem:[%s427 + $0xe8] sm:$0xff] %vm743, %v6056
      %6093 = vst.msk [vmem:[%s427 + $0xf0] sm:$0xff] %vm743, %v6057
      %6094 = vst.msk [vmem:[%s427 + $0xf8] sm:$0xff] %vm743, %v6058
      %6095 = vst.msk [vmem:[%s427 + $0x100] sm:$0xff] %vm743, %v6059
      %6096 = vst.msk [vmem:[%s427 + $0x108] sm:$0xff] %vm743, %v6060
      %6097 = vst.msk [vmem:[%s427 + $0x110] sm:$0xff] %vm743, %v6061
      %6098 = vst.msk [vmem:[%s427 + $0x118] sm:$0xff] %vm743, %v6062
      %p6099 = scmp.lt.s32.totalorder %s22, 1
      %s6100 = scalar_select %p6099, %s22, 1
      %s6101 = smul.addr %s6100, 36
      %s6102 = smul.addr %s6101, 8
      %s6103 = scalar_lea.vmem %s9, %s6102
      %p6104 = scmp.lt.s32.totalorder %s22, 1
      %s6105 = scalar_select %p6104, %s22, 1
      %s6106 = smul.addr %s6105, 10
      %s6107 = smul.addr %s6106, 8
      %s6108 = scalar_lea.vmem %s10, %s6107
      // Predicated region
      $region57: #{basic_block_forward_nchw.3} parent=55 // pred_check
        %p6109 = pneg %p249
      $region58: #{basic_block_forward_nchw.3} parent=55 // pred_check_branch
        %6111 = sbr.rel (%p6109) target = $region60
      $region59: #{basic_block_forward_nchw.3} parent=55 // pred_region
        _
      $region60: #{basic_block_forward_nchw.3} parent=55 // pred_fallthru
        _
      // Predicated region
      $region61: #{basic_block_forward_nchw.3} parent=55 // pred_check
        %p6112 = pneg %p275
      $region62: #{basic_block_forward_nchw.3} parent=55 // pred_check_branch
        %6114 = sbr.rel (%p6112) target = $region64
      $region63: #{basic_block_forward_nchw.3} parent=55 // pred_region
        _
      $region64: #{basic_block_forward_nchw.3} parent=55 // pred_fallthru
        _
    $region56: #{basic_block_forward_nchw.3} parent=5 // pred_fallthru
      _
    %p6115 = scmp.le.s32.totalorder 2, %s17
    // Predicated region
    $region65: #{basic_block_forward_nchw.3} parent=5 // pred_check
      %p6116 = pneg %p6115
    $region66: #{basic_block_forward_nchw.3} parent=5 // pred_check_branch
      %6118 = sbr.rel (%p6116) target = $region68
    $region67: #{basic_block_forward_nchw.3} parent=5 // pred_region
      %s6119 = ssub.s32 %s17, 2
      // Predicated region
      $region69: #{basic_block_forward_nchw.3} parent=67 // pred_check
        %p6120 = pneg %p255
      $region70: #{basic_block_forward_nchw.3} parent=67 // pred_check_branch
        %6122 = sbr.rel (%p6120) target = $region72
      $region71: #{basic_block_forward_nchw.3} parent=67 // pred_region
        %p6123 = scmp.lt.s32.totalorder %s23, 1
        %s6124 = scalar_select %p6123, %s23, 1
        %s6125 = smul.addr %s6124, 36
        %s6126 = smul.addr %s6125, 8
        %s6127 = scalar_lea.vmem %s9, %s6126
      $region72: #{basic_block_forward_nchw.3} parent=67 // pred_fallthru
        _
      // Predicated region
      $region73: #{basic_block_forward_nchw.3} parent=67 // pred_check
        %p6128 = pneg %p281
      $region74: #{basic_block_forward_nchw.3} parent=67 // pred_check_branch
        %6130 = sbr.rel (%p6128) target = $region76
      $region75: #{basic_block_forward_nchw.3} parent=67 // pred_region
        %p6131 = scmp.lt.s32.totalorder %s23, 1
        %s6132 = scalar_select %p6131, %s23, 1
        %s6133 = smul.addr %s6132, 10
        %s6134 = smul.addr %s6133, 8
        %s6135 = scalar_lea.vmem %s10, %s6134
      $region76: #{basic_block_forward_nchw.3} parent=67 // pred_fallthru
        _
    $region68: #{basic_block_forward_nchw.3} parent=5 // pred_fallthru
      _
  $region6: #{basic_block_forward_nchw.3} parent=0 // loop_footer
    %s21 = sadd.s32 1, %s17
  $region7: #{basic_block_forward_nchw.3} parent=0 // loop_footer_branch
    %16 = sbr.rel target = $region3
  $region8: #{basic_block_forward_nchw.3} parent=0 // loop_exit
    _

</llo_original>
